<compile_context>
chip_gen: v5e
topology: v5e:2x2
jax: 0.10.0
libtpu: 0.0.40
codegen_flags: <defaults>
</compile_context>

<pallas_src>
import functools
import math

import jax
import jax.numpy as jnp
from jax.experimental import pallas as pl
from jax.experimental.pallas import tpu as pltpu


def _round_up(x, m):
    return (x + m - 1) // m * m


@functools.lru_cache(maxsize=None)
def _vmem_limit_bytes():
    """Per-generation VMEM limit: ~3/4 of physical, capped at 96 MiB."""
    cap = 64 * 1024 * 1024
    try:
        info = pltpu.get_tpu_info()
        cap = int(getattr(info, "vmem_capacity_bytes", cap) or cap)
    except Exception:
        pass
    return int(min(cap * 3 // 4, 96 * 1024 * 1024))


def _sigmoid(x):
    # sigmoid(x) == 0.5*(tanh(x/2)+1): one EUP tanh instead of exp + divide.
    return 0.5 * (jnp.tanh(0.5 * x) + 1.0)


# -----------------------------------------------------------------------------
# Pallas kernel: one LSTM layer, one time chunk per grid step.
# x is a (chunk*Bp, in_feat) bf16 slab (rows = time-major then batch);
# h/c state is carried in f32 VMEM scratch across grid steps; the hoisted
# per-chunk input projection is staged in f32 VMEM scratch (xp_scr).
# -----------------------------------------------------------------------------
def _lstm_layer_kernel(x_ref, wih_ref, whh_ref, b_ref, h0_ref, c0_ref,
                       y_ref, hn_ref, cn_ref, h_scr, c_scr, xp_scr,
                       *, chunk, bp, hp, seq_len, mask_tail):
    c_idx = pl.program_id(0)

    @pl.when(c_idx == 0)
    def _():
        h_scr[...] = h0_ref[...]
        c_scr[...] = c0_ref[...]

    # Hoisted time-independent input projection for the whole chunk: one big
    # MXU matmul (M = chunk*Bp), staged in VMEM so it is NOT kept live in vregs
    # across the unrolled recurrence.
    xp_scr[...] = jnp.dot(x_ref[...], wih_ref[...],
                          preferred_element_type=jnp.float32) + b_ref[...]

    # Serial recurrence over the chunk (statically unrolled).
    h = h_scr[...]
    c = c_scr[...]
    for t in range(chunk):
        gates = xp_scr[t * bp:(t + 1) * bp, :] + jnp.dot(
            h.astype(whh_ref.dtype), whh_ref[...],
            preferred_element_type=jnp.float32)                      # (Bp, 4Hp)
        # PyTorch LSTM gate order: i, f, g, o.  hp % 128 == 0 -> lane-aligned.
        i_g = _sigmoid(gates[:, 0 * hp:1 * hp])
        f_g = _sigmoid(gates[:, 1 * hp:2 * hp])
        g_g = jnp.tanh(gates[:, 2 * hp:3 * hp])
        o_g = _sigmoid(gates[:, 3 * hp:4 * hp])
        c_new = f_g * c + i_g * g_g
        h_new = o_g * jnp.tanh(c_new)
        if mask_tail:
            # Padded time steps (global t >= seq_len) must not advance state.
            valid = (c_idx * chunk + t) < seq_len
            c = jnp.where(valid, c_new, c)
            h = jnp.where(valid, h_new, h)
        else:
            c = c_new
            h = h_new
        y_ref[t * bp:(t + 1) * bp, :] = h.astype(y_ref.dtype)        # lane-dense

    h_scr[...] = h
    c_scr[...] = c

    @pl.when(c_idx == pl.num_programs(0) - 1)
    def _():
        hn_ref[...] = h
        cn_ref[...] = c


def _lstm_layer_pallas(x2d, wih_t, whh_t, bias_p, h0_p, c0_p, *,
                       seq_len, s_pad, chunk, bp, hp, out_dtype):
    """One LSTM layer on the padded time-major slab.

    x2d: (s_pad*bp, in_feat) bf16.  Returns (y2d (s_pad*bp, hp), h_n, c_n)."""
    n_chunks = s_pad // chunk
    in_feat = x2d.shape[1]

    kernel = functools.partial(_lstm_layer_kernel, chunk=chunk, bp=bp, hp=hp,
                               seq_len=seq_len, mask_tail=(s_pad != seq_len))

    grid_spec = pltpu.PrefetchScalarGridSpec(
        num_scalar_prefetch=0,
        grid=(n_chunks,),
        in_specs=[
            pl.BlockSpec((chunk * bp, in_feat), lambda c: (c, 0)),   # x chunk
            # TODO(synk): on v7x, pipeline_mode=pl.Buffered(1) on the four
            # grid-invariant specs below would halve their resident VMEM.
            pl.BlockSpec((in_feat, 4 * hp), lambda c: (0, 0)),       # W_ih^T (resident)
            pl.BlockSpec((hp, 4 * hp), lambda c: (0, 0)),            # W_hh^T (resident)
            pl.BlockSpec((1, 4 * hp), lambda c: (0, 0)),             # fused bias
            pl.BlockSpec((bp, hp), lambda c: (0, 0)),                # h0
            pl.BlockSpec((bp, hp), lambda c: (0, 0)),                # c0
        ],
        out_specs=[
            pl.BlockSpec((chunk * bp, hp), lambda c: (c, 0)),        # y chunk
            pl.BlockSpec((bp, hp), lambda c: (0, 0)),                # h_n
            pl.BlockSpec((bp, hp), lambda c: (0, 0)),                # c_n
        ],
        scratch_shapes=[
            pltpu.VMEM((bp, hp), jnp.float32),                       # h carry
            pltpu.VMEM((bp, hp), jnp.float32),                       # c carry
            pltpu.VMEM((chunk * bp, 4 * hp), jnp.float32),           # staged x-proj
        ],
    )

    return pl.pallas_call(
        kernel,
        out_shape=(
            jax.ShapeDtypeStruct((s_pad * bp, hp), out_dtype),
            jax.ShapeDtypeStruct((bp, hp), jnp.float32),
            jax.ShapeDtypeStruct((bp, hp), jnp.float32),
        ),
        grid_spec=grid_spec,
        compiler_params=pltpu.CompilerParams(
            dimension_semantics=("arbitrary",),        # time axis is serial
            vmem_limit_bytes=_vmem_limit_bytes(),
        ),
    )(x2d, wih_t, whh_t, bias_p, h0_p, c0_p)


# -----------------------------------------------------------------------------
# One-time weight preparation (outside the jitted forward).
# -----------------------------------------------------------------------------
def prepare_lstm_params(params, input_size, hidden_size):
    """Pad (per-gate to Hp, input dim to a lane-aligned width), transpose,
    cast to bf16 and fuse the two biases — done once, not per forward call."""
    H = hidden_size
    Hp = _round_up(H, 128)
    prepped = []
    for l, (w_ih, w_hh, b_ih, b_hh) in enumerate(params):
        in_l = input_size if l == 0 else hidden_size
        in_p = _round_up(in_l, 128) if l == 0 else Hp   # layers >0 consume Hp slab

        def pad_gates(w, cols_to):
            # (4H, X) -> (4Hp, cols_to): zero-pad each gate's rows to Hp, cols to cols_to.
            return jnp.concatenate(
                [jnp.pad(w[k * H:(k + 1) * H],
                         ((0, Hp - H), (0, cols_to - w.shape[1])))
                 for k in range(4)], axis=0)

        wih_t = jnp.transpose(pad_gates(w_ih, in_p)).astype(jnp.bfloat16)   # (in_p, 4Hp)
        whh_t = jnp.transpose(pad_gates(w_hh, Hp)).astype(jnp.bfloat16)     # (Hp, 4Hp)
        bias = b_ih + b_hh
        bias_p = jnp.concatenate(
            [jnp.pad(bias[k * H:(k + 1) * H], (0, Hp - H)) for k in range(4)]
        ).reshape(1, 4 * Hp).astype(jnp.float32)
        prepped.append((wih_t, whh_t, bias_p))
    return prepped


# -----------------------------------------------------------------------------
# MultiRNN forward (LSTM): stacked layers, batch_first, dropout=0.
# -----------------------------------------------------------------------------
def multi_rnn_forward(x, h0, c0, prepped_params, *, hidden_size, seq_chunk=8):
    """x: (B, S, input_size); h0/c0: (num_layers, B, H).
    Returns (output (B, S, H), (h_n, c_n)) like nn.LSTM(batch_first=True)."""
    B, S, I = x.shape
    H = hidden_size
    L = len(prepped_params)
    Hp = _round_up(H, 128)
    Ip = _round_up(I, 128)
    Bp = _round_up(max(B, 16), 16)          # bf16 minimum sublane tile is 16 rows
    Tc = max(1, min(S, seq_chunk))
    n_chunks = -(-S // Tc)                  # cdiv: no "chunk divides S" requirement
    S_pad = n_chunks * Tc

    # Build the padded, time-major activation slab ONCE.  It stays padded
    # between layers (W_ih of layers > 0 is zero-padded along its input dim,
    # and the Hp-H padded output columns are exactly zero).
    x_tm = jnp.transpose(x, (1, 0, 2))                                    # (S, B, I)
    x_p = jnp.pad(x_tm, ((0, S_pad - S), (0, Bp - B), (0, Ip - I)))
    slab = x_p.astype(jnp.bfloat16).reshape(S_pad * Bp, Ip)

    hs, cs = [], []
    for l, (wih_t, whh_t, bias_p) in enumerate(prepped_params):
        h0_p = jnp.pad(h0[l], ((0, Bp - B), (0, Hp - H))).astype(jnp.float32)
        c0_p = jnp.pad(c0[l], ((0, Bp - B), (0, Hp - H))).astype(jnp.float32)
        out_dt = jnp.float32 if l == L - 1 else jnp.bfloat16
        slab, h_n, c_n = _lstm_layer_pallas(
            slab, wih_t, whh_t, bias_p, h0_p, c0_p,
            seq_len=S, s_pad=S_pad, chunk=Tc, bp=Bp, hp=Hp, out_dtype=out_dt)
        hs.append(h_n[:B, :H])
        cs.append(c_n[:B, :H])
        # dropout=0 (module default) between layers -> no-op.

    y_tm = slab.reshape(S_pad, Bp, Hp)[:S, :B, :H]
    output = jnp.transpose(y_tm, (1, 0, 2)).astype(jnp.float32)
    return output, (jnp.stack(hs, axis=0), jnp.stack(cs, axis=0))


# -----------------------------------------------------------------------------
# Deterministic parameter init (matches nn.LSTM shapes, uniform(-1/sqrt(H), +))
# -----------------------------------------------------------------------------
def init_lstm_params(key, input_size, hidden_size, num_layers):
    k = 1.0 / math.sqrt(hidden_size)
    params = []
    for l in range(num_layers):
        in_l = input_size if l == 0 else hidden_size
        key, k1, k2, k3, k4 = jax.random.split(key, 5)
        w_ih = jax.random.uniform(k1, (4 * hidden_size, in_l), jnp.float32, -k, k)
        w_hh = jax.random.uniform(k2, (4 * hidden_size, hidden_size), jnp.float32, -k, k)
        b_ih = jax.random.uniform(k3, (4 * hidden_size,), jnp.float32, -k, k)
        b_hh = jax.random.uniform(k4, (4 * hidden_size,), jnp.float32, -k, k)
        params.append((w_ih, w_hh, b_ih, b_hh))
    return params


# -----------------------------------------------------------------------------
# Pure-JAX f32 reference (lax.scan) for correctness checking.
# -----------------------------------------------------------------------------
def lstm_reference(x, h0, c0, params):
    def one_layer(x_tm, w_ih, w_hh, b_ih, b_hh, h0l, c0l):
        H = h0l.shape[-1]

        def step(carry, x_t):
            h, c = carry
            gates = x_t @ w_ih.T + h @ w_hh.T + b_ih + b_hh
            i = jax.nn.sigmoid(gates[:, :H])
            f = jax.nn.sigmoid(gates[:, H:2 * H])
            g = jnp.tanh(gates[:, 2 * H:3 * H])
            o = jax.nn.sigmoid(gates[:, 3 * H:])
            c = f * c + i * g
            h = o * jnp.tanh(c)
            return (h, c), h

        (h_n, c_n), ys = jax.lax.scan(step, (h0l, c0l), x_tm)
        return ys, h_n, c_n

    x_tm = jnp.transpose(x, (1, 0, 2))
    hs, cs = [], []
    for l, (w_ih, w_hh, b_ih, b_hh) in enumerate(params):
        x_tm, h_n, c_n = one_layer(x_tm, w_ih, w_hh, b_ih, b_hh, h0[l], c0[l])
        hs.append(h_n)
        cs.append(c_n)
    return jnp.transpose(x_tm, (1, 0, 2)), (jnp.stack(hs), jnp.stack(cs))


if __name__ == "__main__":
    # Small config consistent with the module: MultiRNN('LSTM', 16, 32, num_layers=2).
    B, S, I, H, L = 2, 12, 16, 32, 2
    SEQ_CHUNK = 8   # S=12, chunk=8 -> 2 chunks with a masked tail (exercises cdiv grid)

    key = jax.random.PRNGKey(0)
    kx, kh, kc, kp = jax.random.split(key, 4)
    x = jax.random.normal(kx, (B, S, I), jnp.float32)
    # init_hidden() would return zeros; use small random state to exercise the path.
    h0 = 0.1 * jax.random.normal(kh, (L, B, H), jnp.float32)
    c0 = 0.1 * jax.random.normal(kc, (L, B, H), jnp.float32)
    params = init_lstm_params(kp, I, H, L)

    prepped = prepare_lstm_params(params, I, H)        # one-time weight prep
    fwd = jax.jit(functools.partial(multi_rnn_forward,
                                    hidden_size=H, seq_chunk=SEQ_CHUNK))

    out, (h_n, c_n) = fwd(x, h0, c0, prepped)
    jax.block_until_ready((out, h_n, c_n))

    ref_out, (ref_h, ref_c) = lstm_reference(x, h0, c0, params)
    assert out.shape == (B, S, H) and h_n.shape == (L, B, H) and c_n.shape == (L, B, H)
    # bf16 matmul inputs / inter-layer activations (f32 accumulation) -> loose tol.
    assert jnp.allclose(out, ref_out, atol=5e-2, rtol=5e-2)
    assert jnp.allclose(h_n, ref_h, atol=5e-2, rtol=5e-2)
    assert jnp.allclose(c_n, ref_c, atol=5e-2, rtol=5e-2)

    print("KERNEL_OK")
</pallas_src>

<mosaic_0001>
module attributes {stable_mosaic.version = 11 : i64} {
  func.func @_lstm_layer_kernel(%arg0: i32, %arg1: memref<128x128xbf16, #tpu.memory_space<vmem>>, %arg2: memref<128x512xbf16, #tpu.memory_space<vmem>>, %arg3: memref<128x512xbf16, #tpu.memory_space<vmem>>, %arg4: memref<1x512xf32, #tpu.memory_space<vmem>>, %arg5: memref<16x128xf32, #tpu.memory_space<vmem>>, %arg6: memref<16x128xf32, #tpu.memory_space<vmem>>, %arg7: memref<128x128xbf16, #tpu.memory_space<vmem>>, %arg8: memref<16x128xf32, #tpu.memory_space<vmem>>, %arg9: memref<16x128xf32, #tpu.memory_space<vmem>>, %arg10: memref<16x128xf32, #tpu.memory_space<vmem>>, %arg11: memref<16x128xf32, #tpu.memory_space<vmem>>, %arg12: memref<128x512xf32, #tpu.memory_space<vmem>>) attributes {dimension_semantics = [#tpu.dimension_semantics<arbitrary>], iteration_bounds = array<i64: 2>, scalar_prefetch = 0 : i64, scratch_operands = 3 : i64, tpu.core_type = #tpu.core_type<tc>, window_params = [{transform_indices = @transform_0, window_bounds = array<i64: 128, 128>}, {pipeline_mode = #tpu.pipeline_mode<synchronous>, transform_indices = @transform_1, window_bounds = array<i64: 128, 512>}, {pipeline_mode = #tpu.pipeline_mode<synchronous>, transform_indices = @transform_2, window_bounds = array<i64: 128, 512>}, {pipeline_mode = #tpu.pipeline_mode<synchronous>, transform_indices = @transform_3, window_bounds = array<i64: 1, 512>}, {pipeline_mode = #tpu.pipeline_mode<synchronous>, transform_indices = @transform_4, window_bounds = array<i64: 16, 128>}, {pipeline_mode = #tpu.pipeline_mode<synchronous>, transform_indices = @transform_5, window_bounds = array<i64: 16, 128>}, {transform_indices = @transform_6, window_bounds = array<i64: 128, 128>}, {pipeline_mode = #tpu.pipeline_mode<synchronous>, transform_indices = @transform_7, window_bounds = array<i64: 16, 128>}, {pipeline_mode = #tpu.pipeline_mode<synchronous>, transform_indices = @transform_8, window_bounds = array<i64: 16, 128>}]} {
    %c0_i32 = arith.constant 0 : i32
    %0 = arith.cmpi eq, %arg0, %c0_i32 : i32
    %1 = arith.extui %0 : i1 to i32
    %c0_i32_0 = arith.constant 0 : i32
    %2 = arith.cmpi ne, %1, %c0_i32_0 : i32
    scf.if %2 {
      %c0_154 = arith.constant 0 : index
      %c0_155 = arith.constant 0 : index
      %361 = vector.load %arg5[%c0_154, %c0_155] : memref<16x128xf32, #tpu.memory_space<vmem>>, vector<16x128xf32>
      %c0_156 = arith.constant 0 : index
      %c0_157 = arith.constant 0 : index
      %362 = vector.load %arg10[%c0_156, %c0_157] : memref<16x128xf32, #tpu.memory_space<vmem>>, vector<16x128xf32>
      tpu.vector_store %arg10[%c0_156, %c0_157], %361 {strides = array<i32>} : memref<16x128xf32, #tpu.memory_space<vmem>>, vector<16x128xf32>,
      %c0_158 = arith.constant 0 : index
      %c0_159 = arith.constant 0 : index
      %363 = vector.load %arg6[%c0_158, %c0_159] : memref<16x128xf32, #tpu.memory_space<vmem>>, vector<16x128xf32>
      %c0_160 = arith.constant 0 : index
      %c0_161 = arith.constant 0 : index
      %364 = vector.load %arg11[%c0_160, %c0_161] : memref<16x128xf32, #tpu.memory_space<vmem>>, vector<16x128xf32>
      tpu.vector_store %arg11[%c0_160, %c0_161], %363 {strides = array<i32>} : memref<16x128xf32, #tpu.memory_space<vmem>>, vector<16x128xf32>,
    } else {
    }
    %c0 = arith.constant 0 : index
    %c0_1 = arith.constant 0 : index
    %3 = vector.load %arg1[%c0, %c0_1] : memref<128x128xbf16, #tpu.memory_space<vmem>>, vector<128x128xbf16>
    %c0_2 = arith.constant 0 : index
    %c0_3 = arith.constant 0 : index
    %4 = vector.load %arg2[%c0_2, %c0_3] : memref<128x512xbf16, #tpu.memory_space<vmem>>, vector<128x512xbf16>
    %cst = arith.constant dense<0.000000e+00> : vector<128x512xf32>
    %5 = tpu.matmul %3, %4, %cst {dimension_numbers = #tpu.dot_dimension_numbers<[1], [0], [0], [1], [0, 0, 1, 1], [], []>} : vector<128x128xbf16>, vector<128x512xbf16>, vector<128x512xf32> -> vector<128x512xf32>
    %c0_4 = arith.constant 0 : index
    %c0_5 = arith.constant 0 : index
    %6 = vector.load %arg4[%c0_4, %c0_5] : memref<1x512xf32, #tpu.memory_space<vmem>>, vector<1x512xf32>
    %7 = vector.broadcast %6 : vector<1x512xf32> to vector<128x512xf32>
    %8 = arith.addf %5, %7 : vector<128x512xf32>
    %c0_6 = arith.constant 0 : index
    %c0_7 = arith.constant 0 : index
    %9 = vector.load %arg12[%c0_6, %c0_7] : memref<128x512xf32, #tpu.memory_space<vmem>>, vector<128x512xf32>
    tpu.vector_store %arg12[%c0_6, %c0_7], %8 {strides = array<i32>} : memref<128x512xf32, #tpu.memory_space<vmem>>, vector<128x512xf32>,
    %c0_8 = arith.constant 0 : index
    %c0_9 = arith.constant 0 : index
    %10 = vector.load %arg10[%c0_8, %c0_9] : memref<16x128xf32, #tpu.memory_space<vmem>>, vector<16x128xf32>
    %c0_10 = arith.constant 0 : index
    %c0_11 = arith.constant 0 : index
    %11 = vector.load %arg11[%c0_10, %c0_11] : memref<16x128xf32, #tpu.memory_space<vmem>>, vector<16x128xf32>
    %c0_12 = arith.constant 0 : index
    %c0_13 = arith.constant 0 : index
    %12 = vector.load %arg12[%c0_12, %c0_13] : memref<128x512xf32, #tpu.memory_space<vmem>>, vector<16x512xf32>
    %13 = arith.truncf %10 : vector<16x128xf32> to vector<16x128xbf16>
    %c0_14 = arith.constant 0 : index
    %c0_15 = arith.constant 0 : index
    %14 = vector.load %arg3[%c0_14, %c0_15] : memref<128x512xbf16, #tpu.memory_space<vmem>>, vector<128x512xbf16>
    %cst_16 = arith.constant dense<0.000000e+00> : vector<16x512xf32>
    %15 = tpu.matmul %13, %14, %cst_16 {dimension_numbers = #tpu.dot_dimension_numbers<[1], [0], [0], [1], [0, 0, 1, 1], [], []>} : vector<16x128xbf16>, vector<128x512xbf16>, vector<16x512xf32> -> vector<16x512xf32>
    %16 = arith.addf %12, %15 : vector<16x512xf32>
    %17 = vector.extract_strided_slice %16 {offsets = [0, 0], sizes = [16, 128], strides = [1, 1]} : vector<16x512xf32> to vector<16x128xf32>
    %cst_17 = arith.constant 5.000000e-01 : f32
    %18 = vector.broadcast %cst_17 : f32 to vector<16x128xf32>
    %19 = arith.mulf %18, %17 : vector<16x128xf32>
    %20 = math.tanh %19 : vector<16x128xf32>
    %cst_18 = arith.constant 1.000000e+00 : f32
    %21 = vector.broadcast %cst_18 : f32 to vector<16x128xf32>
    %22 = arith.addf %20, %21 : vector<16x128xf32>
    %cst_19 = arith.constant 5.000000e-01 : f32
    %23 = vector.broadcast %cst_19 : f32 to vector<16x128xf32>
    %24 = arith.mulf %23, %22 : vector<16x128xf32>
    %25 = vector.extract_strided_slice %16 {offsets = [0, 128], sizes = [16, 128], strides = [1, 1]} : vector<16x512xf32> to vector<16x128xf32>
    %cst_20 = arith.constant 5.000000e-01 : f32
    %26 = vector.broadcast %cst_20 : f32 to vector<16x128xf32>
    %27 = arith.mulf %26, %25 : vector<16x128xf32>
    %28 = math.tanh %27 : vector<16x128xf32>
    %cst_21 = arith.constant 1.000000e+00 : f32
    %29 = vector.broadcast %cst_21 : f32 to vector<16x128xf32>
    %30 = arith.addf %28, %29 : vector<16x128xf32>
    %cst_22 = arith.constant 5.000000e-01 : f32
    %31 = vector.broadcast %cst_22 : f32 to vector<16x128xf32>
    %32 = arith.mulf %31, %30 : vector<16x128xf32>
    %33 = vector.extract_strided_slice %16 {offsets = [0, 256], sizes = [16, 128], strides = [1, 1]} : vector<16x512xf32> to vector<16x128xf32>
    %34 = math.tanh %33 : vector<16x128xf32>
    %35 = vector.extract_strided_slice %16 {offsets = [0, 384], sizes = [16, 128], strides = [1, 1]} : vector<16x512xf32> to vector<16x128xf32>
    %cst_23 = arith.constant 5.000000e-01 : f32
    %36 = vector.broadcast %cst_23 : f32 to vector<16x128xf32>
    %37 = arith.mulf %36, %35 : vector<16x128xf32>
    %38 = math.tanh %37 : vector<16x128xf32>
    %cst_24 = arith.constant 1.000000e+00 : f32
    %39 = vector.broadcast %cst_24 : f32 to vector<16x128xf32>
    %40 = arith.addf %38, %39 : vector<16x128xf32>
    %cst_25 = arith.constant 5.000000e-01 : f32
    %41 = vector.broadcast %cst_25 : f32 to vector<16x128xf32>
    %42 = arith.mulf %41, %40 : vector<16x128xf32>
    %43 = arith.mulf %32, %11 : vector<16x128xf32>
    %44 = arith.mulf %24, %34 : vector<16x128xf32>
    %45 = arith.addf %43, %44 : vector<16x128xf32>
    %46 = math.tanh %45 : vector<16x128xf32>
    %47 = arith.mulf %42, %46 : vector<16x128xf32>
    %c8_i32 = arith.constant 8 : i32
    %48 = arith.muli %arg0, %c8_i32 : i32
    %c0_i32_26 = arith.constant 0 : i32
    %49 = arith.addi %48, %c0_i32_26 : i32
    %c12_i32 = arith.constant 12 : i32
    %50 = arith.cmpi slt, %49, %c12_i32 : i32
    %51 = arith.select %50, %45, %11 : vector<16x128xf32>
    %52 = arith.select %50, %47, %10 : vector<16x128xf32>
    %53 = arith.truncf %52 : vector<16x128xf32> to vector<16x128xbf16>
    %c0_27 = arith.constant 0 : index
    %c0_28 = arith.constant 0 : index
    %54 = vector.load %arg7[%c0_27, %c0_28] : memref<128x128xbf16, #tpu.memory_space<vmem>>, vector<16x128xbf16>
    tpu.vector_store %arg7[%c0_27, %c0_28], %53 {strides = array<i32>} : memref<128x128xbf16, #tpu.memory_space<vmem>>, vector<16x128xbf16>,
    %c16 = arith.constant 16 : index
    %c0_29 = arith.constant 0 : index
    %55 = vector.load %arg12[%c16, %c0_29] : memref<128x512xf32, #tpu.memory_space<vmem>>, vector<16x512xf32>
    %56 = arith.truncf %52 : vector<16x128xf32> to vector<16x128xbf16>
    %c0_30 = arith.constant 0 : index
    %c0_31 = arith.constant 0 : index
    %57 = vector.load %arg3[%c0_30, %c0_31] : memref<128x512xbf16, #tpu.memory_space<vmem>>, vector<128x512xbf16>
    %cst_32 = arith.constant dense<0.000000e+00> : vector<16x512xf32>
    %58 = tpu.matmul %56, %57, %cst_32 {dimension_numbers = #tpu.dot_dimension_numbers<[1], [0], [0], [1], [0, 0, 1, 1], [], []>} : vector<16x128xbf16>, vector<128x512xbf16>, vector<16x512xf32> -> vector<16x512xf32>
    %59 = arith.addf %55, %58 : vector<16x512xf32>
    %60 = vector.extract_strided_slice %59 {offsets = [0, 0], sizes = [16, 128], strides = [1, 1]} : vector<16x512xf32> to vector<16x128xf32>
    %cst_33 = arith.constant 5.000000e-01 : f32
    %61 = vector.broadcast %cst_33 : f32 to vector<16x128xf32>
    %62 = arith.mulf %61, %60 : vector<16x128xf32>
    %63 = math.tanh %62 : vector<16x128xf32>
    %cst_34 = arith.constant 1.000000e+00 : f32
    %64 = vector.broadcast %cst_34 : f32 to vector<16x128xf32>
    %65 = arith.addf %63, %64 : vector<16x128xf32>
    %cst_35 = arith.constant 5.000000e-01 : f32
    %66 = vector.broadcast %cst_35 : f32 to vector<16x128xf32>
    %67 = arith.mulf %66, %65 : vector<16x128xf32>
    %68 = vector.extract_strided_slice %59 {offsets = [0, 128], sizes = [16, 128], strides = [1, 1]} : vector<16x512xf32> to vector<16x128xf32>
    %cst_36 = arith.constant 5.000000e-01 : f32
    %69 = vector.broadcast %cst_36 : f32 to vector<16x128xf32>
    %70 = arith.mulf %69, %68 : vector<16x128xf32>
    %71 = math.tanh %70 : vector<16x128xf32>
    %cst_37 = arith.constant 1.000000e+00 : f32
    %72 = vector.broadcast %cst_37 : f32 to vector<16x128xf32>
    %73 = arith.addf %71, %72 : vector<16x128xf32>
    %cst_38 = arith.constant 5.000000e-01 : f32
    %74 = vector.broadcast %cst_38 : f32 to vector<16x128xf32>
    %75 = arith.mulf %74, %73 : vector<16x128xf32>
    %76 = vector.extract_strided_slice %59 {offsets = [0, 256], sizes = [16, 128], strides = [1, 1]} : vector<16x512xf32> to vector<16x128xf32>
    %77 = math.tanh %76 : vector<16x128xf32>
    %78 = vector.extract_strided_slice %59 {offsets = [0, 384], sizes = [16, 128], strides = [1, 1]} : vector<16x512xf32> to vector<16x128xf32>
    %cst_39 = arith.constant 5.000000e-01 : f32
    %79 = vector.broadcast %cst_39 : f32 to vector<16x128xf32>
    %80 = arith.mulf %79, %78 : vector<16x128xf32>
    %81 = math.tanh %80 : vector<16x128xf32>
    %cst_40 = arith.constant 1.000000e+00 : f32
    %82 = vector.broadcast %cst_40 : f32 to vector<16x128xf32>
    %83 = arith.addf %81, %82 : vector<16x128xf32>
    %cst_41 = arith.constant 5.000000e-01 : f32
    %84 = vector.broadcast %cst_41 : f32 to vector<16x128xf32>
    %85 = arith.mulf %84, %83 : vector<16x128xf32>
    %86 = arith.mulf %75, %51 : vector<16x128xf32>
    %87 = arith.mulf %67, %77 : vector<16x128xf32>
    %88 = arith.addf %86, %87 : vector<16x128xf32>
    %89 = math.tanh %88 : vector<16x128xf32>
    %90 = arith.mulf %85, %89 : vector<16x128xf32>
    %c8_i32_42 = arith.constant 8 : i32
    %91 = arith.muli %arg0, %c8_i32_42 : i32
    %c1_i32 = arith.constant 1 : i32
    %92 = arith.addi %91, %c1_i32 : i32
    %c12_i32_43 = arith.constant 12 : i32
    %93 = arith.cmpi slt, %92, %c12_i32_43 : i32
    %94 = arith.select %93, %88, %51 : vector<16x128xf32>
    %95 = arith.select %93, %90, %52 : vector<16x128xf32>
    %96 = arith.truncf %95 : vector<16x128xf32> to vector<16x128xbf16>
    %c16_44 = arith.constant 16 : index
    %c0_45 = arith.constant 0 : index
    %97 = vector.load %arg7[%c16_44, %c0_45] : memref<128x128xbf16, #tpu.memory_space<vmem>>, vector<16x128xbf16>
    tpu.vector_store %arg7[%c16_44, %c0_45], %96 {strides = array<i32>} : memref<128x128xbf16, #tpu.memory_space<vmem>>, vector<16x128xbf16>,
    %c32 = arith.constant 32 : index
    %c0_46 = arith.constant 0 : index
    %98 = vector.load %arg12[%c32, %c0_46] : memref<128x512xf32, #tpu.memory_space<vmem>>, vector<16x512xf32>
    %99 = arith.truncf %95 : vector<16x128xf32> to vector<16x128xbf16>
    %c0_47 = arith.constant 0 : index
    %c0_48 = arith.constant 0 : index
    %100 = vector.load %arg3[%c0_47, %c0_48] : memref<128x512xbf16, #tpu.memory_space<vmem>>, vector<128x512xbf16>
    %cst_49 = arith.constant dense<0.000000e+00> : vector<16x512xf32>
    %101 = tpu.matmul %99, %100, %cst_49 {dimension_numbers = #tpu.dot_dimension_numbers<[1], [0], [0], [1], [0, 0, 1, 1], [], []>} : vector<16x128xbf16>, vector<128x512xbf16>, vector<16x512xf32> -> vector<16x512xf32>
    %102 = arith.addf %98, %101 : vector<16x512xf32>
    %103 = vector.extract_strided_slice %102 {offsets = [0, 0], sizes = [16, 128], strides = [1, 1]} : vector<16x512xf32> to vector<16x128xf32>
    %cst_50 = arith.constant 5.000000e-01 : f32
    %104 = vector.broadcast %cst_50 : f32 to vector<16x128xf32>
    %105 = arith.mulf %104, %103 : vector<16x128xf32>
    %106 = math.tanh %105 : vector<16x128xf32>
    %cst_51 = arith.constant 1.000000e+00 : f32
    %107 = vector.broadcast %cst_51 : f32 to vector<16x128xf32>
    %108 = arith.addf %106, %107 : vector<16x128xf32>
    %cst_52 = arith.constant 5.000000e-01 : f32
    %109 = vector.broadcast %cst_52 : f32 to vector<16x128xf32>
    %110 = arith.mulf %109, %108 : vector<16x128xf32>
    %111 = vector.extract_strided_slice %102 {offsets = [0, 128], sizes = [16, 128], strides = [1, 1]} : vector<16x512xf32> to vector<16x128xf32>
    %cst_53 = arith.constant 5.000000e-01 : f32
    %112 = vector.broadcast %cst_53 : f32 to vector<16x128xf32>
    %113 = arith.mulf %112, %111 : vector<16x128xf32>
    %114 = math.tanh %113 : vector<16x128xf32>
    %cst_54 = arith.constant 1.000000e+00 : f32
    %115 = vector.broadcast %cst_54 : f32 to vector<16x128xf32>
    %116 = arith.addf %114, %115 : vector<16x128xf32>
    %cst_55 = arith.constant 5.000000e-01 : f32
    %117 = vector.broadcast %cst_55 : f32 to vector<16x128xf32>
    %118 = arith.mulf %117, %116 : vector<16x128xf32>
    %119 = vector.extract_strided_slice %102 {offsets = [0, 256], sizes = [16, 128], strides = [1, 1]} : vector<16x512xf32> to vector<16x128xf32>
    %120 = math.tanh %119 : vector<16x128xf32>
    %121 = vector.extract_strided_slice %102 {offsets = [0, 384], sizes = [16, 128], strides = [1, 1]} : vector<16x512xf32> to vector<16x128xf32>
    %cst_56 = arith.constant 5.000000e-01 : f32
    %122 = vector.broadcast %cst_56 : f32 to vector<16x128xf32>
    %123 = arith.mulf %122, %121 : vector<16x128xf32>
    %124 = math.tanh %123 : vector<16x128xf32>
    %cst_57 = arith.constant 1.000000e+00 : f32
    %125 = vector.broadcast %cst_57 : f32 to vector<16x128xf32>
    %126 = arith.addf %124, %125 : vector<16x128xf32>
    %cst_58 = arith.constant 5.000000e-01 : f32
    %127 = vector.broadcast %cst_58 : f32 to vector<16x128xf32>
    %128 = arith.mulf %127, %126 : vector<16x128xf32>
    %129 = arith.mulf %118, %94 : vector<16x128xf32>
    %130 = arith.mulf %110, %120 : vector<16x128xf32>
    %131 = arith.addf %129, %130 : vector<16x128xf32>
    %132 = math.tanh %131 : vector<16x128xf32>
    %133 = arith.mulf %128, %132 : vector<16x128xf32>
    %c8_i32_59 = arith.constant 8 : i32
    %134 = arith.muli %arg0, %c8_i32_59 : i32
    %c2_i32 = arith.constant 2 : i32
    %135 = arith.addi %134, %c2_i32 : i32
    %c12_i32_60 = arith.constant 12 : i32
    %136 = arith.cmpi slt, %135, %c12_i32_60 : i32
    %137 = arith.select %136, %131, %94 : vector<16x128xf32>
    %138 = arith.select %136, %133, %95 : vector<16x128xf32>
    %139 = arith.truncf %138 : vector<16x128xf32> to vector<16x128xbf16>
    %c32_61 = arith.constant 32 : index
    %c0_62 = arith.constant 0 : index
    %140 = vector.load %arg7[%c32_61, %c0_62] : memref<128x128xbf16, #tpu.memory_space<vmem>>, vector<16x128xbf16>
    tpu.vector_store %arg7[%c32_61, %c0_62], %139 {strides = array<i32>} : memref<128x128xbf16, #tpu.memory_space<vmem>>, vector<16x128xbf16>,
    %c48 = arith.constant 48 : index
    %c0_63 = arith.constant 0 : index
    %141 = vector.load %arg12[%c48, %c0_63] : memref<128x512xf32, #tpu.memory_space<vmem>>, vector<16x512xf32>
    %142 = arith.truncf %138 : vector<16x128xf32> to vector<16x128xbf16>
    %c0_64 = arith.constant 0 : index
    %c0_65 = arith.constant 0 : index
    %143 = vector.load %arg3[%c0_64, %c0_65] : memref<128x512xbf16, #tpu.memory_space<vmem>>, vector<128x512xbf16>
    %cst_66 = arith.constant dense<0.000000e+00> : vector<16x512xf32>
    %144 = tpu.matmul %142, %143, %cst_66 {dimension_numbers = #tpu.dot_dimension_numbers<[1], [0], [0], [1], [0, 0, 1, 1], [], []>} : vector<16x128xbf16>, vector<128x512xbf16>, vector<16x512xf32> -> vector<16x512xf32>
    %145 = arith.addf %141, %144 : vector<16x512xf32>
    %146 = vector.extract_strided_slice %145 {offsets = [0, 0], sizes = [16, 128], strides = [1, 1]} : vector<16x512xf32> to vector<16x128xf32>
    %cst_67 = arith.constant 5.000000e-01 : f32
    %147 = vector.broadcast %cst_67 : f32 to vector<16x128xf32>
    %148 = arith.mulf %147, %146 : vector<16x128xf32>
    %149 = math.tanh %148 : vector<16x128xf32>
    %cst_68 = arith.constant 1.000000e+00 : f32
    %150 = vector.broadcast %cst_68 : f32 to vector<16x128xf32>
    %151 = arith.addf %149, %150 : vector<16x128xf32>
    %cst_69 = arith.constant 5.000000e-01 : f32
    %152 = vector.broadcast %cst_69 : f32 to vector<16x128xf32>
    %153 = arith.mulf %152, %151 : vector<16x128xf32>
    %154 = vector.extract_strided_slice %145 {offsets = [0, 128], sizes = [16, 128], strides = [1, 1]} : vector<16x512xf32> to vector<16x128xf32>
    %cst_70 = arith.constant 5.000000e-01 : f32
    %155 = vector.broadcast %cst_70 : f32 to vector<16x128xf32>
    %156 = arith.mulf %155, %154 : vector<16x128xf32>
    %157 = math.tanh %156 : vector<16x128xf32>
    %cst_71 = arith.constant 1.000000e+00 : f32
    %158 = vector.broadcast %cst_71 : f32 to vector<16x128xf32>
    %159 = arith.addf %157, %158 : vector<16x128xf32>
    %cst_72 = arith.constant 5.000000e-01 : f32
    %160 = vector.broadcast %cst_72 : f32 to vector<16x128xf32>
    %161 = arith.mulf %160, %159 : vector<16x128xf32>
    %162 = vector.extract_strided_slice %145 {offsets = [0, 256], sizes = [16, 128], strides = [1, 1]} : vector<16x512xf32> to vector<16x128xf32>
    %163 = math.tanh %162 : vector<16x128xf32>
    %164 = vector.extract_strided_slice %145 {offsets = [0, 384], sizes = [16, 128], strides = [1, 1]} : vector<16x512xf32> to vector<16x128xf32>
    %cst_73 = arith.constant 5.000000e-01 : f32
    %165 = vector.broadcast %cst_73 : f32 to vector<16x128xf32>
    %166 = arith.mulf %165, %164 : vector<16x128xf32>
    %167 = math.tanh %166 : vector<16x128xf32>
    %cst_74 = arith.constant 1.000000e+00 : f32
    %168 = vector.broadcast %cst_74 : f32 to vector<16x128xf32>
    %169 = arith.addf %167, %168 : vector<16x128xf32>
    %cst_75 = arith.constant 5.000000e-01 : f32
    %170 = vector.broadcast %cst_75 : f32 to vector<16x128xf32>
    %171 = arith.mulf %170, %169 : vector<16x128xf32>
    %172 = arith.mulf %161, %137 : vector<16x128xf32>
    %173 = arith.mulf %153, %163 : vector<16x128xf32>
    %174 = arith.addf %172, %173 : vector<16x128xf32>
    %175 = math.tanh %174 : vector<16x128xf32>
    %176 = arith.mulf %171, %175 : vector<16x128xf32>
    %c8_i32_76 = arith.constant 8 : i32
    %177 = arith.muli %arg0, %c8_i32_76 : i32
    %c3_i32 = arith.constant 3 : i32
    %178 = arith.addi %177, %c3_i32 : i32
    %c12_i32_77 = arith.constant 12 : i32
    %179 = arith.cmpi slt, %178, %c12_i32_77 : i32
    %180 = arith.select %179, %174, %137 : vector<16x128xf32>
    %181 = arith.select %179, %176, %138 : vector<16x128xf32>
    %182 = arith.truncf %181 : vector<16x128xf32> to vector<16x128xbf16>
    %c48_78 = arith.constant 48 : index
    %c0_79 = arith.constant 0 : index
    %183 = vector.load %arg7[%c48_78, %c0_79] : memref<128x128xbf16, #tpu.memory_space<vmem>>, vector<16x128xbf16>
    tpu.vector_store %arg7[%c48_78, %c0_79], %182 {strides = array<i32>} : memref<128x128xbf16, #tpu.memory_space<vmem>>, vector<16x128xbf16>,
    %c64 = arith.constant 64 : index
    %c0_80 = arith.constant 0 : index
    %184 = vector.load %arg12[%c64, %c0_80] : memref<128x512xf32, #tpu.memory_space<vmem>>, vector<16x512xf32>
    %185 = arith.truncf %181 : vector<16x128xf32> to vector<16x128xbf16>
    %c0_81 = arith.constant 0 : index
    %c0_82 = arith.constant 0 : index
    %186 = vector.load %arg3[%c0_81, %c0_82] : memref<128x512xbf16, #tpu.memory_space<vmem>>, vector<128x512xbf16>
    %cst_83 = arith.constant dense<0.000000e+00> : vector<16x512xf32>
    %187 = tpu.matmul %185, %186, %cst_83 {dimension_numbers = #tpu.dot_dimension_numbers<[1], [0], [0], [1], [0, 0, 1, 1], [], []>} : vector<16x128xbf16>, vector<128x512xbf16>, vector<16x512xf32> -> vector<16x512xf32>
    %188 = arith.addf %184, %187 : vector<16x512xf32>
    %189 = vector.extract_strided_slice %188 {offsets = [0, 0], sizes = [16, 128], strides = [1, 1]} : vector<16x512xf32> to vector<16x128xf32>
    %cst_84 = arith.constant 5.000000e-01 : f32
    %190 = vector.broadcast %cst_84 : f32 to vector<16x128xf32>
    %191 = arith.mulf %190, %189 : vector<16x128xf32>
    %192 = math.tanh %191 : vector<16x128xf32>
    %cst_85 = arith.constant 1.000000e+00 : f32
    %193 = vector.broadcast %cst_85 : f32 to vector<16x128xf32>
    %194 = arith.addf %192, %193 : vector<16x128xf32>
    %cst_86 = arith.constant 5.000000e-01 : f32
    %195 = vector.broadcast %cst_86 : f32 to vector<16x128xf32>
    %196 = arith.mulf %195, %194 : vector<16x128xf32>
    %197 = vector.extract_strided_slice %188 {offsets = [0, 128], sizes = [16, 128], strides = [1, 1]} : vector<16x512xf32> to vector<16x128xf32>
    %cst_87 = arith.constant 5.000000e-01 : f32
    %198 = vector.broadcast %cst_87 : f32 to vector<16x128xf32>
    %199 = arith.mulf %198, %197 : vector<16x128xf32>
    %200 = math.tanh %199 : vector<16x128xf32>
    %cst_88 = arith.constant 1.000000e+00 : f32
    %201 = vector.broadcast %cst_88 : f32 to vector<16x128xf32>
    %202 = arith.addf %200, %201 : vector<16x128xf32>
    %cst_89 = arith.constant 5.000000e-01 : f32
    %203 = vector.broadcast %cst_89 : f32 to vector<16x128xf32>
    %204 = arith.mulf %203, %202 : vector<16x128xf32>
    %205 = vector.extract_strided_slice %188 {offsets = [0, 256], sizes = [16, 128], strides = [1, 1]} : vector<16x512xf32> to vector<16x128xf32>
    %206 = math.tanh %205 : vector<16x128xf32>
    %207 = vector.extract_strided_slice %188 {offsets = [0, 384], sizes = [16, 128], strides = [1, 1]} : vector<16x512xf32> to vector<16x128xf32>
    %cst_90 = arith.constant 5.000000e-01 : f32
    %208 = vector.broadcast %cst_90 : f32 to vector<16x128xf32>
    %209 = arith.mulf %208, %207 : vector<16x128xf32>
    %210 = math.tanh %209 : vector<16x128xf32>
    %cst_91 = arith.constant 1.000000e+00 : f32
    %211 = vector.broadcast %cst_91 : f32 to vector<16x128xf32>
    %212 = arith.addf %210, %211 : vector<16x128xf32>
    %cst_92 = arith.constant 5.000000e-01 : f32
    %213 = vector.broadcast %cst_92 : f32 to vector<16x128xf32>
    %214 = arith.mulf %213, %212 : vector<16x128xf32>
    %215 = arith.mulf %204, %180 : vector<16x128xf32>
    %216 = arith.mulf %196, %206 : vector<16x128xf32>
    %217 = arith.addf %215, %216 : vector<16x128xf32>
    %218 = math.tanh %217 : vector<16x128xf32>
    %219 = arith.mulf %214, %218 : vector<16x128xf32>
    %c8_i32_93 = arith.constant 8 : i32
    %220 = arith.muli %arg0, %c8_i32_93 : i32
    %c4_i32 = arith.constant 4 : i32
    %221 = arith.addi %220, %c4_i32 : i32
    %c12_i32_94 = arith.constant 12 : i32
    %222 = arith.cmpi slt, %221, %c12_i32_94 : i32
    %223 = arith.select %222, %217, %180 : vector<16x128xf32>
    %224 = arith.select %222, %219, %181 : vector<16x128xf32>
    %225 = arith.truncf %224 : vector<16x128xf32> to vector<16x128xbf16>
    %c64_95 = arith.constant 64 : index
    %c0_96 = arith.constant 0 : index
    %226 = vector.load %arg7[%c64_95, %c0_96] : memref<128x128xbf16, #tpu.memory_space<vmem>>, vector<16x128xbf16>
    tpu.vector_store %arg7[%c64_95, %c0_96], %225 {strides = array<i32>} : memref<128x128xbf16, #tpu.memory_space<vmem>>, vector<16x128xbf16>,
    %c80 = arith.constant 80 : index
    %c0_97 = arith.constant 0 : index
    %227 = vector.load %arg12[%c80, %c0_97] : memref<128x512xf32, #tpu.memory_space<vmem>>, vector<16x512xf32>
    %228 = arith.truncf %224 : vector<16x128xf32> to vector<16x128xbf16>
    %c0_98 = arith.constant 0 : index
    %c0_99 = arith.constant 0 : index
    %229 = vector.load %arg3[%c0_98, %c0_99] : memref<128x512xbf16, #tpu.memory_space<vmem>>, vector<128x512xbf16>
    %cst_100 = arith.constant dense<0.000000e+00> : vector<16x512xf32>
    %230 = tpu.matmul %228, %229, %cst_100 {dimension_numbers = #tpu.dot_dimension_numbers<[1], [0], [0], [1], [0, 0, 1, 1], [], []>} : vector<16x128xbf16>, vector<128x512xbf16>, vector<16x512xf32> -> vector<16x512xf32>
    %231 = arith.addf %227, %230 : vector<16x512xf32>
    %232 = vector.extract_strided_slice %231 {offsets = [0, 0], sizes = [16, 128], strides = [1, 1]} : vector<16x512xf32> to vector<16x128xf32>
    %cst_101 = arith.constant 5.000000e-01 : f32
    %233 = vector.broadcast %cst_101 : f32 to vector<16x128xf32>
    %234 = arith.mulf %233, %232 : vector<16x128xf32>
    %235 = math.tanh %234 : vector<16x128xf32>
    %cst_102 = arith.constant 1.000000e+00 : f32
    %236 = vector.broadcast %cst_102 : f32 to vector<16x128xf32>
    %237 = arith.addf %235, %236 : vector<16x128xf32>
    %cst_103 = arith.constant 5.000000e-01 : f32
    %238 = vector.broadcast %cst_103 : f32 to vector<16x128xf32>
    %239 = arith.mulf %238, %237 : vector<16x128xf32>
    %240 = vector.extract_strided_slice %231 {offsets = [0, 128], sizes = [16, 128], strides = [1, 1]} : vector<16x512xf32> to vector<16x128xf32>
    %cst_104 = arith.constant 5.000000e-01 : f32
    %241 = vector.broadcast %cst_104 : f32 to vector<16x128xf32>
    %242 = arith.mulf %241, %240 : vector<16x128xf32>
    %243 = math.tanh %242 : vector<16x128xf32>
    %cst_105 = arith.constant 1.000000e+00 : f32
    %244 = vector.broadcast %cst_105 : f32 to vector<16x128xf32>
    %245 = arith.addf %243, %244 : vector<16x128xf32>
    %cst_106 = arith.constant 5.000000e-01 : f32
    %246 = vector.broadcast %cst_106 : f32 to vector<16x128xf32>
    %247 = arith.mulf %246, %245 : vector<16x128xf32>
    %248 = vector.extract_strided_slice %231 {offsets = [0, 256], sizes = [16, 128], strides = [1, 1]} : vector<16x512xf32> to vector<16x128xf32>
    %249 = math.tanh %248 : vector<16x128xf32>
    %250 = vector.extract_strided_slice %231 {offsets = [0, 384], sizes = [16, 128], strides = [1, 1]} : vector<16x512xf32> to vector<16x128xf32>
    %cst_107 = arith.constant 5.000000e-01 : f32
    %251 = vector.broadcast %cst_107 : f32 to vector<16x128xf32>
    %252 = arith.mulf %251, %250 : vector<16x128xf32>
    %253 = math.tanh %252 : vector<16x128xf32>
    %cst_108 = arith.constant 1.000000e+00 : f32
    %254 = vector.broadcast %cst_108 : f32 to vector<16x128xf32>
    %255 = arith.addf %253, %254 : vector<16x128xf32>
    %cst_109 = arith.constant 5.000000e-01 : f32
    %256 = vector.broadcast %cst_109 : f32 to vector<16x128xf32>
    %257 = arith.mulf %256, %255 : vector<16x128xf32>
    %258 = arith.mulf %247, %223 : vector<16x128xf32>
    %259 = arith.mulf %239, %249 : vector<16x128xf32>
    %260 = arith.addf %258, %259 : vector<16x128xf32>
    %261 = math.tanh %260 : vector<16x128xf32>
    %262 = arith.mulf %257, %261 : vector<16x128xf32>
    %c8_i32_110 = arith.constant 8 : i32
    %263 = arith.muli %arg0, %c8_i32_110 : i32
    %c5_i32 = arith.constant 5 : i32
    %264 = arith.addi %263, %c5_i32 : i32
    %c12_i32_111 = arith.constant 12 : i32
    %265 = arith.cmpi slt, %264, %c12_i32_111 : i32
    %266 = arith.select %265, %260, %223 : vector<16x128xf32>
    %267 = arith.select %265, %262, %224 : vector<16x128xf32>
    %268 = arith.truncf %267 : vector<16x128xf32> to vector<16x128xbf16>
    %c80_112 = arith.constant 80 : index
    %c0_113 = arith.constant 0 : index
    %269 = vector.load %arg7[%c80_112, %c0_113] : memref<128x128xbf16, #tpu.memory_space<vmem>>, vector<16x128xbf16>
    tpu.vector_store %arg7[%c80_112, %c0_113], %268 {strides = array<i32>} : memref<128x128xbf16, #tpu.memory_space<vmem>>, vector<16x128xbf16>,
    %c96 = arith.constant 96 : index
    %c0_114 = arith.constant 0 : index
    %270 = vector.load %arg12[%c96, %c0_114] : memref<128x512xf32, #tpu.memory_space<vmem>>, vector<16x512xf32>
    %271 = arith.truncf %267 : vector<16x128xf32> to vector<16x128xbf16>
    %c0_115 = arith.constant 0 : index
    %c0_116 = arith.constant 0 : index
    %272 = vector.load %arg3[%c0_115, %c0_116] : memref<128x512xbf16, #tpu.memory_space<vmem>>, vector<128x512xbf16>
    %cst_117 = arith.constant dense<0.000000e+00> : vector<16x512xf32>
    %273 = tpu.matmul %271, %272, %cst_117 {dimension_numbers = #tpu.dot_dimension_numbers<[1], [0], [0], [1], [0, 0, 1, 1], [], []>} : vector<16x128xbf16>, vector<128x512xbf16>, vector<16x512xf32> -> vector<16x512xf32>
    %274 = arith.addf %270, %273 : vector<16x512xf32>
    %275 = vector.extract_strided_slice %274 {offsets = [0, 0], sizes = [16, 128], strides = [1, 1]} : vector<16x512xf32> to vector<16x128xf32>
    %cst_118 = arith.constant 5.000000e-01 : f32
    %276 = vector.broadcast %cst_118 : f32 to vector<16x128xf32>
    %277 = arith.mulf %276, %275 : vector<16x128xf32>
    %278 = math.tanh %277 : vector<16x128xf32>
    %cst_119 = arith.constant 1.000000e+00 : f32
    %279 = vector.broadcast %cst_119 : f32 to vector<16x128xf32>
    %280 = arith.addf %278, %279 : vector<16x128xf32>
    %cst_120 = arith.constant 5.000000e-01 : f32
    %281 = vector.broadcast %cst_120 : f32 to vector<16x128xf32>
    %282 = arith.mulf %281, %280 : vector<16x128xf32>
    %283 = vector.extract_strided_slice %274 {offsets = [0, 128], sizes = [16, 128], strides = [1, 1]} : vector<16x512xf32> to vector<16x128xf32>
    %cst_121 = arith.constant 5.000000e-01 : f32
    %284 = vector.broadcast %cst_121 : f32 to vector<16x128xf32>
    %285 = arith.mulf %284, %283 : vector<16x128xf32>
    %286 = math.tanh %285 : vector<16x128xf32>
    %cst_122 = arith.constant 1.000000e+00 : f32
    %287 = vector.broadcast %cst_122 : f32 to vector<16x128xf32>
    %288 = arith.addf %286, %287 : vector<16x128xf32>
    %cst_123 = arith.constant 5.000000e-01 : f32
    %289 = vector.broadcast %cst_123 : f32 to vector<16x128xf32>
    %290 = arith.mulf %289, %288 : vector<16x128xf32>
    %291 = vector.extract_strided_slice %274 {offsets = [0, 256], sizes = [16, 128], strides = [1, 1]} : vector<16x512xf32> to vector<16x128xf32>
    %292 = math.tanh %291 : vector<16x128xf32>
    %293 = vector.extract_strided_slice %274 {offsets = [0, 384], sizes = [16, 128], strides = [1, 1]} : vector<16x512xf32> to vector<16x128xf32>
    %cst_124 = arith.constant 5.000000e-01 : f32
    %294 = vector.broadcast %cst_124 : f32 to vector<16x128xf32>
    %295 = arith.mulf %294, %293 : vector<16x128xf32>
    %296 = math.tanh %295 : vector<16x128xf32>
    %cst_125 = arith.constant 1.000000e+00 : f32
    %297 = vector.broadcast %cst_125 : f32 to vector<16x128xf32>
    %298 = arith.addf %296, %297 : vector<16x128xf32>
    %cst_126 = arith.constant 5.000000e-01 : f32
    %299 = vector.broadcast %cst_126 : f32 to vector<16x128xf32>
    %300 = arith.mulf %299, %298 : vector<16x128xf32>
    %301 = arith.mulf %290, %266 : vector<16x128xf32>
    %302 = arith.mulf %282, %292 : vector<16x128xf32>
    %303 = arith.addf %301, %302 : vector<16x128xf32>
    %304 = math.tanh %303 : vector<16x128xf32>
    %305 = arith.mulf %300, %304 : vector<16x128xf32>
    %c8_i32_127 = arith.constant 8 : i32
    %306 = arith.muli %arg0, %c8_i32_127 : i32
    %c6_i32 = arith.constant 6 : i32
    %307 = arith.addi %306, %c6_i32 : i32
    %c12_i32_128 = arith.constant 12 : i32
    %308 = arith.cmpi slt, %307, %c12_i32_128 : i32
    %309 = arith.select %308, %303, %266 : vector<16x128xf32>
    %310 = arith.select %308, %305, %267 : vector<16x128xf32>
    %311 = arith.truncf %310 : vector<16x128xf32> to vector<16x128xbf16>
    %c96_129 = arith.constant 96 : index
    %c0_130 = arith.constant 0 : index
    %312 = vector.load %arg7[%c96_129, %c0_130] : memref<128x128xbf16, #tpu.memory_space<vmem>>, vector<16x128xbf16>
    tpu.vector_store %arg7[%c96_129, %c0_130], %311 {strides = array<i32>} : memref<128x128xbf16, #tpu.memory_space<vmem>>, vector<16x128xbf16>,
    %c112 = arith.constant 112 : index
    %c0_131 = arith.constant 0 : index
    %313 = vector.load %arg12[%c112, %c0_131] : memref<128x512xf32, #tpu.memory_space<vmem>>, vector<16x512xf32>
    %314 = arith.truncf %310 : vector<16x128xf32> to vector<16x128xbf16>
    %c0_132 = arith.constant 0 : index
    %c0_133 = arith.constant 0 : index
    %315 = vector.load %arg3[%c0_132, %c0_133] : memref<128x512xbf16, #tpu.memory_space<vmem>>, vector<128x512xbf16>
    %cst_134 = arith.constant dense<0.000000e+00> : vector<16x512xf32>
    %316 = tpu.matmul %314, %315, %cst_134 {dimension_numbers = #tpu.dot_dimension_numbers<[1], [0], [0], [1], [0, 0, 1, 1], [], []>} : vector<16x128xbf16>, vector<128x512xbf16>, vector<16x512xf32> -> vector<16x512xf32>
    %317 = arith.addf %313, %316 : vector<16x512xf32>
    %318 = vector.extract_strided_slice %317 {offsets = [0, 0], sizes = [16, 128], strides = [1, 1]} : vector<16x512xf32> to vector<16x128xf32>
    %cst_135 = arith.constant 5.000000e-01 : f32
    %319 = vector.broadcast %cst_135 : f32 to vector<16x128xf32>
    %320 = arith.mulf %319, %318 : vector<16x128xf32>
    %321 = math.tanh %320 : vector<16x128xf32>
    %cst_136 = arith.constant 1.000000e+00 : f32
    %322 = vector.broadcast %cst_136 : f32 to vector<16x128xf32>
    %323 = arith.addf %321, %322 : vector<16x128xf32>
    %cst_137 = arith.constant 5.000000e-01 : f32
    %324 = vector.broadcast %cst_137 : f32 to vector<16x128xf32>
    %325 = arith.mulf %324, %323 : vector<16x128xf32>
    %326 = vector.extract_strided_slice %317 {offsets = [0, 128], sizes = [16, 128], strides = [1, 1]} : vector<16x512xf32> to vector<16x128xf32>
    %cst_138 = arith.constant 5.000000e-01 : f32
    %327 = vector.broadcast %cst_138 : f32 to vector<16x128xf32>
    %328 = arith.mulf %327, %326 : vector<16x128xf32>
    %329 = math.tanh %328 : vector<16x128xf32>
    %cst_139 = arith.constant 1.000000e+00 : f32
    %330 = vector.broadcast %cst_139 : f32 to vector<16x128xf32>
    %331 = arith.addf %329, %330 : vector<16x128xf32>
    %cst_140 = arith.constant 5.000000e-01 : f32
    %332 = vector.broadcast %cst_140 : f32 to vector<16x128xf32>
    %333 = arith.mulf %332, %331 : vector<16x128xf32>
    %334 = vector.extract_strided_slice %317 {offsets = [0, 256], sizes = [16, 128], strides = [1, 1]} : vector<16x512xf32> to vector<16x128xf32>
    %335 = math.tanh %334 : vector<16x128xf32>
    %336 = vector.extract_strided_slice %317 {offsets = [0, 384], sizes = [16, 128], strides = [1, 1]} : vector<16x512xf32> to vector<16x128xf32>
    %cst_141 = arith.constant 5.000000e-01 : f32
    %337 = vector.broadcast %cst_141 : f32 to vector<16x128xf32>
    %338 = arith.mulf %337, %336 : vector<16x128xf32>
    %339 = math.tanh %338 : vector<16x128xf32>
    %cst_142 = arith.constant 1.000000e+00 : f32
    %340 = vector.broadcast %cst_142 : f32 to vector<16x128xf32>
    %341 = arith.addf %339, %340 : vector<16x128xf32>
    %cst_143 = arith.constant 5.000000e-01 : f32
    %342 = vector.broadcast %cst_143 : f32 to vector<16x128xf32>
    %343 = arith.mulf %342, %341 : vector<16x128xf32>
    %344 = arith.mulf %333, %309 : vector<16x128xf32>
    %345 = arith.mulf %325, %335 : vector<16x128xf32>
    %346 = arith.addf %344, %345 : vector<16x128xf32>
    %347 = math.tanh %346 : vector<16x128xf32>
    %348 = arith.mulf %343, %347 : vector<16x128xf32>
    %c8_i32_144 = arith.constant 8 : i32
    %349 = arith.muli %arg0, %c8_i32_144 : i32
    %c7_i32 = arith.constant 7 : i32
    %350 = arith.addi %349, %c7_i32 : i32
    %c12_i32_145 = arith.constant 12 : i32
    %351 = arith.cmpi slt, %350, %c12_i32_145 : i32
    %352 = arith.select %351, %346, %309 : vector<16x128xf32>
    %353 = arith.select %351, %348, %310 : vector<16x128xf32>
    %354 = arith.truncf %353 : vector<16x128xf32> to vector<16x128xbf16>
    %c112_146 = arith.constant 112 : index
    %c0_147 = arith.constant 0 : index
    %355 = vector.load %arg7[%c112_146, %c0_147] : memref<128x128xbf16, #tpu.memory_space<vmem>>, vector<16x128xbf16>
    tpu.vector_store %arg7[%c112_146, %c0_147], %354 {strides = array<i32>} : memref<128x128xbf16, #tpu.memory_space<vmem>>, vector<16x128xbf16>,
    %c0_148 = arith.constant 0 : index
    %c0_149 = arith.constant 0 : index
    %356 = vector.load %arg10[%c0_148, %c0_149] : memref<16x128xf32, #tpu.memory_space<vmem>>, vector<16x128xf32>
    tpu.vector_store %arg10[%c0_148, %c0_149], %353 {strides = array<i32>} : memref<16x128xf32, #tpu.memory_space<vmem>>, vector<16x128xf32>,
    %c0_150 = arith.constant 0 : index
    %c0_151 = arith.constant 0 : index
    %357 = vector.load %arg11[%c0_150, %c0_151] : memref<16x128xf32, #tpu.memory_space<vmem>>, vector<16x128xf32>
    tpu.vector_store %arg11[%c0_150, %c0_151], %352 {strides = array<i32>} : memref<16x128xf32, #tpu.memory_space<vmem>>, vector<16x128xf32>,
    %c1_i32_152 = arith.constant 1 : i32
    %358 = arith.cmpi eq, %arg0, %c1_i32_152 : i32
    %359 = arith.extui %358 : i1 to i32
    %c0_i32_153 = arith.constant 0 : i32
    %360 = arith.cmpi ne, %359, %c0_i32_153 : i32
    scf.if %360 {
      %c0_154 = arith.constant 0 : index
      %c0_155 = arith.constant 0 : index
      %361 = vector.load %arg8[%c0_154, %c0_155] : memref<16x128xf32, #tpu.memory_space<vmem>>, vector<16x128xf32>
      tpu.vector_store %arg8[%c0_154, %c0_155], %353 {strides = array<i32>} : memref<16x128xf32, #tpu.memory_space<vmem>>, vector<16x128xf32>,
      %c0_156 = arith.constant 0 : index
      %c0_157 = arith.constant 0 : index
      %362 = vector.load %arg9[%c0_156, %c0_157] : memref<16x128xf32, #tpu.memory_space<vmem>>, vector<16x128xf32>
      tpu.vector_store %arg9[%c0_156, %c0_157], %352 {strides = array<i32>} : memref<16x128xf32, #tpu.memory_space<vmem>>, vector<16x128xf32>,
    } else {
    }
    return
  }
  func.func @transform_0(%arg0: i32) -> (i32, i32) {
    %c0_i32 = arith.constant 0 : i32
    %c0_i32_0 = arith.constant 0 : i32
    return %arg0, %c0_i32 : i32, i32
  }
  func.func @transform_1(%arg0: i32) -> (i32, i32) {
    %c0_i32 = arith.constant 0 : i32
    %c0_i32_0 = arith.constant 0 : i32
    %c0_i32_1 = arith.constant 0 : i32
    return %c0_i32, %c0_i32_0 : i32, i32
  }
  func.func @transform_2(%arg0: i32) -> (i32, i32) {
    %c0_i32 = arith.constant 0 : i32
    %c0_i32_0 = arith.constant 0 : i32
    %c0_i32_1 = arith.constant 0 : i32
    return %c0_i32, %c0_i32_0 : i32, i32
  }
  func.func @transform_3(%arg0: i32) -> (i32, i32) {
    %c0_i32 = arith.constant 0 : i32
    %c0_i32_0 = arith.constant 0 : i32
    %c0_i32_1 = arith.constant 0 : i32
    return %c0_i32, %c0_i32_0 : i32, i32
  }
  func.func @transform_4(%arg0: i32) -> (i32, i32) {
    %c0_i32 = arith.constant 0 : i32
    %c0_i32_0 = arith.constant 0 : i32
    %c0_i32_1 = arith.constant 0 : i32
    return %c0_i32, %c0_i32_0 : i32, i32
  }
  func.func @transform_5(%arg0: i32) -> (i32, i32) {
    %c0_i32 = arith.constant 0 : i32
    %c0_i32_0 = arith.constant 0 : i32
    %c0_i32_1 = arith.constant 0 : i32
    return %c0_i32, %c0_i32_0 : i32, i32
  }
  func.func @transform_6(%arg0: i32) -> (i32, i32) {
    %c0_i32 = arith.constant 0 : i32
    %c0_i32_0 = arith.constant 0 : i32
    return %arg0, %c0_i32 : i32, i32
  }
  func.func @transform_7(%arg0: i32) -> (i32, i32) {
    %c0_i32 = arith.constant 0 : i32
    %c0_i32_0 = arith.constant 0 : i32
    %c0_i32_1 = arith.constant 0 : i32
    return %c0_i32, %c0_i32_0 : i32, i32
  }
  func.func @transform_8(%arg0: i32) -> (i32, i32) {
    %c0_i32 = arith.constant 0 : i32
    %c0_i32_0 = arith.constant 0 : i32
    %c0_i32_1 = arith.constant 0 : i32
    return %c0_i32, %c0_i32_0 : i32, i32
  }
}

module attributes {stable_mosaic.version = 11 : i64} {
  func.func @_lstm_layer_kernel(%arg0: i32, %arg1: memref<128x128xbf16, #tpu.memory_space<vmem>>, %arg2: memref<128x512xbf16, #tpu.memory_space<vmem>>, %arg3: memref<128x512xbf16, #tpu.memory_space<vmem>>, %arg4: memref<1x512xf32, #tpu.memory_space<vmem>>, %arg5: memref<16x128xf32, #tpu.memory_space<vmem>>, %arg6: memref<16x128xf32, #tpu.memory_space<vmem>>, %arg7: memref<128x128xf32, #tpu.memory_space<vmem>>, %arg8: memref<16x128xf32, #tpu.memory_space<vmem>>, %arg9: memref<16x128xf32, #tpu.memory_space<vmem>>, %arg10: memref<16x128xf32, #tpu.memory_space<vmem>>, %arg11: memref<16x128xf32, #tpu.memory_space<vmem>>, %arg12: memref<128x512xf32, #tpu.memory_space<vmem>>) attributes {dimension_semantics = [#tpu.dimension_semantics<arbitrary>], iteration_bounds = array<i64: 2>, scalar_prefetch = 0 : i64, scratch_operands = 3 : i64, tpu.core_type = #tpu.core_type<tc>, window_params = [{transform_indices = @transform_0, window_bounds = array<i64: 128, 128>}, {pipeline_mode = #tpu.pipeline_mode<synchronous>, transform_indices = @transform_1, window_bounds = array<i64: 128, 512>}, {pipeline_mode = #tpu.pipeline_mode<synchronous>, transform_indices = @transform_2, window_bounds = array<i64: 128, 512>}, {pipeline_mode = #tpu.pipeline_mode<synchronous>, transform_indices = @transform_3, window_bounds = array<i64: 1, 512>}, {pipeline_mode = #tpu.pipeline_mode<synchronous>, transform_indices = @transform_4, window_bounds = array<i64: 16, 128>}, {pipeline_mode = #tpu.pipeline_mode<synchronous>, transform_indices = @transform_5, window_bounds = array<i64: 16, 128>}, {transform_indices = @transform_6, window_bounds = array<i64: 128, 128>}, {pipeline_mode = #tpu.pipeline_mode<synchronous>, transform_indices = @transform_7, window_bounds = array<i64: 16, 128>}, {pipeline_mode = #tpu.pipeline_mode<synchronous>, transform_indices = @transform_8, window_bounds = array<i64: 16, 128>}]} {
    %c0_i32 = arith.constant 0 : i32
    %0 = arith.cmpi eq, %arg0, %c0_i32 : i32
    %1 = arith.extui %0 : i1 to i32
    %c0_i32_0 = arith.constant 0 : i32
    %2 = arith.cmpi ne, %1, %c0_i32_0 : i32
    scf.if %2 {
      %c0_154 = arith.constant 0 : index
      %c0_155 = arith.constant 0 : index
      %353 = vector.load %arg5[%c0_154, %c0_155] : memref<16x128xf32, #tpu.memory_space<vmem>>, vector<16x128xf32>
      %c0_156 = arith.constant 0 : index
      %c0_157 = arith.constant 0 : index
      %354 = vector.load %arg10[%c0_156, %c0_157] : memref<16x128xf32, #tpu.memory_space<vmem>>, vector<16x128xf32>
      tpu.vector_store %arg10[%c0_156, %c0_157], %353 {strides = array<i32>} : memref<16x128xf32, #tpu.memory_space<vmem>>, vector<16x128xf32>,
      %c0_158 = arith.constant 0 : index
      %c0_159 = arith.constant 0 : index
      %355 = vector.load %arg6[%c0_158, %c0_159] : memref<16x128xf32, #tpu.memory_space<vmem>>, vector<16x128xf32>
      %c0_160 = arith.constant 0 : index
      %c0_161 = arith.constant 0 : index
      %356 = vector.load %arg11[%c0_160, %c0_161] : memref<16x128xf32, #tpu.memory_space<vmem>>, vector<16x128xf32>
      tpu.vector_store %arg11[%c0_160, %c0_161], %355 {strides = array<i32>} : memref<16x128xf32, #tpu.memory_space<vmem>>, vector<16x128xf32>,
    } else {
    }
    %c0 = arith.constant 0 : index
    %c0_1 = arith.constant 0 : index
    %3 = vector.load %arg1[%c0, %c0_1] : memref<128x128xbf16, #tpu.memory_space<vmem>>, vector<128x128xbf16>
    %c0_2 = arith.constant 0 : index
    %c0_3 = arith.constant 0 : index
    %4 = vector.load %arg2[%c0_2, %c0_3] : memref<128x512xbf16, #tpu.memory_space<vmem>>, vector<128x512xbf16>
    %cst = arith.constant dense<0.000000e+00> : vector<128x512xf32>
    %5 = tpu.matmul %3, %4, %cst {dimension_numbers = #tpu.dot_dimension_numbers<[1], [0], [0], [1], [0, 0, 1, 1], [], []>} : vector<128x128xbf16>, vector<128x512xbf16>, vector<128x512xf32> -> vector<128x512xf32>
    %c0_4 = arith.constant 0 : index
    %c0_5 = arith.constant 0 : index
    %6 = vector.load %arg4[%c0_4, %c0_5] : memref<1x512xf32, #tpu.memory_space<vmem>>, vector<1x512xf32>
    %7 = vector.broadcast %6 : vector<1x512xf32> to vector<128x512xf32>
    %8 = arith.addf %5, %7 : vector<128x512xf32>
    %c0_6 = arith.constant 0 : index
    %c0_7 = arith.constant 0 : index
    %9 = vector.load %arg12[%c0_6, %c0_7] : memref<128x512xf32, #tpu.memory_space<vmem>>, vector<128x512xf32>
    tpu.vector_store %arg12[%c0_6, %c0_7], %8 {strides = array<i32>} : memref<128x512xf32, #tpu.memory_space<vmem>>, vector<128x512xf32>,
    %c0_8 = arith.constant 0 : index
    %c0_9 = arith.constant 0 : index
    %10 = vector.load %arg10[%c0_8, %c0_9] : memref<16x128xf32, #tpu.memory_space<vmem>>, vector<16x128xf32>
    %c0_10 = arith.constant 0 : index
    %c0_11 = arith.constant 0 : index
    %11 = vector.load %arg11[%c0_10, %c0_11] : memref<16x128xf32, #tpu.memory_space<vmem>>, vector<16x128xf32>
    %c0_12 = arith.constant 0 : index
    %c0_13 = arith.constant 0 : index
    %12 = vector.load %arg12[%c0_12, %c0_13] : memref<128x512xf32, #tpu.memory_space<vmem>>, vector<16x512xf32>
    %13 = arith.truncf %10 : vector<16x128xf32> to vector<16x128xbf16>
    %c0_14 = arith.constant 0 : index
    %c0_15 = arith.constant 0 : index
    %14 = vector.load %arg3[%c0_14, %c0_15] : memref<128x512xbf16, #tpu.memory_space<vmem>>, vector<128x512xbf16>
    %cst_16 = arith.constant dense<0.000000e+00> : vector<16x512xf32>
    %15 = tpu.matmul %13, %14, %cst_16 {dimension_numbers = #tpu.dot_dimension_numbers<[1], [0], [0], [1], [0, 0, 1, 1], [], []>} : vector<16x128xbf16>, vector<128x512xbf16>, vector<16x512xf32> -> vector<16x512xf32>
    %16 = arith.addf %12, %15 : vector<16x512xf32>
    %17 = vector.extract_strided_slice %16 {offsets = [0, 0], sizes = [16, 128], strides = [1, 1]} : vector<16x512xf32> to vector<16x128xf32>
    %cst_17 = arith.constant 5.000000e-01 : f32
    %18 = vector.broadcast %cst_17 : f32 to vector<16x128xf32>
    %19 = arith.mulf %18, %17 : vector<16x128xf32>
    %20 = math.tanh %19 : vector<16x128xf32>
    %cst_18 = arith.constant 1.000000e+00 : f32
    %21 = vector.broadcast %cst_18 : f32 to vector<16x128xf32>
    %22 = arith.addf %20, %21 : vector<16x128xf32>
    %cst_19 = arith.constant 5.000000e-01 : f32
    %23 = vector.broadcast %cst_19 : f32 to vector<16x128xf32>
    %24 = arith.mulf %23, %22 : vector<16x128xf32>
    %25 = vector.extract_strided_slice %16 {offsets = [0, 128], sizes = [16, 128], strides = [1, 1]} : vector<16x512xf32> to vector<16x128xf32>
    %cst_20 = arith.constant 5.000000e-01 : f32
    %26 = vector.broadcast %cst_20 : f32 to vector<16x128xf32>
    %27 = arith.mulf %26, %25 : vector<16x128xf32>
    %28 = math.tanh %27 : vector<16x128xf32>
    %cst_21 = arith.constant 1.000000e+00 : f32
    %29 = vector.broadcast %cst_21 : f32 to vector<16x128xf32>
    %30 = arith.addf %28, %29 : vector<16x128xf32>
    %cst_22 = arith.constant 5.000000e-01 : f32
    %31 = vector.broadcast %cst_22 : f32 to vector<16x128xf32>
    %32 = arith.mulf %31, %30 : vector<16x128xf32>
    %33 = vector.extract_strided_slice %16 {offsets = [0, 256], sizes = [16, 128], strides = [1, 1]} : vector<16x512xf32> to vector<16x128xf32>
    %34 = math.tanh %33 : vector<16x128xf32>
    %35 = vector.extract_strided_slice %16 {offsets = [0, 384], sizes = [16, 128], strides = [1, 1]} : vector<16x512xf32> to vector<16x128xf32>
    %cst_23 = arith.constant 5.000000e-01 : f32
    %36 = vector.broadcast %cst_23 : f32 to vector<16x128xf32>
    %37 = arith.mulf %36, %35 : vector<16x128xf32>
    %38 = math.tanh %37 : vector<16x128xf32>
    %cst_24 = arith.constant 1.000000e+00 : f32
    %39 = vector.broadcast %cst_24 : f32 to vector<16x128xf32>
    %40 = arith.addf %38, %39 : vector<16x128xf32>
    %cst_25 = arith.constant 5.000000e-01 : f32
    %41 = vector.broadcast %cst_25 : f32 to vector<16x128xf32>
    %42 = arith.mulf %41, %40 : vector<16x128xf32>
    %43 = arith.mulf %32, %11 : vector<16x128xf32>
    %44 = arith.mulf %24, %34 : vector<16x128xf32>
    %45 = arith.addf %43, %44 : vector<16x128xf32>
    %46 = math.tanh %45 : vector<16x128xf32>
    %47 = arith.mulf %42, %46 : vector<16x128xf32>
    %c8_i32 = arith.constant 8 : i32
    %48 = arith.muli %arg0, %c8_i32 : i32
    %c0_i32_26 = arith.constant 0 : i32
    %49 = arith.addi %48, %c0_i32_26 : i32
    %c12_i32 = arith.constant 12 : i32
    %50 = arith.cmpi slt, %49, %c12_i32 : i32
    %51 = arith.select %50, %45, %11 : vector<16x128xf32>
    %52 = arith.select %50, %47, %10 : vector<16x128xf32>
    %c0_27 = arith.constant 0 : index
    %c0_28 = arith.constant 0 : index
    %53 = vector.load %arg7[%c0_27, %c0_28] : memref<128x128xf32, #tpu.memory_space<vmem>>, vector<16x128xf32>
    tpu.vector_store %arg7[%c0_27, %c0_28], %52 {strides = array<i32>} : memref<128x128xf32, #tpu.memory_space<vmem>>, vector<16x128xf32>,
    %c16 = arith.constant 16 : index
    %c0_29 = arith.constant 0 : index
    %54 = vector.load %arg12[%c16, %c0_29] : memref<128x512xf32, #tpu.memory_space<vmem>>, vector<16x512xf32>
    %55 = arith.truncf %52 : vector<16x128xf32> to vector<16x128xbf16>
    %c0_30 = arith.constant 0 : index
    %c0_31 = arith.constant 0 : index
    %56 = vector.load %arg3[%c0_30, %c0_31] : memref<128x512xbf16, #tpu.memory_space<vmem>>, vector<128x512xbf16>
    %cst_32 = arith.constant dense<0.000000e+00> : vector<16x512xf32>
    %57 = tpu.matmul %55, %56, %cst_32 {dimension_numbers = #tpu.dot_dimension_numbers<[1], [0], [0], [1], [0, 0, 1, 1], [], []>} : vector<16x128xbf16>, vector<128x512xbf16>, vector<16x512xf32> -> vector<16x512xf32>
    %58 = arith.addf %54, %57 : vector<16x512xf32>
    %59 = vector.extract_strided_slice %58 {offsets = [0, 0], sizes = [16, 128], strides = [1, 1]} : vector<16x512xf32> to vector<16x128xf32>
    %cst_33 = arith.constant 5.000000e-01 : f32
    %60 = vector.broadcast %cst_33 : f32 to vector<16x128xf32>
    %61 = arith.mulf %60, %59 : vector<16x128xf32>
    %62 = math.tanh %61 : vector<16x128xf32>
    %cst_34 = arith.constant 1.000000e+00 : f32
    %63 = vector.broadcast %cst_34 : f32 to vector<16x128xf32>
    %64 = arith.addf %62, %63 : vector<16x128xf32>
    %cst_35 = arith.constant 5.000000e-01 : f32
    %65 = vector.broadcast %cst_35 : f32 to vector<16x128xf32>
    %66 = arith.mulf %65, %64 : vector<16x128xf32>
    %67 = vector.extract_strided_slice %58 {offsets = [0, 128], sizes = [16, 128], strides = [1, 1]} : vector<16x512xf32> to vector<16x128xf32>
    %cst_36 = arith.constant 5.000000e-01 : f32
    %68 = vector.broadcast %cst_36 : f32 to vector<16x128xf32>
    %69 = arith.mulf %68, %67 : vector<16x128xf32>
    %70 = math.tanh %69 : vector<16x128xf32>
    %cst_37 = arith.constant 1.000000e+00 : f32
    %71 = vector.broadcast %cst_37 : f32 to vector<16x128xf32>
    %72 = arith.addf %70, %71 : vector<16x128xf32>
    %cst_38 = arith.constant 5.000000e-01 : f32
    %73 = vector.broadcast %cst_38 : f32 to vector<16x128xf32>
    %74 = arith.mulf %73, %72 : vector<16x128xf32>
    %75 = vector.extract_strided_slice %58 {offsets = [0, 256], sizes = [16, 128], strides = [1, 1]} : vector<16x512xf32> to vector<16x128xf32>
    %76 = math.tanh %75 : vector<16x128xf32>
    %77 = vector.extract_strided_slice %58 {offsets = [0, 384], sizes = [16, 128], strides = [1, 1]} : vector<16x512xf32> to vector<16x128xf32>
    %cst_39 = arith.constant 5.000000e-01 : f32
    %78 = vector.broadcast %cst_39 : f32 to vector<16x128xf32>
    %79 = arith.mulf %78, %77 : vector<16x128xf32>
    %80 = math.tanh %79 : vector<16x128xf32>
    %cst_40 = arith.constant 1.000000e+00 : f32
    %81 = vector.broadcast %cst_40 : f32 to vector<16x128xf32>
    %82 = arith.addf %80, %81 : vector<16x128xf32>
    %cst_41 = arith.constant 5.000000e-01 : f32
    %83 = vector.broadcast %cst_41 : f32 to vector<16x128xf32>
    %84 = arith.mulf %83, %82 : vector<16x128xf32>
    %85 = arith.mulf %74, %51 : vector<16x128xf32>
    %86 = arith.mulf %66, %76 : vector<16x128xf32>
    %87 = arith.addf %85, %86 : vector<16x128xf32>
    %88 = math.tanh %87 : vector<16x128xf32>
    %89 = arith.mulf %84, %88 : vector<16x128xf32>
    %c8_i32_42 = arith.constant 8 : i32
    %90 = arith.muli %arg0, %c8_i32_42 : i32
    %c1_i32 = arith.constant 1 : i32
    %91 = arith.addi %90, %c1_i32 : i32
    %c12_i32_43 = arith.constant 12 : i32
    %92 = arith.cmpi slt, %91, %c12_i32_43 : i32
    %93 = arith.select %92, %87, %51 : vector<16x128xf32>
    %94 = arith.select %92, %89, %52 : vector<16x128xf32>
    %c16_44 = arith.constant 16 : index
    %c0_45 = arith.constant 0 : index
    %95 = vector.load %arg7[%c16_44, %c0_45] : memref<128x128xf32, #tpu.memory_space<vmem>>, vector<16x128xf32>
    tpu.vector_store %arg7[%c16_44, %c0_45], %94 {strides = array<i32>} : memref<128x128xf32, #tpu.memory_space<vmem>>, vector<16x128xf32>,
    %c32 = arith.constant 32 : index
    %c0_46 = arith.constant 0 : index
    %96 = vector.load %arg12[%c32, %c0_46] : memref<128x512xf32, #tpu.memory_space<vmem>>, vector<16x512xf32>
    %97 = arith.truncf %94 : vector<16x128xf32> to vector<16x128xbf16>
    %c0_47 = arith.constant 0 : index
    %c0_48 = arith.constant 0 : index
    %98 = vector.load %arg3[%c0_47, %c0_48] : memref<128x512xbf16, #tpu.memory_space<vmem>>, vector<128x512xbf16>
    %cst_49 = arith.constant dense<0.000000e+00> : vector<16x512xf32>
    %99 = tpu.matmul %97, %98, %cst_49 {dimension_numbers = #tpu.dot_dimension_numbers<[1], [0], [0], [1], [0, 0, 1, 1], [], []>} : vector<16x128xbf16>, vector<128x512xbf16>, vector<16x512xf32> -> vector<16x512xf32>
    %100 = arith.addf %96, %99 : vector<16x512xf32>
    %101 = vector.extract_strided_slice %100 {offsets = [0, 0], sizes = [16, 128], strides = [1, 1]} : vector<16x512xf32> to vector<16x128xf32>
    %cst_50 = arith.constant 5.000000e-01 : f32
    %102 = vector.broadcast %cst_50 : f32 to vector<16x128xf32>
    %103 = arith.mulf %102, %101 : vector<16x128xf32>
    %104 = math.tanh %103 : vector<16x128xf32>
    %cst_51 = arith.constant 1.000000e+00 : f32
    %105 = vector.broadcast %cst_51 : f32 to vector<16x128xf32>
    %106 = arith.addf %104, %105 : vector<16x128xf32>
    %cst_52 = arith.constant 5.000000e-01 : f32
    %107 = vector.broadcast %cst_52 : f32 to vector<16x128xf32>
    %108 = arith.mulf %107, %106 : vector<16x128xf32>
    %109 = vector.extract_strided_slice %100 {offsets = [0, 128], sizes = [16, 128], strides = [1, 1]} : vector<16x512xf32> to vector<16x128xf32>
    %cst_53 = arith.constant 5.000000e-01 : f32
    %110 = vector.broadcast %cst_53 : f32 to vector<16x128xf32>
    %111 = arith.mulf %110, %109 : vector<16x128xf32>
    %112 = math.tanh %111 : vector<16x128xf32>
    %cst_54 = arith.constant 1.000000e+00 : f32
    %113 = vector.broadcast %cst_54 : f32 to vector<16x128xf32>
    %114 = arith.addf %112, %113 : vector<16x128xf32>
    %cst_55 = arith.constant 5.000000e-01 : f32
    %115 = vector.broadcast %cst_55 : f32 to vector<16x128xf32>
    %116 = arith.mulf %115, %114 : vector<16x128xf32>
    %117 = vector.extract_strided_slice %100 {offsets = [0, 256], sizes = [16, 128], strides = [1, 1]} : vector<16x512xf32> to vector<16x128xf32>
    %118 = math.tanh %117 : vector<16x128xf32>
    %119 = vector.extract_strided_slice %100 {offsets = [0, 384], sizes = [16, 128], strides = [1, 1]} : vector<16x512xf32> to vector<16x128xf32>
    %cst_56 = arith.constant 5.000000e-01 : f32
    %120 = vector.broadcast %cst_56 : f32 to vector<16x128xf32>
    %121 = arith.mulf %120, %119 : vector<16x128xf32>
    %122 = math.tanh %121 : vector<16x128xf32>
    %cst_57 = arith.constant 1.000000e+00 : f32
    %123 = vector.broadcast %cst_57 : f32 to vector<16x128xf32>
    %124 = arith.addf %122, %123 : vector<16x128xf32>
    %cst_58 = arith.constant 5.000000e-01 : f32
    %125 = vector.broadcast %cst_58 : f32 to vector<16x128xf32>
    %126 = arith.mulf %125, %124 : vector<16x128xf32>
    %127 = arith.mulf %116, %93 : vector<16x128xf32>
    %128 = arith.mulf %108, %118 : vector<16x128xf32>
    %129 = arith.addf %127, %128 : vector<16x128xf32>
    %130 = math.tanh %129 : vector<16x128xf32>
    %131 = arith.mulf %126, %130 : vector<16x128xf32>
    %c8_i32_59 = arith.constant 8 : i32
    %132 = arith.muli %arg0, %c8_i32_59 : i32
    %c2_i32 = arith.constant 2 : i32
    %133 = arith.addi %132, %c2_i32 : i32
    %c12_i32_60 = arith.constant 12 : i32
    %134 = arith.cmpi slt, %133, %c12_i32_60 : i32
    %135 = arith.select %134, %129, %93 : vector<16x128xf32>
    %136 = arith.select %134, %131, %94 : vector<16x128xf32>
    %c32_61 = arith.constant 32 : index
    %c0_62 = arith.constant 0 : index
    %137 = vector.load %arg7[%c32_61, %c0_62] : memref<128x128xf32, #tpu.memory_space<vmem>>, vector<16x128xf32>
    tpu.vector_store %arg7[%c32_61, %c0_62], %136 {strides = array<i32>} : memref<128x128xf32, #tpu.memory_space<vmem>>, vector<16x128xf32>,
    %c48 = arith.constant 48 : index
    %c0_63 = arith.constant 0 : index
    %138 = vector.load %arg12[%c48, %c0_63] : memref<128x512xf32, #tpu.memory_space<vmem>>, vector<16x512xf32>
    %139 = arith.truncf %136 : vector<16x128xf32> to vector<16x128xbf16>
    %c0_64 = arith.constant 0 : index
    %c0_65 = arith.constant 0 : index
    %140 = vector.load %arg3[%c0_64, %c0_65] : memref<128x512xbf16, #tpu.memory_space<vmem>>, vector<128x512xbf16>
    %cst_66 = arith.constant dense<0.000000e+00> : vector<16x512xf32>
    %141 = tpu.matmul %139, %140, %cst_66 {dimension_numbers = #tpu.dot_dimension_numbers<[1], [0], [0], [1], [0, 0, 1, 1], [], []>} : vector<16x128xbf16>, vector<128x512xbf16>, vector<16x512xf32> -> vector<16x512xf32>
    %142 = arith.addf %138, %141 : vector<16x512xf32>
    %143 = vector.extract_strided_slice %142 {offsets = [0, 0], sizes = [16, 128], strides = [1, 1]} : vector<16x512xf32> to vector<16x128xf32>
    %cst_67 = arith.constant 5.000000e-01 : f32
    %144 = vector.broadcast %cst_67 : f32 to vector<16x128xf32>
    %145 = arith.mulf %144, %143 : vector<16x128xf32>
    %146 = math.tanh %145 : vector<16x128xf32>
    %cst_68 = arith.constant 1.000000e+00 : f32
    %147 = vector.broadcast %cst_68 : f32 to vector<16x128xf32>
    %148 = arith.addf %146, %147 : vector<16x128xf32>
    %cst_69 = arith.constant 5.000000e-01 : f32
    %149 = vector.broadcast %cst_69 : f32 to vector<16x128xf32>
    %150 = arith.mulf %149, %148 : vector<16x128xf32>
    %151 = vector.extract_strided_slice %142 {offsets = [0, 128], sizes = [16, 128], strides = [1, 1]} : vector<16x512xf32> to vector<16x128xf32>
    %cst_70 = arith.constant 5.000000e-01 : f32
    %152 = vector.broadcast %cst_70 : f32 to vector<16x128xf32>
    %153 = arith.mulf %152, %151 : vector<16x128xf32>
    %154 = math.tanh %153 : vector<16x128xf32>
    %cst_71 = arith.constant 1.000000e+00 : f32
    %155 = vector.broadcast %cst_71 : f32 to vector<16x128xf32>
    %156 = arith.addf %154, %155 : vector<16x128xf32>
    %cst_72 = arith.constant 5.000000e-01 : f32
    %157 = vector.broadcast %cst_72 : f32 to vector<16x128xf32>
    %158 = arith.mulf %157, %156 : vector<16x128xf32>
    %159 = vector.extract_strided_slice %142 {offsets = [0, 256], sizes = [16, 128], strides = [1, 1]} : vector<16x512xf32> to vector<16x128xf32>
    %160 = math.tanh %159 : vector<16x128xf32>
    %161 = vector.extract_strided_slice %142 {offsets = [0, 384], sizes = [16, 128], strides = [1, 1]} : vector<16x512xf32> to vector<16x128xf32>
    %cst_73 = arith.constant 5.000000e-01 : f32
    %162 = vector.broadcast %cst_73 : f32 to vector<16x128xf32>
    %163 = arith.mulf %162, %161 : vector<16x128xf32>
    %164 = math.tanh %163 : vector<16x128xf32>
    %cst_74 = arith.constant 1.000000e+00 : f32
    %165 = vector.broadcast %cst_74 : f32 to vector<16x128xf32>
    %166 = arith.addf %164, %165 : vector<16x128xf32>
    %cst_75 = arith.constant 5.000000e-01 : f32
    %167 = vector.broadcast %cst_75 : f32 to vector<16x128xf32>
    %168 = arith.mulf %167, %166 : vector<16x128xf32>
    %169 = arith.mulf %158, %135 : vector<16x128xf32>
    %170 = arith.mulf %150, %160 : vector<16x128xf32>
    %171 = arith.addf %169, %170 : vector<16x128xf32>
    %172 = math.tanh %171 : vector<16x128xf32>
    %173 = arith.mulf %168, %172 : vector<16x128xf32>
    %c8_i32_76 = arith.constant 8 : i32
    %174 = arith.muli %arg0, %c8_i32_76 : i32
    %c3_i32 = arith.constant 3 : i32
    %175 = arith.addi %174, %c3_i32 : i32
    %c12_i32_77 = arith.constant 12 : i32
    %176 = arith.cmpi slt, %175, %c12_i32_77 : i32
    %177 = arith.select %176, %171, %135 : vector<16x128xf32>
    %178 = arith.select %176, %173, %136 : vector<16x128xf32>
    %c48_78 = arith.constant 48 : index
    %c0_79 = arith.constant 0 : index
    %179 = vector.load %arg7[%c48_78, %c0_79] : memref<128x128xf32, #tpu.memory_space<vmem>>, vector<16x128xf32>
    tpu.vector_store %arg7[%c48_78, %c0_79], %178 {strides = array<i32>} : memref<128x128xf32, #tpu.memory_space<vmem>>, vector<16x128xf32>,
    %c64 = arith.constant 64 : index
    %c0_80 = arith.constant 0 : index
    %180 = vector.load %arg12[%c64, %c0_80] : memref<128x512xf32, #tpu.memory_space<vmem>>, vector<16x512xf32>
    %181 = arith.truncf %178 : vector<16x128xf32> to vector<16x128xbf16>
    %c0_81 = arith.constant 0 : index
    %c0_82 = arith.constant 0 : index
    %182 = vector.load %arg3[%c0_81, %c0_82] : memref<128x512xbf16, #tpu.memory_space<vmem>>, vector<128x512xbf16>
    %cst_83 = arith.constant dense<0.000000e+00> : vector<16x512xf32>
    %183 = tpu.matmul %181, %182, %cst_83 {dimension_numbers = #tpu.dot_dimension_numbers<[1], [0], [0], [1], [0, 0, 1, 1], [], []>} : vector<16x128xbf16>, vector<128x512xbf16>, vector<16x512xf32> -> vector<16x512xf32>
    %184 = arith.addf %180, %183 : vector<16x512xf32>
    %185 = vector.extract_strided_slice %184 {offsets = [0, 0], sizes = [16, 128], strides = [1, 1]} : vector<16x512xf32> to vector<16x128xf32>
    %cst_84 = arith.constant 5.000000e-01 : f32
    %186 = vector.broadcast %cst_84 : f32 to vector<16x128xf32>
    %187 = arith.mulf %186, %185 : vector<16x128xf32>
    %188 = math.tanh %187 : vector<16x128xf32>
    %cst_85 = arith.constant 1.000000e+00 : f32
    %189 = vector.broadcast %cst_85 : f32 to vector<16x128xf32>
    %190 = arith.addf %188, %189 : vector<16x128xf32>
    %cst_86 = arith.constant 5.000000e-01 : f32
    %191 = vector.broadcast %cst_86 : f32 to vector<16x128xf32>
    %192 = arith.mulf %191, %190 : vector<16x128xf32>
    %193 = vector.extract_strided_slice %184 {offsets = [0, 128], sizes = [16, 128], strides = [1, 1]} : vector<16x512xf32> to vector<16x128xf32>
    %cst_87 = arith.constant 5.000000e-01 : f32
    %194 = vector.broadcast %cst_87 : f32 to vector<16x128xf32>
    %195 = arith.mulf %194, %193 : vector<16x128xf32>
    %196 = math.tanh %195 : vector<16x128xf32>
    %cst_88 = arith.constant 1.000000e+00 : f32
    %197 = vector.broadcast %cst_88 : f32 to vector<16x128xf32>
    %198 = arith.addf %196, %197 : vector<16x128xf32>
    %cst_89 = arith.constant 5.000000e-01 : f32
    %199 = vector.broadcast %cst_89 : f32 to vector<16x128xf32>
    %200 = arith.mulf %199, %198 : vector<16x128xf32>
    %201 = vector.extract_strided_slice %184 {offsets = [0, 256], sizes = [16, 128], strides = [1, 1]} : vector<16x512xf32> to vector<16x128xf32>
    %202 = math.tanh %201 : vector<16x128xf32>
    %203 = vector.extract_strided_slice %184 {offsets = [0, 384], sizes = [16, 128], strides = [1, 1]} : vector<16x512xf32> to vector<16x128xf32>
    %cst_90 = arith.constant 5.000000e-01 : f32
    %204 = vector.broadcast %cst_90 : f32 to vector<16x128xf32>
    %205 = arith.mulf %204, %203 : vector<16x128xf32>
    %206 = math.tanh %205 : vector<16x128xf32>
    %cst_91 = arith.constant 1.000000e+00 : f32
    %207 = vector.broadcast %cst_91 : f32 to vector<16x128xf32>
    %208 = arith.addf %206, %207 : vector<16x128xf32>
    %cst_92 = arith.constant 5.000000e-01 : f32
    %209 = vector.broadcast %cst_92 : f32 to vector<16x128xf32>
    %210 = arith.mulf %209, %208 : vector<16x128xf32>
    %211 = arith.mulf %200, %177 : vector<16x128xf32>
    %212 = arith.mulf %192, %202 : vector<16x128xf32>
    %213 = arith.addf %211, %212 : vector<16x128xf32>
    %214 = math.tanh %213 : vector<16x128xf32>
    %215 = arith.mulf %210, %214 : vector<16x128xf32>
    %c8_i32_93 = arith.constant 8 : i32
    %216 = arith.muli %arg0, %c8_i32_93 : i32
    %c4_i32 = arith.constant 4 : i32
    %217 = arith.addi %216, %c4_i32 : i32
    %c12_i32_94 = arith.constant 12 : i32
    %218 = arith.cmpi slt, %217, %c12_i32_94 : i32
    %219 = arith.select %218, %213, %177 : vector<16x128xf32>
    %220 = arith.select %218, %215, %178 : vector<16x128xf32>
    %c64_95 = arith.constant 64 : index
    %c0_96 = arith.constant 0 : index
    %221 = vector.load %arg7[%c64_95, %c0_96] : memref<128x128xf32, #tpu.memory_space<vmem>>, vector<16x128xf32>
    tpu.vector_store %arg7[%c64_95, %c0_96], %220 {strides = array<i32>} : memref<128x128xf32, #tpu.memory_space<vmem>>, vector<16x128xf32>,
    %c80 = arith.constant 80 : index
    %c0_97 = arith.constant 0 : index
    %222 = vector.load %arg12[%c80, %c0_97] : memref<128x512xf32, #tpu.memory_space<vmem>>, vector<16x512xf32>
    %223 = arith.truncf %220 : vector<16x128xf32> to vector<16x128xbf16>
    %c0_98 = arith.constant 0 : index
    %c0_99 = arith.constant 0 : index
    %224 = vector.load %arg3[%c0_98, %c0_99] : memref<128x512xbf16, #tpu.memory_space<vmem>>, vector<128x512xbf16>
    %cst_100 = arith.constant dense<0.000000e+00> : vector<16x512xf32>
    %225 = tpu.matmul %223, %224, %cst_100 {dimension_numbers = #tpu.dot_dimension_numbers<[1], [0], [0], [1], [0, 0, 1, 1], [], []>} : vector<16x128xbf16>, vector<128x512xbf16>, vector<16x512xf32> -> vector<16x512xf32>
    %226 = arith.addf %222, %225 : vector<16x512xf32>
    %227 = vector.extract_strided_slice %226 {offsets = [0, 0], sizes = [16, 128], strides = [1, 1]} : vector<16x512xf32> to vector<16x128xf32>
    %cst_101 = arith.constant 5.000000e-01 : f32
    %228 = vector.broadcast %cst_101 : f32 to vector<16x128xf32>
    %229 = arith.mulf %228, %227 : vector<16x128xf32>
    %230 = math.tanh %229 : vector<16x128xf32>
    %cst_102 = arith.constant 1.000000e+00 : f32
    %231 = vector.broadcast %cst_102 : f32 to vector<16x128xf32>
    %232 = arith.addf %230, %231 : vector<16x128xf32>
    %cst_103 = arith.constant 5.000000e-01 : f32
    %233 = vector.broadcast %cst_103 : f32 to vector<16x128xf32>
    %234 = arith.mulf %233, %232 : vector<16x128xf32>
    %235 = vector.extract_strided_slice %226 {offsets = [0, 128], sizes = [16, 128], strides = [1, 1]} : vector<16x512xf32> to vector<16x128xf32>
    %cst_104 = arith.constant 5.000000e-01 : f32
    %236 = vector.broadcast %cst_104 : f32 to vector<16x128xf32>
    %237 = arith.mulf %236, %235 : vector<16x128xf32>
    %238 = math.tanh %237 : vector<16x128xf32>
    %cst_105 = arith.constant 1.000000e+00 : f32
    %239 = vector.broadcast %cst_105 : f32 to vector<16x128xf32>
    %240 = arith.addf %238, %239 : vector<16x128xf32>
    %cst_106 = arith.constant 5.000000e-01 : f32
    %241 = vector.broadcast %cst_106 : f32 to vector<16x128xf32>
    %242 = arith.mulf %241, %240 : vector<16x128xf32>
    %243 = vector.extract_strided_slice %226 {offsets = [0, 256], sizes = [16, 128], strides = [1, 1]} : vector<16x512xf32> to vector<16x128xf32>
    %244 = math.tanh %243 : vector<16x128xf32>
    %245 = vector.extract_strided_slice %226 {offsets = [0, 384], sizes = [16, 128], strides = [1, 1]} : vector<16x512xf32> to vector<16x128xf32>
    %cst_107 = arith.constant 5.000000e-01 : f32
    %246 = vector.broadcast %cst_107 : f32 to vector<16x128xf32>
    %247 = arith.mulf %246, %245 : vector<16x128xf32>
    %248 = math.tanh %247 : vector<16x128xf32>
    %cst_108 = arith.constant 1.000000e+00 : f32
    %249 = vector.broadcast %cst_108 : f32 to vector<16x128xf32>
    %250 = arith.addf %248, %249 : vector<16x128xf32>
    %cst_109 = arith.constant 5.000000e-01 : f32
    %251 = vector.broadcast %cst_109 : f32 to vector<16x128xf32>
    %252 = arith.mulf %251, %250 : vector<16x128xf32>
    %253 = arith.mulf %242, %219 : vector<16x128xf32>
    %254 = arith.mulf %234, %244 : vector<16x128xf32>
    %255 = arith.addf %253, %254 : vector<16x128xf32>
    %256 = math.tanh %255 : vector<16x128xf32>
    %257 = arith.mulf %252, %256 : vector<16x128xf32>
    %c8_i32_110 = arith.constant 8 : i32
    %258 = arith.muli %arg0, %c8_i32_110 : i32
    %c5_i32 = arith.constant 5 : i32
    %259 = arith.addi %258, %c5_i32 : i32
    %c12_i32_111 = arith.constant 12 : i32
    %260 = arith.cmpi slt, %259, %c12_i32_111 : i32
    %261 = arith.select %260, %255, %219 : vector<16x128xf32>
    %262 = arith.select %260, %257, %220 : vector<16x128xf32>
    %c80_112 = arith.constant 80 : index
    %c0_113 = arith.constant 0 : index
    %263 = vector.load %arg7[%c80_112, %c0_113] : memref<128x128xf32, #tpu.memory_space<vmem>>, vector<16x128xf32>
    tpu.vector_store %arg7[%c80_112, %c0_113], %262 {strides = array<i32>} : memref<128x128xf32, #tpu.memory_space<vmem>>, vector<16x128xf32>,
    %c96 = arith.constant 96 : index
    %c0_114 = arith.constant 0 : index
    %264 = vector.load %arg12[%c96, %c0_114] : memref<128x512xf32, #tpu.memory_space<vmem>>, vector<16x512xf32>
    %265 = arith.truncf %262 : vector<16x128xf32> to vector<16x128xbf16>
    %c0_115 = arith.constant 0 : index
    %c0_116 = arith.constant 0 : index
    %266 = vector.load %arg3[%c0_115, %c0_116] : memref<128x512xbf16, #tpu.memory_space<vmem>>, vector<128x512xbf16>
    %cst_117 = arith.constant dense<0.000000e+00> : vector<16x512xf32>
    %267 = tpu.matmul %265, %266, %cst_117 {dimension_numbers = #tpu.dot_dimension_numbers<[1], [0], [0], [1], [0, 0, 1, 1], [], []>} : vector<16x128xbf16>, vector<128x512xbf16>, vector<16x512xf32> -> vector<16x512xf32>
    %268 = arith.addf %264, %267 : vector<16x512xf32>
    %269 = vector.extract_strided_slice %268 {offsets = [0, 0], sizes = [16, 128], strides = [1, 1]} : vector<16x512xf32> to vector<16x128xf32>
    %cst_118 = arith.constant 5.000000e-01 : f32
    %270 = vector.broadcast %cst_118 : f32 to vector<16x128xf32>
    %271 = arith.mulf %270, %269 : vector<16x128xf32>
    %272 = math.tanh %271 : vector<16x128xf32>
    %cst_119 = arith.constant 1.000000e+00 : f32
    %273 = vector.broadcast %cst_119 : f32 to vector<16x128xf32>
    %274 = arith.addf %272, %273 : vector<16x128xf32>
    %cst_120 = arith.constant 5.000000e-01 : f32
    %275 = vector.broadcast %cst_120 : f32 to vector<16x128xf32>
    %276 = arith.mulf %275, %274 : vector<16x128xf32>
    %277 = vector.extract_strided_slice %268 {offsets = [0, 128], sizes = [16, 128], strides = [1, 1]} : vector<16x512xf32> to vector<16x128xf32>
    %cst_121 = arith.constant 5.000000e-01 : f32
    %278 = vector.broadcast %cst_121 : f32 to vector<16x128xf32>
    %279 = arith.mulf %278, %277 : vector<16x128xf32>
    %280 = math.tanh %279 : vector<16x128xf32>
    %cst_122 = arith.constant 1.000000e+00 : f32
    %281 = vector.broadcast %cst_122 : f32 to vector<16x128xf32>
    %282 = arith.addf %280, %281 : vector<16x128xf32>
    %cst_123 = arith.constant 5.000000e-01 : f32
    %283 = vector.broadcast %cst_123 : f32 to vector<16x128xf32>
    %284 = arith.mulf %283, %282 : vector<16x128xf32>
    %285 = vector.extract_strided_slice %268 {offsets = [0, 256], sizes = [16, 128], strides = [1, 1]} : vector<16x512xf32> to vector<16x128xf32>
    %286 = math.tanh %285 : vector<16x128xf32>
    %287 = vector.extract_strided_slice %268 {offsets = [0, 384], sizes = [16, 128], strides = [1, 1]} : vector<16x512xf32> to vector<16x128xf32>
    %cst_124 = arith.constant 5.000000e-01 : f32
    %288 = vector.broadcast %cst_124 : f32 to vector<16x128xf32>
    %289 = arith.mulf %288, %287 : vector<16x128xf32>
    %290 = math.tanh %289 : vector<16x128xf32>
    %cst_125 = arith.constant 1.000000e+00 : f32
    %291 = vector.broadcast %cst_125 : f32 to vector<16x128xf32>
    %292 = arith.addf %290, %291 : vector<16x128xf32>
    %cst_126 = arith.constant 5.000000e-01 : f32
    %293 = vector.broadcast %cst_126 : f32 to vector<16x128xf32>
    %294 = arith.mulf %293, %292 : vector<16x128xf32>
    %295 = arith.mulf %284, %261 : vector<16x128xf32>
    %296 = arith.mulf %276, %286 : vector<16x128xf32>
    %297 = arith.addf %295, %296 : vector<16x128xf32>
    %298 = math.tanh %297 : vector<16x128xf32>
    %299 = arith.mulf %294, %298 : vector<16x128xf32>
    %c8_i32_127 = arith.constant 8 : i32
    %300 = arith.muli %arg0, %c8_i32_127 : i32
    %c6_i32 = arith.constant 6 : i32
    %301 = arith.addi %300, %c6_i32 : i32
    %c12_i32_128 = arith.constant 12 : i32
    %302 = arith.cmpi slt, %301, %c12_i32_128 : i32
    %303 = arith.select %302, %297, %261 : vector<16x128xf32>
    %304 = arith.select %302, %299, %262 : vector<16x128xf32>
    %c96_129 = arith.constant 96 : index
    %c0_130 = arith.constant 0 : index
    %305 = vector.load %arg7[%c96_129, %c0_130] : memref<128x128xf32, #tpu.memory_space<vmem>>, vector<16x128xf32>
    tpu.vector_store %arg7[%c96_129, %c0_130], %304 {strides = array<i32>} : memref<128x128xf32, #tpu.memory_space<vmem>>, vector<16x128xf32>,
    %c112 = arith.constant 112 : index
    %c0_131 = arith.constant 0 : index
    %306 = vector.load %arg12[%c112, %c0_131] : memref<128x512xf32, #tpu.memory_space<vmem>>, vector<16x512xf32>
    %307 = arith.truncf %304 : vector<16x128xf32> to vector<16x128xbf16>
    %c0_132 = arith.constant 0 : index
    %c0_133 = arith.constant 0 : index
    %308 = vector.load %arg3[%c0_132, %c0_133] : memref<128x512xbf16, #tpu.memory_space<vmem>>, vector<128x512xbf16>
    %cst_134 = arith.constant dense<0.000000e+00> : vector<16x512xf32>
    %309 = tpu.matmul %307, %308, %cst_134 {dimension_numbers = #tpu.dot_dimension_numbers<[1], [0], [0], [1], [0, 0, 1, 1], [], []>} : vector<16x128xbf16>, vector<128x512xbf16>, vector<16x512xf32> -> vector<16x512xf32>
    %310 = arith.addf %306, %309 : vector<16x512xf32>
    %311 = vector.extract_strided_slice %310 {offsets = [0, 0], sizes = [16, 128], strides = [1, 1]} : vector<16x512xf32> to vector<16x128xf32>
    %cst_135 = arith.constant 5.000000e-01 : f32
    %312 = vector.broadcast %cst_135 : f32 to vector<16x128xf32>
    %313 = arith.mulf %312, %311 : vector<16x128xf32>
    %314 = math.tanh %313 : vector<16x128xf32>
    %cst_136 = arith.constant 1.000000e+00 : f32
    %315 = vector.broadcast %cst_136 : f32 to vector<16x128xf32>
    %316 = arith.addf %314, %315 : vector<16x128xf32>
    %cst_137 = arith.constant 5.000000e-01 : f32
    %317 = vector.broadcast %cst_137 : f32 to vector<16x128xf32>
    %318 = arith.mulf %317, %316 : vector<16x128xf32>
    %319 = vector.extract_strided_slice %310 {offsets = [0, 128], sizes = [16, 128], strides = [1, 1]} : vector<16x512xf32> to vector<16x128xf32>
    %cst_138 = arith.constant 5.000000e-01 : f32
    %320 = vector.broadcast %cst_138 : f32 to vector<16x128xf32>
    %321 = arith.mulf %320, %319 : vector<16x128xf32>
    %322 = math.tanh %321 : vector<16x128xf32>
    %cst_139 = arith.constant 1.000000e+00 : f32
    %323 = vector.broadcast %cst_139 : f32 to vector<16x128xf32>
    %324 = arith.addf %322, %323 : vector<16x128xf32>
    %cst_140 = arith.constant 5.000000e-01 : f32
    %325 = vector.broadcast %cst_140 : f32 to vector<16x128xf32>
    %326 = arith.mulf %325, %324 : vector<16x128xf32>
    %327 = vector.extract_strided_slice %310 {offsets = [0, 256], sizes = [16, 128], strides = [1, 1]} : vector<16x512xf32> to vector<16x128xf32>
    %328 = math.tanh %327 : vector<16x128xf32>
    %329 = vector.extract_strided_slice %310 {offsets = [0, 384], sizes = [16, 128], strides = [1, 1]} : vector<16x512xf32> to vector<16x128xf32>
    %cst_141 = arith.constant 5.000000e-01 : f32
    %330 = vector.broadcast %cst_141 : f32 to vector<16x128xf32>
    %331 = arith.mulf %330, %329 : vector<16x128xf32>
    %332 = math.tanh %331 : vector<16x128xf32>
    %cst_142 = arith.constant 1.000000e+00 : f32
    %333 = vector.broadcast %cst_142 : f32 to vector<16x128xf32>
    %334 = arith.addf %332, %333 : vector<16x128xf32>
    %cst_143 = arith.constant 5.000000e-01 : f32
    %335 = vector.broadcast %cst_143 : f32 to vector<16x128xf32>
    %336 = arith.mulf %335, %334 : vector<16x128xf32>
    %337 = arith.mulf %326, %303 : vector<16x128xf32>
    %338 = arith.mulf %318, %328 : vector<16x128xf32>
    %339 = arith.addf %337, %338 : vector<16x128xf32>
    %340 = math.tanh %339 : vector<16x128xf32>
    %341 = arith.mulf %336, %340 : vector<16x128xf32>
    %c8_i32_144 = arith.constant 8 : i32
    %342 = arith.muli %arg0, %c8_i32_144 : i32
    %c7_i32 = arith.constant 7 : i32
    %343 = arith.addi %342, %c7_i32 : i32
    %c12_i32_145 = arith.constant 12 : i32
    %344 = arith.cmpi slt, %343, %c12_i32_145 : i32
    %345 = arith.select %344, %339, %303 : vector<16x128xf32>
    %346 = arith.select %344, %341, %304 : vector<16x128xf32>
    %c112_146 = arith.constant 112 : index
    %c0_147 = arith.constant 0 : index
    %347 = vector.load %arg7[%c112_146, %c0_147] : memref<128x128xf32, #tpu.memory_space<vmem>>, vector<16x128xf32>
    tpu.vector_store %arg7[%c112_146, %c0_147], %346 {strides = array<i32>} : memref<128x128xf32, #tpu.memory_space<vmem>>, vector<16x128xf32>,
    %c0_148 = arith.constant 0 : index
    %c0_149 = arith.constant 0 : index
    %348 = vector.load %arg10[%c0_148, %c0_149] : memref<16x128xf32, #tpu.memory_space<vmem>>, vector<16x128xf32>
    tpu.vector_store %arg10[%c0_148, %c0_149], %346 {strides = array<i32>} : memref<16x128xf32, #tpu.memory_space<vmem>>, vector<16x128xf32>,
    %c0_150 = arith.constant 0 : index
    %c0_151 = arith.constant 0 : index
    %349 = vector.load %arg11[%c0_150, %c0_151] : memref<16x128xf32, #tpu.memory_space<vmem>>, vector<16x128xf32>
    tpu.vector_store %arg11[%c0_150, %c0_151], %345 {strides = array<i32>} : memref<16x128xf32, #tpu.memory_space<vmem>>, vector<16x128xf32>,
    %c1_i32_152 = arith.constant 1 : i32
    %350 = arith.cmpi eq, %arg0, %c1_i32_152 : i32
    %351 = arith.extui %350 : i1 to i32
    %c0_i32_153 = arith.constant 0 : i32
    %352 = arith.cmpi ne, %351, %c0_i32_153 : i32
    scf.if %352 {
      %c0_154 = arith.constant 0 : index
      %c0_155 = arith.constant 0 : index
      %353 = vector.load %arg8[%c0_154, %c0_155] : memref<16x128xf32, #tpu.memory_space<vmem>>, vector<16x128xf32>
      tpu.vector_store %arg8[%c0_154, %c0_155], %346 {strides = array<i32>} : memref<16x128xf32, #tpu.memory_space<vmem>>, vector<16x128xf32>,
      %c0_156 = arith.constant 0 : index
      %c0_157 = arith.constant 0 : index
      %354 = vector.load %arg9[%c0_156, %c0_157] : memref<16x128xf32, #tpu.memory_space<vmem>>, vector<16x128xf32>
      tpu.vector_store %arg9[%c0_156, %c0_157], %345 {strides = array<i32>} : memref<16x128xf32, #tpu.memory_space<vmem>>, vector<16x128xf32>,
    } else {
    }
    return
  }
  func.func @transform_0(%arg0: i32) -> (i32, i32) {
    %c0_i32 = arith.constant 0 : i32
    %c0_i32_0 = arith.constant 0 : i32
    return %arg0, %c0_i32 : i32, i32
  }
  func.func @transform_1(%arg0: i32) -> (i32, i32) {
    %c0_i32 = arith.constant 0 : i32
    %c0_i32_0 = arith.constant 0 : i32
    %c0_i32_1 = arith.constant 0 : i32
    return %c0_i32, %c0_i32_0 : i32, i32
  }
  func.func @transform_2(%arg0: i32) -> (i32, i32) {
    %c0_i32 = arith.constant 0 : i32
    %c0_i32_0 = arith.constant 0 : i32
    %c0_i32_1 = arith.constant 0 : i32
    return %c0_i32, %c0_i32_0 : i32, i32
  }
  func.func @transform_3(%arg0: i32) -> (i32, i32) {
    %c0_i32 = arith.constant 0 : i32
    %c0_i32_0 = arith.constant 0 : i32
    %c0_i32_1 = arith.constant 0 : i32
    return %c0_i32, %c0_i32_0 : i32, i32
  }
  func.func @transform_4(%arg0: i32) -> (i32, i32) {
    %c0_i32 = arith.constant 0 : i32
    %c0_i32_0 = arith.constant 0 : i32
    %c0_i32_1 = arith.constant 0 : i32
    return %c0_i32, %c0_i32_0 : i32, i32
  }
  func.func @transform_5(%arg0: i32) -> (i32, i32) {
    %c0_i32 = arith.constant 0 : i32
    %c0_i32_0 = arith.constant 0 : i32
    %c0_i32_1 = arith.constant 0 : i32
    return %c0_i32, %c0_i32_0 : i32, i32
  }
  func.func @transform_6(%arg0: i32) -> (i32, i32) {
    %c0_i32 = arith.constant 0 : i32
    %c0_i32_0 = arith.constant 0 : i32
    return %arg0, %c0_i32 : i32, i32
  }
  func.func @transform_7(%arg0: i32) -> (i32, i32) {
    %c0_i32 = arith.constant 0 : i32
    %c0_i32_0 = arith.constant 0 : i32
    %c0_i32_1 = arith.constant 0 : i32
    return %c0_i32, %c0_i32_0 : i32, i32
  }
  func.func @transform_8(%arg0: i32) -> (i32, i32) {
    %c0_i32 = arith.constant 0 : i32
    %c0_i32_0 = arith.constant 0 : i32
    %c0_i32_1 = arith.constant 0 : i32
    return %c0_i32, %c0_i32_0 : i32, i32
  }
}

</mosaic_0001>

<llo_original>
// kernel: multi_rnn_forward.3
$region0: #{multi_rnn_forward.3}
  #allocation0 [shape = 'u32[]', space=smem, size = 0x4, offset = 0x4, fixed_abs, tag = 'smem constant byte address 0x4 - core index']
  #allocation1 [shape = 'u32[72,128]{1,0:T(1,128)}', space=vmem, size = 0x9000, scoped, tag = 'internal scratch']
  #allocation2 [shape = 'f32[16,128]{1,0:T(8,128)}', space=vmem, size = 0x2000, scoped, tag = 'scratch operand']
  #allocation3 [shape = 'f32[16,128]{1,0:T(8,128)}', space=vmem, size = 0x2000, scoped, tag = 'scratch operand']
  #allocation4 [shape = 'f32[128,512]{1,0:T(8,128)}', space=vmem, size = 0x40000, scoped, tag = 'scratch operand']
  %s0 = inlined_call_operand.vmem [shape: bf16[256,128], index: 0, kind: input, shape index: {}]
  %s1 = inlined_call_operand.hbm [shape: bf16[128,512], index: 1, kind: input, shape index: {}]
  %s2 = inlined_call_operand.hbm [shape: bf16[128,512], index: 2, kind: input, shape index: {}]
  %s3 = inlined_call_operand.vmem [shape: f32[1,512], index: 3, kind: input, shape index: {}]
  %s4 = inlined_call_operand.vmem [shape: f32[16,128], index: 4, kind: input, shape index: {}]
  %s5 = inlined_call_operand.vmem [shape: f32[16,128], index: 5, kind: input, shape index: {}]
  %s6 = inlined_call_operand.vmem [shape: f32[256,128], index: 6, kind: output, shape index: {0}]
  %s7 = inlined_call_operand.vmem [shape: f32[16,128], index: 7, kind: output, shape index: {1}]
  %s8 = inlined_call_operand.vmem [shape: f32[16,128], index: 8, kind: output, shape index: {2}]
  %9 = xla_tuple %s6, %s7, %s8
  %s10 = sld [smem:[#allocation0]]
  $region89: #{multi_rnn_forward.3} parent=0
    _
  %s12 = ssub.s32 1, %s10
  %s13 = scalar_select 0, %s12, %s10
  $region1: #{multi_rnn_forward.3} parent=0
    #allocation5 [shape = 'u8[131072]{0}', space=vmem, size = 0x20000, scoped, tag = 'input window, operand 1, single buffered']
    #allocation6 [shape = 's32[2]{0}', space=sflag, size = 0x8, scoped, tag = 'scoped memory for multi_rnn_forward.3']
    #allocation7 [shape = 'u8[131072]{0}', space=vmem, size = 0x20000, scoped, tag = 'input window, operand 2, single buffered']
    #allocation8 [shape = 's32[1]{0}', space=sflag, size = 0x4, scoped, tag = 'scoped memory for multi_rnn_forward.3']
    %14 = vsyncpa [#allocation6], 0
    %15 = vsyncpa [#allocation8], 0
    loop: start=0, step=1, limit=4
    $region2: #{multi_rnn_forward.3} parent=1 // loop_pre_header
      _
    $region3: #{multi_rnn_forward.3} parent=1 // loop_header
      %s17 = sphi 0, %s21
      %p18 = scmp.ge.s32.totalorder %s17, 4
      %s27 = sphi 0, %s29
      %s30 = sphi 0, %s27
      %s31 = sphi 0, %s30
      %s47 = sphi 0, %s31
      %s51 = sphi 0, %s51
      %s53 = sphi 0, %s51
      %s54 = sphi 0, %s53
      %s68 = sphi 0, %s54
      %s72 = sphi 0, %s72
      %s74 = sphi 0, %s72
      %s75 = sphi 0, %s74
      %s89 = sphi 0, %s75
      %s93 = sphi 0, %s93
      %s95 = sphi 0, %s93
      %s96 = sphi 0, %s95
      %s110 = sphi 0, %s96
      %s114 = sphi 0, %s114
      %s116 = sphi 0, %s114
      %s117 = sphi 0, %s116
      %s131 = sphi 0, %s117
      %s135 = sphi 0, %s135
      %s137 = sphi 0, %s135
      %s138 = sphi 0, %s137
      %s152 = sphi 0, %s138
      %s158 = sphi 0, %s160
      %s161 = sphi 0, %s158
      %s162 = sphi 0, %s161
      %s178 = sphi 0, %s162
      %s182 = sphi 0, %s182
      %s184 = sphi 0, %s182
      %s185 = sphi 0, %s184
      %s199 = sphi 0, %s185
      %s203 = sphi 0, %s203
      %s205 = sphi 0, %s203
      %s206 = sphi 0, %s205
      %s220 = sphi 0, %s206
    $region4: #{multi_rnn_forward.3} parent=1 // loop_header_branch
      %20 = sbr.rel (%p18) target = $region8
    $region5: #{multi_rnn_forward.3} parent=1 // loop_body
      %s22 = ssub.s32 %s17, 1
      %s23 = ssub.s32 %s17, 2
      %s24 = sadd.s32 %s17, 1
      %s25 = ssub.s32 %s17, %s24
      %p26 = scmp.eq.s32.totalorder %s25, 0
      %s28 = sadd.s32 %s27, 1
      %s29 = scalar_select %p26, %s27, %s28
      %p32 = pneg %p26
      %p33 = scmp.eq.s32.totalorder %s17, 1
      %p34 = por %p32, %p33
      %p35 = scmp.ne.s32.totalorder %s27, %s30
      %p36 = scmp.eq.s32.totalorder %s17, 0
      %p37 = por %p35, %p36
      %p38 = scmp.ne.s32.totalorder %s27, %s30
      %p39 = scmp.eq.s32.totalorder %s22, 1
      %p40 = por %p38, %p39
      %p41 = scmp.ne.s32.totalorder %s30, %s31
      %p42 = scmp.eq.s32.totalorder %s22, 0
      %p43 = por %p41, %p42
      %p44 = scmp.ne.s32.totalorder %s30, %s31
      %p45 = scmp.eq.s32.totalorder %s23, 1
      %p46 = por %p44, %p45
      %p48 = scmp.ne.s32.totalorder %s31, %s47
      %p49 = scmp.eq.s32.totalorder %s23, 0
      %p50 = por %p48, %p49
      %s52 = sadd.s32 %s51, 1
      %p55 = scmp.eq.s32.totalorder %s17, 1
      %p56 = scmp.ne.s32.totalorder %s51, %s53
      %p57 = scmp.eq.s32.totalorder %s17, 0
      %p58 = por %p56, %p57
      %p59 = scmp.ne.s32.totalorder %s51, %s53
      %p60 = scmp.eq.s32.totalorder %s22, 1
      %p61 = por %p59, %p60
      %p62 = scmp.ne.s32.totalorder %s53, %s54
      %p63 = scmp.eq.s32.totalorder %s22, 0
      %p64 = por %p62, %p63
      %p65 = scmp.ne.s32.totalorder %s53, %s54
      %p66 = scmp.eq.s32.totalorder %s23, 1
      %p67 = por %p65, %p66
      %p69 = scmp.ne.s32.totalorder %s54, %s68
      %p70 = scmp.eq.s32.totalorder %s23, 0
      %p71 = por %p69, %p70
      %s73 = sadd.s32 %s72, 1
      %p76 = scmp.eq.s32.totalorder %s17, 1
      %p77 = scmp.ne.s32.totalorder %s72, %s74
      %p78 = scmp.eq.s32.totalorder %s17, 0
      %p79 = por %p77, %p78
      %p80 = scmp.ne.s32.totalorder %s72, %s74
      %p81 = scmp.eq.s32.totalorder %s22, 1
      %p82 = por %p80, %p81
      %p83 = scmp.ne.s32.totalorder %s74, %s75
      %p84 = scmp.eq.s32.totalorder %s22, 0
      %p85 = por %p83, %p84
      %p86 = scmp.ne.s32.totalorder %s74, %s75
      %p87 = scmp.eq.s32.totalorder %s23, 1
      %p88 = por %p86, %p87
      %p90 = scmp.ne.s32.totalorder %s75, %s89
      %p91 = scmp.eq.s32.totalorder %s23, 0
      %p92 = por %p90, %p91
      %s94 = sadd.s32 %s93, 1
      %p97 = scmp.eq.s32.totalorder %s17, 1
      %p98 = scmp.ne.s32.totalorder %s93, %s95
      %p99 = scmp.eq.s32.totalorder %s17, 0
      %p100 = por %p98, %p99
      %p101 = scmp.ne.s32.totalorder %s93, %s95
      %p102 = scmp.eq.s32.totalorder %s22, 1
      %p103 = por %p101, %p102
      %p104 = scmp.ne.s32.totalorder %s95, %s96
      %p105 = scmp.eq.s32.totalorder %s22, 0
      %p106 = por %p104, %p105
      %p107 = scmp.ne.s32.totalorder %s95, %s96
      %p108 = scmp.eq.s32.totalorder %s23, 1
      %p109 = por %p107, %p108
      %p111 = scmp.ne.s32.totalorder %s96, %s110
      %p112 = scmp.eq.s32.totalorder %s23, 0
      %p113 = por %p111, %p112
      %s115 = sadd.s32 %s114, 1
      %p118 = scmp.eq.s32.totalorder %s17, 1
      %p119 = scmp.ne.s32.totalorder %s114, %s116
      %p120 = scmp.eq.s32.totalorder %s17, 0
      %p121 = por %p119, %p120
      %p122 = scmp.ne.s32.totalorder %s114, %s116
      %p123 = scmp.eq.s32.totalorder %s22, 1
      %p124 = por %p122, %p123
      %p125 = scmp.ne.s32.totalorder %s116, %s117
      %p126 = scmp.eq.s32.totalorder %s22, 0
      %p127 = por %p125, %p126
      %p128 = scmp.ne.s32.totalorder %s116, %s117
      %p129 = scmp.eq.s32.totalorder %s23, 1
      %p130 = por %p128, %p129
      %p132 = scmp.ne.s32.totalorder %s117, %s131
      %p133 = scmp.eq.s32.totalorder %s23, 0
      %p134 = por %p132, %p133
      %s136 = sadd.s32 %s135, 1
      %p139 = scmp.eq.s32.totalorder %s17, 1
      %p140 = scmp.ne.s32.totalorder %s135, %s137
      %p141 = scmp.eq.s32.totalorder %s17, 0
      %p142 = por %p140, %p141
      %p143 = scmp.ne.s32.totalorder %s135, %s137
      %p144 = scmp.eq.s32.totalorder %s22, 1
      %p145 = por %p143, %p144
      %p146 = scmp.ne.s32.totalorder %s137, %s138
      %p147 = scmp.eq.s32.totalorder %s22, 0
      %p148 = por %p146, %p147
      %p149 = scmp.ne.s32.totalorder %s137, %s138
      %p150 = scmp.eq.s32.totalorder %s23, 1
      %p151 = por %p149, %p150
      %p153 = scmp.ne.s32.totalorder %s138, %s152
      %p154 = scmp.eq.s32.totalorder %s23, 0
      %p155 = por %p153, %p154
      %s156 = ssub.s32 %s17, %s24
      %p157 = scmp.eq.s32.totalorder %s156, 0
      %s159 = sadd.s32 %s158, 1
      %s160 = scalar_select %p157, %s158, %s159
      %p163 = pneg %p157
      %p164 = scmp.eq.s32.totalorder %s17, 1
      %p165 = por %p163, %p164
      %p166 = scmp.ne.s32.totalorder %s158, %s161
      %p167 = scmp.eq.s32.totalorder %s17, 0
      %p168 = por %p166, %p167
      %p169 = scmp.ne.s32.totalorder %s158, %s161
      %p170 = scmp.eq.s32.totalorder %s22, 1
      %p171 = por %p169, %p170
      %p172 = scmp.ne.s32.totalorder %s161, %s162
      %p173 = scmp.eq.s32.totalorder %s22, 0
      %p174 = por %p172, %p173
      %p175 = scmp.ne.s32.totalorder %s161, %s162
      %p176 = scmp.eq.s32.totalorder %s23, 1
      %p177 = por %p175, %p176
      %p179 = scmp.ne.s32.totalorder %s162, %s178
      %p180 = scmp.eq.s32.totalorder %s23, 0
      %p181 = por %p179, %p180
      %s183 = sadd.s32 %s182, 1
      %p186 = scmp.eq.s32.totalorder %s17, 1
      %p187 = scmp.ne.s32.totalorder %s182, %s184
      %p188 = scmp.eq.s32.totalorder %s17, 0
      %p189 = por %p187, %p188
      %p190 = scmp.ne.s32.totalorder %s182, %s184
      %p191 = scmp.eq.s32.totalorder %s22, 1
      %p192 = por %p190, %p191
      %p193 = scmp.ne.s32.totalorder %s184, %s185
      %p194 = scmp.eq.s32.totalorder %s22, 0
      %p195 = por %p193, %p194
      %p196 = scmp.ne.s32.totalorder %s184, %s185
      %p197 = scmp.eq.s32.totalorder %s23, 1
      %p198 = por %p196, %p197
      %p200 = scmp.ne.s32.totalorder %s185, %s199
      %p201 = scmp.eq.s32.totalorder %s23, 0
      %p202 = por %p200, %p201
      %s204 = sadd.s32 %s203, 1
      %p207 = scmp.eq.s32.totalorder %s17, 1
      %p208 = scmp.ne.s32.totalorder %s203, %s205
      %p209 = scmp.eq.s32.totalorder %s17, 0
      %p210 = por %p208, %p209
      %p211 = scmp.ne.s32.totalorder %s203, %s205
      %p212 = scmp.eq.s32.totalorder %s22, 1
      %p213 = por %p211, %p212
      %p214 = scmp.ne.s32.totalorder %s205, %s206
      %p215 = scmp.eq.s32.totalorder %s22, 0
      %p216 = por %p214, %p215
      %p217 = scmp.ne.s32.totalorder %s205, %s206
      %p218 = scmp.eq.s32.totalorder %s23, 1
      %p219 = por %p217, %p218
      %p221 = scmp.ne.s32.totalorder %s206, %s220
      %p222 = scmp.eq.s32.totalorder %s23, 0
      %p223 = por %p221, %p222
      %p224 = scmp.le.s32.totalorder 1, %s17
      %p225 = scmp.lt.s32.totalorder %s17, 3
      %p226 = pnand %p224, %p225
      %p227 = pneg %p226
      // Predicated region
      $region9: #{multi_rnn_forward.3} parent=5 // pred_check
        _
      $region10: #{multi_rnn_forward.3} parent=5 // pred_check_branch
        %229 = sbr.rel (%p226) target = $region12
      $region11: #{multi_rnn_forward.3} parent=5 // pred_region
        %s230 = ssub.s32 %s17, 1
        // Predicated region
        $region13: #{multi_rnn_forward.3} parent=11 // pred_check
          %p231 = pneg %p64
        $region14: #{multi_rnn_forward.3} parent=11 // pred_check_branch
          %233 = sbr.rel (%p231) target = $region16
        $region15: #{multi_rnn_forward.3} parent=11 // pred_region
          %235 = vsyncadd [#allocation6], 0
          %s236 = sshll.u32 %s1, 4
          %s237 = int_to_ptr.hbm [resolvable:$true] %s236
          %s238 = sshll.u32 [#allocation5], 4
          %s239 = int_to_ptr.vmem [resolvable:$true] %s238
          %244 = dma.hbm_to_vmem [thread:$0]  %s237, 4096, %s239, [#allocation6], 256, 256, 16
        $region16: #{multi_rnn_forward.3} parent=11 // pred_fallthru
          _
        // Predicated region
        $region17: #{multi_rnn_forward.3} parent=11 // pred_check
          %p245 = pneg %p85
        $region18: #{multi_rnn_forward.3} parent=11 // pred_check_branch
          %247 = sbr.rel (%p245) target = $region20
        $region19: #{multi_rnn_forward.3} parent=11 // pred_region
          %249 = vsyncadd [#allocation8], 0
          %s250 = sshll.u32 %s2, 4
          %s251 = int_to_ptr.hbm [resolvable:$true] %s250
          %s252 = sshll.u32 [#allocation7], 4
          %s253 = int_to_ptr.vmem [resolvable:$true] %s252
          %258 = dma.hbm_to_vmem [thread:$0]  %s251, 4096, %s253, [#allocation8], 256, 256, 16
        $region20: #{multi_rnn_forward.3} parent=11 // pred_fallthru
          _
        // Predicated region
        $region21: #{multi_rnn_forward.3} parent=11 // pred_check
          %p259 = pneg %p106
        $region22: #{multi_rnn_forward.3} parent=11 // pred_check_branch
          %261 = sbr.rel (%p259) target = $region24
        $region23: #{multi_rnn_forward.3} parent=11 // pred_region
          _
        $region24: #{multi_rnn_forward.3} parent=11 // pred_fallthru
          _
        // Predicated region
        $region25: #{multi_rnn_forward.3} parent=11 // pred_check
          %p262 = pneg %p127
        $region26: #{multi_rnn_forward.3} parent=11 // pred_check_branch
          %264 = sbr.rel (%p262) target = $region28
        $region27: #{multi_rnn_forward.3} parent=11 // pred_region
          _
        $region28: #{multi_rnn_forward.3} parent=11 // pred_fallthru
          _
        // Predicated region
        $region29: #{multi_rnn_forward.3} parent=11 // pred_check
          %p265 = pneg %p148
        $region30: #{multi_rnn_forward.3} parent=11 // pred_check_branch
          %267 = sbr.rel (%p265) target = $region32
        $region31: #{multi_rnn_forward.3} parent=11 // pred_region
          _
        $region32: #{multi_rnn_forward.3} parent=11 // pred_fallthru
          _
      $region12: #{multi_rnn_forward.3} parent=5 // pred_fallthru
        _
      %p268 = scmp.lt.s32.totalorder %s17, 2
      // Predicated region
      $region33: #{multi_rnn_forward.3} parent=5 // pred_check
        %p269 = pneg %p268
      $region34: #{multi_rnn_forward.3} parent=5 // pred_check_branch
        %271 = sbr.rel (%p269) target = $region36
      $region35: #{multi_rnn_forward.3} parent=5 // pred_region
        // Predicated region
        $region37: #{multi_rnn_forward.3} parent=35 // pred_check
          %p272 = pneg %p37
        $region38: #{multi_rnn_forward.3} parent=35 // pred_check_branch
          %274 = sbr.rel (%p272) target = $region40
        $region39: #{multi_rnn_forward.3} parent=35 // pred_region
          %s275 = smul.u32 16, %s17
          %p276 = scmp.lt.s32.totalorder %s275, 31
          %s277 = scalar_select %p276, %s275, 31
          %s278 = smul.addr %s277, 4
          %s279 = scalar_lea.vmem %s0, %s278
          %s280 = smul.u32 16, %s17
        $region40: #{multi_rnn_forward.3} parent=35 // pred_fallthru
          _
      $region36: #{multi_rnn_forward.3} parent=5 // pred_fallthru
        _
      %p281 = scmp.le.s32.totalorder 1, %s17
      %p282 = scmp.lt.s32.totalorder %s17, 3
      %p283 = pnand %p281, %p282
      %p284 = pneg %p283
      // Predicated region
      $region41: #{multi_rnn_forward.3} parent=5 // pred_check
        _
      $region42: #{multi_rnn_forward.3} parent=5 // pred_check_branch
        %286 = sbr.rel (%p283) target = $region44
      $region43: #{multi_rnn_forward.3} parent=5 // pred_region
        %s287 = ssub.s32 %s17, 1
        // Predicated region
        $region45: #{multi_rnn_forward.3} parent=43 // pred_check
          %p288 = pneg %p64
        $region46: #{multi_rnn_forward.3} parent=43 // pred_check_branch
          %290 = sbr.rel (%p288) target = $region48
        $region47: #{multi_rnn_forward.3} parent=43 // pred_region
          %292 = dma.done [#allocation6], 4096
        $region48: #{multi_rnn_forward.3} parent=43 // pred_fallthru
          _
        // Predicated region
        $region49: #{multi_rnn_forward.3} parent=43 // pred_check
          %p293 = pneg %p85
        $region50: #{multi_rnn_forward.3} parent=43 // pred_check_branch
          %295 = sbr.rel (%p293) target = $region52
        $region51: #{multi_rnn_forward.3} parent=43 // pred_region
          %297 = dma.done [#allocation8], 4096
        $region52: #{multi_rnn_forward.3} parent=43 // pred_fallthru
          _
        %s298 = smul.u32 16, %s22
        %p299 = scmp.lt.s32.totalorder %s298, 31
        %s300 = scalar_select %p299, %s298, 31
        %s301 = smul.addr %s300, 4
        %s302 = scalar_lea.vmem %s0, %s301
        %p303 = pneg %p43
        %p304 = pneg %p40
        %p305 = pneg %p64
        %p306 = pneg %p61
        %p307 = pneg %p85
        %p308 = pneg %p82
        %p309 = pneg %p106
        %p310 = pneg %p103
        %p311 = pneg %p127
        %p312 = pneg %p124
        %p313 = pneg %p148
        %p314 = pneg %p145
        %p315 = pneg %p174
        %p316 = pneg %p171
        %s317 = smul.u32 16, %s22
        %p318 = scmp.lt.s32.totalorder %s317, 31
        %s319 = scalar_select %p318, %s317, 31
        %s320 = smul.addr %s319, 8
        %s321 = scalar_lea.vmem %s6, %s320
        %p322 = pneg %p195
        %p323 = pneg %p192
        %p324 = pneg %p216
        %p325 = pneg %p213
        %s326 = smul.u32 16, %s22
        %p327 = scmp.lt.s32.totalorder %s326, 31
        %s328 = scalar_select %p327, %s326, 31
        %s329 = smul.addr %s328, 4
        %s330 = scalar_lea.vmem %s0, %s329
        %s331 = smul.u32 16, %s22
        %s332 = smul.u32 16, %s22
        %p333 = scmp.lt.s32.totalorder %s332, 31
        %s334 = scalar_select %p333, %s332, 31
        %s335 = smul.addr %s334, 8
        %s336 = scalar_lea.vmem %s6, %s335
        %s337 = smul.u32 16, %s22
        %p338 = scmp.eq.s32.totalorder %s22, 0
        // Predicated region
        $region53: #{multi_rnn_forward.3} parent=43 // pred_check
          %p339 = pneg %p338
        $region54: #{multi_rnn_forward.3} parent=43 // pred_check_branch
          %341 = sbr.rel (%p339) target = $region56
        $region55: #{multi_rnn_forward.3} parent=43 // pred_region
          %v342 = vld [vmem:[%s4] sm:$0xff]
          %v343 = vld [vmem:[%s4 + $0x8] sm:$0xff]
          %344 = vst [vmem:[#allocation2] sm:$0xff] %v342
          %345 = vst [vmem:[#allocation2 + $0x8] sm:$0xff] %v343
          %v346 = vld [vmem:[%s5] sm:$0xff]
          %v347 = vld [vmem:[%s5 + $0x8] sm:$0xff]
          %348 = vst [vmem:[#allocation3] sm:$0xff] %v346
          %349 = vst [vmem:[#allocation3 + $0x8] sm:$0xff] %v347
        $region56: #{multi_rnn_forward.3} parent=43 // pred_fallthru
          _
        %v350 = vld [vmem:[%s330] sm:$0xf]
        %v351 = vld [vmem:[%s330 + $0x4] sm:$0xf]
        %v352 = vld [vmem:[%s330 + $0x8] sm:$0xf]
        %v353 = vld [vmem:[%s330 + $0xc] sm:$0xf]
        %v354 = vld [vmem:[%s330 + $0x10] sm:$0xf]
        %v355 = vld [vmem:[%s330 + $0x14] sm:$0xf]
        %v356 = vld [vmem:[%s330 + $0x18] sm:$0xf]
        %v357 = vld [vmem:[%s330 + $0x1c] sm:$0xf]
        %v358 = vld [vmem:[%s330 + $0x20] sm:$0xf]
        %v359 = vld [vmem:[%s330 + $0x24] sm:$0xf]
        %v360 = vld [vmem:[%s330 + $0x28] sm:$0xf]
        %v361 = vld [vmem:[%s330 + $0x2c] sm:$0xf]
        %v362 = vld [vmem:[%s330 + $0x30] sm:$0xf]
        %v363 = vld [vmem:[%s330 + $0x34] sm:$0xf]
        %v364 = vld [vmem:[%s330 + $0x38] sm:$0xf]
        %v365 = vld [vmem:[%s330 + $0x3c] sm:$0xf]
        %v366 = vld [vmem:[#allocation5] sm:$0xff]
        %v367 = vld [vmem:[#allocation5 + $0x8] sm:$0xff]
        %v368 = vld [vmem:[#allocation5 + $0x10] sm:$0xff]
        %v369 = vld [vmem:[#allocation5 + $0x18] sm:$0xff]
        %v370 = vld [vmem:[#allocation5 + $0x20] sm:$0xff]
        %v371 = vld [vmem:[#allocation5 + $0x28] sm:$0xff]
        %v372 = vld [vmem:[#allocation5 + $0x30] sm:$0xff]
        %v373 = vld [vmem:[#allocation5 + $0x38] sm:$0xff]
        %v374 = vld [vmem:[#allocation5 + $0x40] sm:$0xff]
        %v375 = vld [vmem:[#allocation5 + $0x48] sm:$0xff]
        %v376 = vld [vmem:[#allocation5 + $0x50] sm:$0xff]
        %v377 = vld [vmem:[#allocation5 + $0x58] sm:$0xff]
        %v378 = vld [vmem:[#allocation5 + $0x60] sm:$0xff]
        %v379 = vld [vmem:[#allocation5 + $0x68] sm:$0xff]
        %v380 = vld [vmem:[#allocation5 + $0x70] sm:$0xff]
        %v381 = vld [vmem:[#allocation5 + $0x78] sm:$0xff]
        %v382 = vld [vmem:[#allocation5 + $0x80] sm:$0xff]
        %v383 = vld [vmem:[#allocation5 + $0x88] sm:$0xff]
        %v384 = vld [vmem:[#allocation5 + $0x90] sm:$0xff]
        %v385 = vld [vmem:[#allocation5 + $0x98] sm:$0xff]
        %v386 = vld [vmem:[#allocation5 + $0xa0] sm:$0xff]
        %v387 = vld [vmem:[#allocation5 + $0xa8] sm:$0xff]
        %v388 = vld [vmem:[#allocation5 + $0xb0] sm:$0xff]
        %v389 = vld [vmem:[#allocation5 + $0xb8] sm:$0xff]
        %v390 = vld [vmem:[#allocation5 + $0xc0] sm:$0xff]
        %v391 = vld [vmem:[#allocation5 + $0xc8] sm:$0xff]
        %v392 = vld [vmem:[#allocation5 + $0xd0] sm:$0xff]
        %v393 = vld [vmem:[#allocation5 + $0xd8] sm:$0xff]
        %v394 = vld [vmem:[#allocation5 + $0xe0] sm:$0xff]
        %v395 = vld [vmem:[#allocation5 + $0xe8] sm:$0xff]
        %v396 = vld [vmem:[#allocation5 + $0xf0] sm:$0xff]
        %v397 = vld [vmem:[#allocation5 + $0xf8] sm:$0xff]
        %v398 = vld [vmem:[%s3] sm:$0xf]
        %v400 = vperm.slane %v398, 0
        %v401 = vperm.slane %v398, 1
        %v402 = vperm.slane %v398, 2
        %v403 = vperm.slane %v398, 3
        %v424 = vunpack.c.l.b16 %v350
        %v425 = vunpack.c.l.b16 %v351
        %v426 = vunpack.c.l.b16 %v352
        %v427 = vunpack.c.l.b16 %v353
        %v428 = vunpack.c.l.b16 %v354
        %v429 = vunpack.c.l.b16 %v355
        %v430 = vunpack.c.l.b16 %v356
        %v431 = vunpack.c.l.b16 %v357
        %v432 = vunpack.c.l.b16 %v358
        %v433 = vunpack.c.l.b16 %v359
        %v434 = vunpack.c.l.b16 %v360
        %v435 = vunpack.c.l.b16 %v361
        %v436 = vunpack.c.l.b16 %v362
        %v437 = vunpack.c.l.b16 %v363
        %v438 = vunpack.c.l.b16 %v364
        %v439 = vunpack.c.l.b16 %v365
        %v440 = vpack.c.b16 %v425, %v424
        %v441 = vpack.c.b16 %v427, %v426
        %v442 = vpack.c.b16 %v429, %v428
        %v443 = vpack.c.b16 %v431, %v430
        %v444 = vpack.c.b16 %v433, %v432
        %v445 = vpack.c.b16 %v435, %v434
        %v446 = vpack.c.b16 %v437, %v436
        %v447 = vpack.c.b16 %v439, %v438
        %v488 = vunpack.c.l.b16 %v366
        %v489 = vunpack.c.h.b16 %v366
        %v490 = vunpack.c.l.b16 %v367
        %v491 = vunpack.c.h.b16 %v367
        %v492 = vunpack.c.l.b16 %v368
        %v493 = vunpack.c.h.b16 %v368
        %v494 = vunpack.c.l.b16 %v369
        %v495 = vunpack.c.h.b16 %v369
        %v496 = vunpack.c.l.b16 %v370
        %v497 = vunpack.c.h.b16 %v370
        %v498 = vunpack.c.l.b16 %v371
        %v499 = vunpack.c.h.b16 %v371
        %v500 = vunpack.c.l.b16 %v372
        %v501 = vunpack.c.h.b16 %v372
        %v502 = vunpack.c.l.b16 %v373
        %v503 = vunpack.c.h.b16 %v373
        %v504 = vunpack.c.l.b16 %v374
        %v505 = vunpack.c.h.b16 %v374
        %v506 = vunpack.c.l.b16 %v375
        %v507 = vunpack.c.h.b16 %v375
        %v508 = vunpack.c.l.b16 %v376
        %v509 = vunpack.c.h.b16 %v376
        %v510 = vunpack.c.l.b16 %v377
        %v511 = vunpack.c.h.b16 %v377
        %v512 = vunpack.c.l.b16 %v378
        %v513 = vunpack.c.h.b16 %v378
        %v514 = vunpack.c.l.b16 %v379
        %v515 = vunpack.c.h.b16 %v379
        %v516 = vunpack.c.l.b16 %v380
        %v517 = vunpack.c.h.b16 %v380
        %v518 = vunpack.c.l.b16 %v381
        %v519 = vunpack.c.h.b16 %v381
        %v520 = vunpack.c.l.b16 %v382
        %v521 = vunpack.c.h.b16 %v382
        %v522 = vunpack.c.l.b16 %v383
        %v523 = vunpack.c.h.b16 %v383
        %v524 = vunpack.c.l.b16 %v384
        %v525 = vunpack.c.h.b16 %v384
        %v526 = vunpack.c.l.b16 %v385
        %v527 = vunpack.c.h.b16 %v385
        %v528 = vunpack.c.l.b16 %v386
        %v529 = vunpack.c.h.b16 %v386
        %v530 = vunpack.c.l.b16 %v387
        %v531 = vunpack.c.h.b16 %v387
        %v532 = vunpack.c.l.b16 %v388
        %v533 = vunpack.c.h.b16 %v388
        %v534 = vunpack.c.l.b16 %v389
        %v535 = vunpack.c.h.b16 %v389
        %v536 = vunpack.c.l.b16 %v390
        %v537 = vunpack.c.h.b16 %v390
        %v538 = vunpack.c.l.b16 %v391
        %v539 = vunpack.c.h.b16 %v391
        %v540 = vunpack.c.l.b16 %v392
        %v541 = vunpack.c.h.b16 %v392
        %v542 = vunpack.c.l.b16 %v393
        %v543 = vunpack.c.h.b16 %v393
        %v544 = vunpack.c.l.b16 %v394
        %v545 = vunpack.c.h.b16 %v394
        %v546 = vunpack.c.l.b16 %v395
        %v547 = vunpack.c.h.b16 %v395
        %v548 = vunpack.c.l.b16 %v396
        %v549 = vunpack.c.h.b16 %v396
        %v550 = vunpack.c.l.b16 %v397
        %v551 = vunpack.c.h.b16 %v397
        %v552 = vpack.c.b16 %v492, %v488
        %v553 = vpack.c.b16 %v493, %v489
        %v554 = vpack.c.b16 %v494, %v490
        %v555 = vpack.c.b16 %v495, %v491
        %v556 = vpack.c.b16 %v500, %v496
        %v557 = vpack.c.b16 %v501, %v497
        %v558 = vpack.c.b16 %v502, %v498
        %v559 = vpack.c.b16 %v503, %v499
        %v560 = vpack.c.b16 %v508, %v504
        %v561 = vpack.c.b16 %v509, %v505
        %v562 = vpack.c.b16 %v510, %v506
        %v563 = vpack.c.b16 %v511, %v507
        %v564 = vpack.c.b16 %v516, %v512
        %v565 = vpack.c.b16 %v517, %v513
        %v566 = vpack.c.b16 %v518, %v514
        %v567 = vpack.c.b16 %v519, %v515
        %v568 = vpack.c.b16 %v524, %v520
        %v569 = vpack.c.b16 %v525, %v521
        %v570 = vpack.c.b16 %v526, %v522
        %v571 = vpack.c.b16 %v527, %v523
        %v572 = vpack.c.b16 %v532, %v528
        %v573 = vpack.c.b16 %v533, %v529
        %v574 = vpack.c.b16 %v534, %v530
        %v575 = vpack.c.b16 %v535, %v531
        %v576 = vpack.c.b16 %v540, %v536
        %v577 = vpack.c.b16 %v541, %v537
        %v578 = vpack.c.b16 %v542, %v538
        %v579 = vpack.c.b16 %v543, %v539
        %v580 = vpack.c.b16 %v548, %v544
        %v581 = vpack.c.b16 %v549, %v545
        %v582 = vpack.c.b16 %v550, %v546
        %v583 = vpack.c.b16 %v551, %v547
        %616 = vmatpush.bf16.msra.mxu0 %v580
        %617 = vmatpush.bf16.msra.mxu0 %v576
        %618 = vmatpush.bf16.msra.mxu0 %v572
        %619 = vmatpush.bf16.msra.mxu0 %v568
        %620 = vmatpush.bf16.msra.mxu0 %v564
        %621 = vmatpush.bf16.msra.mxu0 %v560
        %622 = vmatpush.bf16.msra.mxu0 %v556
        %623 = vmatpush.bf16.msra.mxu0 %v552
        %624 = vmatmul.bf16.gmra.mxu0 %v440
        %v625 = vpop.f32.mrf.mxu0
        %v626 = vadd.f32 %v400, %v625
        %v627 = vpop.f32.mrf.mxu0
        %v628 = vadd.f32 %v400, %v627
        %629 = vmatmul.bf16.gmra.mxu0 %v441
        %v630 = vpop.f32.mrf.mxu0
        %v631 = vadd.f32 %v400, %v630
        %v632 = vpop.f32.mrf.mxu0
        %v633 = vadd.f32 %v400, %v632
        %634 = vmatmul.bf16.gmra.mxu0 %v442
        %v635 = vpop.f32.mrf.mxu0
        %v636 = vadd.f32 %v400, %v635
        %v637 = vpop.f32.mrf.mxu0
        %v638 = vadd.f32 %v400, %v637
        %639 = vmatmul.bf16.gmra.mxu0 %v443
        %v640 = vpop.f32.mrf.mxu0
        %v641 = vadd.f32 %v400, %v640
        %v642 = vpop.f32.mrf.mxu0
        %v643 = vadd.f32 %v400, %v642
        %644 = vmatmul.bf16.gmra.mxu0 %v444
        %v645 = vpop.f32.mrf.mxu0
        %v646 = vadd.f32 %v400, %v645
        %v647 = vpop.f32.mrf.mxu0
        %v648 = vadd.f32 %v400, %v647
        %649 = vmatmul.bf16.gmra.mxu0 %v445
        %v650 = vpop.f32.mrf.mxu0
        %v651 = vadd.f32 %v400, %v650
        %v652 = vpop.f32.mrf.mxu0
        %v653 = vadd.f32 %v400, %v652
        %654 = vmatmul.bf16.gmra.mxu0 %v446
        %v655 = vpop.f32.mrf.mxu0
        %v656 = vadd.f32 %v400, %v655
        %v657 = vpop.f32.mrf.mxu0
        %v658 = vadd.f32 %v400, %v657
        %659 = vmatmul.bf16.gmra.mxu0 %v447
        %v660 = vpop.f32.mrf.mxu0
        %v661 = vadd.f32 %v400, %v660
        %v662 = vpop.f32.mrf.mxu0
        %v663 = vadd.f32 %v400, %v662
        %664 = vdwg.mxu0
        %665 = vmatpush.bf16.msra.mxu0 %v581
        %666 = vmatpush.bf16.msra.mxu0 %v577
        %667 = vmatpush.bf16.msra.mxu0 %v573
        %668 = vmatpush.bf16.msra.mxu0 %v569
        %669 = vmatpush.bf16.msra.mxu0 %v565
        %670 = vmatpush.bf16.msra.mxu0 %v561
        %671 = vmatpush.bf16.msra.mxu0 %v557
        %672 = vmatpush.bf16.msra.mxu0 %v553
        %673 = vmatmul.bf16.gmra.mxu0 %v440
        %v674 = vpop.f32.mrf.mxu0
        %v675 = vadd.f32 %v401, %v674
        %v676 = vpop.f32.mrf.mxu0
        %v677 = vadd.f32 %v401, %v676
        %678 = vmatmul.bf16.gmra.mxu0 %v441
        %v679 = vpop.f32.mrf.mxu0
        %v680 = vadd.f32 %v401, %v679
        %v681 = vpop.f32.mrf.mxu0
        %v682 = vadd.f32 %v401, %v681
        %683 = vmatmul.bf16.gmra.mxu0 %v442
        %v684 = vpop.f32.mrf.mxu0
        %v685 = vadd.f32 %v401, %v684
        %v686 = vpop.f32.mrf.mxu0
        %v687 = vadd.f32 %v401, %v686
        %688 = vmatmul.bf16.gmra.mxu0 %v443
        %v689 = vpop.f32.mrf.mxu0
        %v690 = vadd.f32 %v401, %v689
        %v691 = vpop.f32.mrf.mxu0
        %v692 = vadd.f32 %v401, %v691
        %693 = vmatmul.bf16.gmra.mxu0 %v444
        %v694 = vpop.f32.mrf.mxu0
        %v695 = vadd.f32 %v401, %v694
        %v696 = vpop.f32.mrf.mxu0
        %v697 = vadd.f32 %v401, %v696
        %698 = vmatmul.bf16.gmra.mxu0 %v445
        %v699 = vpop.f32.mrf.mxu0
        %v700 = vadd.f32 %v401, %v699
        %v701 = vpop.f32.mrf.mxu0
        %v702 = vadd.f32 %v401, %v701
        %703 = vmatmul.bf16.gmra.mxu0 %v446
        %v704 = vpop.f32.mrf.mxu0
        %v705 = vadd.f32 %v401, %v704
        %v706 = vpop.f32.mrf.mxu0
        %v707 = vadd.f32 %v401, %v706
        %708 = vmatmul.bf16.gmra.mxu0 %v447
        %v709 = vpop.f32.mrf.mxu0
        %v710 = vadd.f32 %v401, %v709
        %v711 = vpop.f32.mrf.mxu0
        %v712 = vadd.f32 %v401, %v711
        %713 = vdwg.mxu0
        %714 = vmatpush.bf16.msra.mxu0 %v582
        %715 = vmatpush.bf16.msra.mxu0 %v578
        %716 = vmatpush.bf16.msra.mxu0 %v574
        %717 = vmatpush.bf16.msra.mxu0 %v570
        %718 = vmatpush.bf16.msra.mxu0 %v566
        %719 = vmatpush.bf16.msra.mxu0 %v562
        %720 = vmatpush.bf16.msra.mxu0 %v558
        %721 = vmatpush.bf16.msra.mxu0 %v554
        %722 = vmatmul.bf16.gmra.mxu0 %v440
        %v723 = vpop.f32.mrf.mxu0
        %v724 = vadd.f32 %v402, %v723
        %v725 = vpop.f32.mrf.mxu0
        %v726 = vadd.f32 %v402, %v725
        %727 = vmatmul.bf16.gmra.mxu0 %v441
        %v728 = vpop.f32.mrf.mxu0
        %v729 = vadd.f32 %v402, %v728
        %v730 = vpop.f32.mrf.mxu0
        %v731 = vadd.f32 %v402, %v730
        %732 = vmatmul.bf16.gmra.mxu0 %v442
        %v733 = vpop.f32.mrf.mxu0
        %v734 = vadd.f32 %v402, %v733
        %v735 = vpop.f32.mrf.mxu0
        %v736 = vadd.f32 %v402, %v735
        %737 = vmatmul.bf16.gmra.mxu0 %v443
        %v738 = vpop.f32.mrf.mxu0
        %v739 = vadd.f32 %v402, %v738
        %v740 = vpop.f32.mrf.mxu0
        %v741 = vadd.f32 %v402, %v740
        %742 = vmatmul.bf16.gmra.mxu0 %v444
        %v743 = vpop.f32.mrf.mxu0
        %v744 = vadd.f32 %v402, %v743
        %v745 = vpop.f32.mrf.mxu0
        %v746 = vadd.f32 %v402, %v745
        %747 = vmatmul.bf16.gmra.mxu0 %v445
        %v748 = vpop.f32.mrf.mxu0
        %v749 = vadd.f32 %v402, %v748
        %v750 = vpop.f32.mrf.mxu0
        %v751 = vadd.f32 %v402, %v750
        %752 = vmatmul.bf16.gmra.mxu0 %v446
        %v753 = vpop.f32.mrf.mxu0
        %v754 = vadd.f32 %v402, %v753
        %v755 = vpop.f32.mrf.mxu0
        %v756 = vadd.f32 %v402, %v755
        %757 = vmatmul.bf16.gmra.mxu0 %v447
        %v758 = vpop.f32.mrf.mxu0
        %v759 = vadd.f32 %v402, %v758
        %v760 = vpop.f32.mrf.mxu0
        %v761 = vadd.f32 %v402, %v760
        %762 = vdwg.mxu0
        %763 = vmatpush.bf16.msra.mxu0 %v583
        %764 = vmatpush.bf16.msra.mxu0 %v579
        %765 = vmatpush.bf16.msra.mxu0 %v575
        %766 = vmatpush.bf16.msra.mxu0 %v571
        %767 = vmatpush.bf16.msra.mxu0 %v567
        %768 = vmatpush.bf16.msra.mxu0 %v563
        %769 = vmatpush.bf16.msra.mxu0 %v559
        %770 = vmatpush.bf16.msra.mxu0 %v555
        %771 = vmatmul.bf16.gmra.mxu0 %v440
        %v772 = vpop.f32.mrf.mxu0
        %v773 = vadd.f32 %v403, %v772
        %v774 = vpop.f32.mrf.mxu0
        %v775 = vadd.f32 %v403, %v774
        %776 = vmatmul.bf16.gmra.mxu0 %v441
        %v777 = vpop.f32.mrf.mxu0
        %v778 = vadd.f32 %v403, %v777
        %v779 = vpop.f32.mrf.mxu0
        %v780 = vadd.f32 %v403, %v779
        %781 = vmatmul.bf16.gmra.mxu0 %v442
        %v782 = vpop.f32.mrf.mxu0
        %v783 = vadd.f32 %v403, %v782
        %v784 = vpop.f32.mrf.mxu0
        %v785 = vadd.f32 %v403, %v784
        %786 = vmatmul.bf16.gmra.mxu0 %v443
        %v787 = vpop.f32.mrf.mxu0
        %v788 = vadd.f32 %v403, %v787
        %v789 = vpop.f32.mrf.mxu0
        %v790 = vadd.f32 %v403, %v789
        %791 = vmatmul.bf16.gmra.mxu0 %v444
        %v792 = vpop.f32.mrf.mxu0
        %v793 = vadd.f32 %v403, %v792
        %v794 = vpop.f32.mrf.mxu0
        %v795 = vadd.f32 %v403, %v794
        %796 = vmatmul.bf16.gmra.mxu0 %v445
        %v797 = vpop.f32.mrf.mxu0
        %v798 = vadd.f32 %v403, %v797
        %v799 = vpop.f32.mrf.mxu0
        %v800 = vadd.f32 %v403, %v799
        %801 = vmatmul.bf16.gmra.mxu0 %v446
        %v802 = vpop.f32.mrf.mxu0
        %v803 = vadd.f32 %v403, %v802
        %v804 = vpop.f32.mrf.mxu0
        %v805 = vadd.f32 %v403, %v804
        %806 = vmatmul.bf16.gmra.mxu0 %v447
        %v807 = vpop.f32.mrf.mxu0
        %v808 = vadd.f32 %v403, %v807
        %v809 = vpop.f32.mrf.mxu0
        %v810 = vadd.f32 %v403, %v809
        %811 = vdwg.mxu0
        %812 = vst [vmem:[#allocation4] sm:$0xff] %v626
        %813 = vst [vmem:[#allocation4 + $0x8] sm:$0xff] %v675
        %814 = vst [vmem:[#allocation4 + $0x10] sm:$0xff] %v724
        %815 = vst [vmem:[#allocation4 + $0x18] sm:$0xff] %v773
        %816 = vst [vmem:[#allocation4 + $0x20] sm:$0xff] %v628
        %817 = vst [vmem:[#allocation4 + $0x28] sm:$0xff] %v677
        %818 = vst [vmem:[#allocation4 + $0x30] sm:$0xff] %v726
        %819 = vst [vmem:[#allocation4 + $0x38] sm:$0xff] %v775
        %820 = vst [vmem:[#allocation4 + $0x40] sm:$0xff] %v631
        %821 = vst [vmem:[#allocation4 + $0x48] sm:$0xff] %v680
        %822 = vst [vmem:[#allocation4 + $0x50] sm:$0xff] %v729
        %823 = vst [vmem:[#allocation4 + $0x58] sm:$0xff] %v778
        %824 = vst [vmem:[#allocation4 + $0x60] sm:$0xff] %v633
        %825 = vst [vmem:[#allocation4 + $0x68] sm:$0xff] %v682
        %826 = vst [vmem:[#allocation4 + $0x70] sm:$0xff] %v731
        %827 = vst [vmem:[#allocation4 + $0x78] sm:$0xff] %v780
        %828 = vst [vmem:[#allocation4 + $0x80] sm:$0xff] %v636
        %829 = vst [vmem:[#allocation4 + $0x88] sm:$0xff] %v685
        %830 = vst [vmem:[#allocation4 + $0x90] sm:$0xff] %v734
        %831 = vst [vmem:[#allocation4 + $0x98] sm:$0xff] %v783
        %832 = vst [vmem:[#allocation4 + $0xa0] sm:$0xff] %v638
        %833 = vst [vmem:[#allocation4 + $0xa8] sm:$0xff] %v687
        %834 = vst [vmem:[#allocation4 + $0xb0] sm:$0xff] %v736
        %835 = vst [vmem:[#allocation4 + $0xb8] sm:$0xff] %v785
        %836 = vst [vmem:[#allocation4 + $0xc0] sm:$0xff] %v641
        %837 = vst [vmem:[#allocation4 + $0xc8] sm:$0xff] %v690
        %838 = vst [vmem:[#allocation4 + $0xd0] sm:$0xff] %v739
        %839 = vst [vmem:[#allocation4 + $0xd8] sm:$0xff] %v788
        %840 = vst [vmem:[#allocation4 + $0xe0] sm:$0xff] %v643
        %841 = vst [vmem:[#allocation4 + $0xe8] sm:$0xff] %v692
        %842 = vst [vmem:[#allocation4 + $0xf0] sm:$0xff] %v741
        %843 = vst [vmem:[#allocation4 + $0xf8] sm:$0xff] %v790
        %844 = vst [vmem:[#allocation4 + $0x100] sm:$0xff] %v646
        %845 = vst [vmem:[#allocation4 + $0x108] sm:$0xff] %v695
        %846 = vst [vmem:[#allocation4 + $0x110] sm:$0xff] %v744
        %847 = vst [vmem:[#allocation4 + $0x118] sm:$0xff] %v793
        %848 = vst [vmem:[#allocation4 + $0x120] sm:$0xff] %v648
        %849 = vst [vmem:[#allocation4 + $0x128] sm:$0xff] %v697
        %850 = vst [vmem:[#allocation4 + $0x130] sm:$0xff] %v746
        %851 = vst [vmem:[#allocation4 + $0x138] sm:$0xff] %v795
        %852 = vst [vmem:[#allocation4 + $0x140] sm:$0xff] %v651
        %853 = vst [vmem:[#allocation4 + $0x148] sm:$0xff] %v700
        %854 = vst [vmem:[#allocation4 + $0x150] sm:$0xff] %v749
        %855 = vst [vmem:[#allocation4 + $0x158] sm:$0xff] %v798
        %856 = vst [vmem:[#allocation4 + $0x160] sm:$0xff] %v653
        %857 = vst [vmem:[#allocation4 + $0x168] sm:$0xff] %v702
        %858 = vst [vmem:[#allocation4 + $0x170] sm:$0xff] %v751
        %859 = vst [vmem:[#allocation4 + $0x178] sm:$0xff] %v800
        %860 = vst [vmem:[#allocation4 + $0x180] sm:$0xff] %v656
        %861 = vst [vmem:[#allocation4 + $0x188] sm:$0xff] %v705
        %862 = vst [vmem:[#allocation4 + $0x190] sm:$0xff] %v754
        %863 = vst [vmem:[#allocation4 + $0x198] sm:$0xff] %v803
        %864 = vst [vmem:[#allocation4 + $0x1a0] sm:$0xff] %v658
        %865 = vst [vmem:[#allocation4 + $0x1a8] sm:$0xff] %v707
        %866 = vst [vmem:[#allocation4 + $0x1b0] sm:$0xff] %v756
        %867 = vst [vmem:[#allocation4 + $0x1b8] sm:$0xff] %v805
        %868 = vst [vmem:[#allocation4 + $0x1c0] sm:$0xff] %v661
        %869 = vst [vmem:[#allocation4 + $0x1c8] sm:$0xff] %v710
        %870 = vst [vmem:[#allocation4 + $0x1d0] sm:$0xff] %v759
        %871 = vst [vmem:[#allocation4 + $0x1d8] sm:$0xff] %v808
        %872 = vst [vmem:[#allocation4 + $0x1e0] sm:$0xff] %v663
        %873 = vst [vmem:[#allocation4 + $0x1e8] sm:$0xff] %v712
        %874 = vst [vmem:[#allocation4 + $0x1f0] sm:$0xff] %v761
        %875 = vst [vmem:[#allocation4 + $0x1f8] sm:$0xff] %v810
        %v876 = vld [vmem:[#allocation2] sm:$0xff]
        %v877 = vld [vmem:[#allocation2 + $0x8] sm:$0xff]
        %v878 = vld [vmem:[#allocation3] sm:$0xff]
        %v879 = vld [vmem:[#allocation3 + $0x8] sm:$0xff]
        %v880 = vld [vmem:[#allocation4] sm:$0xff]
        %v881 = vld [vmem:[#allocation4 + $0x8] sm:$0xff]
        %v882 = vld [vmem:[#allocation4 + $0x10] sm:$0xff]
        %v883 = vld [vmem:[#allocation4 + $0x18] sm:$0xff]
        %v884 = vld [vmem:[#allocation4 + $0x20] sm:$0xff]
        %v885 = vld [vmem:[#allocation4 + $0x28] sm:$0xff]
        %v886 = vld [vmem:[#allocation4 + $0x30] sm:$0xff]
        %v887 = vld [vmem:[#allocation4 + $0x38] sm:$0xff]
        %v888 = vpack.c.bf16 %v877, %v876
        %v889 = vld [vmem:[#allocation7] sm:$0xff]
        %v890 = vld [vmem:[#allocation7 + $0x8] sm:$0xff]
        %v891 = vld [vmem:[#allocation7 + $0x10] sm:$0xff]
        %v892 = vld [vmem:[#allocation7 + $0x18] sm:$0xff]
        %v893 = vld [vmem:[#allocation7 + $0x20] sm:$0xff]
        %v894 = vld [vmem:[#allocation7 + $0x28] sm:$0xff]
        %v895 = vld [vmem:[#allocation7 + $0x30] sm:$0xff]
        %v896 = vld [vmem:[#allocation7 + $0x38] sm:$0xff]
        %v897 = vld [vmem:[#allocation7 + $0x40] sm:$0xff]
        %v898 = vld [vmem:[#allocation7 + $0x48] sm:$0xff]
        %v899 = vld [vmem:[#allocation7 + $0x50] sm:$0xff]
        %v900 = vld [vmem:[#allocation7 + $0x58] sm:$0xff]
        %v901 = vld [vmem:[#allocation7 + $0x60] sm:$0xff]
        %v902 = vld [vmem:[#allocation7 + $0x68] sm:$0xff]
        %v903 = vld [vmem:[#allocation7 + $0x70] sm:$0xff]
        %v904 = vld [vmem:[#allocation7 + $0x78] sm:$0xff]
        %v905 = vld [vmem:[#allocation7 + $0x80] sm:$0xff]
        %v906 = vld [vmem:[#allocation7 + $0x88] sm:$0xff]
        %v907 = vld [vmem:[#allocation7 + $0x90] sm:$0xff]
        %v908 = vld [vmem:[#allocation7 + $0x98] sm:$0xff]
        %v909 = vld [vmem:[#allocation7 + $0xa0] sm:$0xff]
        %v910 = vld [vmem:[#allocation7 + $0xa8] sm:$0xff]
        %v911 = vld [vmem:[#allocation7 + $0xb0] sm:$0xff]
        %v912 = vld [vmem:[#allocation7 + $0xb8] sm:$0xff]
        %v913 = vld [vmem:[#allocation7 + $0xc0] sm:$0xff]
        %v914 = vld [vmem:[#allocation7 + $0xc8] sm:$0xff]
        %v915 = vld [vmem:[#allocation7 + $0xd0] sm:$0xff]
        %v916 = vld [vmem:[#allocation7 + $0xd8] sm:$0xff]
        %v917 = vld [vmem:[#allocation7 + $0xe0] sm:$0xff]
        %v918 = vld [vmem:[#allocation7 + $0xe8] sm:$0xff]
        %v919 = vld [vmem:[#allocation7 + $0xf0] sm:$0xff]
        %v920 = vld [vmem:[#allocation7 + $0xf8] sm:$0xff]
        %v953 = vunpack.c.l.b16 %v889
        %v954 = vunpack.c.h.b16 %v889
        %v955 = vunpack.c.l.b16 %v890
        %v956 = vunpack.c.h.b16 %v890
        %v957 = vunpack.c.l.b16 %v891
        %v958 = vunpack.c.h.b16 %v891
        %v959 = vunpack.c.l.b16 %v892
        %v960 = vunpack.c.h.b16 %v892
        %v961 = vunpack.c.l.b16 %v893
        %v962 = vunpack.c.h.b16 %v893
        %v963 = vunpack.c.l.b16 %v894
        %v964 = vunpack.c.h.b16 %v894
        %v965 = vunpack.c.l.b16 %v895
        %v966 = vunpack.c.h.b16 %v895
        %v967 = vunpack.c.l.b16 %v896
        %v968 = vunpack.c.h.b16 %v896
        %v969 = vunpack.c.l.b16 %v897
        %v970 = vunpack.c.h.b16 %v897
        %v971 = vunpack.c.l.b16 %v898
        %v972 = vunpack.c.h.b16 %v898
        %v973 = vunpack.c.l.b16 %v899
        %v974 = vunpack.c.h.b16 %v899
        %v975 = vunpack.c.l.b16 %v900
        %v976 = vunpack.c.h.b16 %v900
        %v977 = vunpack.c.l.b16 %v901
        %v978 = vunpack.c.h.b16 %v901
        %v979 = vunpack.c.l.b16 %v902
        %v980 = vunpack.c.h.b16 %v902
        %v981 = vunpack.c.l.b16 %v903
        %v982 = vunpack.c.h.b16 %v903
        %v983 = vunpack.c.l.b16 %v904
        %v984 = vunpack.c.h.b16 %v904
        %v985 = vunpack.c.l.b16 %v905
        %v986 = vunpack.c.h.b16 %v905
        %v987 = vunpack.c.l.b16 %v906
        %v988 = vunpack.c.h.b16 %v906
        %v989 = vunpack.c.l.b16 %v907
        %v990 = vunpack.c.h.b16 %v907
        %v991 = vunpack.c.l.b16 %v908
        %v992 = vunpack.c.h.b16 %v908
        %v993 = vunpack.c.l.b16 %v909
        %v994 = vunpack.c.h.b16 %v909
        %v995 = vunpack.c.l.b16 %v910
        %v996 = vunpack.c.h.b16 %v910
        %v997 = vunpack.c.l.b16 %v911
        %v998 = vunpack.c.h.b16 %v911
        %v999 = vunpack.c.l.b16 %v912
        %v1000 = vunpack.c.h.b16 %v912
        %v1001 = vunpack.c.l.b16 %v913
        %v1002 = vunpack.c.h.b16 %v913
        %v1003 = vunpack.c.l.b16 %v914
        %v1004 = vunpack.c.h.b16 %v914
        %v1005 = vunpack.c.l.b16 %v915
        %v1006 = vunpack.c.h.b16 %v915
        %v1007 = vunpack.c.l.b16 %v916
        %v1008 = vunpack.c.h.b16 %v916
        %v1009 = vunpack.c.l.b16 %v917
        %v1010 = vunpack.c.h.b16 %v917
        %v1011 = vunpack.c.l.b16 %v918
        %v1012 = vunpack.c.h.b16 %v918
        %v1013 = vunpack.c.l.b16 %v919
        %v1014 = vunpack.c.h.b16 %v919
        %v1015 = vunpack.c.l.b16 %v920
        %v1016 = vunpack.c.h.b16 %v920
        %v1017 = vpack.c.b16 %v957, %v953
        %v1018 = vpack.c.b16 %v958, %v954
        %v1019 = vpack.c.b16 %v959, %v955
        %v1020 = vpack.c.b16 %v960, %v956
        %v1021 = vpack.c.b16 %v965, %v961
        %v1022 = vpack.c.b16 %v966, %v962
        %v1023 = vpack.c.b16 %v967, %v963
        %v1024 = vpack.c.b16 %v968, %v964
        %v1025 = vpack.c.b16 %v973, %v969
        %v1026 = vpack.c.b16 %v974, %v970
        %v1027 = vpack.c.b16 %v975, %v971
        %v1028 = vpack.c.b16 %v976, %v972
        %v1029 = vpack.c.b16 %v981, %v977
        %v1030 = vpack.c.b16 %v982, %v978
        %v1031 = vpack.c.b16 %v983, %v979
        %v1032 = vpack.c.b16 %v984, %v980
        %v1033 = vpack.c.b16 %v989, %v985
        %v1034 = vpack.c.b16 %v990, %v986
        %v1035 = vpack.c.b16 %v991, %v987
        %v1036 = vpack.c.b16 %v992, %v988
        %v1037 = vpack.c.b16 %v997, %v993
        %v1038 = vpack.c.b16 %v998, %v994
        %v1039 = vpack.c.b16 %v999, %v995
        %v1040 = vpack.c.b16 %v1000, %v996
        %v1041 = vpack.c.b16 %v1005, %v1001
        %v1042 = vpack.c.b16 %v1006, %v1002
        %v1043 = vpack.c.b16 %v1007, %v1003
        %v1044 = vpack.c.b16 %v1008, %v1004
        %v1045 = vpack.c.b16 %v1013, %v1009
        %v1046 = vpack.c.b16 %v1014, %v1010
        %v1047 = vpack.c.b16 %v1015, %v1011
        %v1048 = vpack.c.b16 %v1016, %v1012
        %1081 = vmatpush.bf16.msra.mxu0 %v1045
        %1082 = vmatpush.bf16.msra.mxu0 %v1041
        %1083 = vmatpush.bf16.msra.mxu0 %v1037
        %1084 = vmatpush.bf16.msra.mxu0 %v1033
        %1085 = vmatpush.bf16.msra.mxu0 %v1029
        %1086 = vmatpush.bf16.msra.mxu0 %v1025
        %1087 = vmatpush.bf16.msra.mxu0 %v1021
        %1088 = vmatpush.bf16.msra.mxu0 %v1017
        %1089 = vmatmul.bf16.gmra.mxu0 %v888
        %v1090 = vpop.f32.mrf.mxu0
        %v1091 = vadd.f32 0.0, %v1090
        %v1092 = vpop.f32.mrf.mxu0
        %v1093 = vadd.f32 0.0, %v1092
        %1094 = vdwg.mxu0
        %1095 = vmatpush.bf16.msra.mxu0 %v1046
        %1096 = vmatpush.bf16.msra.mxu0 %v1042
        %1097 = vmatpush.bf16.msra.mxu0 %v1038
        %1098 = vmatpush.bf16.msra.mxu0 %v1034
        %1099 = vmatpush.bf16.msra.mxu0 %v1030
        %1100 = vmatpush.bf16.msra.mxu0 %v1026
        %1101 = vmatpush.bf16.msra.mxu0 %v1022
        %1102 = vmatpush.bf16.msra.mxu0 %v1018
        %1103 = vmatmul.bf16.gmra.mxu0 %v888
        %v1104 = vpop.f32.mrf.mxu0
        %v1105 = vadd.f32 0.0, %v1104
        %v1106 = vpop.f32.mrf.mxu0
        %v1107 = vadd.f32 0.0, %v1106
        %1108 = vdwg.mxu0
        %1109 = vmatpush.bf16.msra.mxu0 %v1047
        %1110 = vmatpush.bf16.msra.mxu0 %v1043
        %1111 = vmatpush.bf16.msra.mxu0 %v1039
        %1112 = vmatpush.bf16.msra.mxu0 %v1035
        %1113 = vmatpush.bf16.msra.mxu0 %v1031
        %1114 = vmatpush.bf16.msra.mxu0 %v1027
        %1115 = vmatpush.bf16.msra.mxu0 %v1023
        %1116 = vmatpush.bf16.msra.mxu0 %v1019
        %1117 = vmatmul.bf16.gmra.mxu0 %v888
        %v1118 = vpop.f32.mrf.mxu0
        %v1119 = vadd.f32 0.0, %v1118
        %v1120 = vpop.f32.mrf.mxu0
        %v1121 = vadd.f32 0.0, %v1120
        %1122 = vdwg.mxu0
        %1123 = vmatpush.bf16.msra.mxu0 %v1048
        %1124 = vmatpush.bf16.msra.mxu0 %v1044
        %1125 = vmatpush.bf16.msra.mxu0 %v1040
        %1126 = vmatpush.bf16.msra.mxu0 %v1036
        %1127 = vmatpush.bf16.msra.mxu0 %v1032
        %1128 = vmatpush.bf16.msra.mxu0 %v1028
        %1129 = vmatpush.bf16.msra.mxu0 %v1024
        %1130 = vmatpush.bf16.msra.mxu0 %v1020
        %1131 = vmatmul.bf16.gmra.mxu0 %v888
        %v1132 = vpop.f32.mrf.mxu0
        %v1133 = vadd.f32 0.0, %v1132
        %v1134 = vpop.f32.mrf.mxu0
        %v1135 = vadd.f32 0.0, %v1134
        %1136 = vdwg.mxu0
        %v1137 = vadd.f32 %v880, %v1091
        %v1138 = vadd.f32 %v881, %v1105
        %v1139 = vadd.f32 %v882, %v1119
        %v1140 = vadd.f32 %v883, %v1133
        %v1141 = vadd.f32 %v884, %v1093
        %v1142 = vadd.f32 %v885, %v1107
        %v1143 = vadd.f32 %v886, %v1121
        %v1144 = vadd.f32 %v887, %v1135
        %v1145 = vmul.f32 %v1137, 0.5
        %v1146 = vmul.f32 %v1141, 0.5
        %v1147 = vtanh.pop %v1145
        %v1148 = vtanh.pop %v1146
        %v1149 = vadd.f32 %v1147, 1.0
        %v1150 = vadd.f32 %v1148, 1.0
        %v1151 = vmul.f32 %v1149, 0.5
        %v1152 = vmul.f32 %v1150, 0.5
        %v1153 = vmul.f32 %v1138, 0.5
        %v1154 = vmul.f32 %v1142, 0.5
        %v1155 = vtanh.pop %v1153
        %v1156 = vtanh.pop %v1154
        %v1157 = vadd.f32 %v1155, 1.0
        %v1158 = vadd.f32 %v1156, 1.0
        %v1159 = vmul.f32 %v1157, 0.5
        %v1160 = vmul.f32 %v1158, 0.5
        %v1161 = vtanh.pop %v1139
        %v1162 = vtanh.pop %v1143
        %v1163 = vmul.f32 %v1140, 0.5
        %v1164 = vmul.f32 %v1144, 0.5
        %v1165 = vtanh.pop %v1163
        %v1166 = vtanh.pop %v1164
        %v1167 = vadd.f32 %v1165, 1.0
        %v1168 = vadd.f32 %v1166, 1.0
        %v1169 = vmul.f32 %v1167, 0.5
        %v1170 = vmul.f32 %v1168, 0.5
        %v1171 = vmul.f32 %v1159, %v878
        %v1172 = vmul.f32 %v1160, %v879
        %v1173 = vmul.f32 %v1151, %v1161
        %v1174 = vmul.f32 %v1152, %v1162
        %v1175 = vadd.f32 %v1171, %v1173
        %v1176 = vadd.f32 %v1172, %v1174
        %v1177 = vtanh.pop %v1175
        %v1178 = vtanh.pop %v1176
        %v1179 = vmul.f32 %v1169, %v1177
        %v1180 = vmul.f32 %v1170, %v1178
        %s1181 = smul.u32 %s22, 8
        %p1182 = scmp.lt.s32.totalorder %s1181, 12
        %s1183 = scalar_select %p1182, 1, 0
        %v1184 = vstv %s1183
        %vm1185 = vcmp.eq.s32.totalorder %v1184, 1
        %v1186 = vsel %vm1185, %v1175, %v878
        %v1187 = vsel %vm1185, %v1176, %v879
        %v1188 = vsel %vm1185, %v1179, %v876
        %v1189 = vsel %vm1185, %v1180, %v877
        %1190 = vst [vmem:[%s336] sm:$0xff] %v1188
        %1191 = vst [vmem:[%s336 + $0x8] sm:$0xff] %v1189
        %v1192 = vld [vmem:[#allocation4 + $0x40] sm:$0xff]
        %v1193 = vld [vmem:[#allocation4 + $0x48] sm:$0xff]
        %v1194 = vld [vmem:[#allocation4 + $0x50] sm:$0xff]
        %v1195 = vld [vmem:[#allocation4 + $0x58] sm:$0xff]
        %v1196 = vld [vmem:[#allocation4 + $0x60] sm:$0xff]
        %v1197 = vld [vmem:[#allocation4 + $0x68] sm:$0xff]
        %v1198 = vld [vmem:[#allocation4 + $0x70] sm:$0xff]
        %v1199 = vld [vmem:[#allocation4 + $0x78] sm:$0xff]
        %v1200 = vpack.c.bf16 %v1189, %v1188
        %v1201 = vld [vmem:[#allocation7] sm:$0xff]
        %v1202 = vld [vmem:[#allocation7 + $0x8] sm:$0xff]
        %v1203 = vld [vmem:[#allocation7 + $0x10] sm:$0xff]
        %v1204 = vld [vmem:[#allocation7 + $0x18] sm:$0xff]
        %v1205 = vld [vmem:[#allocation7 + $0x20] sm:$0xff]
        %v1206 = vld [vmem:[#allocation7 + $0x28] sm:$0xff]
        %v1207 = vld [vmem:[#allocation7 + $0x30] sm:$0xff]
        %v1208 = vld [vmem:[#allocation7 + $0x38] sm:$0xff]
        %v1209 = vld [vmem:[#allocation7 + $0x40] sm:$0xff]
        %v1210 = vld [vmem:[#allocation7 + $0x48] sm:$0xff]
        %v1211 = vld [vmem:[#allocation7 + $0x50] sm:$0xff]
        %v1212 = vld [vmem:[#allocation7 + $0x58] sm:$0xff]
        %v1213 = vld [vmem:[#allocation7 + $0x60] sm:$0xff]
        %v1214 = vld [vmem:[#allocation7 + $0x68] sm:$0xff]
        %v1215 = vld [vmem:[#allocation7 + $0x70] sm:$0xff]
        %v1216 = vld [vmem:[#allocation7 + $0x78] sm:$0xff]
        %v1217 = vld [vmem:[#allocation7 + $0x80] sm:$0xff]
        %v1218 = vld [vmem:[#allocation7 + $0x88] sm:$0xff]
        %v1219 = vld [vmem:[#allocation7 + $0x90] sm:$0xff]
        %v1220 = vld [vmem:[#allocation7 + $0x98] sm:$0xff]
        %v1221 = vld [vmem:[#allocation7 + $0xa0] sm:$0xff]
        %v1222 = vld [vmem:[#allocation7 + $0xa8] sm:$0xff]
        %v1223 = vld [vmem:[#allocation7 + $0xb0] sm:$0xff]
        %v1224 = vld [vmem:[#allocation7 + $0xb8] sm:$0xff]
        %v1225 = vld [vmem:[#allocation7 + $0xc0] sm:$0xff]
        %v1226 = vld [vmem:[#allocation7 + $0xc8] sm:$0xff]
        %v1227 = vld [vmem:[#allocation7 + $0xd0] sm:$0xff]
        %v1228 = vld [vmem:[#allocation7 + $0xd8] sm:$0xff]
        %v1229 = vld [vmem:[#allocation7 + $0xe0] sm:$0xff]
        %v1230 = vld [vmem:[#allocation7 + $0xe8] sm:$0xff]
        %v1231 = vld [vmem:[#allocation7 + $0xf0] sm:$0xff]
        %v1232 = vld [vmem:[#allocation7 + $0xf8] sm:$0xff]
        %v1265 = vunpack.c.l.b16 %v1201
        %v1266 = vunpack.c.h.b16 %v1201
        %v1267 = vunpack.c.l.b16 %v1202
        %v1268 = vunpack.c.h.b16 %v1202
        %v1269 = vunpack.c.l.b16 %v1203
        %v1270 = vunpack.c.h.b16 %v1203
        %v1271 = vunpack.c.l.b16 %v1204
        %v1272 = vunpack.c.h.b16 %v1204
        %v1273 = vunpack.c.l.b16 %v1205
        %v1274 = vunpack.c.h.b16 %v1205
        %v1275 = vunpack.c.l.b16 %v1206
        %v1276 = vunpack.c.h.b16 %v1206
        %v1277 = vunpack.c.l.b16 %v1207
        %v1278 = vunpack.c.h.b16 %v1207
        %v1279 = vunpack.c.l.b16 %v1208
        %v1280 = vunpack.c.h.b16 %v1208
        %v1281 = vunpack.c.l.b16 %v1209
        %v1282 = vunpack.c.h.b16 %v1209
        %v1283 = vunpack.c.l.b16 %v1210
        %v1284 = vunpack.c.h.b16 %v1210
        %v1285 = vunpack.c.l.b16 %v1211
        %v1286 = vunpack.c.h.b16 %v1211
        %v1287 = vunpack.c.l.b16 %v1212
        %v1288 = vunpack.c.h.b16 %v1212
        %v1289 = vunpack.c.l.b16 %v1213
        %v1290 = vunpack.c.h.b16 %v1213
        %v1291 = vunpack.c.l.b16 %v1214
        %v1292 = vunpack.c.h.b16 %v1214
        %v1293 = vunpack.c.l.b16 %v1215
        %v1294 = vunpack.c.h.b16 %v1215
        %v1295 = vunpack.c.l.b16 %v1216
        %v1296 = vunpack.c.h.b16 %v1216
        %v1297 = vunpack.c.l.b16 %v1217
        %v1298 = vunpack.c.h.b16 %v1217
        %v1299 = vunpack.c.l.b16 %v1218
        %v1300 = vunpack.c.h.b16 %v1218
        %v1301 = vunpack.c.l.b16 %v1219
        %v1302 = vunpack.c.h.b16 %v1219
        %v1303 = vunpack.c.l.b16 %v1220
        %v1304 = vunpack.c.h.b16 %v1220
        %v1305 = vunpack.c.l.b16 %v1221
        %v1306 = vunpack.c.h.b16 %v1221
        %v1307 = vunpack.c.l.b16 %v1222
        %v1308 = vunpack.c.h.b16 %v1222
        %v1309 = vunpack.c.l.b16 %v1223
        %v1310 = vunpack.c.h.b16 %v1223
        %v1311 = vunpack.c.l.b16 %v1224
        %v1312 = vunpack.c.h.b16 %v1224
        %v1313 = vunpack.c.l.b16 %v1225
        %v1314 = vunpack.c.h.b16 %v1225
        %v1315 = vunpack.c.l.b16 %v1226
        %v1316 = vunpack.c.h.b16 %v1226
        %v1317 = vunpack.c.l.b16 %v1227
        %v1318 = vunpack.c.h.b16 %v1227
        %v1319 = vunpack.c.l.b16 %v1228
        %v1320 = vunpack.c.h.b16 %v1228
        %v1321 = vunpack.c.l.b16 %v1229
        %v1322 = vunpack.c.h.b16 %v1229
        %v1323 = vunpack.c.l.b16 %v1230
        %v1324 = vunpack.c.h.b16 %v1230
        %v1325 = vunpack.c.l.b16 %v1231
        %v1326 = vunpack.c.h.b16 %v1231
        %v1327 = vunpack.c.l.b16 %v1232
        %v1328 = vunpack.c.h.b16 %v1232
        %v1329 = vpack.c.b16 %v1269, %v1265
        %v1330 = vpack.c.b16 %v1270, %v1266
        %v1331 = vpack.c.b16 %v1271, %v1267
        %v1332 = vpack.c.b16 %v1272, %v1268
        %v1333 = vpack.c.b16 %v1277, %v1273
        %v1334 = vpack.c.b16 %v1278, %v1274
        %v1335 = vpack.c.b16 %v1279, %v1275
        %v1336 = vpack.c.b16 %v1280, %v1276
        %v1337 = vpack.c.b16 %v1285, %v1281
        %v1338 = vpack.c.b16 %v1286, %v1282
        %v1339 = vpack.c.b16 %v1287, %v1283
        %v1340 = vpack.c.b16 %v1288, %v1284
        %v1341 = vpack.c.b16 %v1293, %v1289
        %v1342 = vpack.c.b16 %v1294, %v1290
        %v1343 = vpack.c.b16 %v1295, %v1291
        %v1344 = vpack.c.b16 %v1296, %v1292
        %v1345 = vpack.c.b16 %v1301, %v1297
        %v1346 = vpack.c.b16 %v1302, %v1298
        %v1347 = vpack.c.b16 %v1303, %v1299
        %v1348 = vpack.c.b16 %v1304, %v1300
        %v1349 = vpack.c.b16 %v1309, %v1305
        %v1350 = vpack.c.b16 %v1310, %v1306
        %v1351 = vpack.c.b16 %v1311, %v1307
        %v1352 = vpack.c.b16 %v1312, %v1308
        %v1353 = vpack.c.b16 %v1317, %v1313
        %v1354 = vpack.c.b16 %v1318, %v1314
        %v1355 = vpack.c.b16 %v1319, %v1315
        %v1356 = vpack.c.b16 %v1320, %v1316
        %v1357 = vpack.c.b16 %v1325, %v1321
        %v1358 = vpack.c.b16 %v1326, %v1322
        %v1359 = vpack.c.b16 %v1327, %v1323
        %v1360 = vpack.c.b16 %v1328, %v1324
        %1393 = vmatpush.bf16.msra.mxu0 %v1357
        %1394 = vmatpush.bf16.msra.mxu0 %v1353
        %1395 = vmatpush.bf16.msra.mxu0 %v1349
        %1396 = vmatpush.bf16.msra.mxu0 %v1345
        %1397 = vmatpush.bf16.msra.mxu0 %v1341
        %1398 = vmatpush.bf16.msra.mxu0 %v1337
        %1399 = vmatpush.bf16.msra.mxu0 %v1333
        %1400 = vmatpush.bf16.msra.mxu0 %v1329
        %1401 = vmatmul.bf16.gmra.mxu0 %v1200
        %v1402 = vpop.f32.mrf.mxu0
        %v1403 = vadd.f32 0.0, %v1402
        %v1404 = vpop.f32.mrf.mxu0
        %v1405 = vadd.f32 0.0, %v1404
        %1406 = vdwg.mxu0
        %1407 = vmatpush.bf16.msra.mxu0 %v1358
        %1408 = vmatpush.bf16.msra.mxu0 %v1354
        %1409 = vmatpush.bf16.msra.mxu0 %v1350
        %1410 = vmatpush.bf16.msra.mxu0 %v1346
        %1411 = vmatpush.bf16.msra.mxu0 %v1342
        %1412 = vmatpush.bf16.msra.mxu0 %v1338
        %1413 = vmatpush.bf16.msra.mxu0 %v1334
        %1414 = vmatpush.bf16.msra.mxu0 %v1330
        %1415 = vmatmul.bf16.gmra.mxu0 %v1200
        %v1416 = vpop.f32.mrf.mxu0
        %v1417 = vadd.f32 0.0, %v1416
        %v1418 = vpop.f32.mrf.mxu0
        %v1419 = vadd.f32 0.0, %v1418
        %1420 = vdwg.mxu0
        %1421 = vmatpush.bf16.msra.mxu0 %v1359
        %1422 = vmatpush.bf16.msra.mxu0 %v1355
        %1423 = vmatpush.bf16.msra.mxu0 %v1351
        %1424 = vmatpush.bf16.msra.mxu0 %v1347
        %1425 = vmatpush.bf16.msra.mxu0 %v1343
        %1426 = vmatpush.bf16.msra.mxu0 %v1339
        %1427 = vmatpush.bf16.msra.mxu0 %v1335
        %1428 = vmatpush.bf16.msra.mxu0 %v1331
        %1429 = vmatmul.bf16.gmra.mxu0 %v1200
        %v1430 = vpop.f32.mrf.mxu0
        %v1431 = vadd.f32 0.0, %v1430
        %v1432 = vpop.f32.mrf.mxu0
        %v1433 = vadd.f32 0.0, %v1432
        %1434 = vdwg.mxu0
        %1435 = vmatpush.bf16.msra.mxu0 %v1360
        %1436 = vmatpush.bf16.msra.mxu0 %v1356
        %1437 = vmatpush.bf16.msra.mxu0 %v1352
        %1438 = vmatpush.bf16.msra.mxu0 %v1348
        %1439 = vmatpush.bf16.msra.mxu0 %v1344
        %1440 = vmatpush.bf16.msra.mxu0 %v1340
        %1441 = vmatpush.bf16.msra.mxu0 %v1336
        %1442 = vmatpush.bf16.msra.mxu0 %v1332
        %1443 = vmatmul.bf16.gmra.mxu0 %v1200
        %v1444 = vpop.f32.mrf.mxu0
        %v1445 = vadd.f32 0.0, %v1444
        %v1446 = vpop.f32.mrf.mxu0
        %v1447 = vadd.f32 0.0, %v1446
        %1448 = vdwg.mxu0
        %v1449 = vadd.f32 %v1192, %v1403
        %v1450 = vadd.f32 %v1193, %v1417
        %v1451 = vadd.f32 %v1194, %v1431
        %v1452 = vadd.f32 %v1195, %v1445
        %v1453 = vadd.f32 %v1196, %v1405
        %v1454 = vadd.f32 %v1197, %v1419
        %v1455 = vadd.f32 %v1198, %v1433
        %v1456 = vadd.f32 %v1199, %v1447
        %v1457 = vmul.f32 %v1449, 0.5
        %v1458 = vmul.f32 %v1453, 0.5
        %v1459 = vtanh.pop %v1457
        %v1460 = vtanh.pop %v1458
        %v1461 = vadd.f32 %v1459, 1.0
        %v1462 = vadd.f32 %v1460, 1.0
        %v1463 = vmul.f32 %v1461, 0.5
        %v1464 = vmul.f32 %v1462, 0.5
        %v1465 = vmul.f32 %v1450, 0.5
        %v1466 = vmul.f32 %v1454, 0.5
        %v1467 = vtanh.pop %v1465
        %v1468 = vtanh.pop %v1466
        %v1469 = vadd.f32 %v1467, 1.0
        %v1470 = vadd.f32 %v1468, 1.0
        %v1471 = vmul.f32 %v1469, 0.5
        %v1472 = vmul.f32 %v1470, 0.5
        %v1473 = vtanh.pop %v1451
        %v1474 = vtanh.pop %v1455
        %v1475 = vmul.f32 %v1452, 0.5
        %v1476 = vmul.f32 %v1456, 0.5
        %v1477 = vtanh.pop %v1475
        %v1478 = vtanh.pop %v1476
        %v1479 = vadd.f32 %v1477, 1.0
        %v1480 = vadd.f32 %v1478, 1.0
        %v1481 = vmul.f32 %v1479, 0.5
        %v1482 = vmul.f32 %v1480, 0.5
        %v1483 = vmul.f32 %v1471, %v1186
        %v1484 = vmul.f32 %v1472, %v1187
        %v1485 = vmul.f32 %v1463, %v1473
        %v1486 = vmul.f32 %v1464, %v1474
        %v1487 = vadd.f32 %v1483, %v1485
        %v1488 = vadd.f32 %v1484, %v1486
        %v1489 = vtanh.pop %v1487
        %v1490 = vtanh.pop %v1488
        %v1491 = vmul.f32 %v1481, %v1489
        %v1492 = vmul.f32 %v1482, %v1490
        %s1493 = sadd.s32 %s1181, 1
        %p1494 = scmp.lt.s32.totalorder %s1493, 12
        %s1495 = scalar_select %p1494, 1, 0
        %v1496 = vstv %s1495
        %vm1497 = vcmp.eq.s32.totalorder %v1496, 1
        %v1498 = vsel %vm1497, %v1487, %v1186
        %v1499 = vsel %vm1497, %v1488, %v1187
        %v1500 = vsel %vm1497, %v1491, %v1188
        %v1501 = vsel %vm1497, %v1492, %v1189
        %1502 = vst [vmem:[%s336 + $0x10] sm:$0xff] %v1500
        %1503 = vst [vmem:[%s336 + $0x18] sm:$0xff] %v1501
        %v1504 = vld [vmem:[#allocation4 + $0x80] sm:$0xff]
        %v1505 = vld [vmem:[#allocation4 + $0x88] sm:$0xff]
        %v1506 = vld [vmem:[#allocation4 + $0x90] sm:$0xff]
        %v1507 = vld [vmem:[#allocation4 + $0x98] sm:$0xff]
        %v1508 = vld [vmem:[#allocation4 + $0xa0] sm:$0xff]
        %v1509 = vld [vmem:[#allocation4 + $0xa8] sm:$0xff]
        %v1510 = vld [vmem:[#allocation4 + $0xb0] sm:$0xff]
        %v1511 = vld [vmem:[#allocation4 + $0xb8] sm:$0xff]
        %v1512 = vpack.c.bf16 %v1501, %v1500
        %v1513 = vld [vmem:[#allocation7] sm:$0xff]
        %v1514 = vld [vmem:[#allocation7 + $0x8] sm:$0xff]
        %v1515 = vld [vmem:[#allocation7 + $0x10] sm:$0xff]
        %v1516 = vld [vmem:[#allocation7 + $0x18] sm:$0xff]
        %v1517 = vld [vmem:[#allocation7 + $0x20] sm:$0xff]
        %v1518 = vld [vmem:[#allocation7 + $0x28] sm:$0xff]
        %v1519 = vld [vmem:[#allocation7 + $0x30] sm:$0xff]
        %v1520 = vld [vmem:[#allocation7 + $0x38] sm:$0xff]
        %v1521 = vld [vmem:[#allocation7 + $0x40] sm:$0xff]
        %v1522 = vld [vmem:[#allocation7 + $0x48] sm:$0xff]
        %v1523 = vld [vmem:[#allocation7 + $0x50] sm:$0xff]
        %v1524 = vld [vmem:[#allocation7 + $0x58] sm:$0xff]
        %v1525 = vld [vmem:[#allocation7 + $0x60] sm:$0xff]
        %v1526 = vld [vmem:[#allocation7 + $0x68] sm:$0xff]
        %v1527 = vld [vmem:[#allocation7 + $0x70] sm:$0xff]
        %v1528 = vld [vmem:[#allocation7 + $0x78] sm:$0xff]
        %v1529 = vld [vmem:[#allocation7 + $0x80] sm:$0xff]
        %v1530 = vld [vmem:[#allocation7 + $0x88] sm:$0xff]
        %v1531 = vld [vmem:[#allocation7 + $0x90] sm:$0xff]
        %v1532 = vld [vmem:[#allocation7 + $0x98] sm:$0xff]
        %v1533 = vld [vmem:[#allocation7 + $0xa0] sm:$0xff]
        %v1534 = vld [vmem:[#allocation7 + $0xa8] sm:$0xff]
        %v1535 = vld [vmem:[#allocation7 + $0xb0] sm:$0xff]
        %v1536 = vld [vmem:[#allocation7 + $0xb8] sm:$0xff]
        %v1537 = vld [vmem:[#allocation7 + $0xc0] sm:$0xff]
        %v1538 = vld [vmem:[#allocation7 + $0xc8] sm:$0xff]
        %v1539 = vld [vmem:[#allocation7 + $0xd0] sm:$0xff]
        %v1540 = vld [vmem:[#allocation7 + $0xd8] sm:$0xff]
        %v1541 = vld [vmem:[#allocation7 + $0xe0] sm:$0xff]
        %v1542 = vld [vmem:[#allocation7 + $0xe8] sm:$0xff]
        %v1543 = vld [vmem:[#allocation7 + $0xf0] sm:$0xff]
        %v1544 = vld [vmem:[#allocation7 + $0xf8] sm:$0xff]
        %v1577 = vunpack.c.l.b16 %v1513
        %v1578 = vunpack.c.h.b16 %v1513
        %v1579 = vunpack.c.l.b16 %v1514
        %v1580 = vunpack.c.h.b16 %v1514
        %v1581 = vunpack.c.l.b16 %v1515
        %v1582 = vunpack.c.h.b16 %v1515
        %v1583 = vunpack.c.l.b16 %v1516
        %v1584 = vunpack.c.h.b16 %v1516
        %v1585 = vunpack.c.l.b16 %v1517
        %v1586 = vunpack.c.h.b16 %v1517
        %v1587 = vunpack.c.l.b16 %v1518
        %v1588 = vunpack.c.h.b16 %v1518
        %v1589 = vunpack.c.l.b16 %v1519
        %v1590 = vunpack.c.h.b16 %v1519
        %v1591 = vunpack.c.l.b16 %v1520
        %v1592 = vunpack.c.h.b16 %v1520
        %v1593 = vunpack.c.l.b16 %v1521
        %v1594 = vunpack.c.h.b16 %v1521
        %v1595 = vunpack.c.l.b16 %v1522
        %v1596 = vunpack.c.h.b16 %v1522
        %v1597 = vunpack.c.l.b16 %v1523
        %v1598 = vunpack.c.h.b16 %v1523
        %v1599 = vunpack.c.l.b16 %v1524
        %v1600 = vunpack.c.h.b16 %v1524
        %v1601 = vunpack.c.l.b16 %v1525
        %v1602 = vunpack.c.h.b16 %v1525
        %v1603 = vunpack.c.l.b16 %v1526
        %v1604 = vunpack.c.h.b16 %v1526
        %v1605 = vunpack.c.l.b16 %v1527
        %v1606 = vunpack.c.h.b16 %v1527
        %v1607 = vunpack.c.l.b16 %v1528
        %v1608 = vunpack.c.h.b16 %v1528
        %v1609 = vunpack.c.l.b16 %v1529
        %v1610 = vunpack.c.h.b16 %v1529
        %v1611 = vunpack.c.l.b16 %v1530
        %v1612 = vunpack.c.h.b16 %v1530
        %v1613 = vunpack.c.l.b16 %v1531
        %v1614 = vunpack.c.h.b16 %v1531
        %v1615 = vunpack.c.l.b16 %v1532
        %v1616 = vunpack.c.h.b16 %v1532
        %v1617 = vunpack.c.l.b16 %v1533
        %v1618 = vunpack.c.h.b16 %v1533
        %v1619 = vunpack.c.l.b16 %v1534
        %v1620 = vunpack.c.h.b16 %v1534
        %v1621 = vunpack.c.l.b16 %v1535
        %v1622 = vunpack.c.h.b16 %v1535
        %v1623 = vunpack.c.l.b16 %v1536
        %v1624 = vunpack.c.h.b16 %v1536
        %v1625 = vunpack.c.l.b16 %v1537
        %v1626 = vunpack.c.h.b16 %v1537
        %v1627 = vunpack.c.l.b16 %v1538
        %v1628 = vunpack.c.h.b16 %v1538
        %v1629 = vunpack.c.l.b16 %v1539
        %v1630 = vunpack.c.h.b16 %v1539
        %v1631 = vunpack.c.l.b16 %v1540
        %v1632 = vunpack.c.h.b16 %v1540
        %v1633 = vunpack.c.l.b16 %v1541
        %v1634 = vunpack.c.h.b16 %v1541
        %v1635 = vunpack.c.l.b16 %v1542
        %v1636 = vunpack.c.h.b16 %v1542
        %v1637 = vunpack.c.l.b16 %v1543
        %v1638 = vunpack.c.h.b16 %v1543
        %v1639 = vunpack.c.l.b16 %v1544
        %v1640 = vunpack.c.h.b16 %v1544
        %v1641 = vpack.c.b16 %v1581, %v1577
        %v1642 = vpack.c.b16 %v1582, %v1578
        %v1643 = vpack.c.b16 %v1583, %v1579
        %v1644 = vpack.c.b16 %v1584, %v1580
        %v1645 = vpack.c.b16 %v1589, %v1585
        %v1646 = vpack.c.b16 %v1590, %v1586
        %v1647 = vpack.c.b16 %v1591, %v1587
        %v1648 = vpack.c.b16 %v1592, %v1588
        %v1649 = vpack.c.b16 %v1597, %v1593
        %v1650 = vpack.c.b16 %v1598, %v1594
        %v1651 = vpack.c.b16 %v1599, %v1595
        %v1652 = vpack.c.b16 %v1600, %v1596
        %v1653 = vpack.c.b16 %v1605, %v1601
        %v1654 = vpack.c.b16 %v1606, %v1602
        %v1655 = vpack.c.b16 %v1607, %v1603
        %v1656 = vpack.c.b16 %v1608, %v1604
        %v1657 = vpack.c.b16 %v1613, %v1609
        %v1658 = vpack.c.b16 %v1614, %v1610
        %v1659 = vpack.c.b16 %v1615, %v1611
        %v1660 = vpack.c.b16 %v1616, %v1612
        %v1661 = vpack.c.b16 %v1621, %v1617
        %v1662 = vpack.c.b16 %v1622, %v1618
        %v1663 = vpack.c.b16 %v1623, %v1619
        %v1664 = vpack.c.b16 %v1624, %v1620
        %v1665 = vpack.c.b16 %v1629, %v1625
        %v1666 = vpack.c.b16 %v1630, %v1626
        %v1667 = vpack.c.b16 %v1631, %v1627
        %v1668 = vpack.c.b16 %v1632, %v1628
        %v1669 = vpack.c.b16 %v1637, %v1633
        %v1670 = vpack.c.b16 %v1638, %v1634
        %v1671 = vpack.c.b16 %v1639, %v1635
        %v1672 = vpack.c.b16 %v1640, %v1636
        %1705 = vmatpush.bf16.msra.mxu0 %v1669
        %1706 = vmatpush.bf16.msra.mxu0 %v1665
        %1707 = vmatpush.bf16.msra.mxu0 %v1661
        %1708 = vmatpush.bf16.msra.mxu0 %v1657
        %1709 = vmatpush.bf16.msra.mxu0 %v1653
        %1710 = vmatpush.bf16.msra.mxu0 %v1649
        %1711 = vmatpush.bf16.msra.mxu0 %v1645
        %1712 = vmatpush.bf16.msra.mxu0 %v1641
        %1713 = vmatmul.bf16.gmra.mxu0 %v1512
        %v1714 = vpop.f32.mrf.mxu0
        %v1715 = vadd.f32 0.0, %v1714
        %v1716 = vpop.f32.mrf.mxu0
        %v1717 = vadd.f32 0.0, %v1716
        %1718 = vdwg.mxu0
        %1719 = vmatpush.bf16.msra.mxu0 %v1670
        %1720 = vmatpush.bf16.msra.mxu0 %v1666
        %1721 = vmatpush.bf16.msra.mxu0 %v1662
        %1722 = vmatpush.bf16.msra.mxu0 %v1658
        %1723 = vmatpush.bf16.msra.mxu0 %v1654
        %1724 = vmatpush.bf16.msra.mxu0 %v1650
        %1725 = vmatpush.bf16.msra.mxu0 %v1646
        %1726 = vmatpush.bf16.msra.mxu0 %v1642
        %1727 = vmatmul.bf16.gmra.mxu0 %v1512
        %v1728 = vpop.f32.mrf.mxu0
        %v1729 = vadd.f32 0.0, %v1728
        %v1730 = vpop.f32.mrf.mxu0
        %v1731 = vadd.f32 0.0, %v1730
        %1732 = vdwg.mxu0
        %1733 = vmatpush.bf16.msra.mxu0 %v1671
        %1734 = vmatpush.bf16.msra.mxu0 %v1667
        %1735 = vmatpush.bf16.msra.mxu0 %v1663
        %1736 = vmatpush.bf16.msra.mxu0 %v1659
        %1737 = vmatpush.bf16.msra.mxu0 %v1655
        %1738 = vmatpush.bf16.msra.mxu0 %v1651
        %1739 = vmatpush.bf16.msra.mxu0 %v1647
        %1740 = vmatpush.bf16.msra.mxu0 %v1643
        %1741 = vmatmul.bf16.gmra.mxu0 %v1512
        %v1742 = vpop.f32.mrf.mxu0
        %v1743 = vadd.f32 0.0, %v1742
        %v1744 = vpop.f32.mrf.mxu0
        %v1745 = vadd.f32 0.0, %v1744
        %1746 = vdwg.mxu0
        %1747 = vmatpush.bf16.msra.mxu0 %v1672
        %1748 = vmatpush.bf16.msra.mxu0 %v1668
        %1749 = vmatpush.bf16.msra.mxu0 %v1664
        %1750 = vmatpush.bf16.msra.mxu0 %v1660
        %1751 = vmatpush.bf16.msra.mxu0 %v1656
        %1752 = vmatpush.bf16.msra.mxu0 %v1652
        %1753 = vmatpush.bf16.msra.mxu0 %v1648
        %1754 = vmatpush.bf16.msra.mxu0 %v1644
        %1755 = vmatmul.bf16.gmra.mxu0 %v1512
        %v1756 = vpop.f32.mrf.mxu0
        %v1757 = vadd.f32 0.0, %v1756
        %v1758 = vpop.f32.mrf.mxu0
        %v1759 = vadd.f32 0.0, %v1758
        %1760 = vdwg.mxu0
        %v1761 = vadd.f32 %v1504, %v1715
        %v1762 = vadd.f32 %v1505, %v1729
        %v1763 = vadd.f32 %v1506, %v1743
        %v1764 = vadd.f32 %v1507, %v1757
        %v1765 = vadd.f32 %v1508, %v1717
        %v1766 = vadd.f32 %v1509, %v1731
        %v1767 = vadd.f32 %v1510, %v1745
        %v1768 = vadd.f32 %v1511, %v1759
        %v1769 = vmul.f32 %v1761, 0.5
        %v1770 = vmul.f32 %v1765, 0.5
        %v1771 = vtanh.pop %v1769
        %v1772 = vtanh.pop %v1770
        %v1773 = vadd.f32 %v1771, 1.0
        %v1774 = vadd.f32 %v1772, 1.0
        %v1775 = vmul.f32 %v1773, 0.5
        %v1776 = vmul.f32 %v1774, 0.5
        %v1777 = vmul.f32 %v1762, 0.5
        %v1778 = vmul.f32 %v1766, 0.5
        %v1779 = vtanh.pop %v1777
        %v1780 = vtanh.pop %v1778
        %v1781 = vadd.f32 %v1779, 1.0
        %v1782 = vadd.f32 %v1780, 1.0
        %v1783 = vmul.f32 %v1781, 0.5
        %v1784 = vmul.f32 %v1782, 0.5
        %v1785 = vtanh.pop %v1763
        %v1786 = vtanh.pop %v1767
        %v1787 = vmul.f32 %v1764, 0.5
        %v1788 = vmul.f32 %v1768, 0.5
        %v1789 = vtanh.pop %v1787
        %v1790 = vtanh.pop %v1788
        %v1791 = vadd.f32 %v1789, 1.0
        %v1792 = vadd.f32 %v1790, 1.0
        %v1793 = vmul.f32 %v1791, 0.5
        %v1794 = vmul.f32 %v1792, 0.5
        %v1795 = vmul.f32 %v1783, %v1498
        %v1796 = vmul.f32 %v1784, %v1499
        %v1797 = vmul.f32 %v1775, %v1785
        %v1798 = vmul.f32 %v1776, %v1786
        %v1799 = vadd.f32 %v1795, %v1797
        %v1800 = vadd.f32 %v1796, %v1798
        %v1801 = vtanh.pop %v1799
        %v1802 = vtanh.pop %v1800
        %v1803 = vmul.f32 %v1793, %v1801
        %v1804 = vmul.f32 %v1794, %v1802
        %s1805 = sadd.s32 %s1181, 2
        %p1806 = scmp.lt.s32.totalorder %s1805, 12
        %s1807 = scalar_select %p1806, 1, 0
        %v1808 = vstv %s1807
        %vm1809 = vcmp.eq.s32.totalorder %v1808, 1
        %v1810 = vsel %vm1809, %v1799, %v1498
        %v1811 = vsel %vm1809, %v1800, %v1499
        %v1812 = vsel %vm1809, %v1803, %v1500
        %v1813 = vsel %vm1809, %v1804, %v1501
        %1814 = vst [vmem:[%s336 + $0x20] sm:$0xff] %v1812
        %1815 = vst [vmem:[%s336 + $0x28] sm:$0xff] %v1813
        %v1816 = vld [vmem:[#allocation4 + $0xc0] sm:$0xff]
        %v1817 = vld [vmem:[#allocation4 + $0xc8] sm:$0xff]
        %v1818 = vld [vmem:[#allocation4 + $0xd0] sm:$0xff]
        %v1819 = vld [vmem:[#allocation4 + $0xd8] sm:$0xff]
        %v1820 = vld [vmem:[#allocation4 + $0xe0] sm:$0xff]
        %v1821 = vld [vmem:[#allocation4 + $0xe8] sm:$0xff]
        %v1822 = vld [vmem:[#allocation4 + $0xf0] sm:$0xff]
        %v1823 = vld [vmem:[#allocation4 + $0xf8] sm:$0xff]
        %v1824 = vpack.c.bf16 %v1813, %v1812
        %v1825 = vld [vmem:[#allocation7] sm:$0xff]
        %v1826 = vld [vmem:[#allocation7 + $0x8] sm:$0xff]
        %v1827 = vld [vmem:[#allocation7 + $0x10] sm:$0xff]
        %v1828 = vld [vmem:[#allocation7 + $0x18] sm:$0xff]
        %v1829 = vld [vmem:[#allocation7 + $0x20] sm:$0xff]
        %v1830 = vld [vmem:[#allocation7 + $0x28] sm:$0xff]
        %v1831 = vld [vmem:[#allocation7 + $0x30] sm:$0xff]
        %v1832 = vld [vmem:[#allocation7 + $0x38] sm:$0xff]
        %v1833 = vld [vmem:[#allocation7 + $0x40] sm:$0xff]
        %v1834 = vld [vmem:[#allocation7 + $0x48] sm:$0xff]
        %v1835 = vld [vmem:[#allocation7 + $0x50] sm:$0xff]
        %v1836 = vld [vmem:[#allocation7 + $0x58] sm:$0xff]
        %v1837 = vld [vmem:[#allocation7 + $0x60] sm:$0xff]
        %v1838 = vld [vmem:[#allocation7 + $0x68] sm:$0xff]
        %v1839 = vld [vmem:[#allocation7 + $0x70] sm:$0xff]
        %v1840 = vld [vmem:[#allocation7 + $0x78] sm:$0xff]
        %v1841 = vld [vmem:[#allocation7 + $0x80] sm:$0xff]
        %v1842 = vld [vmem:[#allocation7 + $0x88] sm:$0xff]
        %v1843 = vld [vmem:[#allocation7 + $0x90] sm:$0xff]
        %v1844 = vld [vmem:[#allocation7 + $0x98] sm:$0xff]
        %v1845 = vld [vmem:[#allocation7 + $0xa0] sm:$0xff]
        %v1846 = vld [vmem:[#allocation7 + $0xa8] sm:$0xff]
        %v1847 = vld [vmem:[#allocation7 + $0xb0] sm:$0xff]
        %v1848 = vld [vmem:[#allocation7 + $0xb8] sm:$0xff]
        %v1849 = vld [vmem:[#allocation7 + $0xc0] sm:$0xff]
        %v1850 = vld [vmem:[#allocation7 + $0xc8] sm:$0xff]
        %v1851 = vld [vmem:[#allocation7 + $0xd0] sm:$0xff]
        %v1852 = vld [vmem:[#allocation7 + $0xd8] sm:$0xff]
        %v1853 = vld [vmem:[#allocation7 + $0xe0] sm:$0xff]
        %v1854 = vld [vmem:[#allocation7 + $0xe8] sm:$0xff]
        %v1855 = vld [vmem:[#allocation7 + $0xf0] sm:$0xff]
        %v1856 = vld [vmem:[#allocation7 + $0xf8] sm:$0xff]
        %v1889 = vunpack.c.l.b16 %v1825
        %v1890 = vunpack.c.h.b16 %v1825
        %v1891 = vunpack.c.l.b16 %v1826
        %v1892 = vunpack.c.h.b16 %v1826
        %v1893 = vunpack.c.l.b16 %v1827
        %v1894 = vunpack.c.h.b16 %v1827
        %v1895 = vunpack.c.l.b16 %v1828
        %v1896 = vunpack.c.h.b16 %v1828
        %v1897 = vunpack.c.l.b16 %v1829
        %v1898 = vunpack.c.h.b16 %v1829
        %v1899 = vunpack.c.l.b16 %v1830
        %v1900 = vunpack.c.h.b16 %v1830
        %v1901 = vunpack.c.l.b16 %v1831
        %v1902 = vunpack.c.h.b16 %v1831
        %v1903 = vunpack.c.l.b16 %v1832
        %v1904 = vunpack.c.h.b16 %v1832
        %v1905 = vunpack.c.l.b16 %v1833
        %v1906 = vunpack.c.h.b16 %v1833
        %v1907 = vunpack.c.l.b16 %v1834
        %v1908 = vunpack.c.h.b16 %v1834
        %v1909 = vunpack.c.l.b16 %v1835
        %v1910 = vunpack.c.h.b16 %v1835
        %v1911 = vunpack.c.l.b16 %v1836
        %v1912 = vunpack.c.h.b16 %v1836
        %v1913 = vunpack.c.l.b16 %v1837
        %v1914 = vunpack.c.h.b16 %v1837
        %v1915 = vunpack.c.l.b16 %v1838
        %v1916 = vunpack.c.h.b16 %v1838
        %v1917 = vunpack.c.l.b16 %v1839
        %v1918 = vunpack.c.h.b16 %v1839
        %v1919 = vunpack.c.l.b16 %v1840
        %v1920 = vunpack.c.h.b16 %v1840
        %v1921 = vunpack.c.l.b16 %v1841
        %v1922 = vunpack.c.h.b16 %v1841
        %v1923 = vunpack.c.l.b16 %v1842
        %v1924 = vunpack.c.h.b16 %v1842
        %v1925 = vunpack.c.l.b16 %v1843
        %v1926 = vunpack.c.h.b16 %v1843
        %v1927 = vunpack.c.l.b16 %v1844
        %v1928 = vunpack.c.h.b16 %v1844
        %v1929 = vunpack.c.l.b16 %v1845
        %v1930 = vunpack.c.h.b16 %v1845
        %v1931 = vunpack.c.l.b16 %v1846
        %v1932 = vunpack.c.h.b16 %v1846
        %v1933 = vunpack.c.l.b16 %v1847
        %v1934 = vunpack.c.h.b16 %v1847
        %v1935 = vunpack.c.l.b16 %v1848
        %v1936 = vunpack.c.h.b16 %v1848
        %v1937 = vunpack.c.l.b16 %v1849
        %v1938 = vunpack.c.h.b16 %v1849
        %v1939 = vunpack.c.l.b16 %v1850
        %v1940 = vunpack.c.h.b16 %v1850
        %v1941 = vunpack.c.l.b16 %v1851
        %v1942 = vunpack.c.h.b16 %v1851
        %v1943 = vunpack.c.l.b16 %v1852
        %v1944 = vunpack.c.h.b16 %v1852
        %v1945 = vunpack.c.l.b16 %v1853
        %v1946 = vunpack.c.h.b16 %v1853
        %v1947 = vunpack.c.l.b16 %v1854
        %v1948 = vunpack.c.h.b16 %v1854
        %v1949 = vunpack.c.l.b16 %v1855
        %v1950 = vunpack.c.h.b16 %v1855
        %v1951 = vunpack.c.l.b16 %v1856
        %v1952 = vunpack.c.h.b16 %v1856
        %v1953 = vpack.c.b16 %v1893, %v1889
        %v1954 = vpack.c.b16 %v1894, %v1890
        %v1955 = vpack.c.b16 %v1895, %v1891
        %v1956 = vpack.c.b16 %v1896, %v1892
        %v1957 = vpack.c.b16 %v1901, %v1897
        %v1958 = vpack.c.b16 %v1902, %v1898
        %v1959 = vpack.c.b16 %v1903, %v1899
        %v1960 = vpack.c.b16 %v1904, %v1900
        %v1961 = vpack.c.b16 %v1909, %v1905
        %v1962 = vpack.c.b16 %v1910, %v1906
        %v1963 = vpack.c.b16 %v1911, %v1907
        %v1964 = vpack.c.b16 %v1912, %v1908
        %v1965 = vpack.c.b16 %v1917, %v1913
        %v1966 = vpack.c.b16 %v1918, %v1914
        %v1967 = vpack.c.b16 %v1919, %v1915
        %v1968 = vpack.c.b16 %v1920, %v1916
        %v1969 = vpack.c.b16 %v1925, %v1921
        %v1970 = vpack.c.b16 %v1926, %v1922
        %v1971 = vpack.c.b16 %v1927, %v1923
        %v1972 = vpack.c.b16 %v1928, %v1924
        %v1973 = vpack.c.b16 %v1933, %v1929
        %v1974 = vpack.c.b16 %v1934, %v1930
        %v1975 = vpack.c.b16 %v1935, %v1931
        %v1976 = vpack.c.b16 %v1936, %v1932
        %v1977 = vpack.c.b16 %v1941, %v1937
        %v1978 = vpack.c.b16 %v1942, %v1938
        %v1979 = vpack.c.b16 %v1943, %v1939
        %v1980 = vpack.c.b16 %v1944, %v1940
        %v1981 = vpack.c.b16 %v1949, %v1945
        %v1982 = vpack.c.b16 %v1950, %v1946
        %v1983 = vpack.c.b16 %v1951, %v1947
        %v1984 = vpack.c.b16 %v1952, %v1948
        %2017 = vmatpush.bf16.msra.mxu0 %v1981
        %2018 = vmatpush.bf16.msra.mxu0 %v1977
        %2019 = vmatpush.bf16.msra.mxu0 %v1973
        %2020 = vmatpush.bf16.msra.mxu0 %v1969
        %2021 = vmatpush.bf16.msra.mxu0 %v1965
        %2022 = vmatpush.bf16.msra.mxu0 %v1961
        %2023 = vmatpush.bf16.msra.mxu0 %v1957
        %2024 = vmatpush.bf16.msra.mxu0 %v1953
        %2025 = vmatmul.bf16.gmra.mxu0 %v1824
        %v2026 = vpop.f32.mrf.mxu0
        %v2027 = vadd.f32 0.0, %v2026
        %v2028 = vpop.f32.mrf.mxu0
        %v2029 = vadd.f32 0.0, %v2028
        %2030 = vdwg.mxu0
        %2031 = vmatpush.bf16.msra.mxu0 %v1982
        %2032 = vmatpush.bf16.msra.mxu0 %v1978
        %2033 = vmatpush.bf16.msra.mxu0 %v1974
        %2034 = vmatpush.bf16.msra.mxu0 %v1970
        %2035 = vmatpush.bf16.msra.mxu0 %v1966
        %2036 = vmatpush.bf16.msra.mxu0 %v1962
        %2037 = vmatpush.bf16.msra.mxu0 %v1958
        %2038 = vmatpush.bf16.msra.mxu0 %v1954
        %2039 = vmatmul.bf16.gmra.mxu0 %v1824
        %v2040 = vpop.f32.mrf.mxu0
        %v2041 = vadd.f32 0.0, %v2040
        %v2042 = vpop.f32.mrf.mxu0
        %v2043 = vadd.f32 0.0, %v2042
        %2044 = vdwg.mxu0
        %2045 = vmatpush.bf16.msra.mxu0 %v1983
        %2046 = vmatpush.bf16.msra.mxu0 %v1979
        %2047 = vmatpush.bf16.msra.mxu0 %v1975
        %2048 = vmatpush.bf16.msra.mxu0 %v1971
        %2049 = vmatpush.bf16.msra.mxu0 %v1967
        %2050 = vmatpush.bf16.msra.mxu0 %v1963
        %2051 = vmatpush.bf16.msra.mxu0 %v1959
        %2052 = vmatpush.bf16.msra.mxu0 %v1955
        %2053 = vmatmul.bf16.gmra.mxu0 %v1824
        %v2054 = vpop.f32.mrf.mxu0
        %v2055 = vadd.f32 0.0, %v2054
        %v2056 = vpop.f32.mrf.mxu0
        %v2057 = vadd.f32 0.0, %v2056
        %2058 = vdwg.mxu0
        %2059 = vmatpush.bf16.msra.mxu0 %v1984
        %2060 = vmatpush.bf16.msra.mxu0 %v1980
        %2061 = vmatpush.bf16.msra.mxu0 %v1976
        %2062 = vmatpush.bf16.msra.mxu0 %v1972
        %2063 = vmatpush.bf16.msra.mxu0 %v1968
        %2064 = vmatpush.bf16.msra.mxu0 %v1964
        %2065 = vmatpush.bf16.msra.mxu0 %v1960
        %2066 = vmatpush.bf16.msra.mxu0 %v1956
        %2067 = vmatmul.bf16.gmra.mxu0 %v1824
        %v2068 = vpop.f32.mrf.mxu0
        %v2069 = vadd.f32 0.0, %v2068
        %v2070 = vpop.f32.mrf.mxu0
        %v2071 = vadd.f32 0.0, %v2070
        %2072 = vdwg.mxu0
        %v2073 = vadd.f32 %v1816, %v2027
        %v2074 = vadd.f32 %v1817, %v2041
        %v2075 = vadd.f32 %v1818, %v2055
        %v2076 = vadd.f32 %v1819, %v2069
        %v2077 = vadd.f32 %v1820, %v2029
        %v2078 = vadd.f32 %v1821, %v2043
        %v2079 = vadd.f32 %v1822, %v2057
        %v2080 = vadd.f32 %v1823, %v2071
        %v2081 = vmul.f32 %v2073, 0.5
        %v2082 = vmul.f32 %v2077, 0.5
        %v2083 = vtanh.pop %v2081
        %v2084 = vtanh.pop %v2082
        %v2085 = vadd.f32 %v2083, 1.0
        %v2086 = vadd.f32 %v2084, 1.0
        %v2087 = vmul.f32 %v2085, 0.5
        %v2088 = vmul.f32 %v2086, 0.5
        %v2089 = vmul.f32 %v2074, 0.5
        %v2090 = vmul.f32 %v2078, 0.5
        %v2091 = vtanh.pop %v2089
        %v2092 = vtanh.pop %v2090
        %v2093 = vadd.f32 %v2091, 1.0
        %v2094 = vadd.f32 %v2092, 1.0
        %v2095 = vmul.f32 %v2093, 0.5
        %v2096 = vmul.f32 %v2094, 0.5
        %v2097 = vtanh.pop %v2075
        %v2098 = vtanh.pop %v2079
        %v2099 = vmul.f32 %v2076, 0.5
        %v2100 = vmul.f32 %v2080, 0.5
        %v2101 = vtanh.pop %v2099
        %v2102 = vtanh.pop %v2100
        %v2103 = vadd.f32 %v2101, 1.0
        %v2104 = vadd.f32 %v2102, 1.0
        %v2105 = vmul.f32 %v2103, 0.5
        %v2106 = vmul.f32 %v2104, 0.5
        %v2107 = vmul.f32 %v2095, %v1810
        %v2108 = vmul.f32 %v2096, %v1811
        %v2109 = vmul.f32 %v2087, %v2097
        %v2110 = vmul.f32 %v2088, %v2098
        %v2111 = vadd.f32 %v2107, %v2109
        %v2112 = vadd.f32 %v2108, %v2110
        %v2113 = vtanh.pop %v2111
        %v2114 = vtanh.pop %v2112
        %v2115 = vmul.f32 %v2105, %v2113
        %v2116 = vmul.f32 %v2106, %v2114
        %s2117 = sadd.s32 %s1181, 3
        %p2118 = scmp.lt.s32.totalorder %s2117, 12
        %s2119 = scalar_select %p2118, 1, 0
        %v2120 = vstv %s2119
        %vm2121 = vcmp.eq.s32.totalorder %v2120, 1
        %v2122 = vsel %vm2121, %v2111, %v1810
        %v2123 = vsel %vm2121, %v2112, %v1811
        %v2124 = vsel %vm2121, %v2115, %v1812
        %v2125 = vsel %vm2121, %v2116, %v1813
        %2126 = vst [vmem:[%s336 + $0x30] sm:$0xff] %v2124
        %2127 = vst [vmem:[%s336 + $0x38] sm:$0xff] %v2125
        %v2128 = vld [vmem:[#allocation4 + $0x100] sm:$0xff]
        %v2129 = vld [vmem:[#allocation4 + $0x108] sm:$0xff]
        %v2130 = vld [vmem:[#allocation4 + $0x110] sm:$0xff]
        %v2131 = vld [vmem:[#allocation4 + $0x118] sm:$0xff]
        %v2132 = vld [vmem:[#allocation4 + $0x120] sm:$0xff]
        %v2133 = vld [vmem:[#allocation4 + $0x128] sm:$0xff]
        %v2134 = vld [vmem:[#allocation4 + $0x130] sm:$0xff]
        %v2135 = vld [vmem:[#allocation4 + $0x138] sm:$0xff]
        %v2136 = vpack.c.bf16 %v2125, %v2124
        %v2137 = vld [vmem:[#allocation7] sm:$0xff]
        %v2138 = vld [vmem:[#allocation7 + $0x8] sm:$0xff]
        %v2139 = vld [vmem:[#allocation7 + $0x10] sm:$0xff]
        %v2140 = vld [vmem:[#allocation7 + $0x18] sm:$0xff]
        %v2141 = vld [vmem:[#allocation7 + $0x20] sm:$0xff]
        %v2142 = vld [vmem:[#allocation7 + $0x28] sm:$0xff]
        %v2143 = vld [vmem:[#allocation7 + $0x30] sm:$0xff]
        %v2144 = vld [vmem:[#allocation7 + $0x38] sm:$0xff]
        %v2145 = vld [vmem:[#allocation7 + $0x40] sm:$0xff]
        %v2146 = vld [vmem:[#allocation7 + $0x48] sm:$0xff]
        %v2147 = vld [vmem:[#allocation7 + $0x50] sm:$0xff]
        %v2148 = vld [vmem:[#allocation7 + $0x58] sm:$0xff]
        %v2149 = vld [vmem:[#allocation7 + $0x60] sm:$0xff]
        %v2150 = vld [vmem:[#allocation7 + $0x68] sm:$0xff]
        %v2151 = vld [vmem:[#allocation7 + $0x70] sm:$0xff]
        %v2152 = vld [vmem:[#allocation7 + $0x78] sm:$0xff]
        %v2153 = vld [vmem:[#allocation7 + $0x80] sm:$0xff]
        %v2154 = vld [vmem:[#allocation7 + $0x88] sm:$0xff]
        %v2155 = vld [vmem:[#allocation7 + $0x90] sm:$0xff]
        %v2156 = vld [vmem:[#allocation7 + $0x98] sm:$0xff]
        %v2157 = vld [vmem:[#allocation7 + $0xa0] sm:$0xff]
        %v2158 = vld [vmem:[#allocation7 + $0xa8] sm:$0xff]
        %v2159 = vld [vmem:[#allocation7 + $0xb0] sm:$0xff]
        %v2160 = vld [vmem:[#allocation7 + $0xb8] sm:$0xff]
        %v2161 = vld [vmem:[#allocation7 + $0xc0] sm:$0xff]
        %v2162 = vld [vmem:[#allocation7 + $0xc8] sm:$0xff]
        %v2163 = vld [vmem:[#allocation7 + $0xd0] sm:$0xff]
        %v2164 = vld [vmem:[#allocation7 + $0xd8] sm:$0xff]
        %v2165 = vld [vmem:[#allocation7 + $0xe0] sm:$0xff]
        %v2166 = vld [vmem:[#allocation7 + $0xe8] sm:$0xff]
        %v2167 = vld [vmem:[#allocation7 + $0xf0] sm:$0xff]
        %v2168 = vld [vmem:[#allocation7 + $0xf8] sm:$0xff]
        %v2201 = vunpack.c.l.b16 %v2137
        %v2202 = vunpack.c.h.b16 %v2137
        %v2203 = vunpack.c.l.b16 %v2138
        %v2204 = vunpack.c.h.b16 %v2138
        %v2205 = vunpack.c.l.b16 %v2139
        %v2206 = vunpack.c.h.b16 %v2139
        %v2207 = vunpack.c.l.b16 %v2140
        %v2208 = vunpack.c.h.b16 %v2140
        %v2209 = vunpack.c.l.b16 %v2141
        %v2210 = vunpack.c.h.b16 %v2141
        %v2211 = vunpack.c.l.b16 %v2142
        %v2212 = vunpack.c.h.b16 %v2142
        %v2213 = vunpack.c.l.b16 %v2143
        %v2214 = vunpack.c.h.b16 %v2143
        %v2215 = vunpack.c.l.b16 %v2144
        %v2216 = vunpack.c.h.b16 %v2144
        %v2217 = vunpack.c.l.b16 %v2145
        %v2218 = vunpack.c.h.b16 %v2145
        %v2219 = vunpack.c.l.b16 %v2146
        %v2220 = vunpack.c.h.b16 %v2146
        %v2221 = vunpack.c.l.b16 %v2147
        %v2222 = vunpack.c.h.b16 %v2147
        %v2223 = vunpack.c.l.b16 %v2148
        %v2224 = vunpack.c.h.b16 %v2148
        %v2225 = vunpack.c.l.b16 %v2149
        %v2226 = vunpack.c.h.b16 %v2149
        %v2227 = vunpack.c.l.b16 %v2150
        %v2228 = vunpack.c.h.b16 %v2150
        %v2229 = vunpack.c.l.b16 %v2151
        %v2230 = vunpack.c.h.b16 %v2151
        %v2231 = vunpack.c.l.b16 %v2152
        %v2232 = vunpack.c.h.b16 %v2152
        %v2233 = vunpack.c.l.b16 %v2153
        %v2234 = vunpack.c.h.b16 %v2153
        %v2235 = vunpack.c.l.b16 %v2154
        %v2236 = vunpack.c.h.b16 %v2154
        %v2237 = vunpack.c.l.b16 %v2155
        %v2238 = vunpack.c.h.b16 %v2155
        %v2239 = vunpack.c.l.b16 %v2156
        %v2240 = vunpack.c.h.b16 %v2156
        %v2241 = vunpack.c.l.b16 %v2157
        %v2242 = vunpack.c.h.b16 %v2157
        %v2243 = vunpack.c.l.b16 %v2158
        %v2244 = vunpack.c.h.b16 %v2158
        %v2245 = vunpack.c.l.b16 %v2159
        %v2246 = vunpack.c.h.b16 %v2159
        %v2247 = vunpack.c.l.b16 %v2160
        %v2248 = vunpack.c.h.b16 %v2160
        %v2249 = vunpack.c.l.b16 %v2161
        %v2250 = vunpack.c.h.b16 %v2161
        %v2251 = vunpack.c.l.b16 %v2162
        %v2252 = vunpack.c.h.b16 %v2162
        %v2253 = vunpack.c.l.b16 %v2163
        %v2254 = vunpack.c.h.b16 %v2163
        %v2255 = vunpack.c.l.b16 %v2164
        %v2256 = vunpack.c.h.b16 %v2164
        %v2257 = vunpack.c.l.b16 %v2165
        %v2258 = vunpack.c.h.b16 %v2165
        %v2259 = vunpack.c.l.b16 %v2166
        %v2260 = vunpack.c.h.b16 %v2166
        %v2261 = vunpack.c.l.b16 %v2167
        %v2262 = vunpack.c.h.b16 %v2167
        %v2263 = vunpack.c.l.b16 %v2168
        %v2264 = vunpack.c.h.b16 %v2168
        %v2265 = vpack.c.b16 %v2205, %v2201
        %v2266 = vpack.c.b16 %v2206, %v2202
        %v2267 = vpack.c.b16 %v2207, %v2203
        %v2268 = vpack.c.b16 %v2208, %v2204
        %v2269 = vpack.c.b16 %v2213, %v2209
        %v2270 = vpack.c.b16 %v2214, %v2210
        %v2271 = vpack.c.b16 %v2215, %v2211
        %v2272 = vpack.c.b16 %v2216, %v2212
        %v2273 = vpack.c.b16 %v2221, %v2217
        %v2274 = vpack.c.b16 %v2222, %v2218
        %v2275 = vpack.c.b16 %v2223, %v2219
        %v2276 = vpack.c.b16 %v2224, %v2220
        %v2277 = vpack.c.b16 %v2229, %v2225
        %v2278 = vpack.c.b16 %v2230, %v2226
        %v2279 = vpack.c.b16 %v2231, %v2227
        %v2280 = vpack.c.b16 %v2232, %v2228
        %v2281 = vpack.c.b16 %v2237, %v2233
        %v2282 = vpack.c.b16 %v2238, %v2234
        %v2283 = vpack.c.b16 %v2239, %v2235
        %v2284 = vpack.c.b16 %v2240, %v2236
        %v2285 = vpack.c.b16 %v2245, %v2241
        %v2286 = vpack.c.b16 %v2246, %v2242
        %v2287 = vpack.c.b16 %v2247, %v2243
        %v2288 = vpack.c.b16 %v2248, %v2244
        %v2289 = vpack.c.b16 %v2253, %v2249
        %v2290 = vpack.c.b16 %v2254, %v2250
        %v2291 = vpack.c.b16 %v2255, %v2251
        %v2292 = vpack.c.b16 %v2256, %v2252
        %v2293 = vpack.c.b16 %v2261, %v2257
        %v2294 = vpack.c.b16 %v2262, %v2258
        %v2295 = vpack.c.b16 %v2263, %v2259
        %v2296 = vpack.c.b16 %v2264, %v2260
        %2329 = vmatpush.bf16.msra.mxu0 %v2293
        %2330 = vmatpush.bf16.msra.mxu0 %v2289
        %2331 = vmatpush.bf16.msra.mxu0 %v2285
        %2332 = vmatpush.bf16.msra.mxu0 %v2281
        %2333 = vmatpush.bf16.msra.mxu0 %v2277
        %2334 = vmatpush.bf16.msra.mxu0 %v2273
        %2335 = vmatpush.bf16.msra.mxu0 %v2269
        %2336 = vmatpush.bf16.msra.mxu0 %v2265
        %2337 = vmatmul.bf16.gmra.mxu0 %v2136
        %v2338 = vpop.f32.mrf.mxu0
        %v2339 = vadd.f32 0.0, %v2338
        %v2340 = vpop.f32.mrf.mxu0
        %v2341 = vadd.f32 0.0, %v2340
        %2342 = vdwg.mxu0
        %2343 = vmatpush.bf16.msra.mxu0 %v2294
        %2344 = vmatpush.bf16.msra.mxu0 %v2290
        %2345 = vmatpush.bf16.msra.mxu0 %v2286
        %2346 = vmatpush.bf16.msra.mxu0 %v2282
        %2347 = vmatpush.bf16.msra.mxu0 %v2278
        %2348 = vmatpush.bf16.msra.mxu0 %v2274
        %2349 = vmatpush.bf16.msra.mxu0 %v2270
        %2350 = vmatpush.bf16.msra.mxu0 %v2266
        %2351 = vmatmul.bf16.gmra.mxu0 %v2136
        %v2352 = vpop.f32.mrf.mxu0
        %v2353 = vadd.f32 0.0, %v2352
        %v2354 = vpop.f32.mrf.mxu0
        %v2355 = vadd.f32 0.0, %v2354
        %2356 = vdwg.mxu0
        %2357 = vmatpush.bf16.msra.mxu0 %v2295
        %2358 = vmatpush.bf16.msra.mxu0 %v2291
        %2359 = vmatpush.bf16.msra.mxu0 %v2287
        %2360 = vmatpush.bf16.msra.mxu0 %v2283
        %2361 = vmatpush.bf16.msra.mxu0 %v2279
        %2362 = vmatpush.bf16.msra.mxu0 %v2275
        %2363 = vmatpush.bf16.msra.mxu0 %v2271
        %2364 = vmatpush.bf16.msra.mxu0 %v2267
        %2365 = vmatmul.bf16.gmra.mxu0 %v2136
        %v2366 = vpop.f32.mrf.mxu0
        %v2367 = vadd.f32 0.0, %v2366
        %v2368 = vpop.f32.mrf.mxu0
        %v2369 = vadd.f32 0.0, %v2368
        %2370 = vdwg.mxu0
        %2371 = vmatpush.bf16.msra.mxu0 %v2296
        %2372 = vmatpush.bf16.msra.mxu0 %v2292
        %2373 = vmatpush.bf16.msra.mxu0 %v2288
        %2374 = vmatpush.bf16.msra.mxu0 %v2284
        %2375 = vmatpush.bf16.msra.mxu0 %v2280
        %2376 = vmatpush.bf16.msra.mxu0 %v2276
        %2377 = vmatpush.bf16.msra.mxu0 %v2272
        %2378 = vmatpush.bf16.msra.mxu0 %v2268
        %2379 = vmatmul.bf16.gmra.mxu0 %v2136
        %v2380 = vpop.f32.mrf.mxu0
        %v2381 = vadd.f32 0.0, %v2380
        %v2382 = vpop.f32.mrf.mxu0
        %v2383 = vadd.f32 0.0, %v2382
        %2384 = vdwg.mxu0
        %v2385 = vadd.f32 %v2128, %v2339
        %v2386 = vadd.f32 %v2129, %v2353
        %v2387 = vadd.f32 %v2130, %v2367
        %v2388 = vadd.f32 %v2131, %v2381
        %v2389 = vadd.f32 %v2132, %v2341
        %v2390 = vadd.f32 %v2133, %v2355
        %v2391 = vadd.f32 %v2134, %v2369
        %v2392 = vadd.f32 %v2135, %v2383
        %v2393 = vmul.f32 %v2385, 0.5
        %v2394 = vmul.f32 %v2389, 0.5
        %v2395 = vtanh.pop %v2393
        %v2396 = vtanh.pop %v2394
        %v2397 = vadd.f32 %v2395, 1.0
        %v2398 = vadd.f32 %v2396, 1.0
        %v2399 = vmul.f32 %v2397, 0.5
        %v2400 = vmul.f32 %v2398, 0.5
        %v2401 = vmul.f32 %v2386, 0.5
        %v2402 = vmul.f32 %v2390, 0.5
        %v2403 = vtanh.pop %v2401
        %v2404 = vtanh.pop %v2402
        %v2405 = vadd.f32 %v2403, 1.0
        %v2406 = vadd.f32 %v2404, 1.0
        %v2407 = vmul.f32 %v2405, 0.5
        %v2408 = vmul.f32 %v2406, 0.5
        %v2409 = vtanh.pop %v2387
        %v2410 = vtanh.pop %v2391
        %v2411 = vmul.f32 %v2388, 0.5
        %v2412 = vmul.f32 %v2392, 0.5
        %v2413 = vtanh.pop %v2411
        %v2414 = vtanh.pop %v2412
        %v2415 = vadd.f32 %v2413, 1.0
        %v2416 = vadd.f32 %v2414, 1.0
        %v2417 = vmul.f32 %v2415, 0.5
        %v2418 = vmul.f32 %v2416, 0.5
        %v2419 = vmul.f32 %v2407, %v2122
        %v2420 = vmul.f32 %v2408, %v2123
        %v2421 = vmul.f32 %v2399, %v2409
        %v2422 = vmul.f32 %v2400, %v2410
        %v2423 = vadd.f32 %v2419, %v2421
        %v2424 = vadd.f32 %v2420, %v2422
        %v2425 = vtanh.pop %v2423
        %v2426 = vtanh.pop %v2424
        %v2427 = vmul.f32 %v2417, %v2425
        %v2428 = vmul.f32 %v2418, %v2426
        %s2429 = sadd.s32 %s1181, 4
        %p2430 = scmp.lt.s32.totalorder %s2429, 12
        %s2431 = scalar_select %p2430, 1, 0
        %v2432 = vstv %s2431
        %vm2433 = vcmp.eq.s32.totalorder %v2432, 1
        %v2434 = vsel %vm2433, %v2423, %v2122
        %v2435 = vsel %vm2433, %v2424, %v2123
        %v2436 = vsel %vm2433, %v2427, %v2124
        %v2437 = vsel %vm2433, %v2428, %v2125
        %2438 = vst [vmem:[%s336 + $0x40] sm:$0xff] %v2436
        %2439 = vst [vmem:[%s336 + $0x48] sm:$0xff] %v2437
        %v2440 = vld [vmem:[#allocation4 + $0x140] sm:$0xff]
        %v2441 = vld [vmem:[#allocation4 + $0x148] sm:$0xff]
        %v2442 = vld [vmem:[#allocation4 + $0x150] sm:$0xff]
        %v2443 = vld [vmem:[#allocation4 + $0x158] sm:$0xff]
        %v2444 = vld [vmem:[#allocation4 + $0x160] sm:$0xff]
        %v2445 = vld [vmem:[#allocation4 + $0x168] sm:$0xff]
        %v2446 = vld [vmem:[#allocation4 + $0x170] sm:$0xff]
        %v2447 = vld [vmem:[#allocation4 + $0x178] sm:$0xff]
        %v2448 = vpack.c.bf16 %v2437, %v2436
        %v2449 = vld [vmem:[#allocation7] sm:$0xff]
        %v2450 = vld [vmem:[#allocation7 + $0x8] sm:$0xff]
        %v2451 = vld [vmem:[#allocation7 + $0x10] sm:$0xff]
        %v2452 = vld [vmem:[#allocation7 + $0x18] sm:$0xff]
        %v2453 = vld [vmem:[#allocation7 + $0x20] sm:$0xff]
        %v2454 = vld [vmem:[#allocation7 + $0x28] sm:$0xff]
        %v2455 = vld [vmem:[#allocation7 + $0x30] sm:$0xff]
        %v2456 = vld [vmem:[#allocation7 + $0x38] sm:$0xff]
        %v2457 = vld [vmem:[#allocation7 + $0x40] sm:$0xff]
        %v2458 = vld [vmem:[#allocation7 + $0x48] sm:$0xff]
        %v2459 = vld [vmem:[#allocation7 + $0x50] sm:$0xff]
        %v2460 = vld [vmem:[#allocation7 + $0x58] sm:$0xff]
        %v2461 = vld [vmem:[#allocation7 + $0x60] sm:$0xff]
        %v2462 = vld [vmem:[#allocation7 + $0x68] sm:$0xff]
        %v2463 = vld [vmem:[#allocation7 + $0x70] sm:$0xff]
        %v2464 = vld [vmem:[#allocation7 + $0x78] sm:$0xff]
        %v2465 = vld [vmem:[#allocation7 + $0x80] sm:$0xff]
        %v2466 = vld [vmem:[#allocation7 + $0x88] sm:$0xff]
        %v2467 = vld [vmem:[#allocation7 + $0x90] sm:$0xff]
        %v2468 = vld [vmem:[#allocation7 + $0x98] sm:$0xff]
        %v2469 = vld [vmem:[#allocation7 + $0xa0] sm:$0xff]
        %v2470 = vld [vmem:[#allocation7 + $0xa8] sm:$0xff]
        %v2471 = vld [vmem:[#allocation7 + $0xb0] sm:$0xff]
        %v2472 = vld [vmem:[#allocation7 + $0xb8] sm:$0xff]
        %v2473 = vld [vmem:[#allocation7 + $0xc0] sm:$0xff]
        %v2474 = vld [vmem:[#allocation7 + $0xc8] sm:$0xff]
        %v2475 = vld [vmem:[#allocation7 + $0xd0] sm:$0xff]
        %v2476 = vld [vmem:[#allocation7 + $0xd8] sm:$0xff]
        %v2477 = vld [vmem:[#allocation7 + $0xe0] sm:$0xff]
        %v2478 = vld [vmem:[#allocation7 + $0xe8] sm:$0xff]
        %v2479 = vld [vmem:[#allocation7 + $0xf0] sm:$0xff]
        %v2480 = vld [vmem:[#allocation7 + $0xf8] sm:$0xff]
        %v2513 = vunpack.c.l.b16 %v2449
        %v2514 = vunpack.c.h.b16 %v2449
        %v2515 = vunpack.c.l.b16 %v2450
        %v2516 = vunpack.c.h.b16 %v2450
        %v2517 = vunpack.c.l.b16 %v2451
        %v2518 = vunpack.c.h.b16 %v2451
        %v2519 = vunpack.c.l.b16 %v2452
        %v2520 = vunpack.c.h.b16 %v2452
        %v2521 = vunpack.c.l.b16 %v2453
        %v2522 = vunpack.c.h.b16 %v2453
        %v2523 = vunpack.c.l.b16 %v2454
        %v2524 = vunpack.c.h.b16 %v2454
        %v2525 = vunpack.c.l.b16 %v2455
        %v2526 = vunpack.c.h.b16 %v2455
        %v2527 = vunpack.c.l.b16 %v2456
        %v2528 = vunpack.c.h.b16 %v2456
        %v2529 = vunpack.c.l.b16 %v2457
        %v2530 = vunpack.c.h.b16 %v2457
        %v2531 = vunpack.c.l.b16 %v2458
        %v2532 = vunpack.c.h.b16 %v2458
        %v2533 = vunpack.c.l.b16 %v2459
        %v2534 = vunpack.c.h.b16 %v2459
        %v2535 = vunpack.c.l.b16 %v2460
        %v2536 = vunpack.c.h.b16 %v2460
        %v2537 = vunpack.c.l.b16 %v2461
        %v2538 = vunpack.c.h.b16 %v2461
        %v2539 = vunpack.c.l.b16 %v2462
        %v2540 = vunpack.c.h.b16 %v2462
        %v2541 = vunpack.c.l.b16 %v2463
        %v2542 = vunpack.c.h.b16 %v2463
        %v2543 = vunpack.c.l.b16 %v2464
        %v2544 = vunpack.c.h.b16 %v2464
        %v2545 = vunpack.c.l.b16 %v2465
        %v2546 = vunpack.c.h.b16 %v2465
        %v2547 = vunpack.c.l.b16 %v2466
        %v2548 = vunpack.c.h.b16 %v2466
        %v2549 = vunpack.c.l.b16 %v2467
        %v2550 = vunpack.c.h.b16 %v2467
        %v2551 = vunpack.c.l.b16 %v2468
        %v2552 = vunpack.c.h.b16 %v2468
        %v2553 = vunpack.c.l.b16 %v2469
        %v2554 = vunpack.c.h.b16 %v2469
        %v2555 = vunpack.c.l.b16 %v2470
        %v2556 = vunpack.c.h.b16 %v2470
        %v2557 = vunpack.c.l.b16 %v2471
        %v2558 = vunpack.c.h.b16 %v2471
        %v2559 = vunpack.c.l.b16 %v2472
        %v2560 = vunpack.c.h.b16 %v2472
        %v2561 = vunpack.c.l.b16 %v2473
        %v2562 = vunpack.c.h.b16 %v2473
        %v2563 = vunpack.c.l.b16 %v2474
        %v2564 = vunpack.c.h.b16 %v2474
        %v2565 = vunpack.c.l.b16 %v2475
        %v2566 = vunpack.c.h.b16 %v2475
        %v2567 = vunpack.c.l.b16 %v2476
        %v2568 = vunpack.c.h.b16 %v2476
        %v2569 = vunpack.c.l.b16 %v2477
        %v2570 = vunpack.c.h.b16 %v2477
        %v2571 = vunpack.c.l.b16 %v2478
        %v2572 = vunpack.c.h.b16 %v2478
        %v2573 = vunpack.c.l.b16 %v2479
        %v2574 = vunpack.c.h.b16 %v2479
        %v2575 = vunpack.c.l.b16 %v2480
        %v2576 = vunpack.c.h.b16 %v2480
        %v2577 = vpack.c.b16 %v2517, %v2513
        %v2578 = vpack.c.b16 %v2518, %v2514
        %v2579 = vpack.c.b16 %v2519, %v2515
        %v2580 = vpack.c.b16 %v2520, %v2516
        %v2581 = vpack.c.b16 %v2525, %v2521
        %v2582 = vpack.c.b16 %v2526, %v2522
        %v2583 = vpack.c.b16 %v2527, %v2523
        %v2584 = vpack.c.b16 %v2528, %v2524
        %v2585 = vpack.c.b16 %v2533, %v2529
        %v2586 = vpack.c.b16 %v2534, %v2530
        %v2587 = vpack.c.b16 %v2535, %v2531
        %v2588 = vpack.c.b16 %v2536, %v2532
        %v2589 = vpack.c.b16 %v2541, %v2537
        %v2590 = vpack.c.b16 %v2542, %v2538
        %v2591 = vpack.c.b16 %v2543, %v2539
        %v2592 = vpack.c.b16 %v2544, %v2540
        %v2593 = vpack.c.b16 %v2549, %v2545
        %v2594 = vpack.c.b16 %v2550, %v2546
        %v2595 = vpack.c.b16 %v2551, %v2547
        %v2596 = vpack.c.b16 %v2552, %v2548
        %v2597 = vpack.c.b16 %v2557, %v2553
        %v2598 = vpack.c.b16 %v2558, %v2554
        %v2599 = vpack.c.b16 %v2559, %v2555
        %v2600 = vpack.c.b16 %v2560, %v2556
        %v2601 = vpack.c.b16 %v2565, %v2561
        %v2602 = vpack.c.b16 %v2566, %v2562
        %v2603 = vpack.c.b16 %v2567, %v2563
        %v2604 = vpack.c.b16 %v2568, %v2564
        %v2605 = vpack.c.b16 %v2573, %v2569
        %v2606 = vpack.c.b16 %v2574, %v2570
        %v2607 = vpack.c.b16 %v2575, %v2571
        %v2608 = vpack.c.b16 %v2576, %v2572
        %2641 = vmatpush.bf16.msra.mxu0 %v2605
        %2642 = vmatpush.bf16.msra.mxu0 %v2601
        %2643 = vmatpush.bf16.msra.mxu0 %v2597
        %2644 = vmatpush.bf16.msra.mxu0 %v2593
        %2645 = vmatpush.bf16.msra.mxu0 %v2589
        %2646 = vmatpush.bf16.msra.mxu0 %v2585
        %2647 = vmatpush.bf16.msra.mxu0 %v2581
        %2648 = vmatpush.bf16.msra.mxu0 %v2577
        %2649 = vmatmul.bf16.gmra.mxu0 %v2448
        %v2650 = vpop.f32.mrf.mxu0
        %v2651 = vadd.f32 0.0, %v2650
        %v2652 = vpop.f32.mrf.mxu0
        %v2653 = vadd.f32 0.0, %v2652
        %2654 = vdwg.mxu0
        %2655 = vmatpush.bf16.msra.mxu0 %v2606
        %2656 = vmatpush.bf16.msra.mxu0 %v2602
        %2657 = vmatpush.bf16.msra.mxu0 %v2598
        %2658 = vmatpush.bf16.msra.mxu0 %v2594
        %2659 = vmatpush.bf16.msra.mxu0 %v2590
        %2660 = vmatpush.bf16.msra.mxu0 %v2586
        %2661 = vmatpush.bf16.msra.mxu0 %v2582
        %2662 = vmatpush.bf16.msra.mxu0 %v2578
        %2663 = vmatmul.bf16.gmra.mxu0 %v2448
        %v2664 = vpop.f32.mrf.mxu0
        %v2665 = vadd.f32 0.0, %v2664
        %v2666 = vpop.f32.mrf.mxu0
        %v2667 = vadd.f32 0.0, %v2666
        %2668 = vdwg.mxu0
        %2669 = vmatpush.bf16.msra.mxu0 %v2607
        %2670 = vmatpush.bf16.msra.mxu0 %v2603
        %2671 = vmatpush.bf16.msra.mxu0 %v2599
        %2672 = vmatpush.bf16.msra.mxu0 %v2595
        %2673 = vmatpush.bf16.msra.mxu0 %v2591
        %2674 = vmatpush.bf16.msra.mxu0 %v2587
        %2675 = vmatpush.bf16.msra.mxu0 %v2583
        %2676 = vmatpush.bf16.msra.mxu0 %v2579
        %2677 = vmatmul.bf16.gmra.mxu0 %v2448
        %v2678 = vpop.f32.mrf.mxu0
        %v2679 = vadd.f32 0.0, %v2678
        %v2680 = vpop.f32.mrf.mxu0
        %v2681 = vadd.f32 0.0, %v2680
        %2682 = vdwg.mxu0
        %2683 = vmatpush.bf16.msra.mxu0 %v2608
        %2684 = vmatpush.bf16.msra.mxu0 %v2604
        %2685 = vmatpush.bf16.msra.mxu0 %v2600
        %2686 = vmatpush.bf16.msra.mxu0 %v2596
        %2687 = vmatpush.bf16.msra.mxu0 %v2592
        %2688 = vmatpush.bf16.msra.mxu0 %v2588
        %2689 = vmatpush.bf16.msra.mxu0 %v2584
        %2690 = vmatpush.bf16.msra.mxu0 %v2580
        %2691 = vmatmul.bf16.gmra.mxu0 %v2448
        %v2692 = vpop.f32.mrf.mxu0
        %v2693 = vadd.f32 0.0, %v2692
        %v2694 = vpop.f32.mrf.mxu0
        %v2695 = vadd.f32 0.0, %v2694
        %2696 = vdwg.mxu0
        %v2697 = vadd.f32 %v2440, %v2651
        %v2698 = vadd.f32 %v2441, %v2665
        %v2699 = vadd.f32 %v2442, %v2679
        %v2700 = vadd.f32 %v2443, %v2693
        %v2701 = vadd.f32 %v2444, %v2653
        %v2702 = vadd.f32 %v2445, %v2667
        %v2703 = vadd.f32 %v2446, %v2681
        %v2704 = vadd.f32 %v2447, %v2695
        %v2705 = vmul.f32 %v2697, 0.5
        %v2706 = vmul.f32 %v2701, 0.5
        %v2707 = vtanh.pop %v2705
        %v2708 = vtanh.pop %v2706
        %v2709 = vadd.f32 %v2707, 1.0
        %v2710 = vadd.f32 %v2708, 1.0
        %v2711 = vmul.f32 %v2709, 0.5
        %v2712 = vmul.f32 %v2710, 0.5
        %v2713 = vmul.f32 %v2698, 0.5
        %v2714 = vmul.f32 %v2702, 0.5
        %v2715 = vtanh.pop %v2713
        %v2716 = vtanh.pop %v2714
        %v2717 = vadd.f32 %v2715, 1.0
        %v2718 = vadd.f32 %v2716, 1.0
        %v2719 = vmul.f32 %v2717, 0.5
        %v2720 = vmul.f32 %v2718, 0.5
        %v2721 = vtanh.pop %v2699
        %v2722 = vtanh.pop %v2703
        %v2723 = vmul.f32 %v2700, 0.5
        %v2724 = vmul.f32 %v2704, 0.5
        %v2725 = vtanh.pop %v2723
        %v2726 = vtanh.pop %v2724
        %v2727 = vadd.f32 %v2725, 1.0
        %v2728 = vadd.f32 %v2726, 1.0
        %v2729 = vmul.f32 %v2727, 0.5
        %v2730 = vmul.f32 %v2728, 0.5
        %v2731 = vmul.f32 %v2719, %v2434
        %v2732 = vmul.f32 %v2720, %v2435
        %v2733 = vmul.f32 %v2711, %v2721
        %v2734 = vmul.f32 %v2712, %v2722
        %v2735 = vadd.f32 %v2731, %v2733
        %v2736 = vadd.f32 %v2732, %v2734
        %v2737 = vtanh.pop %v2735
        %v2738 = vtanh.pop %v2736
        %v2739 = vmul.f32 %v2729, %v2737
        %v2740 = vmul.f32 %v2730, %v2738
        %s2741 = sadd.s32 %s1181, 5
        %p2742 = scmp.lt.s32.totalorder %s2741, 12
        %s2743 = scalar_select %p2742, 1, 0
        %v2744 = vstv %s2743
        %vm2745 = vcmp.eq.s32.totalorder %v2744, 1
        %v2746 = vsel %vm2745, %v2735, %v2434
        %v2747 = vsel %vm2745, %v2736, %v2435
        %v2748 = vsel %vm2745, %v2739, %v2436
        %v2749 = vsel %vm2745, %v2740, %v2437
        %2750 = vst [vmem:[%s336 + $0x50] sm:$0xff] %v2748
        %2751 = vst [vmem:[%s336 + $0x58] sm:$0xff] %v2749
        %v2752 = vld [vmem:[#allocation4 + $0x180] sm:$0xff]
        %v2753 = vld [vmem:[#allocation4 + $0x188] sm:$0xff]
        %v2754 = vld [vmem:[#allocation4 + $0x190] sm:$0xff]
        %v2755 = vld [vmem:[#allocation4 + $0x198] sm:$0xff]
        %v2756 = vld [vmem:[#allocation4 + $0x1a0] sm:$0xff]
        %v2757 = vld [vmem:[#allocation4 + $0x1a8] sm:$0xff]
        %v2758 = vld [vmem:[#allocation4 + $0x1b0] sm:$0xff]
        %v2759 = vld [vmem:[#allocation4 + $0x1b8] sm:$0xff]
        %v2760 = vpack.c.bf16 %v2749, %v2748
        %v2761 = vld [vmem:[#allocation7] sm:$0xff]
        %v2762 = vld [vmem:[#allocation7 + $0x8] sm:$0xff]
        %v2763 = vld [vmem:[#allocation7 + $0x10] sm:$0xff]
        %v2764 = vld [vmem:[#allocation7 + $0x18] sm:$0xff]
        %v2765 = vld [vmem:[#allocation7 + $0x20] sm:$0xff]
        %v2766 = vld [vmem:[#allocation7 + $0x28] sm:$0xff]
        %v2767 = vld [vmem:[#allocation7 + $0x30] sm:$0xff]
        %v2768 = vld [vmem:[#allocation7 + $0x38] sm:$0xff]
        %v2769 = vld [vmem:[#allocation7 + $0x40] sm:$0xff]
        %v2770 = vld [vmem:[#allocation7 + $0x48] sm:$0xff]
        %v2771 = vld [vmem:[#allocation7 + $0x50] sm:$0xff]
        %v2772 = vld [vmem:[#allocation7 + $0x58] sm:$0xff]
        %v2773 = vld [vmem:[#allocation7 + $0x60] sm:$0xff]
        %v2774 = vld [vmem:[#allocation7 + $0x68] sm:$0xff]
        %v2775 = vld [vmem:[#allocation7 + $0x70] sm:$0xff]
        %v2776 = vld [vmem:[#allocation7 + $0x78] sm:$0xff]
        %v2777 = vld [vmem:[#allocation7 + $0x80] sm:$0xff]
        %v2778 = vld [vmem:[#allocation7 + $0x88] sm:$0xff]
        %v2779 = vld [vmem:[#allocation7 + $0x90] sm:$0xff]
        %v2780 = vld [vmem:[#allocation7 + $0x98] sm:$0xff]
        %v2781 = vld [vmem:[#allocation7 + $0xa0] sm:$0xff]
        %v2782 = vld [vmem:[#allocation7 + $0xa8] sm:$0xff]
        %v2783 = vld [vmem:[#allocation7 + $0xb0] sm:$0xff]
        %v2784 = vld [vmem:[#allocation7 + $0xb8] sm:$0xff]
        %v2785 = vld [vmem:[#allocation7 + $0xc0] sm:$0xff]
        %v2786 = vld [vmem:[#allocation7 + $0xc8] sm:$0xff]
        %v2787 = vld [vmem:[#allocation7 + $0xd0] sm:$0xff]
        %v2788 = vld [vmem:[#allocation7 + $0xd8] sm:$0xff]
        %v2789 = vld [vmem:[#allocation7 + $0xe0] sm:$0xff]
        %v2790 = vld [vmem:[#allocation7 + $0xe8] sm:$0xff]
        %v2791 = vld [vmem:[#allocation7 + $0xf0] sm:$0xff]
        %v2792 = vld [vmem:[#allocation7 + $0xf8] sm:$0xff]
        %v2825 = vunpack.c.l.b16 %v2761
        %v2826 = vunpack.c.h.b16 %v2761
        %v2827 = vunpack.c.l.b16 %v2762
        %v2828 = vunpack.c.h.b16 %v2762
        %v2829 = vunpack.c.l.b16 %v2763
        %v2830 = vunpack.c.h.b16 %v2763
        %v2831 = vunpack.c.l.b16 %v2764
        %v2832 = vunpack.c.h.b16 %v2764
        %v2833 = vunpack.c.l.b16 %v2765
        %v2834 = vunpack.c.h.b16 %v2765
        %v2835 = vunpack.c.l.b16 %v2766
        %v2836 = vunpack.c.h.b16 %v2766
        %v2837 = vunpack.c.l.b16 %v2767
        %v2838 = vunpack.c.h.b16 %v2767
        %v2839 = vunpack.c.l.b16 %v2768
        %v2840 = vunpack.c.h.b16 %v2768
        %v2841 = vunpack.c.l.b16 %v2769
        %v2842 = vunpack.c.h.b16 %v2769
        %v2843 = vunpack.c.l.b16 %v2770
        %v2844 = vunpack.c.h.b16 %v2770
        %v2845 = vunpack.c.l.b16 %v2771
        %v2846 = vunpack.c.h.b16 %v2771
        %v2847 = vunpack.c.l.b16 %v2772
        %v2848 = vunpack.c.h.b16 %v2772
        %v2849 = vunpack.c.l.b16 %v2773
        %v2850 = vunpack.c.h.b16 %v2773
        %v2851 = vunpack.c.l.b16 %v2774
        %v2852 = vunpack.c.h.b16 %v2774
        %v2853 = vunpack.c.l.b16 %v2775
        %v2854 = vunpack.c.h.b16 %v2775
        %v2855 = vunpack.c.l.b16 %v2776
        %v2856 = vunpack.c.h.b16 %v2776
        %v2857 = vunpack.c.l.b16 %v2777
        %v2858 = vunpack.c.h.b16 %v2777
        %v2859 = vunpack.c.l.b16 %v2778
        %v2860 = vunpack.c.h.b16 %v2778
        %v2861 = vunpack.c.l.b16 %v2779
        %v2862 = vunpack.c.h.b16 %v2779
        %v2863 = vunpack.c.l.b16 %v2780
        %v2864 = vunpack.c.h.b16 %v2780
        %v2865 = vunpack.c.l.b16 %v2781
        %v2866 = vunpack.c.h.b16 %v2781
        %v2867 = vunpack.c.l.b16 %v2782
        %v2868 = vunpack.c.h.b16 %v2782
        %v2869 = vunpack.c.l.b16 %v2783
        %v2870 = vunpack.c.h.b16 %v2783
        %v2871 = vunpack.c.l.b16 %v2784
        %v2872 = vunpack.c.h.b16 %v2784
        %v2873 = vunpack.c.l.b16 %v2785
        %v2874 = vunpack.c.h.b16 %v2785
        %v2875 = vunpack.c.l.b16 %v2786
        %v2876 = vunpack.c.h.b16 %v2786
        %v2877 = vunpack.c.l.b16 %v2787
        %v2878 = vunpack.c.h.b16 %v2787
        %v2879 = vunpack.c.l.b16 %v2788
        %v2880 = vunpack.c.h.b16 %v2788
        %v2881 = vunpack.c.l.b16 %v2789
        %v2882 = vunpack.c.h.b16 %v2789
        %v2883 = vunpack.c.l.b16 %v2790
        %v2884 = vunpack.c.h.b16 %v2790
        %v2885 = vunpack.c.l.b16 %v2791
        %v2886 = vunpack.c.h.b16 %v2791
        %v2887 = vunpack.c.l.b16 %v2792
        %v2888 = vunpack.c.h.b16 %v2792
        %v2889 = vpack.c.b16 %v2829, %v2825
        %v2890 = vpack.c.b16 %v2830, %v2826
        %v2891 = vpack.c.b16 %v2831, %v2827
        %v2892 = vpack.c.b16 %v2832, %v2828
        %v2893 = vpack.c.b16 %v2837, %v2833
        %v2894 = vpack.c.b16 %v2838, %v2834
        %v2895 = vpack.c.b16 %v2839, %v2835
        %v2896 = vpack.c.b16 %v2840, %v2836
        %v2897 = vpack.c.b16 %v2845, %v2841
        %v2898 = vpack.c.b16 %v2846, %v2842
        %v2899 = vpack.c.b16 %v2847, %v2843
        %v2900 = vpack.c.b16 %v2848, %v2844
        %v2901 = vpack.c.b16 %v2853, %v2849
        %v2902 = vpack.c.b16 %v2854, %v2850
        %v2903 = vpack.c.b16 %v2855, %v2851
        %v2904 = vpack.c.b16 %v2856, %v2852
        %v2905 = vpack.c.b16 %v2861, %v2857
        %v2906 = vpack.c.b16 %v2862, %v2858
        %v2907 = vpack.c.b16 %v2863, %v2859
        %v2908 = vpack.c.b16 %v2864, %v2860
        %v2909 = vpack.c.b16 %v2869, %v2865
        %v2910 = vpack.c.b16 %v2870, %v2866
        %v2911 = vpack.c.b16 %v2871, %v2867
        %v2912 = vpack.c.b16 %v2872, %v2868
        %v2913 = vpack.c.b16 %v2877, %v2873
        %v2914 = vpack.c.b16 %v2878, %v2874
        %v2915 = vpack.c.b16 %v2879, %v2875
        %v2916 = vpack.c.b16 %v2880, %v2876
        %v2917 = vpack.c.b16 %v2885, %v2881
        %v2918 = vpack.c.b16 %v2886, %v2882
        %v2919 = vpack.c.b16 %v2887, %v2883
        %v2920 = vpack.c.b16 %v2888, %v2884
        %2953 = vmatpush.bf16.msra.mxu0 %v2917
        %2954 = vmatpush.bf16.msra.mxu0 %v2913
        %2955 = vmatpush.bf16.msra.mxu0 %v2909
        %2956 = vmatpush.bf16.msra.mxu0 %v2905
        %2957 = vmatpush.bf16.msra.mxu0 %v2901
        %2958 = vmatpush.bf16.msra.mxu0 %v2897
        %2959 = vmatpush.bf16.msra.mxu0 %v2893
        %2960 = vmatpush.bf16.msra.mxu0 %v2889
        %2961 = vmatmul.bf16.gmra.mxu0 %v2760
        %v2962 = vpop.f32.mrf.mxu0
        %v2963 = vadd.f32 0.0, %v2962
        %v2964 = vpop.f32.mrf.mxu0
        %v2965 = vadd.f32 0.0, %v2964
        %2966 = vdwg.mxu0
        %2967 = vmatpush.bf16.msra.mxu0 %v2918
        %2968 = vmatpush.bf16.msra.mxu0 %v2914
        %2969 = vmatpush.bf16.msra.mxu0 %v2910
        %2970 = vmatpush.bf16.msra.mxu0 %v2906
        %2971 = vmatpush.bf16.msra.mxu0 %v2902
        %2972 = vmatpush.bf16.msra.mxu0 %v2898
        %2973 = vmatpush.bf16.msra.mxu0 %v2894
        %2974 = vmatpush.bf16.msra.mxu0 %v2890
        %2975 = vmatmul.bf16.gmra.mxu0 %v2760
        %v2976 = vpop.f32.mrf.mxu0
        %v2977 = vadd.f32 0.0, %v2976
        %v2978 = vpop.f32.mrf.mxu0
        %v2979 = vadd.f32 0.0, %v2978
        %2980 = vdwg.mxu0
        %2981 = vmatpush.bf16.msra.mxu0 %v2919
        %2982 = vmatpush.bf16.msra.mxu0 %v2915
        %2983 = vmatpush.bf16.msra.mxu0 %v2911
        %2984 = vmatpush.bf16.msra.mxu0 %v2907
        %2985 = vmatpush.bf16.msra.mxu0 %v2903
        %2986 = vmatpush.bf16.msra.mxu0 %v2899
        %2987 = vmatpush.bf16.msra.mxu0 %v2895
        %2988 = vmatpush.bf16.msra.mxu0 %v2891
        %2989 = vmatmul.bf16.gmra.mxu0 %v2760
        %v2990 = vpop.f32.mrf.mxu0
        %v2991 = vadd.f32 0.0, %v2990
        %v2992 = vpop.f32.mrf.mxu0
        %v2993 = vadd.f32 0.0, %v2992
        %2994 = vdwg.mxu0
        %2995 = vmatpush.bf16.msra.mxu0 %v2920
        %2996 = vmatpush.bf16.msra.mxu0 %v2916
        %2997 = vmatpush.bf16.msra.mxu0 %v2912
        %2998 = vmatpush.bf16.msra.mxu0 %v2908
        %2999 = vmatpush.bf16.msra.mxu0 %v2904
        %3000 = vmatpush.bf16.msra.mxu0 %v2900
        %3001 = vmatpush.bf16.msra.mxu0 %v2896
        %3002 = vmatpush.bf16.msra.mxu0 %v2892
        %3003 = vmatmul.bf16.gmra.mxu0 %v2760
        %v3004 = vpop.f32.mrf.mxu0
        %v3005 = vadd.f32 0.0, %v3004
        %v3006 = vpop.f32.mrf.mxu0
        %v3007 = vadd.f32 0.0, %v3006
        %3008 = vdwg.mxu0
        %v3009 = vadd.f32 %v2752, %v2963
        %v3010 = vadd.f32 %v2753, %v2977
        %v3011 = vadd.f32 %v2754, %v2991
        %v3012 = vadd.f32 %v2755, %v3005
        %v3013 = vadd.f32 %v2756, %v2965
        %v3014 = vadd.f32 %v2757, %v2979
        %v3015 = vadd.f32 %v2758, %v2993
        %v3016 = vadd.f32 %v2759, %v3007
        %v3017 = vmul.f32 %v3009, 0.5
        %v3018 = vmul.f32 %v3013, 0.5
        %v3019 = vtanh.pop %v3017
        %v3020 = vtanh.pop %v3018
        %v3021 = vadd.f32 %v3019, 1.0
        %v3022 = vadd.f32 %v3020, 1.0
        %v3023 = vmul.f32 %v3021, 0.5
        %v3024 = vmul.f32 %v3022, 0.5
        %v3025 = vmul.f32 %v3010, 0.5
        %v3026 = vmul.f32 %v3014, 0.5
        %v3027 = vtanh.pop %v3025
        %v3028 = vtanh.pop %v3026
        %v3029 = vadd.f32 %v3027, 1.0
        %v3030 = vadd.f32 %v3028, 1.0
        %v3031 = vmul.f32 %v3029, 0.5
        %v3032 = vmul.f32 %v3030, 0.5
        %v3033 = vtanh.pop %v3011
        %v3034 = vtanh.pop %v3015
        %v3035 = vmul.f32 %v3012, 0.5
        %v3036 = vmul.f32 %v3016, 0.5
        %v3037 = vtanh.pop %v3035
        %v3038 = vtanh.pop %v3036
        %v3039 = vadd.f32 %v3037, 1.0
        %v3040 = vadd.f32 %v3038, 1.0
        %v3041 = vmul.f32 %v3039, 0.5
        %v3042 = vmul.f32 %v3040, 0.5
        %v3043 = vmul.f32 %v3031, %v2746
        %v3044 = vmul.f32 %v3032, %v2747
        %v3045 = vmul.f32 %v3023, %v3033
        %v3046 = vmul.f32 %v3024, %v3034
        %v3047 = vadd.f32 %v3043, %v3045
        %v3048 = vadd.f32 %v3044, %v3046
        %v3049 = vtanh.pop %v3047
        %v3050 = vtanh.pop %v3048
        %v3051 = vmul.f32 %v3041, %v3049
        %v3052 = vmul.f32 %v3042, %v3050
        %s3053 = sadd.s32 %s1181, 6
        %p3054 = scmp.lt.s32.totalorder %s3053, 12
        %s3055 = scalar_select %p3054, 1, 0
        %v3056 = vstv %s3055
        %vm3057 = vcmp.eq.s32.totalorder %v3056, 1
        %v3058 = vsel %vm3057, %v3047, %v2746
        %v3059 = vsel %vm3057, %v3048, %v2747
        %v3060 = vsel %vm3057, %v3051, %v2748
        %v3061 = vsel %vm3057, %v3052, %v2749
        %3062 = vst [vmem:[%s336 + $0x60] sm:$0xff] %v3060
        %3063 = vst [vmem:[%s336 + $0x68] sm:$0xff] %v3061
        %v3064 = vld [vmem:[#allocation4 + $0x1c0] sm:$0xff]
        %v3065 = vld [vmem:[#allocation4 + $0x1c8] sm:$0xff]
        %v3066 = vld [vmem:[#allocation4 + $0x1d0] sm:$0xff]
        %v3067 = vld [vmem:[#allocation4 + $0x1d8] sm:$0xff]
        %v3068 = vld [vmem:[#allocation4 + $0x1e0] sm:$0xff]
        %v3069 = vld [vmem:[#allocation4 + $0x1e8] sm:$0xff]
        %v3070 = vld [vmem:[#allocation4 + $0x1f0] sm:$0xff]
        %v3071 = vld [vmem:[#allocation4 + $0x1f8] sm:$0xff]
        %v3072 = vpack.c.bf16 %v3061, %v3060
        %v3073 = vld [vmem:[#allocation7] sm:$0xff]
        %v3074 = vld [vmem:[#allocation7 + $0x8] sm:$0xff]
        %v3075 = vld [vmem:[#allocation7 + $0x10] sm:$0xff]
        %v3076 = vld [vmem:[#allocation7 + $0x18] sm:$0xff]
        %v3077 = vld [vmem:[#allocation7 + $0x20] sm:$0xff]
        %v3078 = vld [vmem:[#allocation7 + $0x28] sm:$0xff]
        %v3079 = vld [vmem:[#allocation7 + $0x30] sm:$0xff]
        %v3080 = vld [vmem:[#allocation7 + $0x38] sm:$0xff]
        %v3081 = vld [vmem:[#allocation7 + $0x40] sm:$0xff]
        %v3082 = vld [vmem:[#allocation7 + $0x48] sm:$0xff]
        %v3083 = vld [vmem:[#allocation7 + $0x50] sm:$0xff]
        %v3084 = vld [vmem:[#allocation7 + $0x58] sm:$0xff]
        %v3085 = vld [vmem:[#allocation7 + $0x60] sm:$0xff]
        %v3086 = vld [vmem:[#allocation7 + $0x68] sm:$0xff]
        %v3087 = vld [vmem:[#allocation7 + $0x70] sm:$0xff]
        %v3088 = vld [vmem:[#allocation7 + $0x78] sm:$0xff]
        %v3089 = vld [vmem:[#allocation7 + $0x80] sm:$0xff]
        %v3090 = vld [vmem:[#allocation7 + $0x88] sm:$0xff]
        %v3091 = vld [vmem:[#allocation7 + $0x90] sm:$0xff]
        %v3092 = vld [vmem:[#allocation7 + $0x98] sm:$0xff]
        %v3093 = vld [vmem:[#allocation7 + $0xa0] sm:$0xff]
        %v3094 = vld [vmem:[#allocation7 + $0xa8] sm:$0xff]
        %v3095 = vld [vmem:[#allocation7 + $0xb0] sm:$0xff]
        %v3096 = vld [vmem:[#allocation7 + $0xb8] sm:$0xff]
        %v3097 = vld [vmem:[#allocation7 + $0xc0] sm:$0xff]
        %v3098 = vld [vmem:[#allocation7 + $0xc8] sm:$0xff]
        %v3099 = vld [vmem:[#allocation7 + $0xd0] sm:$0xff]
        %v3100 = vld [vmem:[#allocation7 + $0xd8] sm:$0xff]
        %v3101 = vld [vmem:[#allocation7 + $0xe0] sm:$0xff]
        %v3102 = vld [vmem:[#allocation7 + $0xe8] sm:$0xff]
        %v3103 = vld [vmem:[#allocation7 + $0xf0] sm:$0xff]
        %v3104 = vld [vmem:[#allocation7 + $0xf8] sm:$0xff]
        %v3137 = vunpack.c.l.b16 %v3073
        %v3138 = vunpack.c.h.b16 %v3073
        %v3139 = vunpack.c.l.b16 %v3074
        %v3140 = vunpack.c.h.b16 %v3074
        %v3141 = vunpack.c.l.b16 %v3075
        %v3142 = vunpack.c.h.b16 %v3075
        %v3143 = vunpack.c.l.b16 %v3076
        %v3144 = vunpack.c.h.b16 %v3076
        %v3145 = vunpack.c.l.b16 %v3077
        %v3146 = vunpack.c.h.b16 %v3077
        %v3147 = vunpack.c.l.b16 %v3078
        %v3148 = vunpack.c.h.b16 %v3078
        %v3149 = vunpack.c.l.b16 %v3079
        %v3150 = vunpack.c.h.b16 %v3079
        %v3151 = vunpack.c.l.b16 %v3080
        %v3152 = vunpack.c.h.b16 %v3080
        %v3153 = vunpack.c.l.b16 %v3081
        %v3154 = vunpack.c.h.b16 %v3081
        %v3155 = vunpack.c.l.b16 %v3082
        %v3156 = vunpack.c.h.b16 %v3082
        %v3157 = vunpack.c.l.b16 %v3083
        %v3158 = vunpack.c.h.b16 %v3083
        %v3159 = vunpack.c.l.b16 %v3084
        %v3160 = vunpack.c.h.b16 %v3084
        %v3161 = vunpack.c.l.b16 %v3085
        %v3162 = vunpack.c.h.b16 %v3085
        %v3163 = vunpack.c.l.b16 %v3086
        %v3164 = vunpack.c.h.b16 %v3086
        %v3165 = vunpack.c.l.b16 %v3087
        %v3166 = vunpack.c.h.b16 %v3087
        %v3167 = vunpack.c.l.b16 %v3088
        %v3168 = vunpack.c.h.b16 %v3088
        %v3169 = vunpack.c.l.b16 %v3089
        %v3170 = vunpack.c.h.b16 %v3089
        %v3171 = vunpack.c.l.b16 %v3090
        %v3172 = vunpack.c.h.b16 %v3090
        %v3173 = vunpack.c.l.b16 %v3091
        %v3174 = vunpack.c.h.b16 %v3091
        %v3175 = vunpack.c.l.b16 %v3092
        %v3176 = vunpack.c.h.b16 %v3092
        %v3177 = vunpack.c.l.b16 %v3093
        %v3178 = vunpack.c.h.b16 %v3093
        %v3179 = vunpack.c.l.b16 %v3094
        %v3180 = vunpack.c.h.b16 %v3094
        %v3181 = vunpack.c.l.b16 %v3095
        %v3182 = vunpack.c.h.b16 %v3095
        %v3183 = vunpack.c.l.b16 %v3096
        %v3184 = vunpack.c.h.b16 %v3096
        %v3185 = vunpack.c.l.b16 %v3097
        %v3186 = vunpack.c.h.b16 %v3097
        %v3187 = vunpack.c.l.b16 %v3098
        %v3188 = vunpack.c.h.b16 %v3098
        %v3189 = vunpack.c.l.b16 %v3099
        %v3190 = vunpack.c.h.b16 %v3099
        %v3191 = vunpack.c.l.b16 %v3100
        %v3192 = vunpack.c.h.b16 %v3100
        %v3193 = vunpack.c.l.b16 %v3101
        %v3194 = vunpack.c.h.b16 %v3101
        %v3195 = vunpack.c.l.b16 %v3102
        %v3196 = vunpack.c.h.b16 %v3102
        %v3197 = vunpack.c.l.b16 %v3103
        %v3198 = vunpack.c.h.b16 %v3103
        %v3199 = vunpack.c.l.b16 %v3104
        %v3200 = vunpack.c.h.b16 %v3104
        %v3201 = vpack.c.b16 %v3141, %v3137
        %v3202 = vpack.c.b16 %v3142, %v3138
        %v3203 = vpack.c.b16 %v3143, %v3139
        %v3204 = vpack.c.b16 %v3144, %v3140
        %v3205 = vpack.c.b16 %v3149, %v3145
        %v3206 = vpack.c.b16 %v3150, %v3146
        %v3207 = vpack.c.b16 %v3151, %v3147
        %v3208 = vpack.c.b16 %v3152, %v3148
        %v3209 = vpack.c.b16 %v3157, %v3153
        %v3210 = vpack.c.b16 %v3158, %v3154
        %v3211 = vpack.c.b16 %v3159, %v3155
        %v3212 = vpack.c.b16 %v3160, %v3156
        %v3213 = vpack.c.b16 %v3165, %v3161
        %v3214 = vpack.c.b16 %v3166, %v3162
        %v3215 = vpack.c.b16 %v3167, %v3163
        %v3216 = vpack.c.b16 %v3168, %v3164
        %v3217 = vpack.c.b16 %v3173, %v3169
        %v3218 = vpack.c.b16 %v3174, %v3170
        %v3219 = vpack.c.b16 %v3175, %v3171
        %v3220 = vpack.c.b16 %v3176, %v3172
        %v3221 = vpack.c.b16 %v3181, %v3177
        %v3222 = vpack.c.b16 %v3182, %v3178
        %v3223 = vpack.c.b16 %v3183, %v3179
        %v3224 = vpack.c.b16 %v3184, %v3180
        %v3225 = vpack.c.b16 %v3189, %v3185
        %v3226 = vpack.c.b16 %v3190, %v3186
        %v3227 = vpack.c.b16 %v3191, %v3187
        %v3228 = vpack.c.b16 %v3192, %v3188
        %v3229 = vpack.c.b16 %v3197, %v3193
        %v3230 = vpack.c.b16 %v3198, %v3194
        %v3231 = vpack.c.b16 %v3199, %v3195
        %v3232 = vpack.c.b16 %v3200, %v3196
        %3265 = vmatpush.bf16.msra.mxu0 %v3229
        %3266 = vmatpush.bf16.msra.mxu0 %v3225
        %3267 = vmatpush.bf16.msra.mxu0 %v3221
        %3268 = vmatpush.bf16.msra.mxu0 %v3217
        %3269 = vmatpush.bf16.msra.mxu0 %v3213
        %3270 = vmatpush.bf16.msra.mxu0 %v3209
        %3271 = vmatpush.bf16.msra.mxu0 %v3205
        %3272 = vmatpush.bf16.msra.mxu0 %v3201
        %3273 = vmatmul.bf16.gmra.mxu0 %v3072
        %v3274 = vpop.f32.mrf.mxu0
        %v3275 = vadd.f32 0.0, %v3274
        %v3276 = vpop.f32.mrf.mxu0
        %v3277 = vadd.f32 0.0, %v3276
        %3278 = vdwg.mxu0
        %3279 = vmatpush.bf16.msra.mxu0 %v3230
        %3280 = vmatpush.bf16.msra.mxu0 %v3226
        %3281 = vmatpush.bf16.msra.mxu0 %v3222
        %3282 = vmatpush.bf16.msra.mxu0 %v3218
        %3283 = vmatpush.bf16.msra.mxu0 %v3214
        %3284 = vmatpush.bf16.msra.mxu0 %v3210
        %3285 = vmatpush.bf16.msra.mxu0 %v3206
        %3286 = vmatpush.bf16.msra.mxu0 %v3202
        %3287 = vmatmul.bf16.gmra.mxu0 %v3072
        %v3288 = vpop.f32.mrf.mxu0
        %v3289 = vadd.f32 0.0, %v3288
        %v3290 = vpop.f32.mrf.mxu0
        %v3291 = vadd.f32 0.0, %v3290
        %3292 = vdwg.mxu0
        %3293 = vmatpush.bf16.msra.mxu0 %v3231
        %3294 = vmatpush.bf16.msra.mxu0 %v3227
        %3295 = vmatpush.bf16.msra.mxu0 %v3223
        %3296 = vmatpush.bf16.msra.mxu0 %v3219
        %3297 = vmatpush.bf16.msra.mxu0 %v3215
        %3298 = vmatpush.bf16.msra.mxu0 %v3211
        %3299 = vmatpush.bf16.msra.mxu0 %v3207
        %3300 = vmatpush.bf16.msra.mxu0 %v3203
        %3301 = vmatmul.bf16.gmra.mxu0 %v3072
        %v3302 = vpop.f32.mrf.mxu0
        %v3303 = vadd.f32 0.0, %v3302
        %v3304 = vpop.f32.mrf.mxu0
        %v3305 = vadd.f32 0.0, %v3304
        %3306 = vdwg.mxu0
        %3307 = vmatpush.bf16.msra.mxu0 %v3232
        %3308 = vmatpush.bf16.msra.mxu0 %v3228
        %3309 = vmatpush.bf16.msra.mxu0 %v3224
        %3310 = vmatpush.bf16.msra.mxu0 %v3220
        %3311 = vmatpush.bf16.msra.mxu0 %v3216
        %3312 = vmatpush.bf16.msra.mxu0 %v3212
        %3313 = vmatpush.bf16.msra.mxu0 %v3208
        %3314 = vmatpush.bf16.msra.mxu0 %v3204
        %3315 = vmatmul.bf16.gmra.mxu0 %v3072
        %v3316 = vpop.f32.mrf.mxu0
        %v3317 = vadd.f32 0.0, %v3316
        %v3318 = vpop.f32.mrf.mxu0
        %v3319 = vadd.f32 0.0, %v3318
        %3320 = vdwg.mxu0
        %v3321 = vadd.f32 %v3064, %v3275
        %v3322 = vadd.f32 %v3065, %v3289
        %v3323 = vadd.f32 %v3066, %v3303
        %v3324 = vadd.f32 %v3067, %v3317
        %v3325 = vadd.f32 %v3068, %v3277
        %v3326 = vadd.f32 %v3069, %v3291
        %v3327 = vadd.f32 %v3070, %v3305
        %v3328 = vadd.f32 %v3071, %v3319
        %v3329 = vmul.f32 %v3321, 0.5
        %v3330 = vmul.f32 %v3325, 0.5
        %v3331 = vtanh.pop %v3329
        %v3332 = vtanh.pop %v3330
        %v3333 = vadd.f32 %v3331, 1.0
        %v3334 = vadd.f32 %v3332, 1.0
        %v3335 = vmul.f32 %v3333, 0.5
        %v3336 = vmul.f32 %v3334, 0.5
        %v3337 = vmul.f32 %v3322, 0.5
        %v3338 = vmul.f32 %v3326, 0.5
        %v3339 = vtanh.pop %v3337
        %v3340 = vtanh.pop %v3338
        %v3341 = vadd.f32 %v3339, 1.0
        %v3342 = vadd.f32 %v3340, 1.0
        %v3343 = vmul.f32 %v3341, 0.5
        %v3344 = vmul.f32 %v3342, 0.5
        %v3345 = vtanh.pop %v3323
        %v3346 = vtanh.pop %v3327
        %v3347 = vmul.f32 %v3324, 0.5
        %v3348 = vmul.f32 %v3328, 0.5
        %v3349 = vtanh.pop %v3347
        %v3350 = vtanh.pop %v3348
        %v3351 = vadd.f32 %v3349, 1.0
        %v3352 = vadd.f32 %v3350, 1.0
        %v3353 = vmul.f32 %v3351, 0.5
        %v3354 = vmul.f32 %v3352, 0.5
        %v3355 = vmul.f32 %v3343, %v3058
        %v3356 = vmul.f32 %v3344, %v3059
        %v3357 = vmul.f32 %v3335, %v3345
        %v3358 = vmul.f32 %v3336, %v3346
        %v3359 = vadd.f32 %v3355, %v3357
        %v3360 = vadd.f32 %v3356, %v3358
        %v3361 = vtanh.pop %v3359
        %v3362 = vtanh.pop %v3360
        %v3363 = vmul.f32 %v3353, %v3361
        %v3364 = vmul.f32 %v3354, %v3362
        %s3365 = sadd.s32 %s1181, 7
        %p3366 = scmp.lt.s32.totalorder %s3365, 12
        %s3367 = scalar_select %p3366, 1, 0
        %v3368 = vstv %s3367
        %vm3369 = vcmp.eq.s32.totalorder %v3368, 1
        %v3370 = vsel %vm3369, %v3359, %v3058
        %v3371 = vsel %vm3369, %v3360, %v3059
        %v3372 = vsel %vm3369, %v3363, %v3060
        %v3373 = vsel %vm3369, %v3364, %v3061
        %3374 = vst [vmem:[%s336 + $0x70] sm:$0xff] %v3372
        %3375 = vst [vmem:[%s336 + $0x78] sm:$0xff] %v3373
        %3376 = vst [vmem:[#allocation2] sm:$0xff] %v3372
        %3377 = vst [vmem:[#allocation2 + $0x8] sm:$0xff] %v3373
        %3378 = vst [vmem:[#allocation3] sm:$0xff] %v3370
        %3379 = vst [vmem:[#allocation3 + $0x8] sm:$0xff] %v3371
        %p3380 = scmp.eq.s32.totalorder %s22, 1
        // Predicated region
        $region57: #{multi_rnn_forward.3} parent=43 // pred_check
          %p3381 = pneg %p3380
        $region58: #{multi_rnn_forward.3} parent=43 // pred_check_branch
          %3383 = sbr.rel (%p3381) target = $region60
        $region59: #{multi_rnn_forward.3} parent=43 // pred_region
          %3384 = vst [vmem:[%s7] sm:$0xff] %v3372
          %3385 = vst [vmem:[%s7 + $0x8] sm:$0xff] %v3373
          %3386 = vst [vmem:[%s8] sm:$0xff] %v3370
          %3387 = vst [vmem:[%s8 + $0x8] sm:$0xff] %v3371
        $region60: #{multi_rnn_forward.3} parent=43 // pred_fallthru
          _
        %s3388 = smul.u32 16, %s22
        %p3389 = scmp.lt.s32.totalorder %s3388, 31
        %s3390 = scalar_select %p3389, %s3388, 31
        %s3391 = smul.addr %s3390, 8
        %s3392 = scalar_lea.vmem %s6, %s3391
        // Predicated region
        $region61: #{multi_rnn_forward.3} parent=43 // pred_check
          %p3393 = pneg %p171
        $region62: #{multi_rnn_forward.3} parent=43 // pred_check_branch
          %3395 = sbr.rel (%p3393) target = $region64
        $region63: #{multi_rnn_forward.3} parent=43 // pred_region
          %s3396 = smul.u32 16, %s22
        $region64: #{multi_rnn_forward.3} parent=43 // pred_fallthru
          _
        // Predicated region
        $region65: #{multi_rnn_forward.3} parent=43 // pred_check
          %p3397 = pneg %p192
        $region66: #{multi_rnn_forward.3} parent=43 // pred_check_branch
          %3399 = sbr.rel (%p3397) target = $region68
        $region67: #{multi_rnn_forward.3} parent=43 // pred_region
          _
        $region68: #{multi_rnn_forward.3} parent=43 // pred_fallthru
          _
        // Predicated region
        $region69: #{multi_rnn_forward.3} parent=43 // pred_check
          %p3400 = pneg %p213
        $region70: #{multi_rnn_forward.3} parent=43 // pred_check_branch
          %3402 = sbr.rel (%p3400) target = $region72
        $region71: #{multi_rnn_forward.3} parent=43 // pred_region
          _
        $region72: #{multi_rnn_forward.3} parent=43 // pred_fallthru
          _
        // Predicated region
        $region73: #{multi_rnn_forward.3} parent=43 // pred_check
          %p3403 = pneg %p192
        $region74: #{multi_rnn_forward.3} parent=43 // pred_check_branch
          %3405 = sbr.rel (%p3403) target = $region76
        $region75: #{multi_rnn_forward.3} parent=43 // pred_region
          _
        $region76: #{multi_rnn_forward.3} parent=43 // pred_fallthru
          _
        // Predicated region
        $region77: #{multi_rnn_forward.3} parent=43 // pred_check
          %p3406 = pneg %p213
        $region78: #{multi_rnn_forward.3} parent=43 // pred_check_branch
          %3408 = sbr.rel (%p3406) target = $region80
        $region79: #{multi_rnn_forward.3} parent=43 // pred_region
          _
        $region80: #{multi_rnn_forward.3} parent=43 // pred_fallthru
          _
      $region44: #{multi_rnn_forward.3} parent=5 // pred_fallthru
        _
      %p3409 = scmp.le.s32.totalorder 2, %s17
      // Predicated region
      $region81: #{multi_rnn_forward.3} parent=5 // pred_check
        %p3410 = pneg %p3409
      $region82: #{multi_rnn_forward.3} parent=5 // pred_check_branch
        %3412 = sbr.rel (%p3410) target = $region84
      $region83: #{multi_rnn_forward.3} parent=5 // pred_region
        %s3413 = ssub.s32 %s17, 2
        // Predicated region
        $region85: #{multi_rnn_forward.3} parent=83 // pred_check
          %p3414 = pneg %p177
        $region86: #{multi_rnn_forward.3} parent=83 // pred_check_branch
          %3416 = sbr.rel (%p3414) target = $region88
        $region87: #{multi_rnn_forward.3} parent=83 // pred_region
          %s3417 = smul.u32 16, %s23
          %p3418 = scmp.lt.s32.totalorder %s3417, 31
          %s3419 = scalar_select %p3418, %s3417, 31
          %s3420 = smul.addr %s3419, 8
          %s3421 = scalar_lea.vmem %s6, %s3420
        $region88: #{multi_rnn_forward.3} parent=83 // pred_fallthru
          _
      $region84: #{multi_rnn_forward.3} parent=5 // pred_fallthru
        _
    $region6: #{multi_rnn_forward.3} parent=1 // loop_footer
      %s21 = sadd.s32 1, %s17
    $region7: #{multi_rnn_forward.3} parent=1 // loop_footer_branch
      %16 = sbr.rel target = $region3
    $region8: #{multi_rnn_forward.3} parent=1 // loop_exit
      _
    %3422 = vsyncpa [#allocation6], 1
    %s3423 = scalar_lea.sflag [#allocation6], 1
    %3424 = vsyncpa %s3423, 1
    %3425 = vsyncpa [#allocation8], 1

// kernel: multi_rnn_forward.2
$region0: #{multi_rnn_forward.2}
  #allocation0 [shape = 'u32[]', space=smem, size = 0x4, offset = 0x4, fixed_abs, tag = 'smem constant byte address 0x4 - core index']
  #allocation1 [shape = 'u32[72,128]{1,0:T(1,128)}', space=vmem, size = 0x9000, scoped, tag = 'internal scratch']
  #allocation2 [shape = 'f32[16,128]{1,0:T(8,128)}', space=vmem, size = 0x2000, scoped, tag = 'scratch operand']
  #allocation3 [shape = 'f32[16,128]{1,0:T(8,128)}', space=vmem, size = 0x2000, scoped, tag = 'scratch operand']
  #allocation4 [shape = 'f32[128,512]{1,0:T(8,128)}', space=vmem, size = 0x40000, scoped, tag = 'scratch operand']
  %s0 = inlined_call_operand.vmem [shape: bf16[256,128], index: 0, kind: input, shape index: {}]
  %s1 = inlined_call_operand.vmem [shape: bf16[128,512], index: 1, kind: input, shape index: {}]
  %s2 = inlined_call_operand.hbm [shape: bf16[128,512], index: 2, kind: input, shape index: {}]
  %s3 = inlined_call_operand.vmem [shape: f32[1,512], index: 3, kind: input, shape index: {}]
  %s4 = inlined_call_operand.vmem [shape: f32[16,128], index: 4, kind: input, shape index: {}]
  %s5 = inlined_call_operand.vmem [shape: f32[16,128], index: 5, kind: input, shape index: {}]
  %s6 = inlined_call_operand.vmem [shape: bf16[256,128], index: 6, kind: output, shape index: {0}]
  %s7 = inlined_call_operand.vmem [shape: f32[16,128], index: 7, kind: output, shape index: {1}]
  %s8 = inlined_call_operand.vmem [shape: f32[16,128], index: 8, kind: output, shape index: {2}]
  %9 = xla_tuple %s6, %s7, %s8
  %s10 = sld [smem:[#allocation0]]
  $region85: #{multi_rnn_forward.2} parent=0
    _
  %s12 = ssub.s32 1, %s10
  %s13 = scalar_select 0, %s12, %s10
  $region1: #{multi_rnn_forward.2} parent=0
    #allocation5 [shape = 'u8[131072]{0}', space=vmem, size = 0x20000, scoped, tag = 'input window, operand 2, single buffered']
    #allocation6 [shape = 's32[2]{0}', space=sflag, size = 0x8, scoped, tag = 'scoped memory for multi_rnn_forward.2']
    %14 = vsyncpa [#allocation6], 0
    loop: start=0, step=1, limit=4
    $region2: #{multi_rnn_forward.2} parent=1 // loop_pre_header
      _
    $region3: #{multi_rnn_forward.2} parent=1 // loop_header
      %s16 = sphi 0, %s20
      %p17 = scmp.ge.s32.totalorder %s16, 4
      %s26 = sphi 0, %s28
      %s29 = sphi 0, %s26
      %s30 = sphi 0, %s29
      %s46 = sphi 0, %s30
      %s50 = sphi 0, %s50
      %s52 = sphi 0, %s50
      %s53 = sphi 0, %s52
      %s67 = sphi 0, %s53
      %s71 = sphi 0, %s71
      %s73 = sphi 0, %s71
      %s74 = sphi 0, %s73
      %s88 = sphi 0, %s74
      %s92 = sphi 0, %s92
      %s94 = sphi 0, %s92
      %s95 = sphi 0, %s94
      %s109 = sphi 0, %s95
      %s113 = sphi 0, %s113
      %s115 = sphi 0, %s113
      %s116 = sphi 0, %s115
      %s130 = sphi 0, %s116
      %s134 = sphi 0, %s134
      %s136 = sphi 0, %s134
      %s137 = sphi 0, %s136
      %s151 = sphi 0, %s137
      %s157 = sphi 0, %s159
      %s160 = sphi 0, %s157
      %s161 = sphi 0, %s160
      %s177 = sphi 0, %s161
      %s181 = sphi 0, %s181
      %s183 = sphi 0, %s181
      %s184 = sphi 0, %s183
      %s198 = sphi 0, %s184
      %s202 = sphi 0, %s202
      %s204 = sphi 0, %s202
      %s205 = sphi 0, %s204
      %s219 = sphi 0, %s205
    $region4: #{multi_rnn_forward.2} parent=1 // loop_header_branch
      %19 = sbr.rel (%p17) target = $region8
    $region5: #{multi_rnn_forward.2} parent=1 // loop_body
      %s21 = ssub.s32 %s16, 1
      %s22 = ssub.s32 %s16, 2
      %s23 = sadd.s32 %s16, 1
      %s24 = ssub.s32 %s16, %s23
      %p25 = scmp.eq.s32.totalorder %s24, 0
      %s27 = sadd.s32 %s26, 1
      %s28 = scalar_select %p25, %s26, %s27
      %p31 = pneg %p25
      %p32 = scmp.eq.s32.totalorder %s16, 1
      %p33 = por %p31, %p32
      %p34 = scmp.ne.s32.totalorder %s26, %s29
      %p35 = scmp.eq.s32.totalorder %s16, 0
      %p36 = por %p34, %p35
      %p37 = scmp.ne.s32.totalorder %s26, %s29
      %p38 = scmp.eq.s32.totalorder %s21, 1
      %p39 = por %p37, %p38
      %p40 = scmp.ne.s32.totalorder %s29, %s30
      %p41 = scmp.eq.s32.totalorder %s21, 0
      %p42 = por %p40, %p41
      %p43 = scmp.ne.s32.totalorder %s29, %s30
      %p44 = scmp.eq.s32.totalorder %s22, 1
      %p45 = por %p43, %p44
      %p47 = scmp.ne.s32.totalorder %s30, %s46
      %p48 = scmp.eq.s32.totalorder %s22, 0
      %p49 = por %p47, %p48
      %s51 = sadd.s32 %s50, 1
      %p54 = scmp.eq.s32.totalorder %s16, 1
      %p55 = scmp.ne.s32.totalorder %s50, %s52
      %p56 = scmp.eq.s32.totalorder %s16, 0
      %p57 = por %p55, %p56
      %p58 = scmp.ne.s32.totalorder %s50, %s52
      %p59 = scmp.eq.s32.totalorder %s21, 1
      %p60 = por %p58, %p59
      %p61 = scmp.ne.s32.totalorder %s52, %s53
      %p62 = scmp.eq.s32.totalorder %s21, 0
      %p63 = por %p61, %p62
      %p64 = scmp.ne.s32.totalorder %s52, %s53
      %p65 = scmp.eq.s32.totalorder %s22, 1
      %p66 = por %p64, %p65
      %p68 = scmp.ne.s32.totalorder %s53, %s67
      %p69 = scmp.eq.s32.totalorder %s22, 0
      %p70 = por %p68, %p69
      %s72 = sadd.s32 %s71, 1
      %p75 = scmp.eq.s32.totalorder %s16, 1
      %p76 = scmp.ne.s32.totalorder %s71, %s73
      %p77 = scmp.eq.s32.totalorder %s16, 0
      %p78 = por %p76, %p77
      %p79 = scmp.ne.s32.totalorder %s71, %s73
      %p80 = scmp.eq.s32.totalorder %s21, 1
      %p81 = por %p79, %p80
      %p82 = scmp.ne.s32.totalorder %s73, %s74
      %p83 = scmp.eq.s32.totalorder %s21, 0
      %p84 = por %p82, %p83
      %p85 = scmp.ne.s32.totalorder %s73, %s74
      %p86 = scmp.eq.s32.totalorder %s22, 1
      %p87 = por %p85, %p86
      %p89 = scmp.ne.s32.totalorder %s74, %s88
      %p90 = scmp.eq.s32.totalorder %s22, 0
      %p91 = por %p89, %p90
      %s93 = sadd.s32 %s92, 1
      %p96 = scmp.eq.s32.totalorder %s16, 1
      %p97 = scmp.ne.s32.totalorder %s92, %s94
      %p98 = scmp.eq.s32.totalorder %s16, 0
      %p99 = por %p97, %p98
      %p100 = scmp.ne.s32.totalorder %s92, %s94
      %p101 = scmp.eq.s32.totalorder %s21, 1
      %p102 = por %p100, %p101
      %p103 = scmp.ne.s32.totalorder %s94, %s95
      %p104 = scmp.eq.s32.totalorder %s21, 0
      %p105 = por %p103, %p104
      %p106 = scmp.ne.s32.totalorder %s94, %s95
      %p107 = scmp.eq.s32.totalorder %s22, 1
      %p108 = por %p106, %p107
      %p110 = scmp.ne.s32.totalorder %s95, %s109
      %p111 = scmp.eq.s32.totalorder %s22, 0
      %p112 = por %p110, %p111
      %s114 = sadd.s32 %s113, 1
      %p117 = scmp.eq.s32.totalorder %s16, 1
      %p118 = scmp.ne.s32.totalorder %s113, %s115
      %p119 = scmp.eq.s32.totalorder %s16, 0
      %p120 = por %p118, %p119
      %p121 = scmp.ne.s32.totalorder %s113, %s115
      %p122 = scmp.eq.s32.totalorder %s21, 1
      %p123 = por %p121, %p122
      %p124 = scmp.ne.s32.totalorder %s115, %s116
      %p125 = scmp.eq.s32.totalorder %s21, 0
      %p126 = por %p124, %p125
      %p127 = scmp.ne.s32.totalorder %s115, %s116
      %p128 = scmp.eq.s32.totalorder %s22, 1
      %p129 = por %p127, %p128
      %p131 = scmp.ne.s32.totalorder %s116, %s130
      %p132 = scmp.eq.s32.totalorder %s22, 0
      %p133 = por %p131, %p132
      %s135 = sadd.s32 %s134, 1
      %p138 = scmp.eq.s32.totalorder %s16, 1
      %p139 = scmp.ne.s32.totalorder %s134, %s136
      %p140 = scmp.eq.s32.totalorder %s16, 0
      %p141 = por %p139, %p140
      %p142 = scmp.ne.s32.totalorder %s134, %s136
      %p143 = scmp.eq.s32.totalorder %s21, 1
      %p144 = por %p142, %p143
      %p145 = scmp.ne.s32.totalorder %s136, %s137
      %p146 = scmp.eq.s32.totalorder %s21, 0
      %p147 = por %p145, %p146
      %p148 = scmp.ne.s32.totalorder %s136, %s137
      %p149 = scmp.eq.s32.totalorder %s22, 1
      %p150 = por %p148, %p149
      %p152 = scmp.ne.s32.totalorder %s137, %s151
      %p153 = scmp.eq.s32.totalorder %s22, 0
      %p154 = por %p152, %p153
      %s155 = ssub.s32 %s16, %s23
      %p156 = scmp.eq.s32.totalorder %s155, 0
      %s158 = sadd.s32 %s157, 1
      %s159 = scalar_select %p156, %s157, %s158
      %p162 = pneg %p156
      %p163 = scmp.eq.s32.totalorder %s16, 1
      %p164 = por %p162, %p163
      %p165 = scmp.ne.s32.totalorder %s157, %s160
      %p166 = scmp.eq.s32.totalorder %s16, 0
      %p167 = por %p165, %p166
      %p168 = scmp.ne.s32.totalorder %s157, %s160
      %p169 = scmp.eq.s32.totalorder %s21, 1
      %p170 = por %p168, %p169
      %p171 = scmp.ne.s32.totalorder %s160, %s161
      %p172 = scmp.eq.s32.totalorder %s21, 0
      %p173 = por %p171, %p172
      %p174 = scmp.ne.s32.totalorder %s160, %s161
      %p175 = scmp.eq.s32.totalorder %s22, 1
      %p176 = por %p174, %p175
      %p178 = scmp.ne.s32.totalorder %s161, %s177
      %p179 = scmp.eq.s32.totalorder %s22, 0
      %p180 = por %p178, %p179
      %s182 = sadd.s32 %s181, 1
      %p185 = scmp.eq.s32.totalorder %s16, 1
      %p186 = scmp.ne.s32.totalorder %s181, %s183
      %p187 = scmp.eq.s32.totalorder %s16, 0
      %p188 = por %p186, %p187
      %p189 = scmp.ne.s32.totalorder %s181, %s183
      %p190 = scmp.eq.s32.totalorder %s21, 1
      %p191 = por %p189, %p190
      %p192 = scmp.ne.s32.totalorder %s183, %s184
      %p193 = scmp.eq.s32.totalorder %s21, 0
      %p194 = por %p192, %p193
      %p195 = scmp.ne.s32.totalorder %s183, %s184
      %p196 = scmp.eq.s32.totalorder %s22, 1
      %p197 = por %p195, %p196
      %p199 = scmp.ne.s32.totalorder %s184, %s198
      %p200 = scmp.eq.s32.totalorder %s22, 0
      %p201 = por %p199, %p200
      %s203 = sadd.s32 %s202, 1
      %p206 = scmp.eq.s32.totalorder %s16, 1
      %p207 = scmp.ne.s32.totalorder %s202, %s204
      %p208 = scmp.eq.s32.totalorder %s16, 0
      %p209 = por %p207, %p208
      %p210 = scmp.ne.s32.totalorder %s202, %s204
      %p211 = scmp.eq.s32.totalorder %s21, 1
      %p212 = por %p210, %p211
      %p213 = scmp.ne.s32.totalorder %s204, %s205
      %p214 = scmp.eq.s32.totalorder %s21, 0
      %p215 = por %p213, %p214
      %p216 = scmp.ne.s32.totalorder %s204, %s205
      %p217 = scmp.eq.s32.totalorder %s22, 1
      %p218 = por %p216, %p217
      %p220 = scmp.ne.s32.totalorder %s205, %s219
      %p221 = scmp.eq.s32.totalorder %s22, 0
      %p222 = por %p220, %p221
      %p223 = scmp.le.s32.totalorder 1, %s16
      %p224 = scmp.lt.s32.totalorder %s16, 3
      %p225 = pnand %p223, %p224
      %p226 = pneg %p225
      // Predicated region
      $region9: #{multi_rnn_forward.2} parent=5 // pred_check
        _
      $region10: #{multi_rnn_forward.2} parent=5 // pred_check_branch
        %228 = sbr.rel (%p225) target = $region12
      $region11: #{multi_rnn_forward.2} parent=5 // pred_region
        %s229 = ssub.s32 %s16, 1
        // Predicated region
        $region13: #{multi_rnn_forward.2} parent=11 // pred_check
          %p230 = pneg %p63
        $region14: #{multi_rnn_forward.2} parent=11 // pred_check_branch
          %232 = sbr.rel (%p230) target = $region16
        $region15: #{multi_rnn_forward.2} parent=11 // pred_region
          _
        $region16: #{multi_rnn_forward.2} parent=11 // pred_fallthru
          _
        // Predicated region
        $region17: #{multi_rnn_forward.2} parent=11 // pred_check
          %p233 = pneg %p84
        $region18: #{multi_rnn_forward.2} parent=11 // pred_check_branch
          %235 = sbr.rel (%p233) target = $region20
        $region19: #{multi_rnn_forward.2} parent=11 // pred_region
          %237 = vsyncadd [#allocation6], 0
          %s238 = sshll.u32 %s2, 4
          %s239 = int_to_ptr.hbm [resolvable:$true] %s238
          %s240 = sshll.u32 [#allocation5], 4
          %s241 = int_to_ptr.vmem [resolvable:$true] %s240
          %246 = dma.hbm_to_vmem [thread:$0]  %s239, 4096, %s241, [#allocation6], 256, 256, 16
        $region20: #{multi_rnn_forward.2} parent=11 // pred_fallthru
          _
        // Predicated region
        $region21: #{multi_rnn_forward.2} parent=11 // pred_check
          %p247 = pneg %p105
        $region22: #{multi_rnn_forward.2} parent=11 // pred_check_branch
          %249 = sbr.rel (%p247) target = $region24
        $region23: #{multi_rnn_forward.2} parent=11 // pred_region
          _
        $region24: #{multi_rnn_forward.2} parent=11 // pred_fallthru
          _
        // Predicated region
        $region25: #{multi_rnn_forward.2} parent=11 // pred_check
          %p250 = pneg %p126
        $region26: #{multi_rnn_forward.2} parent=11 // pred_check_branch
          %252 = sbr.rel (%p250) target = $region28
        $region27: #{multi_rnn_forward.2} parent=11 // pred_region
          _
        $region28: #{multi_rnn_forward.2} parent=11 // pred_fallthru
          _
        // Predicated region
        $region29: #{multi_rnn_forward.2} parent=11 // pred_check
          %p253 = pneg %p147
        $region30: #{multi_rnn_forward.2} parent=11 // pred_check_branch
          %255 = sbr.rel (%p253) target = $region32
        $region31: #{multi_rnn_forward.2} parent=11 // pred_region
          _
        $region32: #{multi_rnn_forward.2} parent=11 // pred_fallthru
          _
      $region12: #{multi_rnn_forward.2} parent=5 // pred_fallthru
        _
      %p256 = scmp.lt.s32.totalorder %s16, 2
      // Predicated region
      $region33: #{multi_rnn_forward.2} parent=5 // pred_check
        %p257 = pneg %p256
      $region34: #{multi_rnn_forward.2} parent=5 // pred_check_branch
        %259 = sbr.rel (%p257) target = $region36
      $region35: #{multi_rnn_forward.2} parent=5 // pred_region
        // Predicated region
        $region37: #{multi_rnn_forward.2} parent=35 // pred_check
          %p260 = pneg %p36
        $region38: #{multi_rnn_forward.2} parent=35 // pred_check_branch
          %262 = sbr.rel (%p260) target = $region40
        $region39: #{multi_rnn_forward.2} parent=35 // pred_region
          %s263 = smul.u32 16, %s16
          %p264 = scmp.lt.s32.totalorder %s263, 31
          %s265 = scalar_select %p264, %s263, 31
          %s266 = smul.addr %s265, 4
          %s267 = scalar_lea.vmem %s0, %s266
          %s268 = smul.u32 16, %s16
        $region40: #{multi_rnn_forward.2} parent=35 // pred_fallthru
          _
      $region36: #{multi_rnn_forward.2} parent=5 // pred_fallthru
        _
      %p269 = scmp.le.s32.totalorder 1, %s16
      %p270 = scmp.lt.s32.totalorder %s16, 3
      %p271 = pnand %p269, %p270
      %p272 = pneg %p271
      // Predicated region
      $region41: #{multi_rnn_forward.2} parent=5 // pred_check
        _
      $region42: #{multi_rnn_forward.2} parent=5 // pred_check_branch
        %274 = sbr.rel (%p271) target = $region44
      $region43: #{multi_rnn_forward.2} parent=5 // pred_region
        %s275 = ssub.s32 %s16, 1
        // Predicated region
        $region45: #{multi_rnn_forward.2} parent=43 // pred_check
          %p276 = pneg %p84
        $region46: #{multi_rnn_forward.2} parent=43 // pred_check_branch
          %278 = sbr.rel (%p276) target = $region48
        $region47: #{multi_rnn_forward.2} parent=43 // pred_region
          %280 = dma.done [#allocation6], 4096
        $region48: #{multi_rnn_forward.2} parent=43 // pred_fallthru
          _
        %s281 = smul.u32 16, %s21
        %p282 = scmp.lt.s32.totalorder %s281, 31
        %s283 = scalar_select %p282, %s281, 31
        %s284 = smul.addr %s283, 4
        %s285 = scalar_lea.vmem %s0, %s284
        %p286 = pneg %p42
        %p287 = pneg %p39
        %p288 = pneg %p63
        %p289 = pneg %p60
        %p290 = pneg %p84
        %p291 = pneg %p81
        %p292 = pneg %p105
        %p293 = pneg %p102
        %p294 = pneg %p126
        %p295 = pneg %p123
        %p296 = pneg %p147
        %p297 = pneg %p144
        %p298 = pneg %p173
        %p299 = pneg %p170
        %s300 = smul.u32 16, %s21
        %p301 = scmp.lt.s32.totalorder %s300, 31
        %s302 = scalar_select %p301, %s300, 31
        %s303 = smul.addr %s302, 4
        %s304 = scalar_lea.vmem %s6, %s303
        %p305 = pneg %p194
        %p306 = pneg %p191
        %p307 = pneg %p215
        %p308 = pneg %p212
        %s309 = smul.u32 16, %s21
        %p310 = scmp.lt.s32.totalorder %s309, 31
        %s311 = scalar_select %p310, %s309, 31
        %s312 = smul.addr %s311, 4
        %s313 = scalar_lea.vmem %s0, %s312
        %s314 = smul.u32 16, %s21
        %s315 = smul.u32 16, %s21
        %p316 = scmp.lt.s32.totalorder %s315, 31
        %s317 = scalar_select %p316, %s315, 31
        %s318 = smul.addr %s317, 4
        %s319 = scalar_lea.vmem %s6, %s318
        %s320 = smul.u32 16, %s21
        %p321 = scmp.eq.s32.totalorder %s21, 0
        // Predicated region
        $region49: #{multi_rnn_forward.2} parent=43 // pred_check
          %p322 = pneg %p321
        $region50: #{multi_rnn_forward.2} parent=43 // pred_check_branch
          %324 = sbr.rel (%p322) target = $region52
        $region51: #{multi_rnn_forward.2} parent=43 // pred_region
          %v325 = vld [vmem:[%s4] sm:$0xff]
          %v326 = vld [vmem:[%s4 + $0x8] sm:$0xff]
          %327 = vst [vmem:[#allocation2] sm:$0xff] %v325
          %328 = vst [vmem:[#allocation2 + $0x8] sm:$0xff] %v326
          %v329 = vld [vmem:[%s5] sm:$0xff]
          %v330 = vld [vmem:[%s5 + $0x8] sm:$0xff]
          %331 = vst [vmem:[#allocation3] sm:$0xff] %v329
          %332 = vst [vmem:[#allocation3 + $0x8] sm:$0xff] %v330
        $region52: #{multi_rnn_forward.2} parent=43 // pred_fallthru
          _
        %v333 = vld [vmem:[%s313] sm:$0xf]
        %v334 = vld [vmem:[%s313 + $0x4] sm:$0xf]
        %v335 = vld [vmem:[%s313 + $0x8] sm:$0xf]
        %v336 = vld [vmem:[%s313 + $0xc] sm:$0xf]
        %v337 = vld [vmem:[%s313 + $0x10] sm:$0xf]
        %v338 = vld [vmem:[%s313 + $0x14] sm:$0xf]
        %v339 = vld [vmem:[%s313 + $0x18] sm:$0xf]
        %v340 = vld [vmem:[%s313 + $0x1c] sm:$0xf]
        %v341 = vld [vmem:[%s313 + $0x20] sm:$0xf]
        %v342 = vld [vmem:[%s313 + $0x24] sm:$0xf]
        %v343 = vld [vmem:[%s313 + $0x28] sm:$0xf]
        %v344 = vld [vmem:[%s313 + $0x2c] sm:$0xf]
        %v345 = vld [vmem:[%s313 + $0x30] sm:$0xf]
        %v346 = vld [vmem:[%s313 + $0x34] sm:$0xf]
        %v347 = vld [vmem:[%s313 + $0x38] sm:$0xf]
        %v348 = vld [vmem:[%s313 + $0x3c] sm:$0xf]
        %v349 = vld [vmem:[%s1] sm:$0xff]
        %v350 = vld [vmem:[%s1 + $0x8] sm:$0xff]
        %v351 = vld [vmem:[%s1 + $0x10] sm:$0xff]
        %v352 = vld [vmem:[%s1 + $0x18] sm:$0xff]
        %v353 = vld [vmem:[%s1 + $0x20] sm:$0xff]
        %v354 = vld [vmem:[%s1 + $0x28] sm:$0xff]
        %v355 = vld [vmem:[%s1 + $0x30] sm:$0xff]
        %v356 = vld [vmem:[%s1 + $0x38] sm:$0xff]
        %v357 = vld [vmem:[%s1 + $0x40] sm:$0xff]
        %v358 = vld [vmem:[%s1 + $0x48] sm:$0xff]
        %v359 = vld [vmem:[%s1 + $0x50] sm:$0xff]
        %v360 = vld [vmem:[%s1 + $0x58] sm:$0xff]
        %v361 = vld [vmem:[%s1 + $0x60] sm:$0xff]
        %v362 = vld [vmem:[%s1 + $0x68] sm:$0xff]
        %v363 = vld [vmem:[%s1 + $0x70] sm:$0xff]
        %v364 = vld [vmem:[%s1 + $0x78] sm:$0xff]
        %v365 = vld [vmem:[%s1 + $0x80] sm:$0xff]
        %v366 = vld [vmem:[%s1 + $0x88] sm:$0xff]
        %v367 = vld [vmem:[%s1 + $0x90] sm:$0xff]
        %v368 = vld [vmem:[%s1 + $0x98] sm:$0xff]
        %v369 = vld [vmem:[%s1 + $0xa0] sm:$0xff]
        %v370 = vld [vmem:[%s1 + $0xa8] sm:$0xff]
        %v371 = vld [vmem:[%s1 + $0xb0] sm:$0xff]
        %v372 = vld [vmem:[%s1 + $0xb8] sm:$0xff]
        %v373 = vld [vmem:[%s1 + $0xc0] sm:$0xff]
        %v374 = vld [vmem:[%s1 + $0xc8] sm:$0xff]
        %v375 = vld [vmem:[%s1 + $0xd0] sm:$0xff]
        %v376 = vld [vmem:[%s1 + $0xd8] sm:$0xff]
        %v377 = vld [vmem:[%s1 + $0xe0] sm:$0xff]
        %v378 = vld [vmem:[%s1 + $0xe8] sm:$0xff]
        %v379 = vld [vmem:[%s1 + $0xf0] sm:$0xff]
        %v380 = vld [vmem:[%s1 + $0xf8] sm:$0xff]
        %v381 = vld [vmem:[%s3] sm:$0xf]
        %v383 = vperm.slane %v381, 0
        %v384 = vperm.slane %v381, 1
        %v385 = vperm.slane %v381, 2
        %v386 = vperm.slane %v381, 3
        %v407 = vunpack.c.l.b16 %v333
        %v408 = vunpack.c.l.b16 %v334
        %v409 = vunpack.c.l.b16 %v335
        %v410 = vunpack.c.l.b16 %v336
        %v411 = vunpack.c.l.b16 %v337
        %v412 = vunpack.c.l.b16 %v338
        %v413 = vunpack.c.l.b16 %v339
        %v414 = vunpack.c.l.b16 %v340
        %v415 = vunpack.c.l.b16 %v341
        %v416 = vunpack.c.l.b16 %v342
        %v417 = vunpack.c.l.b16 %v343
        %v418 = vunpack.c.l.b16 %v344
        %v419 = vunpack.c.l.b16 %v345
        %v420 = vunpack.c.l.b16 %v346
        %v421 = vunpack.c.l.b16 %v347
        %v422 = vunpack.c.l.b16 %v348
        %v423 = vpack.c.b16 %v408, %v407
        %v424 = vpack.c.b16 %v410, %v409
        %v425 = vpack.c.b16 %v412, %v411
        %v426 = vpack.c.b16 %v414, %v413
        %v427 = vpack.c.b16 %v416, %v415
        %v428 = vpack.c.b16 %v418, %v417
        %v429 = vpack.c.b16 %v420, %v419
        %v430 = vpack.c.b16 %v422, %v421
        %v471 = vunpack.c.l.b16 %v349
        %v472 = vunpack.c.h.b16 %v349
        %v473 = vunpack.c.l.b16 %v350
        %v474 = vunpack.c.h.b16 %v350
        %v475 = vunpack.c.l.b16 %v351
        %v476 = vunpack.c.h.b16 %v351
        %v477 = vunpack.c.l.b16 %v352
        %v478 = vunpack.c.h.b16 %v352
        %v479 = vunpack.c.l.b16 %v353
        %v480 = vunpack.c.h.b16 %v353
        %v481 = vunpack.c.l.b16 %v354
        %v482 = vunpack.c.h.b16 %v354
        %v483 = vunpack.c.l.b16 %v355
        %v484 = vunpack.c.h.b16 %v355
        %v485 = vunpack.c.l.b16 %v356
        %v486 = vunpack.c.h.b16 %v356
        %v487 = vunpack.c.l.b16 %v357
        %v488 = vunpack.c.h.b16 %v357
        %v489 = vunpack.c.l.b16 %v358
        %v490 = vunpack.c.h.b16 %v358
        %v491 = vunpack.c.l.b16 %v359
        %v492 = vunpack.c.h.b16 %v359
        %v493 = vunpack.c.l.b16 %v360
        %v494 = vunpack.c.h.b16 %v360
        %v495 = vunpack.c.l.b16 %v361
        %v496 = vunpack.c.h.b16 %v361
        %v497 = vunpack.c.l.b16 %v362
        %v498 = vunpack.c.h.b16 %v362
        %v499 = vunpack.c.l.b16 %v363
        %v500 = vunpack.c.h.b16 %v363
        %v501 = vunpack.c.l.b16 %v364
        %v502 = vunpack.c.h.b16 %v364
        %v503 = vunpack.c.l.b16 %v365
        %v504 = vunpack.c.h.b16 %v365
        %v505 = vunpack.c.l.b16 %v366
        %v506 = vunpack.c.h.b16 %v366
        %v507 = vunpack.c.l.b16 %v367
        %v508 = vunpack.c.h.b16 %v367
        %v509 = vunpack.c.l.b16 %v368
        %v510 = vunpack.c.h.b16 %v368
        %v511 = vunpack.c.l.b16 %v369
        %v512 = vunpack.c.h.b16 %v369
        %v513 = vunpack.c.l.b16 %v370
        %v514 = vunpack.c.h.b16 %v370
        %v515 = vunpack.c.l.b16 %v371
        %v516 = vunpack.c.h.b16 %v371
        %v517 = vunpack.c.l.b16 %v372
        %v518 = vunpack.c.h.b16 %v372
        %v519 = vunpack.c.l.b16 %v373
        %v520 = vunpack.c.h.b16 %v373
        %v521 = vunpack.c.l.b16 %v374
        %v522 = vunpack.c.h.b16 %v374
        %v523 = vunpack.c.l.b16 %v375
        %v524 = vunpack.c.h.b16 %v375
        %v525 = vunpack.c.l.b16 %v376
        %v526 = vunpack.c.h.b16 %v376
        %v527 = vunpack.c.l.b16 %v377
        %v528 = vunpack.c.h.b16 %v377
        %v529 = vunpack.c.l.b16 %v378
        %v530 = vunpack.c.h.b16 %v378
        %v531 = vunpack.c.l.b16 %v379
        %v532 = vunpack.c.h.b16 %v379
        %v533 = vunpack.c.l.b16 %v380
        %v534 = vunpack.c.h.b16 %v380
        %v535 = vpack.c.b16 %v475, %v471
        %v536 = vpack.c.b16 %v476, %v472
        %v537 = vpack.c.b16 %v477, %v473
        %v538 = vpack.c.b16 %v478, %v474
        %v539 = vpack.c.b16 %v483, %v479
        %v540 = vpack.c.b16 %v484, %v480
        %v541 = vpack.c.b16 %v485, %v481
        %v542 = vpack.c.b16 %v486, %v482
        %v543 = vpack.c.b16 %v491, %v487
        %v544 = vpack.c.b16 %v492, %v488
        %v545 = vpack.c.b16 %v493, %v489
        %v546 = vpack.c.b16 %v494, %v490
        %v547 = vpack.c.b16 %v499, %v495
        %v548 = vpack.c.b16 %v500, %v496
        %v549 = vpack.c.b16 %v501, %v497
        %v550 = vpack.c.b16 %v502, %v498
        %v551 = vpack.c.b16 %v507, %v503
        %v552 = vpack.c.b16 %v508, %v504
        %v553 = vpack.c.b16 %v509, %v505
        %v554 = vpack.c.b16 %v510, %v506
        %v555 = vpack.c.b16 %v515, %v511
        %v556 = vpack.c.b16 %v516, %v512
        %v557 = vpack.c.b16 %v517, %v513
        %v558 = vpack.c.b16 %v518, %v514
        %v559 = vpack.c.b16 %v523, %v519
        %v560 = vpack.c.b16 %v524, %v520
        %v561 = vpack.c.b16 %v525, %v521
        %v562 = vpack.c.b16 %v526, %v522
        %v563 = vpack.c.b16 %v531, %v527
        %v564 = vpack.c.b16 %v532, %v528
        %v565 = vpack.c.b16 %v533, %v529
        %v566 = vpack.c.b16 %v534, %v530
        %599 = vmatpush.bf16.msra.mxu0 %v563
        %600 = vmatpush.bf16.msra.mxu0 %v559
        %601 = vmatpush.bf16.msra.mxu0 %v555
        %602 = vmatpush.bf16.msra.mxu0 %v551
        %603 = vmatpush.bf16.msra.mxu0 %v547
        %604 = vmatpush.bf16.msra.mxu0 %v543
        %605 = vmatpush.bf16.msra.mxu0 %v539
        %606 = vmatpush.bf16.msra.mxu0 %v535
        %607 = vmatmul.bf16.gmra.mxu0 %v423
        %v608 = vpop.f32.mrf.mxu0
        %v609 = vadd.f32 %v383, %v608
        %v610 = vpop.f32.mrf.mxu0
        %v611 = vadd.f32 %v383, %v610
        %612 = vmatmul.bf16.gmra.mxu0 %v424
        %v613 = vpop.f32.mrf.mxu0
        %v614 = vadd.f32 %v383, %v613
        %v615 = vpop.f32.mrf.mxu0
        %v616 = vadd.f32 %v383, %v615
        %617 = vmatmul.bf16.gmra.mxu0 %v425
        %v618 = vpop.f32.mrf.mxu0
        %v619 = vadd.f32 %v383, %v618
        %v620 = vpop.f32.mrf.mxu0
        %v621 = vadd.f32 %v383, %v620
        %622 = vmatmul.bf16.gmra.mxu0 %v426
        %v623 = vpop.f32.mrf.mxu0
        %v624 = vadd.f32 %v383, %v623
        %v625 = vpop.f32.mrf.mxu0
        %v626 = vadd.f32 %v383, %v625
        %627 = vmatmul.bf16.gmra.mxu0 %v427
        %v628 = vpop.f32.mrf.mxu0
        %v629 = vadd.f32 %v383, %v628
        %v630 = vpop.f32.mrf.mxu0
        %v631 = vadd.f32 %v383, %v630
        %632 = vmatmul.bf16.gmra.mxu0 %v428
        %v633 = vpop.f32.mrf.mxu0
        %v634 = vadd.f32 %v383, %v633
        %v635 = vpop.f32.mrf.mxu0
        %v636 = vadd.f32 %v383, %v635
        %637 = vmatmul.bf16.gmra.mxu0 %v429
        %v638 = vpop.f32.mrf.mxu0
        %v639 = vadd.f32 %v383, %v638
        %v640 = vpop.f32.mrf.mxu0
        %v641 = vadd.f32 %v383, %v640
        %642 = vmatmul.bf16.gmra.mxu0 %v430
        %v643 = vpop.f32.mrf.mxu0
        %v644 = vadd.f32 %v383, %v643
        %v645 = vpop.f32.mrf.mxu0
        %v646 = vadd.f32 %v383, %v645
        %647 = vdwg.mxu0
        %648 = vmatpush.bf16.msra.mxu0 %v564
        %649 = vmatpush.bf16.msra.mxu0 %v560
        %650 = vmatpush.bf16.msra.mxu0 %v556
        %651 = vmatpush.bf16.msra.mxu0 %v552
        %652 = vmatpush.bf16.msra.mxu0 %v548
        %653 = vmatpush.bf16.msra.mxu0 %v544
        %654 = vmatpush.bf16.msra.mxu0 %v540
        %655 = vmatpush.bf16.msra.mxu0 %v536
        %656 = vmatmul.bf16.gmra.mxu0 %v423
        %v657 = vpop.f32.mrf.mxu0
        %v658 = vadd.f32 %v384, %v657
        %v659 = vpop.f32.mrf.mxu0
        %v660 = vadd.f32 %v384, %v659
        %661 = vmatmul.bf16.gmra.mxu0 %v424
        %v662 = vpop.f32.mrf.mxu0
        %v663 = vadd.f32 %v384, %v662
        %v664 = vpop.f32.mrf.mxu0
        %v665 = vadd.f32 %v384, %v664
        %666 = vmatmul.bf16.gmra.mxu0 %v425
        %v667 = vpop.f32.mrf.mxu0
        %v668 = vadd.f32 %v384, %v667
        %v669 = vpop.f32.mrf.mxu0
        %v670 = vadd.f32 %v384, %v669
        %671 = vmatmul.bf16.gmra.mxu0 %v426
        %v672 = vpop.f32.mrf.mxu0
        %v673 = vadd.f32 %v384, %v672
        %v674 = vpop.f32.mrf.mxu0
        %v675 = vadd.f32 %v384, %v674
        %676 = vmatmul.bf16.gmra.mxu0 %v427
        %v677 = vpop.f32.mrf.mxu0
        %v678 = vadd.f32 %v384, %v677
        %v679 = vpop.f32.mrf.mxu0
        %v680 = vadd.f32 %v384, %v679
        %681 = vmatmul.bf16.gmra.mxu0 %v428
        %v682 = vpop.f32.mrf.mxu0
        %v683 = vadd.f32 %v384, %v682
        %v684 = vpop.f32.mrf.mxu0
        %v685 = vadd.f32 %v384, %v684
        %686 = vmatmul.bf16.gmra.mxu0 %v429
        %v687 = vpop.f32.mrf.mxu0
        %v688 = vadd.f32 %v384, %v687
        %v689 = vpop.f32.mrf.mxu0
        %v690 = vadd.f32 %v384, %v689
        %691 = vmatmul.bf16.gmra.mxu0 %v430
        %v692 = vpop.f32.mrf.mxu0
        %v693 = vadd.f32 %v384, %v692
        %v694 = vpop.f32.mrf.mxu0
        %v695 = vadd.f32 %v384, %v694
        %696 = vdwg.mxu0
        %697 = vmatpush.bf16.msra.mxu0 %v565
        %698 = vmatpush.bf16.msra.mxu0 %v561
        %699 = vmatpush.bf16.msra.mxu0 %v557
        %700 = vmatpush.bf16.msra.mxu0 %v553
        %701 = vmatpush.bf16.msra.mxu0 %v549
        %702 = vmatpush.bf16.msra.mxu0 %v545
        %703 = vmatpush.bf16.msra.mxu0 %v541
        %704 = vmatpush.bf16.msra.mxu0 %v537
        %705 = vmatmul.bf16.gmra.mxu0 %v423
        %v706 = vpop.f32.mrf.mxu0
        %v707 = vadd.f32 %v385, %v706
        %v708 = vpop.f32.mrf.mxu0
        %v709 = vadd.f32 %v385, %v708
        %710 = vmatmul.bf16.gmra.mxu0 %v424
        %v711 = vpop.f32.mrf.mxu0
        %v712 = vadd.f32 %v385, %v711
        %v713 = vpop.f32.mrf.mxu0
        %v714 = vadd.f32 %v385, %v713
        %715 = vmatmul.bf16.gmra.mxu0 %v425
        %v716 = vpop.f32.mrf.mxu0
        %v717 = vadd.f32 %v385, %v716
        %v718 = vpop.f32.mrf.mxu0
        %v719 = vadd.f32 %v385, %v718
        %720 = vmatmul.bf16.gmra.mxu0 %v426
        %v721 = vpop.f32.mrf.mxu0
        %v722 = vadd.f32 %v385, %v721
        %v723 = vpop.f32.mrf.mxu0
        %v724 = vadd.f32 %v385, %v723
        %725 = vmatmul.bf16.gmra.mxu0 %v427
        %v726 = vpop.f32.mrf.mxu0
        %v727 = vadd.f32 %v385, %v726
        %v728 = vpop.f32.mrf.mxu0
        %v729 = vadd.f32 %v385, %v728
        %730 = vmatmul.bf16.gmra.mxu0 %v428
        %v731 = vpop.f32.mrf.mxu0
        %v732 = vadd.f32 %v385, %v731
        %v733 = vpop.f32.mrf.mxu0
        %v734 = vadd.f32 %v385, %v733
        %735 = vmatmul.bf16.gmra.mxu0 %v429
        %v736 = vpop.f32.mrf.mxu0
        %v737 = vadd.f32 %v385, %v736
        %v738 = vpop.f32.mrf.mxu0
        %v739 = vadd.f32 %v385, %v738
        %740 = vmatmul.bf16.gmra.mxu0 %v430
        %v741 = vpop.f32.mrf.mxu0
        %v742 = vadd.f32 %v385, %v741
        %v743 = vpop.f32.mrf.mxu0
        %v744 = vadd.f32 %v385, %v743
        %745 = vdwg.mxu0
        %746 = vmatpush.bf16.msra.mxu0 %v566
        %747 = vmatpush.bf16.msra.mxu0 %v562
        %748 = vmatpush.bf16.msra.mxu0 %v558
        %749 = vmatpush.bf16.msra.mxu0 %v554
        %750 = vmatpush.bf16.msra.mxu0 %v550
        %751 = vmatpush.bf16.msra.mxu0 %v546
        %752 = vmatpush.bf16.msra.mxu0 %v542
        %753 = vmatpush.bf16.msra.mxu0 %v538
        %754 = vmatmul.bf16.gmra.mxu0 %v423
        %v755 = vpop.f32.mrf.mxu0
        %v756 = vadd.f32 %v386, %v755
        %v757 = vpop.f32.mrf.mxu0
        %v758 = vadd.f32 %v386, %v757
        %759 = vmatmul.bf16.gmra.mxu0 %v424
        %v760 = vpop.f32.mrf.mxu0
        %v761 = vadd.f32 %v386, %v760
        %v762 = vpop.f32.mrf.mxu0
        %v763 = vadd.f32 %v386, %v762
        %764 = vmatmul.bf16.gmra.mxu0 %v425
        %v765 = vpop.f32.mrf.mxu0
        %v766 = vadd.f32 %v386, %v765
        %v767 = vpop.f32.mrf.mxu0
        %v768 = vadd.f32 %v386, %v767
        %769 = vmatmul.bf16.gmra.mxu0 %v426
        %v770 = vpop.f32.mrf.mxu0
        %v771 = vadd.f32 %v386, %v770
        %v772 = vpop.f32.mrf.mxu0
        %v773 = vadd.f32 %v386, %v772
        %774 = vmatmul.bf16.gmra.mxu0 %v427
        %v775 = vpop.f32.mrf.mxu0
        %v776 = vadd.f32 %v386, %v775
        %v777 = vpop.f32.mrf.mxu0
        %v778 = vadd.f32 %v386, %v777
        %779 = vmatmul.bf16.gmra.mxu0 %v428
        %v780 = vpop.f32.mrf.mxu0
        %v781 = vadd.f32 %v386, %v780
        %v782 = vpop.f32.mrf.mxu0
        %v783 = vadd.f32 %v386, %v782
        %784 = vmatmul.bf16.gmra.mxu0 %v429
        %v785 = vpop.f32.mrf.mxu0
        %v786 = vadd.f32 %v386, %v785
        %v787 = vpop.f32.mrf.mxu0
        %v788 = vadd.f32 %v386, %v787
        %789 = vmatmul.bf16.gmra.mxu0 %v430
        %v790 = vpop.f32.mrf.mxu0
        %v791 = vadd.f32 %v386, %v790
        %v792 = vpop.f32.mrf.mxu0
        %v793 = vadd.f32 %v386, %v792
        %794 = vdwg.mxu0
        %795 = vst [vmem:[#allocation4] sm:$0xff] %v609
        %796 = vst [vmem:[#allocation4 + $0x8] sm:$0xff] %v658
        %797 = vst [vmem:[#allocation4 + $0x10] sm:$0xff] %v707
        %798 = vst [vmem:[#allocation4 + $0x18] sm:$0xff] %v756
        %799 = vst [vmem:[#allocation4 + $0x20] sm:$0xff] %v611
        %800 = vst [vmem:[#allocation4 + $0x28] sm:$0xff] %v660
        %801 = vst [vmem:[#allocation4 + $0x30] sm:$0xff] %v709
        %802 = vst [vmem:[#allocation4 + $0x38] sm:$0xff] %v758
        %803 = vst [vmem:[#allocation4 + $0x40] sm:$0xff] %v614
        %804 = vst [vmem:[#allocation4 + $0x48] sm:$0xff] %v663
        %805 = vst [vmem:[#allocation4 + $0x50] sm:$0xff] %v712
        %806 = vst [vmem:[#allocation4 + $0x58] sm:$0xff] %v761
        %807 = vst [vmem:[#allocation4 + $0x60] sm:$0xff] %v616
        %808 = vst [vmem:[#allocation4 + $0x68] sm:$0xff] %v665
        %809 = vst [vmem:[#allocation4 + $0x70] sm:$0xff] %v714
        %810 = vst [vmem:[#allocation4 + $0x78] sm:$0xff] %v763
        %811 = vst [vmem:[#allocation4 + $0x80] sm:$0xff] %v619
        %812 = vst [vmem:[#allocation4 + $0x88] sm:$0xff] %v668
        %813 = vst [vmem:[#allocation4 + $0x90] sm:$0xff] %v717
        %814 = vst [vmem:[#allocation4 + $0x98] sm:$0xff] %v766
        %815 = vst [vmem:[#allocation4 + $0xa0] sm:$0xff] %v621
        %816 = vst [vmem:[#allocation4 + $0xa8] sm:$0xff] %v670
        %817 = vst [vmem:[#allocation4 + $0xb0] sm:$0xff] %v719
        %818 = vst [vmem:[#allocation4 + $0xb8] sm:$0xff] %v768
        %819 = vst [vmem:[#allocation4 + $0xc0] sm:$0xff] %v624
        %820 = vst [vmem:[#allocation4 + $0xc8] sm:$0xff] %v673
        %821 = vst [vmem:[#allocation4 + $0xd0] sm:$0xff] %v722
        %822 = vst [vmem:[#allocation4 + $0xd8] sm:$0xff] %v771
        %823 = vst [vmem:[#allocation4 + $0xe0] sm:$0xff] %v626
        %824 = vst [vmem:[#allocation4 + $0xe8] sm:$0xff] %v675
        %825 = vst [vmem:[#allocation4 + $0xf0] sm:$0xff] %v724
        %826 = vst [vmem:[#allocation4 + $0xf8] sm:$0xff] %v773
        %827 = vst [vmem:[#allocation4 + $0x100] sm:$0xff] %v629
        %828 = vst [vmem:[#allocation4 + $0x108] sm:$0xff] %v678
        %829 = vst [vmem:[#allocation4 + $0x110] sm:$0xff] %v727
        %830 = vst [vmem:[#allocation4 + $0x118] sm:$0xff] %v776
        %831 = vst [vmem:[#allocation4 + $0x120] sm:$0xff] %v631
        %832 = vst [vmem:[#allocation4 + $0x128] sm:$0xff] %v680
        %833 = vst [vmem:[#allocation4 + $0x130] sm:$0xff] %v729
        %834 = vst [vmem:[#allocation4 + $0x138] sm:$0xff] %v778
        %835 = vst [vmem:[#allocation4 + $0x140] sm:$0xff] %v634
        %836 = vst [vmem:[#allocation4 + $0x148] sm:$0xff] %v683
        %837 = vst [vmem:[#allocation4 + $0x150] sm:$0xff] %v732
        %838 = vst [vmem:[#allocation4 + $0x158] sm:$0xff] %v781
        %839 = vst [vmem:[#allocation4 + $0x160] sm:$0xff] %v636
        %840 = vst [vmem:[#allocation4 + $0x168] sm:$0xff] %v685
        %841 = vst [vmem:[#allocation4 + $0x170] sm:$0xff] %v734
        %842 = vst [vmem:[#allocation4 + $0x178] sm:$0xff] %v783
        %843 = vst [vmem:[#allocation4 + $0x180] sm:$0xff] %v639
        %844 = vst [vmem:[#allocation4 + $0x188] sm:$0xff] %v688
        %845 = vst [vmem:[#allocation4 + $0x190] sm:$0xff] %v737
        %846 = vst [vmem:[#allocation4 + $0x198] sm:$0xff] %v786
        %847 = vst [vmem:[#allocation4 + $0x1a0] sm:$0xff] %v641
        %848 = vst [vmem:[#allocation4 + $0x1a8] sm:$0xff] %v690
        %849 = vst [vmem:[#allocation4 + $0x1b0] sm:$0xff] %v739
        %850 = vst [vmem:[#allocation4 + $0x1b8] sm:$0xff] %v788
        %851 = vst [vmem:[#allocation4 + $0x1c0] sm:$0xff] %v644
        %852 = vst [vmem:[#allocation4 + $0x1c8] sm:$0xff] %v693
        %853 = vst [vmem:[#allocation4 + $0x1d0] sm:$0xff] %v742
        %854 = vst [vmem:[#allocation4 + $0x1d8] sm:$0xff] %v791
        %855 = vst [vmem:[#allocation4 + $0x1e0] sm:$0xff] %v646
        %856 = vst [vmem:[#allocation4 + $0x1e8] sm:$0xff] %v695
        %857 = vst [vmem:[#allocation4 + $0x1f0] sm:$0xff] %v744
        %858 = vst [vmem:[#allocation4 + $0x1f8] sm:$0xff] %v793
        %v859 = vld [vmem:[#allocation2] sm:$0xff]
        %v860 = vld [vmem:[#allocation2 + $0x8] sm:$0xff]
        %v861 = vld [vmem:[#allocation3] sm:$0xff]
        %v862 = vld [vmem:[#allocation3 + $0x8] sm:$0xff]
        %v863 = vld [vmem:[#allocation4] sm:$0xff]
        %v864 = vld [vmem:[#allocation4 + $0x8] sm:$0xff]
        %v865 = vld [vmem:[#allocation4 + $0x10] sm:$0xff]
        %v866 = vld [vmem:[#allocation4 + $0x18] sm:$0xff]
        %v867 = vld [vmem:[#allocation4 + $0x20] sm:$0xff]
        %v868 = vld [vmem:[#allocation4 + $0x28] sm:$0xff]
        %v869 = vld [vmem:[#allocation4 + $0x30] sm:$0xff]
        %v870 = vld [vmem:[#allocation4 + $0x38] sm:$0xff]
        %v871 = vpack.c.bf16 %v860, %v859
        %v872 = vld [vmem:[#allocation5] sm:$0xff]
        %v873 = vld [vmem:[#allocation5 + $0x8] sm:$0xff]
        %v874 = vld [vmem:[#allocation5 + $0x10] sm:$0xff]
        %v875 = vld [vmem:[#allocation5 + $0x18] sm:$0xff]
        %v876 = vld [vmem:[#allocation5 + $0x20] sm:$0xff]
        %v877 = vld [vmem:[#allocation5 + $0x28] sm:$0xff]
        %v878 = vld [vmem:[#allocation5 + $0x30] sm:$0xff]
        %v879 = vld [vmem:[#allocation5 + $0x38] sm:$0xff]
        %v880 = vld [vmem:[#allocation5 + $0x40] sm:$0xff]
        %v881 = vld [vmem:[#allocation5 + $0x48] sm:$0xff]
        %v882 = vld [vmem:[#allocation5 + $0x50] sm:$0xff]
        %v883 = vld [vmem:[#allocation5 + $0x58] sm:$0xff]
        %v884 = vld [vmem:[#allocation5 + $0x60] sm:$0xff]
        %v885 = vld [vmem:[#allocation5 + $0x68] sm:$0xff]
        %v886 = vld [vmem:[#allocation5 + $0x70] sm:$0xff]
        %v887 = vld [vmem:[#allocation5 + $0x78] sm:$0xff]
        %v888 = vld [vmem:[#allocation5 + $0x80] sm:$0xff]
        %v889 = vld [vmem:[#allocation5 + $0x88] sm:$0xff]
        %v890 = vld [vmem:[#allocation5 + $0x90] sm:$0xff]
        %v891 = vld [vmem:[#allocation5 + $0x98] sm:$0xff]
        %v892 = vld [vmem:[#allocation5 + $0xa0] sm:$0xff]
        %v893 = vld [vmem:[#allocation5 + $0xa8] sm:$0xff]
        %v894 = vld [vmem:[#allocation5 + $0xb0] sm:$0xff]
        %v895 = vld [vmem:[#allocation5 + $0xb8] sm:$0xff]
        %v896 = vld [vmem:[#allocation5 + $0xc0] sm:$0xff]
        %v897 = vld [vmem:[#allocation5 + $0xc8] sm:$0xff]
        %v898 = vld [vmem:[#allocation5 + $0xd0] sm:$0xff]
        %v899 = vld [vmem:[#allocation5 + $0xd8] sm:$0xff]
        %v900 = vld [vmem:[#allocation5 + $0xe0] sm:$0xff]
        %v901 = vld [vmem:[#allocation5 + $0xe8] sm:$0xff]
        %v902 = vld [vmem:[#allocation5 + $0xf0] sm:$0xff]
        %v903 = vld [vmem:[#allocation5 + $0xf8] sm:$0xff]
        %v936 = vunpack.c.l.b16 %v872
        %v937 = vunpack.c.h.b16 %v872
        %v938 = vunpack.c.l.b16 %v873
        %v939 = vunpack.c.h.b16 %v873
        %v940 = vunpack.c.l.b16 %v874
        %v941 = vunpack.c.h.b16 %v874
        %v942 = vunpack.c.l.b16 %v875
        %v943 = vunpack.c.h.b16 %v875
        %v944 = vunpack.c.l.b16 %v876
        %v945 = vunpack.c.h.b16 %v876
        %v946 = vunpack.c.l.b16 %v877
        %v947 = vunpack.c.h.b16 %v877
        %v948 = vunpack.c.l.b16 %v878
        %v949 = vunpack.c.h.b16 %v878
        %v950 = vunpack.c.l.b16 %v879
        %v951 = vunpack.c.h.b16 %v879
        %v952 = vunpack.c.l.b16 %v880
        %v953 = vunpack.c.h.b16 %v880
        %v954 = vunpack.c.l.b16 %v881
        %v955 = vunpack.c.h.b16 %v881
        %v956 = vunpack.c.l.b16 %v882
        %v957 = vunpack.c.h.b16 %v882
        %v958 = vunpack.c.l.b16 %v883
        %v959 = vunpack.c.h.b16 %v883
        %v960 = vunpack.c.l.b16 %v884
        %v961 = vunpack.c.h.b16 %v884
        %v962 = vunpack.c.l.b16 %v885
        %v963 = vunpack.c.h.b16 %v885
        %v964 = vunpack.c.l.b16 %v886
        %v965 = vunpack.c.h.b16 %v886
        %v966 = vunpack.c.l.b16 %v887
        %v967 = vunpack.c.h.b16 %v887
        %v968 = vunpack.c.l.b16 %v888
        %v969 = vunpack.c.h.b16 %v888
        %v970 = vunpack.c.l.b16 %v889
        %v971 = vunpack.c.h.b16 %v889
        %v972 = vunpack.c.l.b16 %v890
        %v973 = vunpack.c.h.b16 %v890
        %v974 = vunpack.c.l.b16 %v891
        %v975 = vunpack.c.h.b16 %v891
        %v976 = vunpack.c.l.b16 %v892
        %v977 = vunpack.c.h.b16 %v892
        %v978 = vunpack.c.l.b16 %v893
        %v979 = vunpack.c.h.b16 %v893
        %v980 = vunpack.c.l.b16 %v894
        %v981 = vunpack.c.h.b16 %v894
        %v982 = vunpack.c.l.b16 %v895
        %v983 = vunpack.c.h.b16 %v895
        %v984 = vunpack.c.l.b16 %v896
        %v985 = vunpack.c.h.b16 %v896
        %v986 = vunpack.c.l.b16 %v897
        %v987 = vunpack.c.h.b16 %v897
        %v988 = vunpack.c.l.b16 %v898
        %v989 = vunpack.c.h.b16 %v898
        %v990 = vunpack.c.l.b16 %v899
        %v991 = vunpack.c.h.b16 %v899
        %v992 = vunpack.c.l.b16 %v900
        %v993 = vunpack.c.h.b16 %v900
        %v994 = vunpack.c.l.b16 %v901
        %v995 = vunpack.c.h.b16 %v901
        %v996 = vunpack.c.l.b16 %v902
        %v997 = vunpack.c.h.b16 %v902
        %v998 = vunpack.c.l.b16 %v903
        %v999 = vunpack.c.h.b16 %v903
        %v1000 = vpack.c.b16 %v940, %v936
        %v1001 = vpack.c.b16 %v941, %v937
        %v1002 = vpack.c.b16 %v942, %v938
        %v1003 = vpack.c.b16 %v943, %v939
        %v1004 = vpack.c.b16 %v948, %v944
        %v1005 = vpack.c.b16 %v949, %v945
        %v1006 = vpack.c.b16 %v950, %v946
        %v1007 = vpack.c.b16 %v951, %v947
        %v1008 = vpack.c.b16 %v956, %v952
        %v1009 = vpack.c.b16 %v957, %v953
        %v1010 = vpack.c.b16 %v958, %v954
        %v1011 = vpack.c.b16 %v959, %v955
        %v1012 = vpack.c.b16 %v964, %v960
        %v1013 = vpack.c.b16 %v965, %v961
        %v1014 = vpack.c.b16 %v966, %v962
        %v1015 = vpack.c.b16 %v967, %v963
        %v1016 = vpack.c.b16 %v972, %v968
        %v1017 = vpack.c.b16 %v973, %v969
        %v1018 = vpack.c.b16 %v974, %v970
        %v1019 = vpack.c.b16 %v975, %v971
        %v1020 = vpack.c.b16 %v980, %v976
        %v1021 = vpack.c.b16 %v981, %v977
        %v1022 = vpack.c.b16 %v982, %v978
        %v1023 = vpack.c.b16 %v983, %v979
        %v1024 = vpack.c.b16 %v988, %v984
        %v1025 = vpack.c.b16 %v989, %v985
        %v1026 = vpack.c.b16 %v990, %v986
        %v1027 = vpack.c.b16 %v991, %v987
        %v1028 = vpack.c.b16 %v996, %v992
        %v1029 = vpack.c.b16 %v997, %v993
        %v1030 = vpack.c.b16 %v998, %v994
        %v1031 = vpack.c.b16 %v999, %v995
        %1064 = vmatpush.bf16.msra.mxu0 %v1028
        %1065 = vmatpush.bf16.msra.mxu0 %v1024
        %1066 = vmatpush.bf16.msra.mxu0 %v1020
        %1067 = vmatpush.bf16.msra.mxu0 %v1016
        %1068 = vmatpush.bf16.msra.mxu0 %v1012
        %1069 = vmatpush.bf16.msra.mxu0 %v1008
        %1070 = vmatpush.bf16.msra.mxu0 %v1004
        %1071 = vmatpush.bf16.msra.mxu0 %v1000
        %1072 = vmatmul.bf16.gmra.mxu0 %v871
        %v1073 = vpop.f32.mrf.mxu0
        %v1074 = vadd.f32 0.0, %v1073
        %v1075 = vpop.f32.mrf.mxu0
        %v1076 = vadd.f32 0.0, %v1075
        %1077 = vdwg.mxu0
        %1078 = vmatpush.bf16.msra.mxu0 %v1029
        %1079 = vmatpush.bf16.msra.mxu0 %v1025
        %1080 = vmatpush.bf16.msra.mxu0 %v1021
        %1081 = vmatpush.bf16.msra.mxu0 %v1017
        %1082 = vmatpush.bf16.msra.mxu0 %v1013
        %1083 = vmatpush.bf16.msra.mxu0 %v1009
        %1084 = vmatpush.bf16.msra.mxu0 %v1005
        %1085 = vmatpush.bf16.msra.mxu0 %v1001
        %1086 = vmatmul.bf16.gmra.mxu0 %v871
        %v1087 = vpop.f32.mrf.mxu0
        %v1088 = vadd.f32 0.0, %v1087
        %v1089 = vpop.f32.mrf.mxu0
        %v1090 = vadd.f32 0.0, %v1089
        %1091 = vdwg.mxu0
        %1092 = vmatpush.bf16.msra.mxu0 %v1030
        %1093 = vmatpush.bf16.msra.mxu0 %v1026
        %1094 = vmatpush.bf16.msra.mxu0 %v1022
        %1095 = vmatpush.bf16.msra.mxu0 %v1018
        %1096 = vmatpush.bf16.msra.mxu0 %v1014
        %1097 = vmatpush.bf16.msra.mxu0 %v1010
        %1098 = vmatpush.bf16.msra.mxu0 %v1006
        %1099 = vmatpush.bf16.msra.mxu0 %v1002
        %1100 = vmatmul.bf16.gmra.mxu0 %v871
        %v1101 = vpop.f32.mrf.mxu0
        %v1102 = vadd.f32 0.0, %v1101
        %v1103 = vpop.f32.mrf.mxu0
        %v1104 = vadd.f32 0.0, %v1103
        %1105 = vdwg.mxu0
        %1106 = vmatpush.bf16.msra.mxu0 %v1031
        %1107 = vmatpush.bf16.msra.mxu0 %v1027
        %1108 = vmatpush.bf16.msra.mxu0 %v1023
        %1109 = vmatpush.bf16.msra.mxu0 %v1019
        %1110 = vmatpush.bf16.msra.mxu0 %v1015
        %1111 = vmatpush.bf16.msra.mxu0 %v1011
        %1112 = vmatpush.bf16.msra.mxu0 %v1007
        %1113 = vmatpush.bf16.msra.mxu0 %v1003
        %1114 = vmatmul.bf16.gmra.mxu0 %v871
        %v1115 = vpop.f32.mrf.mxu0
        %v1116 = vadd.f32 0.0, %v1115
        %v1117 = vpop.f32.mrf.mxu0
        %v1118 = vadd.f32 0.0, %v1117
        %1119 = vdwg.mxu0
        %v1120 = vadd.f32 %v863, %v1074
        %v1121 = vadd.f32 %v864, %v1088
        %v1122 = vadd.f32 %v865, %v1102
        %v1123 = vadd.f32 %v866, %v1116
        %v1124 = vadd.f32 %v867, %v1076
        %v1125 = vadd.f32 %v868, %v1090
        %v1126 = vadd.f32 %v869, %v1104
        %v1127 = vadd.f32 %v870, %v1118
        %v1128 = vmul.f32 %v1120, 0.5
        %v1129 = vmul.f32 %v1124, 0.5
        %v1130 = vtanh.pop %v1128
        %v1131 = vtanh.pop %v1129
        %v1132 = vadd.f32 %v1130, 1.0
        %v1133 = vadd.f32 %v1131, 1.0
        %v1134 = vmul.f32 %v1132, 0.5
        %v1135 = vmul.f32 %v1133, 0.5
        %v1136 = vmul.f32 %v1121, 0.5
        %v1137 = vmul.f32 %v1125, 0.5
        %v1138 = vtanh.pop %v1136
        %v1139 = vtanh.pop %v1137
        %v1140 = vadd.f32 %v1138, 1.0
        %v1141 = vadd.f32 %v1139, 1.0
        %v1142 = vmul.f32 %v1140, 0.5
        %v1143 = vmul.f32 %v1141, 0.5
        %v1144 = vtanh.pop %v1122
        %v1145 = vtanh.pop %v1126
        %v1146 = vmul.f32 %v1123, 0.5
        %v1147 = vmul.f32 %v1127, 0.5
        %v1148 = vtanh.pop %v1146
        %v1149 = vtanh.pop %v1147
        %v1150 = vadd.f32 %v1148, 1.0
        %v1151 = vadd.f32 %v1149, 1.0
        %v1152 = vmul.f32 %v1150, 0.5
        %v1153 = vmul.f32 %v1151, 0.5
        %v1154 = vmul.f32 %v1142, %v861
        %v1155 = vmul.f32 %v1143, %v862
        %v1156 = vmul.f32 %v1134, %v1144
        %v1157 = vmul.f32 %v1135, %v1145
        %v1158 = vadd.f32 %v1154, %v1156
        %v1159 = vadd.f32 %v1155, %v1157
        %v1160 = vtanh.pop %v1158
        %v1161 = vtanh.pop %v1159
        %v1162 = vmul.f32 %v1152, %v1160
        %v1163 = vmul.f32 %v1153, %v1161
        %s1164 = smul.u32 %s21, 8
        %p1165 = scmp.lt.s32.totalorder %s1164, 12
        %s1166 = scalar_select %p1165, 1, 0
        %v1167 = vstv %s1166
        %vm1168 = vcmp.eq.s32.totalorder %v1167, 1
        %v1169 = vsel %vm1168, %v1158, %v861
        %v1170 = vsel %vm1168, %v1159, %v862
        %v1171 = vsel %vm1168, %v1162, %v859
        %v1172 = vsel %vm1168, %v1163, %v860
        %v1173 = vpack.c.bf16 %v1171, %v1171
        %v1174 = vpack.c.bf16 %v1172, %v1172
        %1175 = vst [vmem:[%s319] sm:$0xf] %v1173
        %1176 = vst [vmem:[%s319 + $0x4] sm:$0xf] %v1174
        %v1177 = vld [vmem:[#allocation4 + $0x40] sm:$0xff]
        %v1178 = vld [vmem:[#allocation4 + $0x48] sm:$0xff]
        %v1179 = vld [vmem:[#allocation4 + $0x50] sm:$0xff]
        %v1180 = vld [vmem:[#allocation4 + $0x58] sm:$0xff]
        %v1181 = vld [vmem:[#allocation4 + $0x60] sm:$0xff]
        %v1182 = vld [vmem:[#allocation4 + $0x68] sm:$0xff]
        %v1183 = vld [vmem:[#allocation4 + $0x70] sm:$0xff]
        %v1184 = vld [vmem:[#allocation4 + $0x78] sm:$0xff]
        %v1185 = vld [vmem:[#allocation5] sm:$0xff]
        %v1186 = vld [vmem:[#allocation5 + $0x8] sm:$0xff]
        %v1187 = vld [vmem:[#allocation5 + $0x10] sm:$0xff]
        %v1188 = vld [vmem:[#allocation5 + $0x18] sm:$0xff]
        %v1189 = vld [vmem:[#allocation5 + $0x20] sm:$0xff]
        %v1190 = vld [vmem:[#allocation5 + $0x28] sm:$0xff]
        %v1191 = vld [vmem:[#allocation5 + $0x30] sm:$0xff]
        %v1192 = vld [vmem:[#allocation5 + $0x38] sm:$0xff]
        %v1193 = vld [vmem:[#allocation5 + $0x40] sm:$0xff]
        %v1194 = vld [vmem:[#allocation5 + $0x48] sm:$0xff]
        %v1195 = vld [vmem:[#allocation5 + $0x50] sm:$0xff]
        %v1196 = vld [vmem:[#allocation5 + $0x58] sm:$0xff]
        %v1197 = vld [vmem:[#allocation5 + $0x60] sm:$0xff]
        %v1198 = vld [vmem:[#allocation5 + $0x68] sm:$0xff]
        %v1199 = vld [vmem:[#allocation5 + $0x70] sm:$0xff]
        %v1200 = vld [vmem:[#allocation5 + $0x78] sm:$0xff]
        %v1201 = vld [vmem:[#allocation5 + $0x80] sm:$0xff]
        %v1202 = vld [vmem:[#allocation5 + $0x88] sm:$0xff]
        %v1203 = vld [vmem:[#allocation5 + $0x90] sm:$0xff]
        %v1204 = vld [vmem:[#allocation5 + $0x98] sm:$0xff]
        %v1205 = vld [vmem:[#allocation5 + $0xa0] sm:$0xff]
        %v1206 = vld [vmem:[#allocation5 + $0xa8] sm:$0xff]
        %v1207 = vld [vmem:[#allocation5 + $0xb0] sm:$0xff]
        %v1208 = vld [vmem:[#allocation5 + $0xb8] sm:$0xff]
        %v1209 = vld [vmem:[#allocation5 + $0xc0] sm:$0xff]
        %v1210 = vld [vmem:[#allocation5 + $0xc8] sm:$0xff]
        %v1211 = vld [vmem:[#allocation5 + $0xd0] sm:$0xff]
        %v1212 = vld [vmem:[#allocation5 + $0xd8] sm:$0xff]
        %v1213 = vld [vmem:[#allocation5 + $0xe0] sm:$0xff]
        %v1214 = vld [vmem:[#allocation5 + $0xe8] sm:$0xff]
        %v1215 = vld [vmem:[#allocation5 + $0xf0] sm:$0xff]
        %v1216 = vld [vmem:[#allocation5 + $0xf8] sm:$0xff]
        %v1219 = vunpack.c.l.b16 %v1173
        %v1220 = vunpack.c.l.b16 %v1174
        %v1221 = vpack.c.b16 %v1220, %v1219
        %v1255 = vunpack.c.l.b16 %v1185
        %v1256 = vunpack.c.h.b16 %v1185
        %v1257 = vunpack.c.l.b16 %v1186
        %v1258 = vunpack.c.h.b16 %v1186
        %v1259 = vunpack.c.l.b16 %v1187
        %v1260 = vunpack.c.h.b16 %v1187
        %v1261 = vunpack.c.l.b16 %v1188
        %v1262 = vunpack.c.h.b16 %v1188
        %v1263 = vunpack.c.l.b16 %v1189
        %v1264 = vunpack.c.h.b16 %v1189
        %v1265 = vunpack.c.l.b16 %v1190
        %v1266 = vunpack.c.h.b16 %v1190
        %v1267 = vunpack.c.l.b16 %v1191
        %v1268 = vunpack.c.h.b16 %v1191
        %v1269 = vunpack.c.l.b16 %v1192
        %v1270 = vunpack.c.h.b16 %v1192
        %v1271 = vunpack.c.l.b16 %v1193
        %v1272 = vunpack.c.h.b16 %v1193
        %v1273 = vunpack.c.l.b16 %v1194
        %v1274 = vunpack.c.h.b16 %v1194
        %v1275 = vunpack.c.l.b16 %v1195
        %v1276 = vunpack.c.h.b16 %v1195
        %v1277 = vunpack.c.l.b16 %v1196
        %v1278 = vunpack.c.h.b16 %v1196
        %v1279 = vunpack.c.l.b16 %v1197
        %v1280 = vunpack.c.h.b16 %v1197
        %v1281 = vunpack.c.l.b16 %v1198
        %v1282 = vunpack.c.h.b16 %v1198
        %v1283 = vunpack.c.l.b16 %v1199
        %v1284 = vunpack.c.h.b16 %v1199
        %v1285 = vunpack.c.l.b16 %v1200
        %v1286 = vunpack.c.h.b16 %v1200
        %v1287 = vunpack.c.l.b16 %v1201
        %v1288 = vunpack.c.h.b16 %v1201
        %v1289 = vunpack.c.l.b16 %v1202
        %v1290 = vunpack.c.h.b16 %v1202
        %v1291 = vunpack.c.l.b16 %v1203
        %v1292 = vunpack.c.h.b16 %v1203
        %v1293 = vunpack.c.l.b16 %v1204
        %v1294 = vunpack.c.h.b16 %v1204
        %v1295 = vunpack.c.l.b16 %v1205
        %v1296 = vunpack.c.h.b16 %v1205
        %v1297 = vunpack.c.l.b16 %v1206
        %v1298 = vunpack.c.h.b16 %v1206
        %v1299 = vunpack.c.l.b16 %v1207
        %v1300 = vunpack.c.h.b16 %v1207
        %v1301 = vunpack.c.l.b16 %v1208
        %v1302 = vunpack.c.h.b16 %v1208
        %v1303 = vunpack.c.l.b16 %v1209
        %v1304 = vunpack.c.h.b16 %v1209
        %v1305 = vunpack.c.l.b16 %v1210
        %v1306 = vunpack.c.h.b16 %v1210
        %v1307 = vunpack.c.l.b16 %v1211
        %v1308 = vunpack.c.h.b16 %v1211
        %v1309 = vunpack.c.l.b16 %v1212
        %v1310 = vunpack.c.h.b16 %v1212
        %v1311 = vunpack.c.l.b16 %v1213
        %v1312 = vunpack.c.h.b16 %v1213
        %v1313 = vunpack.c.l.b16 %v1214
        %v1314 = vunpack.c.h.b16 %v1214
        %v1315 = vunpack.c.l.b16 %v1215
        %v1316 = vunpack.c.h.b16 %v1215
        %v1317 = vunpack.c.l.b16 %v1216
        %v1318 = vunpack.c.h.b16 %v1216
        %v1319 = vpack.c.b16 %v1259, %v1255
        %v1320 = vpack.c.b16 %v1260, %v1256
        %v1321 = vpack.c.b16 %v1261, %v1257
        %v1322 = vpack.c.b16 %v1262, %v1258
        %v1323 = vpack.c.b16 %v1267, %v1263
        %v1324 = vpack.c.b16 %v1268, %v1264
        %v1325 = vpack.c.b16 %v1269, %v1265
        %v1326 = vpack.c.b16 %v1270, %v1266
        %v1327 = vpack.c.b16 %v1275, %v1271
        %v1328 = vpack.c.b16 %v1276, %v1272
        %v1329 = vpack.c.b16 %v1277, %v1273
        %v1330 = vpack.c.b16 %v1278, %v1274
        %v1331 = vpack.c.b16 %v1283, %v1279
        %v1332 = vpack.c.b16 %v1284, %v1280
        %v1333 = vpack.c.b16 %v1285, %v1281
        %v1334 = vpack.c.b16 %v1286, %v1282
        %v1335 = vpack.c.b16 %v1291, %v1287
        %v1336 = vpack.c.b16 %v1292, %v1288
        %v1337 = vpack.c.b16 %v1293, %v1289
        %v1338 = vpack.c.b16 %v1294, %v1290
        %v1339 = vpack.c.b16 %v1299, %v1295
        %v1340 = vpack.c.b16 %v1300, %v1296
        %v1341 = vpack.c.b16 %v1301, %v1297
        %v1342 = vpack.c.b16 %v1302, %v1298
        %v1343 = vpack.c.b16 %v1307, %v1303
        %v1344 = vpack.c.b16 %v1308, %v1304
        %v1345 = vpack.c.b16 %v1309, %v1305
        %v1346 = vpack.c.b16 %v1310, %v1306
        %v1347 = vpack.c.b16 %v1315, %v1311
        %v1348 = vpack.c.b16 %v1316, %v1312
        %v1349 = vpack.c.b16 %v1317, %v1313
        %v1350 = vpack.c.b16 %v1318, %v1314
        %1383 = vmatpush.bf16.msra.mxu0 %v1347
        %1384 = vmatpush.bf16.msra.mxu0 %v1343
        %1385 = vmatpush.bf16.msra.mxu0 %v1339
        %1386 = vmatpush.bf16.msra.mxu0 %v1335
        %1387 = vmatpush.bf16.msra.mxu0 %v1331
        %1388 = vmatpush.bf16.msra.mxu0 %v1327
        %1389 = vmatpush.bf16.msra.mxu0 %v1323
        %1390 = vmatpush.bf16.msra.mxu0 %v1319
        %1391 = vmatmul.bf16.gmra.mxu0 %v1221
        %v1392 = vpop.f32.mrf.mxu0
        %v1393 = vadd.f32 0.0, %v1392
        %v1394 = vpop.f32.mrf.mxu0
        %v1395 = vadd.f32 0.0, %v1394
        %1396 = vdwg.mxu0
        %1397 = vmatpush.bf16.msra.mxu0 %v1348
        %1398 = vmatpush.bf16.msra.mxu0 %v1344
        %1399 = vmatpush.bf16.msra.mxu0 %v1340
        %1400 = vmatpush.bf16.msra.mxu0 %v1336
        %1401 = vmatpush.bf16.msra.mxu0 %v1332
        %1402 = vmatpush.bf16.msra.mxu0 %v1328
        %1403 = vmatpush.bf16.msra.mxu0 %v1324
        %1404 = vmatpush.bf16.msra.mxu0 %v1320
        %1405 = vmatmul.bf16.gmra.mxu0 %v1221
        %v1406 = vpop.f32.mrf.mxu0
        %v1407 = vadd.f32 0.0, %v1406
        %v1408 = vpop.f32.mrf.mxu0
        %v1409 = vadd.f32 0.0, %v1408
        %1410 = vdwg.mxu0
        %1411 = vmatpush.bf16.msra.mxu0 %v1349
        %1412 = vmatpush.bf16.msra.mxu0 %v1345
        %1413 = vmatpush.bf16.msra.mxu0 %v1341
        %1414 = vmatpush.bf16.msra.mxu0 %v1337
        %1415 = vmatpush.bf16.msra.mxu0 %v1333
        %1416 = vmatpush.bf16.msra.mxu0 %v1329
        %1417 = vmatpush.bf16.msra.mxu0 %v1325
        %1418 = vmatpush.bf16.msra.mxu0 %v1321
        %1419 = vmatmul.bf16.gmra.mxu0 %v1221
        %v1420 = vpop.f32.mrf.mxu0
        %v1421 = vadd.f32 0.0, %v1420
        %v1422 = vpop.f32.mrf.mxu0
        %v1423 = vadd.f32 0.0, %v1422
        %1424 = vdwg.mxu0
        %1425 = vmatpush.bf16.msra.mxu0 %v1350
        %1426 = vmatpush.bf16.msra.mxu0 %v1346
        %1427 = vmatpush.bf16.msra.mxu0 %v1342
        %1428 = vmatpush.bf16.msra.mxu0 %v1338
        %1429 = vmatpush.bf16.msra.mxu0 %v1334
        %1430 = vmatpush.bf16.msra.mxu0 %v1330
        %1431 = vmatpush.bf16.msra.mxu0 %v1326
        %1432 = vmatpush.bf16.msra.mxu0 %v1322
        %1433 = vmatmul.bf16.gmra.mxu0 %v1221
        %v1434 = vpop.f32.mrf.mxu0
        %v1435 = vadd.f32 0.0, %v1434
        %v1436 = vpop.f32.mrf.mxu0
        %v1437 = vadd.f32 0.0, %v1436
        %1438 = vdwg.mxu0
        %v1439 = vadd.f32 %v1177, %v1393
        %v1440 = vadd.f32 %v1178, %v1407
        %v1441 = vadd.f32 %v1179, %v1421
        %v1442 = vadd.f32 %v1180, %v1435
        %v1443 = vadd.f32 %v1181, %v1395
        %v1444 = vadd.f32 %v1182, %v1409
        %v1445 = vadd.f32 %v1183, %v1423
        %v1446 = vadd.f32 %v1184, %v1437
        %v1447 = vmul.f32 %v1439, 0.5
        %v1448 = vmul.f32 %v1443, 0.5
        %v1449 = vtanh.pop %v1447
        %v1450 = vtanh.pop %v1448
        %v1451 = vadd.f32 %v1449, 1.0
        %v1452 = vadd.f32 %v1450, 1.0
        %v1453 = vmul.f32 %v1451, 0.5
        %v1454 = vmul.f32 %v1452, 0.5
        %v1455 = vmul.f32 %v1440, 0.5
        %v1456 = vmul.f32 %v1444, 0.5
        %v1457 = vtanh.pop %v1455
        %v1458 = vtanh.pop %v1456
        %v1459 = vadd.f32 %v1457, 1.0
        %v1460 = vadd.f32 %v1458, 1.0
        %v1461 = vmul.f32 %v1459, 0.5
        %v1462 = vmul.f32 %v1460, 0.5
        %v1463 = vtanh.pop %v1441
        %v1464 = vtanh.pop %v1445
        %v1465 = vmul.f32 %v1442, 0.5
        %v1466 = vmul.f32 %v1446, 0.5
        %v1467 = vtanh.pop %v1465
        %v1468 = vtanh.pop %v1466
        %v1469 = vadd.f32 %v1467, 1.0
        %v1470 = vadd.f32 %v1468, 1.0
        %v1471 = vmul.f32 %v1469, 0.5
        %v1472 = vmul.f32 %v1470, 0.5
        %v1473 = vmul.f32 %v1461, %v1169
        %v1474 = vmul.f32 %v1462, %v1170
        %v1475 = vmul.f32 %v1453, %v1463
        %v1476 = vmul.f32 %v1454, %v1464
        %v1477 = vadd.f32 %v1473, %v1475
        %v1478 = vadd.f32 %v1474, %v1476
        %v1479 = vtanh.pop %v1477
        %v1480 = vtanh.pop %v1478
        %v1481 = vmul.f32 %v1471, %v1479
        %v1482 = vmul.f32 %v1472, %v1480
        %s1483 = sadd.s32 %s1164, 1
        %p1484 = scmp.lt.s32.totalorder %s1483, 12
        %s1485 = scalar_select %p1484, 1, 0
        %v1486 = vstv %s1485
        %vm1487 = vcmp.eq.s32.totalorder %v1486, 1
        %v1488 = vsel %vm1487, %v1477, %v1169
        %v1489 = vsel %vm1487, %v1478, %v1170
        %v1490 = vsel %vm1487, %v1481, %v1171
        %v1491 = vsel %vm1487, %v1482, %v1172
        %v1492 = vpack.c.bf16 %v1490, %v1490
        %v1493 = vpack.c.bf16 %v1491, %v1491
        %1494 = vst [vmem:[%s319 + $0x8] sm:$0xf] %v1492
        %1495 = vst [vmem:[%s319 + $0xc] sm:$0xf] %v1493
        %v1496 = vld [vmem:[#allocation4 + $0x80] sm:$0xff]
        %v1497 = vld [vmem:[#allocation4 + $0x88] sm:$0xff]
        %v1498 = vld [vmem:[#allocation4 + $0x90] sm:$0xff]
        %v1499 = vld [vmem:[#allocation4 + $0x98] sm:$0xff]
        %v1500 = vld [vmem:[#allocation4 + $0xa0] sm:$0xff]
        %v1501 = vld [vmem:[#allocation4 + $0xa8] sm:$0xff]
        %v1502 = vld [vmem:[#allocation4 + $0xb0] sm:$0xff]
        %v1503 = vld [vmem:[#allocation4 + $0xb8] sm:$0xff]
        %v1504 = vld [vmem:[#allocation5] sm:$0xff]
        %v1505 = vld [vmem:[#allocation5 + $0x8] sm:$0xff]
        %v1506 = vld [vmem:[#allocation5 + $0x10] sm:$0xff]
        %v1507 = vld [vmem:[#allocation5 + $0x18] sm:$0xff]
        %v1508 = vld [vmem:[#allocation5 + $0x20] sm:$0xff]
        %v1509 = vld [vmem:[#allocation5 + $0x28] sm:$0xff]
        %v1510 = vld [vmem:[#allocation5 + $0x30] sm:$0xff]
        %v1511 = vld [vmem:[#allocation5 + $0x38] sm:$0xff]
        %v1512 = vld [vmem:[#allocation5 + $0x40] sm:$0xff]
        %v1513 = vld [vmem:[#allocation5 + $0x48] sm:$0xff]
        %v1514 = vld [vmem:[#allocation5 + $0x50] sm:$0xff]
        %v1515 = vld [vmem:[#allocation5 + $0x58] sm:$0xff]
        %v1516 = vld [vmem:[#allocation5 + $0x60] sm:$0xff]
        %v1517 = vld [vmem:[#allocation5 + $0x68] sm:$0xff]
        %v1518 = vld [vmem:[#allocation5 + $0x70] sm:$0xff]
        %v1519 = vld [vmem:[#allocation5 + $0x78] sm:$0xff]
        %v1520 = vld [vmem:[#allocation5 + $0x80] sm:$0xff]
        %v1521 = vld [vmem:[#allocation5 + $0x88] sm:$0xff]
        %v1522 = vld [vmem:[#allocation5 + $0x90] sm:$0xff]
        %v1523 = vld [vmem:[#allocation5 + $0x98] sm:$0xff]
        %v1524 = vld [vmem:[#allocation5 + $0xa0] sm:$0xff]
        %v1525 = vld [vmem:[#allocation5 + $0xa8] sm:$0xff]
        %v1526 = vld [vmem:[#allocation5 + $0xb0] sm:$0xff]
        %v1527 = vld [vmem:[#allocation5 + $0xb8] sm:$0xff]
        %v1528 = vld [vmem:[#allocation5 + $0xc0] sm:$0xff]
        %v1529 = vld [vmem:[#allocation5 + $0xc8] sm:$0xff]
        %v1530 = vld [vmem:[#allocation5 + $0xd0] sm:$0xff]
        %v1531 = vld [vmem:[#allocation5 + $0xd8] sm:$0xff]
        %v1532 = vld [vmem:[#allocation5 + $0xe0] sm:$0xff]
        %v1533 = vld [vmem:[#allocation5 + $0xe8] sm:$0xff]
        %v1534 = vld [vmem:[#allocation5 + $0xf0] sm:$0xff]
        %v1535 = vld [vmem:[#allocation5 + $0xf8] sm:$0xff]
        %v1538 = vunpack.c.l.b16 %v1492
        %v1539 = vunpack.c.l.b16 %v1493
        %v1540 = vpack.c.b16 %v1539, %v1538
        %v1574 = vunpack.c.l.b16 %v1504
        %v1575 = vunpack.c.h.b16 %v1504
        %v1576 = vunpack.c.l.b16 %v1505
        %v1577 = vunpack.c.h.b16 %v1505
        %v1578 = vunpack.c.l.b16 %v1506
        %v1579 = vunpack.c.h.b16 %v1506
        %v1580 = vunpack.c.l.b16 %v1507
        %v1581 = vunpack.c.h.b16 %v1507
        %v1582 = vunpack.c.l.b16 %v1508
        %v1583 = vunpack.c.h.b16 %v1508
        %v1584 = vunpack.c.l.b16 %v1509
        %v1585 = vunpack.c.h.b16 %v1509
        %v1586 = vunpack.c.l.b16 %v1510
        %v1587 = vunpack.c.h.b16 %v1510
        %v1588 = vunpack.c.l.b16 %v1511
        %v1589 = vunpack.c.h.b16 %v1511
        %v1590 = vunpack.c.l.b16 %v1512
        %v1591 = vunpack.c.h.b16 %v1512
        %v1592 = vunpack.c.l.b16 %v1513
        %v1593 = vunpack.c.h.b16 %v1513
        %v1594 = vunpack.c.l.b16 %v1514
        %v1595 = vunpack.c.h.b16 %v1514
        %v1596 = vunpack.c.l.b16 %v1515
        %v1597 = vunpack.c.h.b16 %v1515
        %v1598 = vunpack.c.l.b16 %v1516
        %v1599 = vunpack.c.h.b16 %v1516
        %v1600 = vunpack.c.l.b16 %v1517
        %v1601 = vunpack.c.h.b16 %v1517
        %v1602 = vunpack.c.l.b16 %v1518
        %v1603 = vunpack.c.h.b16 %v1518
        %v1604 = vunpack.c.l.b16 %v1519
        %v1605 = vunpack.c.h.b16 %v1519
        %v1606 = vunpack.c.l.b16 %v1520
        %v1607 = vunpack.c.h.b16 %v1520
        %v1608 = vunpack.c.l.b16 %v1521
        %v1609 = vunpack.c.h.b16 %v1521
        %v1610 = vunpack.c.l.b16 %v1522
        %v1611 = vunpack.c.h.b16 %v1522
        %v1612 = vunpack.c.l.b16 %v1523
        %v1613 = vunpack.c.h.b16 %v1523
        %v1614 = vunpack.c.l.b16 %v1524
        %v1615 = vunpack.c.h.b16 %v1524
        %v1616 = vunpack.c.l.b16 %v1525
        %v1617 = vunpack.c.h.b16 %v1525
        %v1618 = vunpack.c.l.b16 %v1526
        %v1619 = vunpack.c.h.b16 %v1526
        %v1620 = vunpack.c.l.b16 %v1527
        %v1621 = vunpack.c.h.b16 %v1527
        %v1622 = vunpack.c.l.b16 %v1528
        %v1623 = vunpack.c.h.b16 %v1528
        %v1624 = vunpack.c.l.b16 %v1529
        %v1625 = vunpack.c.h.b16 %v1529
        %v1626 = vunpack.c.l.b16 %v1530
        %v1627 = vunpack.c.h.b16 %v1530
        %v1628 = vunpack.c.l.b16 %v1531
        %v1629 = vunpack.c.h.b16 %v1531
        %v1630 = vunpack.c.l.b16 %v1532
        %v1631 = vunpack.c.h.b16 %v1532
        %v1632 = vunpack.c.l.b16 %v1533
        %v1633 = vunpack.c.h.b16 %v1533
        %v1634 = vunpack.c.l.b16 %v1534
        %v1635 = vunpack.c.h.b16 %v1534
        %v1636 = vunpack.c.l.b16 %v1535
        %v1637 = vunpack.c.h.b16 %v1535
        %v1638 = vpack.c.b16 %v1578, %v1574
        %v1639 = vpack.c.b16 %v1579, %v1575
        %v1640 = vpack.c.b16 %v1580, %v1576
        %v1641 = vpack.c.b16 %v1581, %v1577
        %v1642 = vpack.c.b16 %v1586, %v1582
        %v1643 = vpack.c.b16 %v1587, %v1583
        %v1644 = vpack.c.b16 %v1588, %v1584
        %v1645 = vpack.c.b16 %v1589, %v1585
        %v1646 = vpack.c.b16 %v1594, %v1590
        %v1647 = vpack.c.b16 %v1595, %v1591
        %v1648 = vpack.c.b16 %v1596, %v1592
        %v1649 = vpack.c.b16 %v1597, %v1593
        %v1650 = vpack.c.b16 %v1602, %v1598
        %v1651 = vpack.c.b16 %v1603, %v1599
        %v1652 = vpack.c.b16 %v1604, %v1600
        %v1653 = vpack.c.b16 %v1605, %v1601
        %v1654 = vpack.c.b16 %v1610, %v1606
        %v1655 = vpack.c.b16 %v1611, %v1607
        %v1656 = vpack.c.b16 %v1612, %v1608
        %v1657 = vpack.c.b16 %v1613, %v1609
        %v1658 = vpack.c.b16 %v1618, %v1614
        %v1659 = vpack.c.b16 %v1619, %v1615
        %v1660 = vpack.c.b16 %v1620, %v1616
        %v1661 = vpack.c.b16 %v1621, %v1617
        %v1662 = vpack.c.b16 %v1626, %v1622
        %v1663 = vpack.c.b16 %v1627, %v1623
        %v1664 = vpack.c.b16 %v1628, %v1624
        %v1665 = vpack.c.b16 %v1629, %v1625
        %v1666 = vpack.c.b16 %v1634, %v1630
        %v1667 = vpack.c.b16 %v1635, %v1631
        %v1668 = vpack.c.b16 %v1636, %v1632
        %v1669 = vpack.c.b16 %v1637, %v1633
        %1702 = vmatpush.bf16.msra.mxu0 %v1666
        %1703 = vmatpush.bf16.msra.mxu0 %v1662
        %1704 = vmatpush.bf16.msra.mxu0 %v1658
        %1705 = vmatpush.bf16.msra.mxu0 %v1654
        %1706 = vmatpush.bf16.msra.mxu0 %v1650
        %1707 = vmatpush.bf16.msra.mxu0 %v1646
        %1708 = vmatpush.bf16.msra.mxu0 %v1642
        %1709 = vmatpush.bf16.msra.mxu0 %v1638
        %1710 = vmatmul.bf16.gmra.mxu0 %v1540
        %v1711 = vpop.f32.mrf.mxu0
        %v1712 = vadd.f32 0.0, %v1711
        %v1713 = vpop.f32.mrf.mxu0
        %v1714 = vadd.f32 0.0, %v1713
        %1715 = vdwg.mxu0
        %1716 = vmatpush.bf16.msra.mxu0 %v1667
        %1717 = vmatpush.bf16.msra.mxu0 %v1663
        %1718 = vmatpush.bf16.msra.mxu0 %v1659
        %1719 = vmatpush.bf16.msra.mxu0 %v1655
        %1720 = vmatpush.bf16.msra.mxu0 %v1651
        %1721 = vmatpush.bf16.msra.mxu0 %v1647
        %1722 = vmatpush.bf16.msra.mxu0 %v1643
        %1723 = vmatpush.bf16.msra.mxu0 %v1639
        %1724 = vmatmul.bf16.gmra.mxu0 %v1540
        %v1725 = vpop.f32.mrf.mxu0
        %v1726 = vadd.f32 0.0, %v1725
        %v1727 = vpop.f32.mrf.mxu0
        %v1728 = vadd.f32 0.0, %v1727
        %1729 = vdwg.mxu0
        %1730 = vmatpush.bf16.msra.mxu0 %v1668
        %1731 = vmatpush.bf16.msra.mxu0 %v1664
        %1732 = vmatpush.bf16.msra.mxu0 %v1660
        %1733 = vmatpush.bf16.msra.mxu0 %v1656
        %1734 = vmatpush.bf16.msra.mxu0 %v1652
        %1735 = vmatpush.bf16.msra.mxu0 %v1648
        %1736 = vmatpush.bf16.msra.mxu0 %v1644
        %1737 = vmatpush.bf16.msra.mxu0 %v1640
        %1738 = vmatmul.bf16.gmra.mxu0 %v1540
        %v1739 = vpop.f32.mrf.mxu0
        %v1740 = vadd.f32 0.0, %v1739
        %v1741 = vpop.f32.mrf.mxu0
        %v1742 = vadd.f32 0.0, %v1741
        %1743 = vdwg.mxu0
        %1744 = vmatpush.bf16.msra.mxu0 %v1669
        %1745 = vmatpush.bf16.msra.mxu0 %v1665
        %1746 = vmatpush.bf16.msra.mxu0 %v1661
        %1747 = vmatpush.bf16.msra.mxu0 %v1657
        %1748 = vmatpush.bf16.msra.mxu0 %v1653
        %1749 = vmatpush.bf16.msra.mxu0 %v1649
        %1750 = vmatpush.bf16.msra.mxu0 %v1645
        %1751 = vmatpush.bf16.msra.mxu0 %v1641
        %1752 = vmatmul.bf16.gmra.mxu0 %v1540
        %v1753 = vpop.f32.mrf.mxu0
        %v1754 = vadd.f32 0.0, %v1753
        %v1755 = vpop.f32.mrf.mxu0
        %v1756 = vadd.f32 0.0, %v1755
        %1757 = vdwg.mxu0
        %v1758 = vadd.f32 %v1496, %v1712
        %v1759 = vadd.f32 %v1497, %v1726
        %v1760 = vadd.f32 %v1498, %v1740
        %v1761 = vadd.f32 %v1499, %v1754
        %v1762 = vadd.f32 %v1500, %v1714
        %v1763 = vadd.f32 %v1501, %v1728
        %v1764 = vadd.f32 %v1502, %v1742
        %v1765 = vadd.f32 %v1503, %v1756
        %v1766 = vmul.f32 %v1758, 0.5
        %v1767 = vmul.f32 %v1762, 0.5
        %v1768 = vtanh.pop %v1766
        %v1769 = vtanh.pop %v1767
        %v1770 = vadd.f32 %v1768, 1.0
        %v1771 = vadd.f32 %v1769, 1.0
        %v1772 = vmul.f32 %v1770, 0.5
        %v1773 = vmul.f32 %v1771, 0.5
        %v1774 = vmul.f32 %v1759, 0.5
        %v1775 = vmul.f32 %v1763, 0.5
        %v1776 = vtanh.pop %v1774
        %v1777 = vtanh.pop %v1775
        %v1778 = vadd.f32 %v1776, 1.0
        %v1779 = vadd.f32 %v1777, 1.0
        %v1780 = vmul.f32 %v1778, 0.5
        %v1781 = vmul.f32 %v1779, 0.5
        %v1782 = vtanh.pop %v1760
        %v1783 = vtanh.pop %v1764
        %v1784 = vmul.f32 %v1761, 0.5
        %v1785 = vmul.f32 %v1765, 0.5
        %v1786 = vtanh.pop %v1784
        %v1787 = vtanh.pop %v1785
        %v1788 = vadd.f32 %v1786, 1.0
        %v1789 = vadd.f32 %v1787, 1.0
        %v1790 = vmul.f32 %v1788, 0.5
        %v1791 = vmul.f32 %v1789, 0.5
        %v1792 = vmul.f32 %v1780, %v1488
        %v1793 = vmul.f32 %v1781, %v1489
        %v1794 = vmul.f32 %v1772, %v1782
        %v1795 = vmul.f32 %v1773, %v1783
        %v1796 = vadd.f32 %v1792, %v1794
        %v1797 = vadd.f32 %v1793, %v1795
        %v1798 = vtanh.pop %v1796
        %v1799 = vtanh.pop %v1797
        %v1800 = vmul.f32 %v1790, %v1798
        %v1801 = vmul.f32 %v1791, %v1799
        %s1802 = sadd.s32 %s1164, 2
        %p1803 = scmp.lt.s32.totalorder %s1802, 12
        %s1804 = scalar_select %p1803, 1, 0
        %v1805 = vstv %s1804
        %vm1806 = vcmp.eq.s32.totalorder %v1805, 1
        %v1807 = vsel %vm1806, %v1796, %v1488
        %v1808 = vsel %vm1806, %v1797, %v1489
        %v1809 = vsel %vm1806, %v1800, %v1490
        %v1810 = vsel %vm1806, %v1801, %v1491
        %v1811 = vpack.c.bf16 %v1809, %v1809
        %v1812 = vpack.c.bf16 %v1810, %v1810
        %1813 = vst [vmem:[%s319 + $0x10] sm:$0xf] %v1811
        %1814 = vst [vmem:[%s319 + $0x14] sm:$0xf] %v1812
        %v1815 = vld [vmem:[#allocation4 + $0xc0] sm:$0xff]
        %v1816 = vld [vmem:[#allocation4 + $0xc8] sm:$0xff]
        %v1817 = vld [vmem:[#allocation4 + $0xd0] sm:$0xff]
        %v1818 = vld [vmem:[#allocation4 + $0xd8] sm:$0xff]
        %v1819 = vld [vmem:[#allocation4 + $0xe0] sm:$0xff]
        %v1820 = vld [vmem:[#allocation4 + $0xe8] sm:$0xff]
        %v1821 = vld [vmem:[#allocation4 + $0xf0] sm:$0xff]
        %v1822 = vld [vmem:[#allocation4 + $0xf8] sm:$0xff]
        %v1823 = vld [vmem:[#allocation5] sm:$0xff]
        %v1824 = vld [vmem:[#allocation5 + $0x8] sm:$0xff]
        %v1825 = vld [vmem:[#allocation5 + $0x10] sm:$0xff]
        %v1826 = vld [vmem:[#allocation5 + $0x18] sm:$0xff]
        %v1827 = vld [vmem:[#allocation5 + $0x20] sm:$0xff]
        %v1828 = vld [vmem:[#allocation5 + $0x28] sm:$0xff]
        %v1829 = vld [vmem:[#allocation5 + $0x30] sm:$0xff]
        %v1830 = vld [vmem:[#allocation5 + $0x38] sm:$0xff]
        %v1831 = vld [vmem:[#allocation5 + $0x40] sm:$0xff]
        %v1832 = vld [vmem:[#allocation5 + $0x48] sm:$0xff]
        %v1833 = vld [vmem:[#allocation5 + $0x50] sm:$0xff]
        %v1834 = vld [vmem:[#allocation5 + $0x58] sm:$0xff]
        %v1835 = vld [vmem:[#allocation5 + $0x60] sm:$0xff]
        %v1836 = vld [vmem:[#allocation5 + $0x68] sm:$0xff]
        %v1837 = vld [vmem:[#allocation5 + $0x70] sm:$0xff]
        %v1838 = vld [vmem:[#allocation5 + $0x78] sm:$0xff]
        %v1839 = vld [vmem:[#allocation5 + $0x80] sm:$0xff]
        %v1840 = vld [vmem:[#allocation5 + $0x88] sm:$0xff]
        %v1841 = vld [vmem:[#allocation5 + $0x90] sm:$0xff]
        %v1842 = vld [vmem:[#allocation5 + $0x98] sm:$0xff]
        %v1843 = vld [vmem:[#allocation5 + $0xa0] sm:$0xff]
        %v1844 = vld [vmem:[#allocation5 + $0xa8] sm:$0xff]
        %v1845 = vld [vmem:[#allocation5 + $0xb0] sm:$0xff]
        %v1846 = vld [vmem:[#allocation5 + $0xb8] sm:$0xff]
        %v1847 = vld [vmem:[#allocation5 + $0xc0] sm:$0xff]
        %v1848 = vld [vmem:[#allocation5 + $0xc8] sm:$0xff]
        %v1849 = vld [vmem:[#allocation5 + $0xd0] sm:$0xff]
        %v1850 = vld [vmem:[#allocation5 + $0xd8] sm:$0xff]
        %v1851 = vld [vmem:[#allocation5 + $0xe0] sm:$0xff]
        %v1852 = vld [vmem:[#allocation5 + $0xe8] sm:$0xff]
        %v1853 = vld [vmem:[#allocation5 + $0xf0] sm:$0xff]
        %v1854 = vld [vmem:[#allocation5 + $0xf8] sm:$0xff]
        %v1857 = vunpack.c.l.b16 %v1811
        %v1858 = vunpack.c.l.b16 %v1812
        %v1859 = vpack.c.b16 %v1858, %v1857
        %v1893 = vunpack.c.l.b16 %v1823
        %v1894 = vunpack.c.h.b16 %v1823
        %v1895 = vunpack.c.l.b16 %v1824
        %v1896 = vunpack.c.h.b16 %v1824
        %v1897 = vunpack.c.l.b16 %v1825
        %v1898 = vunpack.c.h.b16 %v1825
        %v1899 = vunpack.c.l.b16 %v1826
        %v1900 = vunpack.c.h.b16 %v1826
        %v1901 = vunpack.c.l.b16 %v1827
        %v1902 = vunpack.c.h.b16 %v1827
        %v1903 = vunpack.c.l.b16 %v1828
        %v1904 = vunpack.c.h.b16 %v1828
        %v1905 = vunpack.c.l.b16 %v1829
        %v1906 = vunpack.c.h.b16 %v1829
        %v1907 = vunpack.c.l.b16 %v1830
        %v1908 = vunpack.c.h.b16 %v1830
        %v1909 = vunpack.c.l.b16 %v1831
        %v1910 = vunpack.c.h.b16 %v1831
        %v1911 = vunpack.c.l.b16 %v1832
        %v1912 = vunpack.c.h.b16 %v1832
        %v1913 = vunpack.c.l.b16 %v1833
        %v1914 = vunpack.c.h.b16 %v1833
        %v1915 = vunpack.c.l.b16 %v1834
        %v1916 = vunpack.c.h.b16 %v1834
        %v1917 = vunpack.c.l.b16 %v1835
        %v1918 = vunpack.c.h.b16 %v1835
        %v1919 = vunpack.c.l.b16 %v1836
        %v1920 = vunpack.c.h.b16 %v1836
        %v1921 = vunpack.c.l.b16 %v1837
        %v1922 = vunpack.c.h.b16 %v1837
        %v1923 = vunpack.c.l.b16 %v1838
        %v1924 = vunpack.c.h.b16 %v1838
        %v1925 = vunpack.c.l.b16 %v1839
        %v1926 = vunpack.c.h.b16 %v1839
        %v1927 = vunpack.c.l.b16 %v1840
        %v1928 = vunpack.c.h.b16 %v1840
        %v1929 = vunpack.c.l.b16 %v1841
        %v1930 = vunpack.c.h.b16 %v1841
        %v1931 = vunpack.c.l.b16 %v1842
        %v1932 = vunpack.c.h.b16 %v1842
        %v1933 = vunpack.c.l.b16 %v1843
        %v1934 = vunpack.c.h.b16 %v1843
        %v1935 = vunpack.c.l.b16 %v1844
        %v1936 = vunpack.c.h.b16 %v1844
        %v1937 = vunpack.c.l.b16 %v1845
        %v1938 = vunpack.c.h.b16 %v1845
        %v1939 = vunpack.c.l.b16 %v1846
        %v1940 = vunpack.c.h.b16 %v1846
        %v1941 = vunpack.c.l.b16 %v1847
        %v1942 = vunpack.c.h.b16 %v1847
        %v1943 = vunpack.c.l.b16 %v1848
        %v1944 = vunpack.c.h.b16 %v1848
        %v1945 = vunpack.c.l.b16 %v1849
        %v1946 = vunpack.c.h.b16 %v1849
        %v1947 = vunpack.c.l.b16 %v1850
        %v1948 = vunpack.c.h.b16 %v1850
        %v1949 = vunpack.c.l.b16 %v1851
        %v1950 = vunpack.c.h.b16 %v1851
        %v1951 = vunpack.c.l.b16 %v1852
        %v1952 = vunpack.c.h.b16 %v1852
        %v1953 = vunpack.c.l.b16 %v1853
        %v1954 = vunpack.c.h.b16 %v1853
        %v1955 = vunpack.c.l.b16 %v1854
        %v1956 = vunpack.c.h.b16 %v1854
        %v1957 = vpack.c.b16 %v1897, %v1893
        %v1958 = vpack.c.b16 %v1898, %v1894
        %v1959 = vpack.c.b16 %v1899, %v1895
        %v1960 = vpack.c.b16 %v1900, %v1896
        %v1961 = vpack.c.b16 %v1905, %v1901
        %v1962 = vpack.c.b16 %v1906, %v1902
        %v1963 = vpack.c.b16 %v1907, %v1903
        %v1964 = vpack.c.b16 %v1908, %v1904
        %v1965 = vpack.c.b16 %v1913, %v1909
        %v1966 = vpack.c.b16 %v1914, %v1910
        %v1967 = vpack.c.b16 %v1915, %v1911
        %v1968 = vpack.c.b16 %v1916, %v1912
        %v1969 = vpack.c.b16 %v1921, %v1917
        %v1970 = vpack.c.b16 %v1922, %v1918
        %v1971 = vpack.c.b16 %v1923, %v1919
        %v1972 = vpack.c.b16 %v1924, %v1920
        %v1973 = vpack.c.b16 %v1929, %v1925
        %v1974 = vpack.c.b16 %v1930, %v1926
        %v1975 = vpack.c.b16 %v1931, %v1927
        %v1976 = vpack.c.b16 %v1932, %v1928
        %v1977 = vpack.c.b16 %v1937, %v1933
        %v1978 = vpack.c.b16 %v1938, %v1934
        %v1979 = vpack.c.b16 %v1939, %v1935
        %v1980 = vpack.c.b16 %v1940, %v1936
        %v1981 = vpack.c.b16 %v1945, %v1941
        %v1982 = vpack.c.b16 %v1946, %v1942
        %v1983 = vpack.c.b16 %v1947, %v1943
        %v1984 = vpack.c.b16 %v1948, %v1944
        %v1985 = vpack.c.b16 %v1953, %v1949
        %v1986 = vpack.c.b16 %v1954, %v1950
        %v1987 = vpack.c.b16 %v1955, %v1951
        %v1988 = vpack.c.b16 %v1956, %v1952
        %2021 = vmatpush.bf16.msra.mxu0 %v1985
        %2022 = vmatpush.bf16.msra.mxu0 %v1981
        %2023 = vmatpush.bf16.msra.mxu0 %v1977
        %2024 = vmatpush.bf16.msra.mxu0 %v1973
        %2025 = vmatpush.bf16.msra.mxu0 %v1969
        %2026 = vmatpush.bf16.msra.mxu0 %v1965
        %2027 = vmatpush.bf16.msra.mxu0 %v1961
        %2028 = vmatpush.bf16.msra.mxu0 %v1957
        %2029 = vmatmul.bf16.gmra.mxu0 %v1859
        %v2030 = vpop.f32.mrf.mxu0
        %v2031 = vadd.f32 0.0, %v2030
        %v2032 = vpop.f32.mrf.mxu0
        %v2033 = vadd.f32 0.0, %v2032
        %2034 = vdwg.mxu0
        %2035 = vmatpush.bf16.msra.mxu0 %v1986
        %2036 = vmatpush.bf16.msra.mxu0 %v1982
        %2037 = vmatpush.bf16.msra.mxu0 %v1978
        %2038 = vmatpush.bf16.msra.mxu0 %v1974
        %2039 = vmatpush.bf16.msra.mxu0 %v1970
        %2040 = vmatpush.bf16.msra.mxu0 %v1966
        %2041 = vmatpush.bf16.msra.mxu0 %v1962
        %2042 = vmatpush.bf16.msra.mxu0 %v1958
        %2043 = vmatmul.bf16.gmra.mxu0 %v1859
        %v2044 = vpop.f32.mrf.mxu0
        %v2045 = vadd.f32 0.0, %v2044
        %v2046 = vpop.f32.mrf.mxu0
        %v2047 = vadd.f32 0.0, %v2046
        %2048 = vdwg.mxu0
        %2049 = vmatpush.bf16.msra.mxu0 %v1987
        %2050 = vmatpush.bf16.msra.mxu0 %v1983
        %2051 = vmatpush.bf16.msra.mxu0 %v1979
        %2052 = vmatpush.bf16.msra.mxu0 %v1975
        %2053 = vmatpush.bf16.msra.mxu0 %v1971
        %2054 = vmatpush.bf16.msra.mxu0 %v1967
        %2055 = vmatpush.bf16.msra.mxu0 %v1963
        %2056 = vmatpush.bf16.msra.mxu0 %v1959
        %2057 = vmatmul.bf16.gmra.mxu0 %v1859
        %v2058 = vpop.f32.mrf.mxu0
        %v2059 = vadd.f32 0.0, %v2058
        %v2060 = vpop.f32.mrf.mxu0
        %v2061 = vadd.f32 0.0, %v2060
        %2062 = vdwg.mxu0
        %2063 = vmatpush.bf16.msra.mxu0 %v1988
        %2064 = vmatpush.bf16.msra.mxu0 %v1984
        %2065 = vmatpush.bf16.msra.mxu0 %v1980
        %2066 = vmatpush.bf16.msra.mxu0 %v1976
        %2067 = vmatpush.bf16.msra.mxu0 %v1972
        %2068 = vmatpush.bf16.msra.mxu0 %v1968
        %2069 = vmatpush.bf16.msra.mxu0 %v1964
        %2070 = vmatpush.bf16.msra.mxu0 %v1960
        %2071 = vmatmul.bf16.gmra.mxu0 %v1859
        %v2072 = vpop.f32.mrf.mxu0
        %v2073 = vadd.f32 0.0, %v2072
        %v2074 = vpop.f32.mrf.mxu0
        %v2075 = vadd.f32 0.0, %v2074
        %2076 = vdwg.mxu0
        %v2077 = vadd.f32 %v1815, %v2031
        %v2078 = vadd.f32 %v1816, %v2045
        %v2079 = vadd.f32 %v1817, %v2059
        %v2080 = vadd.f32 %v1818, %v2073
        %v2081 = vadd.f32 %v1819, %v2033
        %v2082 = vadd.f32 %v1820, %v2047
        %v2083 = vadd.f32 %v1821, %v2061
        %v2084 = vadd.f32 %v1822, %v2075
        %v2085 = vmul.f32 %v2077, 0.5
        %v2086 = vmul.f32 %v2081, 0.5
        %v2087 = vtanh.pop %v2085
        %v2088 = vtanh.pop %v2086
        %v2089 = vadd.f32 %v2087, 1.0
        %v2090 = vadd.f32 %v2088, 1.0
        %v2091 = vmul.f32 %v2089, 0.5
        %v2092 = vmul.f32 %v2090, 0.5
        %v2093 = vmul.f32 %v2078, 0.5
        %v2094 = vmul.f32 %v2082, 0.5
        %v2095 = vtanh.pop %v2093
        %v2096 = vtanh.pop %v2094
        %v2097 = vadd.f32 %v2095, 1.0
        %v2098 = vadd.f32 %v2096, 1.0
        %v2099 = vmul.f32 %v2097, 0.5
        %v2100 = vmul.f32 %v2098, 0.5
        %v2101 = vtanh.pop %v2079
        %v2102 = vtanh.pop %v2083
        %v2103 = vmul.f32 %v2080, 0.5
        %v2104 = vmul.f32 %v2084, 0.5
        %v2105 = vtanh.pop %v2103
        %v2106 = vtanh.pop %v2104
        %v2107 = vadd.f32 %v2105, 1.0
        %v2108 = vadd.f32 %v2106, 1.0
        %v2109 = vmul.f32 %v2107, 0.5
        %v2110 = vmul.f32 %v2108, 0.5
        %v2111 = vmul.f32 %v2099, %v1807
        %v2112 = vmul.f32 %v2100, %v1808
        %v2113 = vmul.f32 %v2091, %v2101
        %v2114 = vmul.f32 %v2092, %v2102
        %v2115 = vadd.f32 %v2111, %v2113
        %v2116 = vadd.f32 %v2112, %v2114
        %v2117 = vtanh.pop %v2115
        %v2118 = vtanh.pop %v2116
        %v2119 = vmul.f32 %v2109, %v2117
        %v2120 = vmul.f32 %v2110, %v2118
        %s2121 = sadd.s32 %s1164, 3
        %p2122 = scmp.lt.s32.totalorder %s2121, 12
        %s2123 = scalar_select %p2122, 1, 0
        %v2124 = vstv %s2123
        %vm2125 = vcmp.eq.s32.totalorder %v2124, 1
        %v2126 = vsel %vm2125, %v2115, %v1807
        %v2127 = vsel %vm2125, %v2116, %v1808
        %v2128 = vsel %vm2125, %v2119, %v1809
        %v2129 = vsel %vm2125, %v2120, %v1810
        %v2130 = vpack.c.bf16 %v2128, %v2128
        %v2131 = vpack.c.bf16 %v2129, %v2129
        %2132 = vst [vmem:[%s319 + $0x18] sm:$0xf] %v2130
        %2133 = vst [vmem:[%s319 + $0x1c] sm:$0xf] %v2131
        %v2134 = vld [vmem:[#allocation4 + $0x100] sm:$0xff]
        %v2135 = vld [vmem:[#allocation4 + $0x108] sm:$0xff]
        %v2136 = vld [vmem:[#allocation4 + $0x110] sm:$0xff]
        %v2137 = vld [vmem:[#allocation4 + $0x118] sm:$0xff]
        %v2138 = vld [vmem:[#allocation4 + $0x120] sm:$0xff]
        %v2139 = vld [vmem:[#allocation4 + $0x128] sm:$0xff]
        %v2140 = vld [vmem:[#allocation4 + $0x130] sm:$0xff]
        %v2141 = vld [vmem:[#allocation4 + $0x138] sm:$0xff]
        %v2142 = vld [vmem:[#allocation5] sm:$0xff]
        %v2143 = vld [vmem:[#allocation5 + $0x8] sm:$0xff]
        %v2144 = vld [vmem:[#allocation5 + $0x10] sm:$0xff]
        %v2145 = vld [vmem:[#allocation5 + $0x18] sm:$0xff]
        %v2146 = vld [vmem:[#allocation5 + $0x20] sm:$0xff]
        %v2147 = vld [vmem:[#allocation5 + $0x28] sm:$0xff]
        %v2148 = vld [vmem:[#allocation5 + $0x30] sm:$0xff]
        %v2149 = vld [vmem:[#allocation5 + $0x38] sm:$0xff]
        %v2150 = vld [vmem:[#allocation5 + $0x40] sm:$0xff]
        %v2151 = vld [vmem:[#allocation5 + $0x48] sm:$0xff]
        %v2152 = vld [vmem:[#allocation5 + $0x50] sm:$0xff]
        %v2153 = vld [vmem:[#allocation5 + $0x58] sm:$0xff]
        %v2154 = vld [vmem:[#allocation5 + $0x60] sm:$0xff]
        %v2155 = vld [vmem:[#allocation5 + $0x68] sm:$0xff]
        %v2156 = vld [vmem:[#allocation5 + $0x70] sm:$0xff]
        %v2157 = vld [vmem:[#allocation5 + $0x78] sm:$0xff]
        %v2158 = vld [vmem:[#allocation5 + $0x80] sm:$0xff]
        %v2159 = vld [vmem:[#allocation5 + $0x88] sm:$0xff]
        %v2160 = vld [vmem:[#allocation5 + $0x90] sm:$0xff]
        %v2161 = vld [vmem:[#allocation5 + $0x98] sm:$0xff]
        %v2162 = vld [vmem:[#allocation5 + $0xa0] sm:$0xff]
        %v2163 = vld [vmem:[#allocation5 + $0xa8] sm:$0xff]
        %v2164 = vld [vmem:[#allocation5 + $0xb0] sm:$0xff]
        %v2165 = vld [vmem:[#allocation5 + $0xb8] sm:$0xff]
        %v2166 = vld [vmem:[#allocation5 + $0xc0] sm:$0xff]
        %v2167 = vld [vmem:[#allocation5 + $0xc8] sm:$0xff]
        %v2168 = vld [vmem:[#allocation5 + $0xd0] sm:$0xff]
        %v2169 = vld [vmem:[#allocation5 + $0xd8] sm:$0xff]
        %v2170 = vld [vmem:[#allocation5 + $0xe0] sm:$0xff]
        %v2171 = vld [vmem:[#allocation5 + $0xe8] sm:$0xff]
        %v2172 = vld [vmem:[#allocation5 + $0xf0] sm:$0xff]
        %v2173 = vld [vmem:[#allocation5 + $0xf8] sm:$0xff]
        %v2176 = vunpack.c.l.b16 %v2130
        %v2177 = vunpack.c.l.b16 %v2131
        %v2178 = vpack.c.b16 %v2177, %v2176
        %v2212 = vunpack.c.l.b16 %v2142
        %v2213 = vunpack.c.h.b16 %v2142
        %v2214 = vunpack.c.l.b16 %v2143
        %v2215 = vunpack.c.h.b16 %v2143
        %v2216 = vunpack.c.l.b16 %v2144
        %v2217 = vunpack.c.h.b16 %v2144
        %v2218 = vunpack.c.l.b16 %v2145
        %v2219 = vunpack.c.h.b16 %v2145
        %v2220 = vunpack.c.l.b16 %v2146
        %v2221 = vunpack.c.h.b16 %v2146
        %v2222 = vunpack.c.l.b16 %v2147
        %v2223 = vunpack.c.h.b16 %v2147
        %v2224 = vunpack.c.l.b16 %v2148
        %v2225 = vunpack.c.h.b16 %v2148
        %v2226 = vunpack.c.l.b16 %v2149
        %v2227 = vunpack.c.h.b16 %v2149
        %v2228 = vunpack.c.l.b16 %v2150
        %v2229 = vunpack.c.h.b16 %v2150
        %v2230 = vunpack.c.l.b16 %v2151
        %v2231 = vunpack.c.h.b16 %v2151
        %v2232 = vunpack.c.l.b16 %v2152
        %v2233 = vunpack.c.h.b16 %v2152
        %v2234 = vunpack.c.l.b16 %v2153
        %v2235 = vunpack.c.h.b16 %v2153
        %v2236 = vunpack.c.l.b16 %v2154
        %v2237 = vunpack.c.h.b16 %v2154
        %v2238 = vunpack.c.l.b16 %v2155
        %v2239 = vunpack.c.h.b16 %v2155
        %v2240 = vunpack.c.l.b16 %v2156
        %v2241 = vunpack.c.h.b16 %v2156
        %v2242 = vunpack.c.l.b16 %v2157
        %v2243 = vunpack.c.h.b16 %v2157
        %v2244 = vunpack.c.l.b16 %v2158
        %v2245 = vunpack.c.h.b16 %v2158
        %v2246 = vunpack.c.l.b16 %v2159
        %v2247 = vunpack.c.h.b16 %v2159
        %v2248 = vunpack.c.l.b16 %v2160
        %v2249 = vunpack.c.h.b16 %v2160
        %v2250 = vunpack.c.l.b16 %v2161
        %v2251 = vunpack.c.h.b16 %v2161
        %v2252 = vunpack.c.l.b16 %v2162
        %v2253 = vunpack.c.h.b16 %v2162
        %v2254 = vunpack.c.l.b16 %v2163
        %v2255 = vunpack.c.h.b16 %v2163
        %v2256 = vunpack.c.l.b16 %v2164
        %v2257 = vunpack.c.h.b16 %v2164
        %v2258 = vunpack.c.l.b16 %v2165
        %v2259 = vunpack.c.h.b16 %v2165
        %v2260 = vunpack.c.l.b16 %v2166
        %v2261 = vunpack.c.h.b16 %v2166
        %v2262 = vunpack.c.l.b16 %v2167
        %v2263 = vunpack.c.h.b16 %v2167
        %v2264 = vunpack.c.l.b16 %v2168
        %v2265 = vunpack.c.h.b16 %v2168
        %v2266 = vunpack.c.l.b16 %v2169
        %v2267 = vunpack.c.h.b16 %v2169
        %v2268 = vunpack.c.l.b16 %v2170
        %v2269 = vunpack.c.h.b16 %v2170
        %v2270 = vunpack.c.l.b16 %v2171
        %v2271 = vunpack.c.h.b16 %v2171
        %v2272 = vunpack.c.l.b16 %v2172
        %v2273 = vunpack.c.h.b16 %v2172
        %v2274 = vunpack.c.l.b16 %v2173
        %v2275 = vunpack.c.h.b16 %v2173
        %v2276 = vpack.c.b16 %v2216, %v2212
        %v2277 = vpack.c.b16 %v2217, %v2213
        %v2278 = vpack.c.b16 %v2218, %v2214
        %v2279 = vpack.c.b16 %v2219, %v2215
        %v2280 = vpack.c.b16 %v2224, %v2220
        %v2281 = vpack.c.b16 %v2225, %v2221
        %v2282 = vpack.c.b16 %v2226, %v2222
        %v2283 = vpack.c.b16 %v2227, %v2223
        %v2284 = vpack.c.b16 %v2232, %v2228
        %v2285 = vpack.c.b16 %v2233, %v2229
        %v2286 = vpack.c.b16 %v2234, %v2230
        %v2287 = vpack.c.b16 %v2235, %v2231
        %v2288 = vpack.c.b16 %v2240, %v2236
        %v2289 = vpack.c.b16 %v2241, %v2237
        %v2290 = vpack.c.b16 %v2242, %v2238
        %v2291 = vpack.c.b16 %v2243, %v2239
        %v2292 = vpack.c.b16 %v2248, %v2244
        %v2293 = vpack.c.b16 %v2249, %v2245
        %v2294 = vpack.c.b16 %v2250, %v2246
        %v2295 = vpack.c.b16 %v2251, %v2247
        %v2296 = vpack.c.b16 %v2256, %v2252
        %v2297 = vpack.c.b16 %v2257, %v2253
        %v2298 = vpack.c.b16 %v2258, %v2254
        %v2299 = vpack.c.b16 %v2259, %v2255
        %v2300 = vpack.c.b16 %v2264, %v2260
        %v2301 = vpack.c.b16 %v2265, %v2261
        %v2302 = vpack.c.b16 %v2266, %v2262
        %v2303 = vpack.c.b16 %v2267, %v2263
        %v2304 = vpack.c.b16 %v2272, %v2268
        %v2305 = vpack.c.b16 %v2273, %v2269
        %v2306 = vpack.c.b16 %v2274, %v2270
        %v2307 = vpack.c.b16 %v2275, %v2271
        %2340 = vmatpush.bf16.msra.mxu0 %v2304
        %2341 = vmatpush.bf16.msra.mxu0 %v2300
        %2342 = vmatpush.bf16.msra.mxu0 %v2296
        %2343 = vmatpush.bf16.msra.mxu0 %v2292
        %2344 = vmatpush.bf16.msra.mxu0 %v2288
        %2345 = vmatpush.bf16.msra.mxu0 %v2284
        %2346 = vmatpush.bf16.msra.mxu0 %v2280
        %2347 = vmatpush.bf16.msra.mxu0 %v2276
        %2348 = vmatmul.bf16.gmra.mxu0 %v2178
        %v2349 = vpop.f32.mrf.mxu0
        %v2350 = vadd.f32 0.0, %v2349
        %v2351 = vpop.f32.mrf.mxu0
        %v2352 = vadd.f32 0.0, %v2351
        %2353 = vdwg.mxu0
        %2354 = vmatpush.bf16.msra.mxu0 %v2305
        %2355 = vmatpush.bf16.msra.mxu0 %v2301
        %2356 = vmatpush.bf16.msra.mxu0 %v2297
        %2357 = vmatpush.bf16.msra.mxu0 %v2293
        %2358 = vmatpush.bf16.msra.mxu0 %v2289
        %2359 = vmatpush.bf16.msra.mxu0 %v2285
        %2360 = vmatpush.bf16.msra.mxu0 %v2281
        %2361 = vmatpush.bf16.msra.mxu0 %v2277
        %2362 = vmatmul.bf16.gmra.mxu0 %v2178
        %v2363 = vpop.f32.mrf.mxu0
        %v2364 = vadd.f32 0.0, %v2363
        %v2365 = vpop.f32.mrf.mxu0
        %v2366 = vadd.f32 0.0, %v2365
        %2367 = vdwg.mxu0
        %2368 = vmatpush.bf16.msra.mxu0 %v2306
        %2369 = vmatpush.bf16.msra.mxu0 %v2302
        %2370 = vmatpush.bf16.msra.mxu0 %v2298
        %2371 = vmatpush.bf16.msra.mxu0 %v2294
        %2372 = vmatpush.bf16.msra.mxu0 %v2290
        %2373 = vmatpush.bf16.msra.mxu0 %v2286
        %2374 = vmatpush.bf16.msra.mxu0 %v2282
        %2375 = vmatpush.bf16.msra.mxu0 %v2278
        %2376 = vmatmul.bf16.gmra.mxu0 %v2178
        %v2377 = vpop.f32.mrf.mxu0
        %v2378 = vadd.f32 0.0, %v2377
        %v2379 = vpop.f32.mrf.mxu0
        %v2380 = vadd.f32 0.0, %v2379
        %2381 = vdwg.mxu0
        %2382 = vmatpush.bf16.msra.mxu0 %v2307
        %2383 = vmatpush.bf16.msra.mxu0 %v2303
        %2384 = vmatpush.bf16.msra.mxu0 %v2299
        %2385 = vmatpush.bf16.msra.mxu0 %v2295
        %2386 = vmatpush.bf16.msra.mxu0 %v2291
        %2387 = vmatpush.bf16.msra.mxu0 %v2287
        %2388 = vmatpush.bf16.msra.mxu0 %v2283
        %2389 = vmatpush.bf16.msra.mxu0 %v2279
        %2390 = vmatmul.bf16.gmra.mxu0 %v2178
        %v2391 = vpop.f32.mrf.mxu0
        %v2392 = vadd.f32 0.0, %v2391
        %v2393 = vpop.f32.mrf.mxu0
        %v2394 = vadd.f32 0.0, %v2393
        %2395 = vdwg.mxu0
        %v2396 = vadd.f32 %v2134, %v2350
        %v2397 = vadd.f32 %v2135, %v2364
        %v2398 = vadd.f32 %v2136, %v2378
        %v2399 = vadd.f32 %v2137, %v2392
        %v2400 = vadd.f32 %v2138, %v2352
        %v2401 = vadd.f32 %v2139, %v2366
        %v2402 = vadd.f32 %v2140, %v2380
        %v2403 = vadd.f32 %v2141, %v2394
        %v2404 = vmul.f32 %v2396, 0.5
        %v2405 = vmul.f32 %v2400, 0.5
        %v2406 = vtanh.pop %v2404
        %v2407 = vtanh.pop %v2405
        %v2408 = vadd.f32 %v2406, 1.0
        %v2409 = vadd.f32 %v2407, 1.0
        %v2410 = vmul.f32 %v2408, 0.5
        %v2411 = vmul.f32 %v2409, 0.5
        %v2412 = vmul.f32 %v2397, 0.5
        %v2413 = vmul.f32 %v2401, 0.5
        %v2414 = vtanh.pop %v2412
        %v2415 = vtanh.pop %v2413
        %v2416 = vadd.f32 %v2414, 1.0
        %v2417 = vadd.f32 %v2415, 1.0
        %v2418 = vmul.f32 %v2416, 0.5
        %v2419 = vmul.f32 %v2417, 0.5
        %v2420 = vtanh.pop %v2398
        %v2421 = vtanh.pop %v2402
        %v2422 = vmul.f32 %v2399, 0.5
        %v2423 = vmul.f32 %v2403, 0.5
        %v2424 = vtanh.pop %v2422
        %v2425 = vtanh.pop %v2423
        %v2426 = vadd.f32 %v2424, 1.0
        %v2427 = vadd.f32 %v2425, 1.0
        %v2428 = vmul.f32 %v2426, 0.5
        %v2429 = vmul.f32 %v2427, 0.5
        %v2430 = vmul.f32 %v2418, %v2126
        %v2431 = vmul.f32 %v2419, %v2127
        %v2432 = vmul.f32 %v2410, %v2420
        %v2433 = vmul.f32 %v2411, %v2421
        %v2434 = vadd.f32 %v2430, %v2432
        %v2435 = vadd.f32 %v2431, %v2433
        %v2436 = vtanh.pop %v2434
        %v2437 = vtanh.pop %v2435
        %v2438 = vmul.f32 %v2428, %v2436
        %v2439 = vmul.f32 %v2429, %v2437
        %s2440 = sadd.s32 %s1164, 4
        %p2441 = scmp.lt.s32.totalorder %s2440, 12
        %s2442 = scalar_select %p2441, 1, 0
        %v2443 = vstv %s2442
        %vm2444 = vcmp.eq.s32.totalorder %v2443, 1
        %v2445 = vsel %vm2444, %v2434, %v2126
        %v2446 = vsel %vm2444, %v2435, %v2127
        %v2447 = vsel %vm2444, %v2438, %v2128
        %v2448 = vsel %vm2444, %v2439, %v2129
        %v2449 = vpack.c.bf16 %v2447, %v2447
        %v2450 = vpack.c.bf16 %v2448, %v2448
        %2451 = vst [vmem:[%s319 + $0x20] sm:$0xf] %v2449
        %2452 = vst [vmem:[%s319 + $0x24] sm:$0xf] %v2450
        %v2453 = vld [vmem:[#allocation4 + $0x140] sm:$0xff]
        %v2454 = vld [vmem:[#allocation4 + $0x148] sm:$0xff]
        %v2455 = vld [vmem:[#allocation4 + $0x150] sm:$0xff]
        %v2456 = vld [vmem:[#allocation4 + $0x158] sm:$0xff]
        %v2457 = vld [vmem:[#allocation4 + $0x160] sm:$0xff]
        %v2458 = vld [vmem:[#allocation4 + $0x168] sm:$0xff]
        %v2459 = vld [vmem:[#allocation4 + $0x170] sm:$0xff]
        %v2460 = vld [vmem:[#allocation4 + $0x178] sm:$0xff]
        %v2461 = vld [vmem:[#allocation5] sm:$0xff]
        %v2462 = vld [vmem:[#allocation5 + $0x8] sm:$0xff]
        %v2463 = vld [vmem:[#allocation5 + $0x10] sm:$0xff]
        %v2464 = vld [vmem:[#allocation5 + $0x18] sm:$0xff]
        %v2465 = vld [vmem:[#allocation5 + $0x20] sm:$0xff]
        %v2466 = vld [vmem:[#allocation5 + $0x28] sm:$0xff]
        %v2467 = vld [vmem:[#allocation5 + $0x30] sm:$0xff]
        %v2468 = vld [vmem:[#allocation5 + $0x38] sm:$0xff]
        %v2469 = vld [vmem:[#allocation5 + $0x40] sm:$0xff]
        %v2470 = vld [vmem:[#allocation5 + $0x48] sm:$0xff]
        %v2471 = vld [vmem:[#allocation5 + $0x50] sm:$0xff]
        %v2472 = vld [vmem:[#allocation5 + $0x58] sm:$0xff]
        %v2473 = vld [vmem:[#allocation5 + $0x60] sm:$0xff]
        %v2474 = vld [vmem:[#allocation5 + $0x68] sm:$0xff]
        %v2475 = vld [vmem:[#allocation5 + $0x70] sm:$0xff]
        %v2476 = vld [vmem:[#allocation5 + $0x78] sm:$0xff]
        %v2477 = vld [vmem:[#allocation5 + $0x80] sm:$0xff]
        %v2478 = vld [vmem:[#allocation5 + $0x88] sm:$0xff]
        %v2479 = vld [vmem:[#allocation5 + $0x90] sm:$0xff]
        %v2480 = vld [vmem:[#allocation5 + $0x98] sm:$0xff]
        %v2481 = vld [vmem:[#allocation5 + $0xa0] sm:$0xff]
        %v2482 = vld [vmem:[#allocation5 + $0xa8] sm:$0xff]
        %v2483 = vld [vmem:[#allocation5 + $0xb0] sm:$0xff]
        %v2484 = vld [vmem:[#allocation5 + $0xb8] sm:$0xff]
        %v2485 = vld [vmem:[#allocation5 + $0xc0] sm:$0xff]
        %v2486 = vld [vmem:[#allocation5 + $0xc8] sm:$0xff]
        %v2487 = vld [vmem:[#allocation5 + $0xd0] sm:$0xff]
        %v2488 = vld [vmem:[#allocation5 + $0xd8] sm:$0xff]
        %v2489 = vld [vmem:[#allocation5 + $0xe0] sm:$0xff]
        %v2490 = vld [vmem:[#allocation5 + $0xe8] sm:$0xff]
        %v2491 = vld [vmem:[#allocation5 + $0xf0] sm:$0xff]
        %v2492 = vld [vmem:[#allocation5 + $0xf8] sm:$0xff]
        %v2495 = vunpack.c.l.b16 %v2449
        %v2496 = vunpack.c.l.b16 %v2450
        %v2497 = vpack.c.b16 %v2496, %v2495
        %v2531 = vunpack.c.l.b16 %v2461
        %v2532 = vunpack.c.h.b16 %v2461
        %v2533 = vunpack.c.l.b16 %v2462
        %v2534 = vunpack.c.h.b16 %v2462
        %v2535 = vunpack.c.l.b16 %v2463
        %v2536 = vunpack.c.h.b16 %v2463
        %v2537 = vunpack.c.l.b16 %v2464
        %v2538 = vunpack.c.h.b16 %v2464
        %v2539 = vunpack.c.l.b16 %v2465
        %v2540 = vunpack.c.h.b16 %v2465
        %v2541 = vunpack.c.l.b16 %v2466
        %v2542 = vunpack.c.h.b16 %v2466
        %v2543 = vunpack.c.l.b16 %v2467
        %v2544 = vunpack.c.h.b16 %v2467
        %v2545 = vunpack.c.l.b16 %v2468
        %v2546 = vunpack.c.h.b16 %v2468
        %v2547 = vunpack.c.l.b16 %v2469
        %v2548 = vunpack.c.h.b16 %v2469
        %v2549 = vunpack.c.l.b16 %v2470
        %v2550 = vunpack.c.h.b16 %v2470
        %v2551 = vunpack.c.l.b16 %v2471
        %v2552 = vunpack.c.h.b16 %v2471
        %v2553 = vunpack.c.l.b16 %v2472
        %v2554 = vunpack.c.h.b16 %v2472
        %v2555 = vunpack.c.l.b16 %v2473
        %v2556 = vunpack.c.h.b16 %v2473
        %v2557 = vunpack.c.l.b16 %v2474
        %v2558 = vunpack.c.h.b16 %v2474
        %v2559 = vunpack.c.l.b16 %v2475
        %v2560 = vunpack.c.h.b16 %v2475
        %v2561 = vunpack.c.l.b16 %v2476
        %v2562 = vunpack.c.h.b16 %v2476
        %v2563 = vunpack.c.l.b16 %v2477
        %v2564 = vunpack.c.h.b16 %v2477
        %v2565 = vunpack.c.l.b16 %v2478
        %v2566 = vunpack.c.h.b16 %v2478
        %v2567 = vunpack.c.l.b16 %v2479
        %v2568 = vunpack.c.h.b16 %v2479
        %v2569 = vunpack.c.l.b16 %v2480
        %v2570 = vunpack.c.h.b16 %v2480
        %v2571 = vunpack.c.l.b16 %v2481
        %v2572 = vunpack.c.h.b16 %v2481
        %v2573 = vunpack.c.l.b16 %v2482
        %v2574 = vunpack.c.h.b16 %v2482
        %v2575 = vunpack.c.l.b16 %v2483
        %v2576 = vunpack.c.h.b16 %v2483
        %v2577 = vunpack.c.l.b16 %v2484
        %v2578 = vunpack.c.h.b16 %v2484
        %v2579 = vunpack.c.l.b16 %v2485
        %v2580 = vunpack.c.h.b16 %v2485
        %v2581 = vunpack.c.l.b16 %v2486
        %v2582 = vunpack.c.h.b16 %v2486
        %v2583 = vunpack.c.l.b16 %v2487
        %v2584 = vunpack.c.h.b16 %v2487
        %v2585 = vunpack.c.l.b16 %v2488
        %v2586 = vunpack.c.h.b16 %v2488
        %v2587 = vunpack.c.l.b16 %v2489
        %v2588 = vunpack.c.h.b16 %v2489
        %v2589 = vunpack.c.l.b16 %v2490
        %v2590 = vunpack.c.h.b16 %v2490
        %v2591 = vunpack.c.l.b16 %v2491
        %v2592 = vunpack.c.h.b16 %v2491
        %v2593 = vunpack.c.l.b16 %v2492
        %v2594 = vunpack.c.h.b16 %v2492
        %v2595 = vpack.c.b16 %v2535, %v2531
        %v2596 = vpack.c.b16 %v2536, %v2532
        %v2597 = vpack.c.b16 %v2537, %v2533
        %v2598 = vpack.c.b16 %v2538, %v2534
        %v2599 = vpack.c.b16 %v2543, %v2539
        %v2600 = vpack.c.b16 %v2544, %v2540
        %v2601 = vpack.c.b16 %v2545, %v2541
        %v2602 = vpack.c.b16 %v2546, %v2542
        %v2603 = vpack.c.b16 %v2551, %v2547
        %v2604 = vpack.c.b16 %v2552, %v2548
        %v2605 = vpack.c.b16 %v2553, %v2549
        %v2606 = vpack.c.b16 %v2554, %v2550
        %v2607 = vpack.c.b16 %v2559, %v2555
        %v2608 = vpack.c.b16 %v2560, %v2556
        %v2609 = vpack.c.b16 %v2561, %v2557
        %v2610 = vpack.c.b16 %v2562, %v2558
        %v2611 = vpack.c.b16 %v2567, %v2563
        %v2612 = vpack.c.b16 %v2568, %v2564
        %v2613 = vpack.c.b16 %v2569, %v2565
        %v2614 = vpack.c.b16 %v2570, %v2566
        %v2615 = vpack.c.b16 %v2575, %v2571
        %v2616 = vpack.c.b16 %v2576, %v2572
        %v2617 = vpack.c.b16 %v2577, %v2573
        %v2618 = vpack.c.b16 %v2578, %v2574
        %v2619 = vpack.c.b16 %v2583, %v2579
        %v2620 = vpack.c.b16 %v2584, %v2580
        %v2621 = vpack.c.b16 %v2585, %v2581
        %v2622 = vpack.c.b16 %v2586, %v2582
        %v2623 = vpack.c.b16 %v2591, %v2587
        %v2624 = vpack.c.b16 %v2592, %v2588
        %v2625 = vpack.c.b16 %v2593, %v2589
        %v2626 = vpack.c.b16 %v2594, %v2590
        %2659 = vmatpush.bf16.msra.mxu0 %v2623
        %2660 = vmatpush.bf16.msra.mxu0 %v2619
        %2661 = vmatpush.bf16.msra.mxu0 %v2615
        %2662 = vmatpush.bf16.msra.mxu0 %v2611
        %2663 = vmatpush.bf16.msra.mxu0 %v2607
        %2664 = vmatpush.bf16.msra.mxu0 %v2603
        %2665 = vmatpush.bf16.msra.mxu0 %v2599
        %2666 = vmatpush.bf16.msra.mxu0 %v2595
        %2667 = vmatmul.bf16.gmra.mxu0 %v2497
        %v2668 = vpop.f32.mrf.mxu0
        %v2669 = vadd.f32 0.0, %v2668
        %v2670 = vpop.f32.mrf.mxu0
        %v2671 = vadd.f32 0.0, %v2670
        %2672 = vdwg.mxu0
        %2673 = vmatpush.bf16.msra.mxu0 %v2624
        %2674 = vmatpush.bf16.msra.mxu0 %v2620
        %2675 = vmatpush.bf16.msra.mxu0 %v2616
        %2676 = vmatpush.bf16.msra.mxu0 %v2612
        %2677 = vmatpush.bf16.msra.mxu0 %v2608
        %2678 = vmatpush.bf16.msra.mxu0 %v2604
        %2679 = vmatpush.bf16.msra.mxu0 %v2600
        %2680 = vmatpush.bf16.msra.mxu0 %v2596
        %2681 = vmatmul.bf16.gmra.mxu0 %v2497
        %v2682 = vpop.f32.mrf.mxu0
        %v2683 = vadd.f32 0.0, %v2682
        %v2684 = vpop.f32.mrf.mxu0
        %v2685 = vadd.f32 0.0, %v2684
        %2686 = vdwg.mxu0
        %2687 = vmatpush.bf16.msra.mxu0 %v2625
        %2688 = vmatpush.bf16.msra.mxu0 %v2621
        %2689 = vmatpush.bf16.msra.mxu0 %v2617
        %2690 = vmatpush.bf16.msra.mxu0 %v2613
        %2691 = vmatpush.bf16.msra.mxu0 %v2609
        %2692 = vmatpush.bf16.msra.mxu0 %v2605
        %2693 = vmatpush.bf16.msra.mxu0 %v2601
        %2694 = vmatpush.bf16.msra.mxu0 %v2597
        %2695 = vmatmul.bf16.gmra.mxu0 %v2497
        %v2696 = vpop.f32.mrf.mxu0
        %v2697 = vadd.f32 0.0, %v2696
        %v2698 = vpop.f32.mrf.mxu0
        %v2699 = vadd.f32 0.0, %v2698
        %2700 = vdwg.mxu0
        %2701 = vmatpush.bf16.msra.mxu0 %v2626
        %2702 = vmatpush.bf16.msra.mxu0 %v2622
        %2703 = vmatpush.bf16.msra.mxu0 %v2618
        %2704 = vmatpush.bf16.msra.mxu0 %v2614
        %2705 = vmatpush.bf16.msra.mxu0 %v2610
        %2706 = vmatpush.bf16.msra.mxu0 %v2606
        %2707 = vmatpush.bf16.msra.mxu0 %v2602
        %2708 = vmatpush.bf16.msra.mxu0 %v2598
        %2709 = vmatmul.bf16.gmra.mxu0 %v2497
        %v2710 = vpop.f32.mrf.mxu0
        %v2711 = vadd.f32 0.0, %v2710
        %v2712 = vpop.f32.mrf.mxu0
        %v2713 = vadd.f32 0.0, %v2712
        %2714 = vdwg.mxu0
        %v2715 = vadd.f32 %v2453, %v2669
        %v2716 = vadd.f32 %v2454, %v2683
        %v2717 = vadd.f32 %v2455, %v2697
        %v2718 = vadd.f32 %v2456, %v2711
        %v2719 = vadd.f32 %v2457, %v2671
        %v2720 = vadd.f32 %v2458, %v2685
        %v2721 = vadd.f32 %v2459, %v2699
        %v2722 = vadd.f32 %v2460, %v2713
        %v2723 = vmul.f32 %v2715, 0.5
        %v2724 = vmul.f32 %v2719, 0.5
        %v2725 = vtanh.pop %v2723
        %v2726 = vtanh.pop %v2724
        %v2727 = vadd.f32 %v2725, 1.0
        %v2728 = vadd.f32 %v2726, 1.0
        %v2729 = vmul.f32 %v2727, 0.5
        %v2730 = vmul.f32 %v2728, 0.5
        %v2731 = vmul.f32 %v2716, 0.5
        %v2732 = vmul.f32 %v2720, 0.5
        %v2733 = vtanh.pop %v2731
        %v2734 = vtanh.pop %v2732
        %v2735 = vadd.f32 %v2733, 1.0
        %v2736 = vadd.f32 %v2734, 1.0
        %v2737 = vmul.f32 %v2735, 0.5
        %v2738 = vmul.f32 %v2736, 0.5
        %v2739 = vtanh.pop %v2717
        %v2740 = vtanh.pop %v2721
        %v2741 = vmul.f32 %v2718, 0.5
        %v2742 = vmul.f32 %v2722, 0.5
        %v2743 = vtanh.pop %v2741
        %v2744 = vtanh.pop %v2742
        %v2745 = vadd.f32 %v2743, 1.0
        %v2746 = vadd.f32 %v2744, 1.0
        %v2747 = vmul.f32 %v2745, 0.5
        %v2748 = vmul.f32 %v2746, 0.5
        %v2749 = vmul.f32 %v2737, %v2445
        %v2750 = vmul.f32 %v2738, %v2446
        %v2751 = vmul.f32 %v2729, %v2739
        %v2752 = vmul.f32 %v2730, %v2740
        %v2753 = vadd.f32 %v2749, %v2751
        %v2754 = vadd.f32 %v2750, %v2752
        %v2755 = vtanh.pop %v2753
        %v2756 = vtanh.pop %v2754
        %v2757 = vmul.f32 %v2747, %v2755
        %v2758 = vmul.f32 %v2748, %v2756
        %s2759 = sadd.s32 %s1164, 5
        %p2760 = scmp.lt.s32.totalorder %s2759, 12
        %s2761 = scalar_select %p2760, 1, 0
        %v2762 = vstv %s2761
        %vm2763 = vcmp.eq.s32.totalorder %v2762, 1
        %v2764 = vsel %vm2763, %v2753, %v2445
        %v2765 = vsel %vm2763, %v2754, %v2446
        %v2766 = vsel %vm2763, %v2757, %v2447
        %v2767 = vsel %vm2763, %v2758, %v2448
        %v2768 = vpack.c.bf16 %v2766, %v2766
        %v2769 = vpack.c.bf16 %v2767, %v2767
        %2770 = vst [vmem:[%s319 + $0x28] sm:$0xf] %v2768
        %2771 = vst [vmem:[%s319 + $0x2c] sm:$0xf] %v2769
        %v2772 = vld [vmem:[#allocation4 + $0x180] sm:$0xff]
        %v2773 = vld [vmem:[#allocation4 + $0x188] sm:$0xff]
        %v2774 = vld [vmem:[#allocation4 + $0x190] sm:$0xff]
        %v2775 = vld [vmem:[#allocation4 + $0x198] sm:$0xff]
        %v2776 = vld [vmem:[#allocation4 + $0x1a0] sm:$0xff]
        %v2777 = vld [vmem:[#allocation4 + $0x1a8] sm:$0xff]
        %v2778 = vld [vmem:[#allocation4 + $0x1b0] sm:$0xff]
        %v2779 = vld [vmem:[#allocation4 + $0x1b8] sm:$0xff]
        %v2780 = vld [vmem:[#allocation5] sm:$0xff]
        %v2781 = vld [vmem:[#allocation5 + $0x8] sm:$0xff]
        %v2782 = vld [vmem:[#allocation5 + $0x10] sm:$0xff]
        %v2783 = vld [vmem:[#allocation5 + $0x18] sm:$0xff]
        %v2784 = vld [vmem:[#allocation5 + $0x20] sm:$0xff]
        %v2785 = vld [vmem:[#allocation5 + $0x28] sm:$0xff]
        %v2786 = vld [vmem:[#allocation5 + $0x30] sm:$0xff]
        %v2787 = vld [vmem:[#allocation5 + $0x38] sm:$0xff]
        %v2788 = vld [vmem:[#allocation5 + $0x40] sm:$0xff]
        %v2789 = vld [vmem:[#allocation5 + $0x48] sm:$0xff]
        %v2790 = vld [vmem:[#allocation5 + $0x50] sm:$0xff]
        %v2791 = vld [vmem:[#allocation5 + $0x58] sm:$0xff]
        %v2792 = vld [vmem:[#allocation5 + $0x60] sm:$0xff]
        %v2793 = vld [vmem:[#allocation5 + $0x68] sm:$0xff]
        %v2794 = vld [vmem:[#allocation5 + $0x70] sm:$0xff]
        %v2795 = vld [vmem:[#allocation5 + $0x78] sm:$0xff]
        %v2796 = vld [vmem:[#allocation5 + $0x80] sm:$0xff]
        %v2797 = vld [vmem:[#allocation5 + $0x88] sm:$0xff]
        %v2798 = vld [vmem:[#allocation5 + $0x90] sm:$0xff]
        %v2799 = vld [vmem:[#allocation5 + $0x98] sm:$0xff]
        %v2800 = vld [vmem:[#allocation5 + $0xa0] sm:$0xff]
        %v2801 = vld [vmem:[#allocation5 + $0xa8] sm:$0xff]
        %v2802 = vld [vmem:[#allocation5 + $0xb0] sm:$0xff]
        %v2803 = vld [vmem:[#allocation5 + $0xb8] sm:$0xff]
        %v2804 = vld [vmem:[#allocation5 + $0xc0] sm:$0xff]
        %v2805 = vld [vmem:[#allocation5 + $0xc8] sm:$0xff]
        %v2806 = vld [vmem:[#allocation5 + $0xd0] sm:$0xff]
        %v2807 = vld [vmem:[#allocation5 + $0xd8] sm:$0xff]
        %v2808 = vld [vmem:[#allocation5 + $0xe0] sm:$0xff]
        %v2809 = vld [vmem:[#allocation5 + $0xe8] sm:$0xff]
        %v2810 = vld [vmem:[#allocation5 + $0xf0] sm:$0xff]
        %v2811 = vld [vmem:[#allocation5 + $0xf8] sm:$0xff]
        %v2814 = vunpack.c.l.b16 %v2768
        %v2815 = vunpack.c.l.b16 %v2769
        %v2816 = vpack.c.b16 %v2815, %v2814
        %v2850 = vunpack.c.l.b16 %v2780
        %v2851 = vunpack.c.h.b16 %v2780
        %v2852 = vunpack.c.l.b16 %v2781
        %v2853 = vunpack.c.h.b16 %v2781
        %v2854 = vunpack.c.l.b16 %v2782
        %v2855 = vunpack.c.h.b16 %v2782
        %v2856 = vunpack.c.l.b16 %v2783
        %v2857 = vunpack.c.h.b16 %v2783
        %v2858 = vunpack.c.l.b16 %v2784
        %v2859 = vunpack.c.h.b16 %v2784
        %v2860 = vunpack.c.l.b16 %v2785
        %v2861 = vunpack.c.h.b16 %v2785
        %v2862 = vunpack.c.l.b16 %v2786
        %v2863 = vunpack.c.h.b16 %v2786
        %v2864 = vunpack.c.l.b16 %v2787
        %v2865 = vunpack.c.h.b16 %v2787
        %v2866 = vunpack.c.l.b16 %v2788
        %v2867 = vunpack.c.h.b16 %v2788
        %v2868 = vunpack.c.l.b16 %v2789
        %v2869 = vunpack.c.h.b16 %v2789
        %v2870 = vunpack.c.l.b16 %v2790
        %v2871 = vunpack.c.h.b16 %v2790
        %v2872 = vunpack.c.l.b16 %v2791
        %v2873 = vunpack.c.h.b16 %v2791
        %v2874 = vunpack.c.l.b16 %v2792
        %v2875 = vunpack.c.h.b16 %v2792
        %v2876 = vunpack.c.l.b16 %v2793
        %v2877 = vunpack.c.h.b16 %v2793
        %v2878 = vunpack.c.l.b16 %v2794
        %v2879 = vunpack.c.h.b16 %v2794
        %v2880 = vunpack.c.l.b16 %v2795
        %v2881 = vunpack.c.h.b16 %v2795
        %v2882 = vunpack.c.l.b16 %v2796
        %v2883 = vunpack.c.h.b16 %v2796
        %v2884 = vunpack.c.l.b16 %v2797
        %v2885 = vunpack.c.h.b16 %v2797
        %v2886 = vunpack.c.l.b16 %v2798
        %v2887 = vunpack.c.h.b16 %v2798
        %v2888 = vunpack.c.l.b16 %v2799
        %v2889 = vunpack.c.h.b16 %v2799
        %v2890 = vunpack.c.l.b16 %v2800
        %v2891 = vunpack.c.h.b16 %v2800
        %v2892 = vunpack.c.l.b16 %v2801
        %v2893 = vunpack.c.h.b16 %v2801
        %v2894 = vunpack.c.l.b16 %v2802
        %v2895 = vunpack.c.h.b16 %v2802
        %v2896 = vunpack.c.l.b16 %v2803
        %v2897 = vunpack.c.h.b16 %v2803
        %v2898 = vunpack.c.l.b16 %v2804
        %v2899 = vunpack.c.h.b16 %v2804
        %v2900 = vunpack.c.l.b16 %v2805
        %v2901 = vunpack.c.h.b16 %v2805
        %v2902 = vunpack.c.l.b16 %v2806
        %v2903 = vunpack.c.h.b16 %v2806
        %v2904 = vunpack.c.l.b16 %v2807
        %v2905 = vunpack.c.h.b16 %v2807
        %v2906 = vunpack.c.l.b16 %v2808
        %v2907 = vunpack.c.h.b16 %v2808
        %v2908 = vunpack.c.l.b16 %v2809
        %v2909 = vunpack.c.h.b16 %v2809
        %v2910 = vunpack.c.l.b16 %v2810
        %v2911 = vunpack.c.h.b16 %v2810
        %v2912 = vunpack.c.l.b16 %v2811
        %v2913 = vunpack.c.h.b16 %v2811
        %v2914 = vpack.c.b16 %v2854, %v2850
        %v2915 = vpack.c.b16 %v2855, %v2851
        %v2916 = vpack.c.b16 %v2856, %v2852
        %v2917 = vpack.c.b16 %v2857, %v2853
        %v2918 = vpack.c.b16 %v2862, %v2858
        %v2919 = vpack.c.b16 %v2863, %v2859
        %v2920 = vpack.c.b16 %v2864, %v2860
        %v2921 = vpack.c.b16 %v2865, %v2861
        %v2922 = vpack.c.b16 %v2870, %v2866
        %v2923 = vpack.c.b16 %v2871, %v2867
        %v2924 = vpack.c.b16 %v2872, %v2868
        %v2925 = vpack.c.b16 %v2873, %v2869
        %v2926 = vpack.c.b16 %v2878, %v2874
        %v2927 = vpack.c.b16 %v2879, %v2875
        %v2928 = vpack.c.b16 %v2880, %v2876
        %v2929 = vpack.c.b16 %v2881, %v2877
        %v2930 = vpack.c.b16 %v2886, %v2882
        %v2931 = vpack.c.b16 %v2887, %v2883
        %v2932 = vpack.c.b16 %v2888, %v2884
        %v2933 = vpack.c.b16 %v2889, %v2885
        %v2934 = vpack.c.b16 %v2894, %v2890
        %v2935 = vpack.c.b16 %v2895, %v2891
        %v2936 = vpack.c.b16 %v2896, %v2892
        %v2937 = vpack.c.b16 %v2897, %v2893
        %v2938 = vpack.c.b16 %v2902, %v2898
        %v2939 = vpack.c.b16 %v2903, %v2899
        %v2940 = vpack.c.b16 %v2904, %v2900
        %v2941 = vpack.c.b16 %v2905, %v2901
        %v2942 = vpack.c.b16 %v2910, %v2906
        %v2943 = vpack.c.b16 %v2911, %v2907
        %v2944 = vpack.c.b16 %v2912, %v2908
        %v2945 = vpack.c.b16 %v2913, %v2909
        %2978 = vmatpush.bf16.msra.mxu0 %v2942
        %2979 = vmatpush.bf16.msra.mxu0 %v2938
        %2980 = vmatpush.bf16.msra.mxu0 %v2934
        %2981 = vmatpush.bf16.msra.mxu0 %v2930
        %2982 = vmatpush.bf16.msra.mxu0 %v2926
        %2983 = vmatpush.bf16.msra.mxu0 %v2922
        %2984 = vmatpush.bf16.msra.mxu0 %v2918
        %2985 = vmatpush.bf16.msra.mxu0 %v2914
        %2986 = vmatmul.bf16.gmra.mxu0 %v2816
        %v2987 = vpop.f32.mrf.mxu0
        %v2988 = vadd.f32 0.0, %v2987
        %v2989 = vpop.f32.mrf.mxu0
        %v2990 = vadd.f32 0.0, %v2989
        %2991 = vdwg.mxu0
        %2992 = vmatpush.bf16.msra.mxu0 %v2943
        %2993 = vmatpush.bf16.msra.mxu0 %v2939
        %2994 = vmatpush.bf16.msra.mxu0 %v2935
        %2995 = vmatpush.bf16.msra.mxu0 %v2931
        %2996 = vmatpush.bf16.msra.mxu0 %v2927
        %2997 = vmatpush.bf16.msra.mxu0 %v2923
        %2998 = vmatpush.bf16.msra.mxu0 %v2919
        %2999 = vmatpush.bf16.msra.mxu0 %v2915
        %3000 = vmatmul.bf16.gmra.mxu0 %v2816
        %v3001 = vpop.f32.mrf.mxu0
        %v3002 = vadd.f32 0.0, %v3001
        %v3003 = vpop.f32.mrf.mxu0
        %v3004 = vadd.f32 0.0, %v3003
        %3005 = vdwg.mxu0
        %3006 = vmatpush.bf16.msra.mxu0 %v2944
        %3007 = vmatpush.bf16.msra.mxu0 %v2940
        %3008 = vmatpush.bf16.msra.mxu0 %v2936
        %3009 = vmatpush.bf16.msra.mxu0 %v2932
        %3010 = vmatpush.bf16.msra.mxu0 %v2928
        %3011 = vmatpush.bf16.msra.mxu0 %v2924
        %3012 = vmatpush.bf16.msra.mxu0 %v2920
        %3013 = vmatpush.bf16.msra.mxu0 %v2916
        %3014 = vmatmul.bf16.gmra.mxu0 %v2816
        %v3015 = vpop.f32.mrf.mxu0
        %v3016 = vadd.f32 0.0, %v3015
        %v3017 = vpop.f32.mrf.mxu0
        %v3018 = vadd.f32 0.0, %v3017
        %3019 = vdwg.mxu0
        %3020 = vmatpush.bf16.msra.mxu0 %v2945
        %3021 = vmatpush.bf16.msra.mxu0 %v2941
        %3022 = vmatpush.bf16.msra.mxu0 %v2937
        %3023 = vmatpush.bf16.msra.mxu0 %v2933
        %3024 = vmatpush.bf16.msra.mxu0 %v2929
        %3025 = vmatpush.bf16.msra.mxu0 %v2925
        %3026 = vmatpush.bf16.msra.mxu0 %v2921
        %3027 = vmatpush.bf16.msra.mxu0 %v2917
        %3028 = vmatmul.bf16.gmra.mxu0 %v2816
        %v3029 = vpop.f32.mrf.mxu0
        %v3030 = vadd.f32 0.0, %v3029
        %v3031 = vpop.f32.mrf.mxu0
        %v3032 = vadd.f32 0.0, %v3031
        %3033 = vdwg.mxu0
        %v3034 = vadd.f32 %v2772, %v2988
        %v3035 = vadd.f32 %v2773, %v3002
        %v3036 = vadd.f32 %v2774, %v3016
        %v3037 = vadd.f32 %v2775, %v3030
        %v3038 = vadd.f32 %v2776, %v2990
        %v3039 = vadd.f32 %v2777, %v3004
        %v3040 = vadd.f32 %v2778, %v3018
        %v3041 = vadd.f32 %v2779, %v3032
        %v3042 = vmul.f32 %v3034, 0.5
        %v3043 = vmul.f32 %v3038, 0.5
        %v3044 = vtanh.pop %v3042
        %v3045 = vtanh.pop %v3043
        %v3046 = vadd.f32 %v3044, 1.0
        %v3047 = vadd.f32 %v3045, 1.0
        %v3048 = vmul.f32 %v3046, 0.5
        %v3049 = vmul.f32 %v3047, 0.5
        %v3050 = vmul.f32 %v3035, 0.5
        %v3051 = vmul.f32 %v3039, 0.5
        %v3052 = vtanh.pop %v3050
        %v3053 = vtanh.pop %v3051
        %v3054 = vadd.f32 %v3052, 1.0
        %v3055 = vadd.f32 %v3053, 1.0
        %v3056 = vmul.f32 %v3054, 0.5
        %v3057 = vmul.f32 %v3055, 0.5
        %v3058 = vtanh.pop %v3036
        %v3059 = vtanh.pop %v3040
        %v3060 = vmul.f32 %v3037, 0.5
        %v3061 = vmul.f32 %v3041, 0.5
        %v3062 = vtanh.pop %v3060
        %v3063 = vtanh.pop %v3061
        %v3064 = vadd.f32 %v3062, 1.0
        %v3065 = vadd.f32 %v3063, 1.0
        %v3066 = vmul.f32 %v3064, 0.5
        %v3067 = vmul.f32 %v3065, 0.5
        %v3068 = vmul.f32 %v3056, %v2764
        %v3069 = vmul.f32 %v3057, %v2765
        %v3070 = vmul.f32 %v3048, %v3058
        %v3071 = vmul.f32 %v3049, %v3059
        %v3072 = vadd.f32 %v3068, %v3070
        %v3073 = vadd.f32 %v3069, %v3071
        %v3074 = vtanh.pop %v3072
        %v3075 = vtanh.pop %v3073
        %v3076 = vmul.f32 %v3066, %v3074
        %v3077 = vmul.f32 %v3067, %v3075
        %s3078 = sadd.s32 %s1164, 6
        %p3079 = scmp.lt.s32.totalorder %s3078, 12
        %s3080 = scalar_select %p3079, 1, 0
        %v3081 = vstv %s3080
        %vm3082 = vcmp.eq.s32.totalorder %v3081, 1
        %v3083 = vsel %vm3082, %v3072, %v2764
        %v3084 = vsel %vm3082, %v3073, %v2765
        %v3085 = vsel %vm3082, %v3076, %v2766
        %v3086 = vsel %vm3082, %v3077, %v2767
        %v3087 = vpack.c.bf16 %v3085, %v3085
        %v3088 = vpack.c.bf16 %v3086, %v3086
        %3089 = vst [vmem:[%s319 + $0x30] sm:$0xf] %v3087
        %3090 = vst [vmem:[%s319 + $0x34] sm:$0xf] %v3088
        %v3091 = vld [vmem:[#allocation4 + $0x1c0] sm:$0xff]
        %v3092 = vld [vmem:[#allocation4 + $0x1c8] sm:$0xff]
        %v3093 = vld [vmem:[#allocation4 + $0x1d0] sm:$0xff]
        %v3094 = vld [vmem:[#allocation4 + $0x1d8] sm:$0xff]
        %v3095 = vld [vmem:[#allocation4 + $0x1e0] sm:$0xff]
        %v3096 = vld [vmem:[#allocation4 + $0x1e8] sm:$0xff]
        %v3097 = vld [vmem:[#allocation4 + $0x1f0] sm:$0xff]
        %v3098 = vld [vmem:[#allocation4 + $0x1f8] sm:$0xff]
        %v3099 = vld [vmem:[#allocation5] sm:$0xff]
        %v3100 = vld [vmem:[#allocation5 + $0x8] sm:$0xff]
        %v3101 = vld [vmem:[#allocation5 + $0x10] sm:$0xff]
        %v3102 = vld [vmem:[#allocation5 + $0x18] sm:$0xff]
        %v3103 = vld [vmem:[#allocation5 + $0x20] sm:$0xff]
        %v3104 = vld [vmem:[#allocation5 + $0x28] sm:$0xff]
        %v3105 = vld [vmem:[#allocation5 + $0x30] sm:$0xff]
        %v3106 = vld [vmem:[#allocation5 + $0x38] sm:$0xff]
        %v3107 = vld [vmem:[#allocation5 + $0x40] sm:$0xff]
        %v3108 = vld [vmem:[#allocation5 + $0x48] sm:$0xff]
        %v3109 = vld [vmem:[#allocation5 + $0x50] sm:$0xff]
        %v3110 = vld [vmem:[#allocation5 + $0x58] sm:$0xff]
        %v3111 = vld [vmem:[#allocation5 + $0x60] sm:$0xff]
        %v3112 = vld [vmem:[#allocation5 + $0x68] sm:$0xff]
        %v3113 = vld [vmem:[#allocation5 + $0x70] sm:$0xff]
        %v3114 = vld [vmem:[#allocation5 + $0x78] sm:$0xff]
        %v3115 = vld [vmem:[#allocation5 + $0x80] sm:$0xff]
        %v3116 = vld [vmem:[#allocation5 + $0x88] sm:$0xff]
        %v3117 = vld [vmem:[#allocation5 + $0x90] sm:$0xff]
        %v3118 = vld [vmem:[#allocation5 + $0x98] sm:$0xff]
        %v3119 = vld [vmem:[#allocation5 + $0xa0] sm:$0xff]
        %v3120 = vld [vmem:[#allocation5 + $0xa8] sm:$0xff]
        %v3121 = vld [vmem:[#allocation5 + $0xb0] sm:$0xff]
        %v3122 = vld [vmem:[#allocation5 + $0xb8] sm:$0xff]
        %v3123 = vld [vmem:[#allocation5 + $0xc0] sm:$0xff]
        %v3124 = vld [vmem:[#allocation5 + $0xc8] sm:$0xff]
        %v3125 = vld [vmem:[#allocation5 + $0xd0] sm:$0xff]
        %v3126 = vld [vmem:[#allocation5 + $0xd8] sm:$0xff]
        %v3127 = vld [vmem:[#allocation5 + $0xe0] sm:$0xff]
        %v3128 = vld [vmem:[#allocation5 + $0xe8] sm:$0xff]
        %v3129 = vld [vmem:[#allocation5 + $0xf0] sm:$0xff]
        %v3130 = vld [vmem:[#allocation5 + $0xf8] sm:$0xff]
        %v3133 = vunpack.c.l.b16 %v3087
        %v3134 = vunpack.c.l.b16 %v3088
        %v3135 = vpack.c.b16 %v3134, %v3133
        %v3169 = vunpack.c.l.b16 %v3099
        %v3170 = vunpack.c.h.b16 %v3099
        %v3171 = vunpack.c.l.b16 %v3100
        %v3172 = vunpack.c.h.b16 %v3100
        %v3173 = vunpack.c.l.b16 %v3101
        %v3174 = vunpack.c.h.b16 %v3101
        %v3175 = vunpack.c.l.b16 %v3102
        %v3176 = vunpack.c.h.b16 %v3102
        %v3177 = vunpack.c.l.b16 %v3103
        %v3178 = vunpack.c.h.b16 %v3103
        %v3179 = vunpack.c.l.b16 %v3104
        %v3180 = vunpack.c.h.b16 %v3104
        %v3181 = vunpack.c.l.b16 %v3105
        %v3182 = vunpack.c.h.b16 %v3105
        %v3183 = vunpack.c.l.b16 %v3106
        %v3184 = vunpack.c.h.b16 %v3106
        %v3185 = vunpack.c.l.b16 %v3107
        %v3186 = vunpack.c.h.b16 %v3107
        %v3187 = vunpack.c.l.b16 %v3108
        %v3188 = vunpack.c.h.b16 %v3108
        %v3189 = vunpack.c.l.b16 %v3109
        %v3190 = vunpack.c.h.b16 %v3109
        %v3191 = vunpack.c.l.b16 %v3110
        %v3192 = vunpack.c.h.b16 %v3110
        %v3193 = vunpack.c.l.b16 %v3111
        %v3194 = vunpack.c.h.b16 %v3111
        %v3195 = vunpack.c.l.b16 %v3112
        %v3196 = vunpack.c.h.b16 %v3112
        %v3197 = vunpack.c.l.b16 %v3113
        %v3198 = vunpack.c.h.b16 %v3113
        %v3199 = vunpack.c.l.b16 %v3114
        %v3200 = vunpack.c.h.b16 %v3114
        %v3201 = vunpack.c.l.b16 %v3115
        %v3202 = vunpack.c.h.b16 %v3115
        %v3203 = vunpack.c.l.b16 %v3116
        %v3204 = vunpack.c.h.b16 %v3116
        %v3205 = vunpack.c.l.b16 %v3117
        %v3206 = vunpack.c.h.b16 %v3117
        %v3207 = vunpack.c.l.b16 %v3118
        %v3208 = vunpack.c.h.b16 %v3118
        %v3209 = vunpack.c.l.b16 %v3119
        %v3210 = vunpack.c.h.b16 %v3119
        %v3211 = vunpack.c.l.b16 %v3120
        %v3212 = vunpack.c.h.b16 %v3120
        %v3213 = vunpack.c.l.b16 %v3121
        %v3214 = vunpack.c.h.b16 %v3121
        %v3215 = vunpack.c.l.b16 %v3122
        %v3216 = vunpack.c.h.b16 %v3122
        %v3217 = vunpack.c.l.b16 %v3123
        %v3218 = vunpack.c.h.b16 %v3123
        %v3219 = vunpack.c.l.b16 %v3124
        %v3220 = vunpack.c.h.b16 %v3124
        %v3221 = vunpack.c.l.b16 %v3125
        %v3222 = vunpack.c.h.b16 %v3125
        %v3223 = vunpack.c.l.b16 %v3126
        %v3224 = vunpack.c.h.b16 %v3126
        %v3225 = vunpack.c.l.b16 %v3127
        %v3226 = vunpack.c.h.b16 %v3127
        %v3227 = vunpack.c.l.b16 %v3128
        %v3228 = vunpack.c.h.b16 %v3128
        %v3229 = vunpack.c.l.b16 %v3129
        %v3230 = vunpack.c.h.b16 %v3129
        %v3231 = vunpack.c.l.b16 %v3130
        %v3232 = vunpack.c.h.b16 %v3130
        %v3233 = vpack.c.b16 %v3173, %v3169
        %v3234 = vpack.c.b16 %v3174, %v3170
        %v3235 = vpack.c.b16 %v3175, %v3171
        %v3236 = vpack.c.b16 %v3176, %v3172
        %v3237 = vpack.c.b16 %v3181, %v3177
        %v3238 = vpack.c.b16 %v3182, %v3178
        %v3239 = vpack.c.b16 %v3183, %v3179
        %v3240 = vpack.c.b16 %v3184, %v3180
        %v3241 = vpack.c.b16 %v3189, %v3185
        %v3242 = vpack.c.b16 %v3190, %v3186
        %v3243 = vpack.c.b16 %v3191, %v3187
        %v3244 = vpack.c.b16 %v3192, %v3188
        %v3245 = vpack.c.b16 %v3197, %v3193
        %v3246 = vpack.c.b16 %v3198, %v3194
        %v3247 = vpack.c.b16 %v3199, %v3195
        %v3248 = vpack.c.b16 %v3200, %v3196
        %v3249 = vpack.c.b16 %v3205, %v3201
        %v3250 = vpack.c.b16 %v3206, %v3202
        %v3251 = vpack.c.b16 %v3207, %v3203
        %v3252 = vpack.c.b16 %v3208, %v3204
        %v3253 = vpack.c.b16 %v3213, %v3209
        %v3254 = vpack.c.b16 %v3214, %v3210
        %v3255 = vpack.c.b16 %v3215, %v3211
        %v3256 = vpack.c.b16 %v3216, %v3212
        %v3257 = vpack.c.b16 %v3221, %v3217
        %v3258 = vpack.c.b16 %v3222, %v3218
        %v3259 = vpack.c.b16 %v3223, %v3219
        %v3260 = vpack.c.b16 %v3224, %v3220
        %v3261 = vpack.c.b16 %v3229, %v3225
        %v3262 = vpack.c.b16 %v3230, %v3226
        %v3263 = vpack.c.b16 %v3231, %v3227
        %v3264 = vpack.c.b16 %v3232, %v3228
        %3297 = vmatpush.bf16.msra.mxu0 %v3261
        %3298 = vmatpush.bf16.msra.mxu0 %v3257
        %3299 = vmatpush.bf16.msra.mxu0 %v3253
        %3300 = vmatpush.bf16.msra.mxu0 %v3249
        %3301 = vmatpush.bf16.msra.mxu0 %v3245
        %3302 = vmatpush.bf16.msra.mxu0 %v3241
        %3303 = vmatpush.bf16.msra.mxu0 %v3237
        %3304 = vmatpush.bf16.msra.mxu0 %v3233
        %3305 = vmatmul.bf16.gmra.mxu0 %v3135
        %v3306 = vpop.f32.mrf.mxu0
        %v3307 = vadd.f32 0.0, %v3306
        %v3308 = vpop.f32.mrf.mxu0
        %v3309 = vadd.f32 0.0, %v3308
        %3310 = vdwg.mxu0
        %3311 = vmatpush.bf16.msra.mxu0 %v3262
        %3312 = vmatpush.bf16.msra.mxu0 %v3258
        %3313 = vmatpush.bf16.msra.mxu0 %v3254
        %3314 = vmatpush.bf16.msra.mxu0 %v3250
        %3315 = vmatpush.bf16.msra.mxu0 %v3246
        %3316 = vmatpush.bf16.msra.mxu0 %v3242
        %3317 = vmatpush.bf16.msra.mxu0 %v3238
        %3318 = vmatpush.bf16.msra.mxu0 %v3234
        %3319 = vmatmul.bf16.gmra.mxu0 %v3135
        %v3320 = vpop.f32.mrf.mxu0
        %v3321 = vadd.f32 0.0, %v3320
        %v3322 = vpop.f32.mrf.mxu0
        %v3323 = vadd.f32 0.0, %v3322
        %3324 = vdwg.mxu0
        %3325 = vmatpush.bf16.msra.mxu0 %v3263
        %3326 = vmatpush.bf16.msra.mxu0 %v3259
        %3327 = vmatpush.bf16.msra.mxu0 %v3255
        %3328 = vmatpush.bf16.msra.mxu0 %v3251
        %3329 = vmatpush.bf16.msra.mxu0 %v3247
        %3330 = vmatpush.bf16.msra.mxu0 %v3243
        %3331 = vmatpush.bf16.msra.mxu0 %v3239
        %3332 = vmatpush.bf16.msra.mxu0 %v3235
        %3333 = vmatmul.bf16.gmra.mxu0 %v3135
        %v3334 = vpop.f32.mrf.mxu0
        %v3335 = vadd.f32 0.0, %v3334
        %v3336 = vpop.f32.mrf.mxu0
        %v3337 = vadd.f32 0.0, %v3336
        %3338 = vdwg.mxu0
        %3339 = vmatpush.bf16.msra.mxu0 %v3264
        %3340 = vmatpush.bf16.msra.mxu0 %v3260
        %3341 = vmatpush.bf16.msra.mxu0 %v3256
        %3342 = vmatpush.bf16.msra.mxu0 %v3252
        %3343 = vmatpush.bf16.msra.mxu0 %v3248
        %3344 = vmatpush.bf16.msra.mxu0 %v3244
        %3345 = vmatpush.bf16.msra.mxu0 %v3240
        %3346 = vmatpush.bf16.msra.mxu0 %v3236
        %3347 = vmatmul.bf16.gmra.mxu0 %v3135
        %v3348 = vpop.f32.mrf.mxu0
        %v3349 = vadd.f32 0.0, %v3348
        %v3350 = vpop.f32.mrf.mxu0
        %v3351 = vadd.f32 0.0, %v3350
        %3352 = vdwg.mxu0
        %v3353 = vadd.f32 %v3091, %v3307
        %v3354 = vadd.f32 %v3092, %v3321
        %v3355 = vadd.f32 %v3093, %v3335
        %v3356 = vadd.f32 %v3094, %v3349
        %v3357 = vadd.f32 %v3095, %v3309
        %v3358 = vadd.f32 %v3096, %v3323
        %v3359 = vadd.f32 %v3097, %v3337
        %v3360 = vadd.f32 %v3098, %v3351
        %v3361 = vmul.f32 %v3353, 0.5
        %v3362 = vmul.f32 %v3357, 0.5
        %v3363 = vtanh.pop %v3361
        %v3364 = vtanh.pop %v3362
        %v3365 = vadd.f32 %v3363, 1.0
        %v3366 = vadd.f32 %v3364, 1.0
        %v3367 = vmul.f32 %v3365, 0.5
        %v3368 = vmul.f32 %v3366, 0.5
        %v3369 = vmul.f32 %v3354, 0.5
        %v3370 = vmul.f32 %v3358, 0.5
        %v3371 = vtanh.pop %v3369
        %v3372 = vtanh.pop %v3370
        %v3373 = vadd.f32 %v3371, 1.0
        %v3374 = vadd.f32 %v3372, 1.0
        %v3375 = vmul.f32 %v3373, 0.5
        %v3376 = vmul.f32 %v3374, 0.5
        %v3377 = vtanh.pop %v3355
        %v3378 = vtanh.pop %v3359
        %v3379 = vmul.f32 %v3356, 0.5
        %v3380 = vmul.f32 %v3360, 0.5
        %v3381 = vtanh.pop %v3379
        %v3382 = vtanh.pop %v3380
        %v3383 = vadd.f32 %v3381, 1.0
        %v3384 = vadd.f32 %v3382, 1.0
        %v3385 = vmul.f32 %v3383, 0.5
        %v3386 = vmul.f32 %v3384, 0.5
        %v3387 = vmul.f32 %v3375, %v3083
        %v3388 = vmul.f32 %v3376, %v3084
        %v3389 = vmul.f32 %v3367, %v3377
        %v3390 = vmul.f32 %v3368, %v3378
        %v3391 = vadd.f32 %v3387, %v3389
        %v3392 = vadd.f32 %v3388, %v3390
        %v3393 = vtanh.pop %v3391
        %v3394 = vtanh.pop %v3392
        %v3395 = vmul.f32 %v3385, %v3393
        %v3396 = vmul.f32 %v3386, %v3394
        %s3397 = sadd.s32 %s1164, 7
        %p3398 = scmp.lt.s32.totalorder %s3397, 12
        %s3399 = scalar_select %p3398, 1, 0
        %v3400 = vstv %s3399
        %vm3401 = vcmp.eq.s32.totalorder %v3400, 1
        %v3402 = vsel %vm3401, %v3391, %v3083
        %v3403 = vsel %vm3401, %v3392, %v3084
        %v3404 = vsel %vm3401, %v3395, %v3085
        %v3405 = vsel %vm3401, %v3396, %v3086
        %v3406 = vpack.c.bf16 %v3404, %v3404
        %v3407 = vpack.c.bf16 %v3405, %v3405
        %3408 = vst [vmem:[%s319 + $0x38] sm:$0xf] %v3406
        %3409 = vst [vmem:[%s319 + $0x3c] sm:$0xf] %v3407
        %3410 = vst [vmem:[#allocation2] sm:$0xff] %v3404
        %3411 = vst [vmem:[#allocation2 + $0x8] sm:$0xff] %v3405
        %3412 = vst [vmem:[#allocation3] sm:$0xff] %v3402
        %3413 = vst [vmem:[#allocation3 + $0x8] sm:$0xff] %v3403
        %p3414 = scmp.eq.s32.totalorder %s21, 1
        // Predicated region
        $region53: #{multi_rnn_forward.2} parent=43 // pred_check
          %p3415 = pneg %p3414
        $region54: #{multi_rnn_forward.2} parent=43 // pred_check_branch
          %3417 = sbr.rel (%p3415) target = $region56
        $region55: #{multi_rnn_forward.2} parent=43 // pred_region
          %3418 = vst [vmem:[%s7] sm:$0xff] %v3404
          %3419 = vst [vmem:[%s7 + $0x8] sm:$0xff] %v3405
          %3420 = vst [vmem:[%s8] sm:$0xff] %v3402
          %3421 = vst [vmem:[%s8 + $0x8] sm:$0xff] %v3403
        $region56: #{multi_rnn_forward.2} parent=43 // pred_fallthru
          _
        %s3422 = smul.u32 16, %s21
        %p3423 = scmp.lt.s32.totalorder %s3422, 31
        %s3424 = scalar_select %p3423, %s3422, 31
        %s3425 = smul.addr %s3424, 4
        %s3426 = scalar_lea.vmem %s6, %s3425
        // Predicated region
        $region57: #{multi_rnn_forward.2} parent=43 // pred_check
          %p3427 = pneg %p170
        $region58: #{multi_rnn_forward.2} parent=43 // pred_check_branch
          %3429 = sbr.rel (%p3427) target = $region60
        $region59: #{multi_rnn_forward.2} parent=43 // pred_region
          %s3430 = smul.u32 16, %s21
        $region60: #{multi_rnn_forward.2} parent=43 // pred_fallthru
          _
        // Predicated region
        $region61: #{multi_rnn_forward.2} parent=43 // pred_check
          %p3431 = pneg %p191
        $region62: #{multi_rnn_forward.2} parent=43 // pred_check_branch
          %3433 = sbr.rel (%p3431) target = $region64
        $region63: #{multi_rnn_forward.2} parent=43 // pred_region
          _
        $region64: #{multi_rnn_forward.2} parent=43 // pred_fallthru
          _
        // Predicated region
        $region65: #{multi_rnn_forward.2} parent=43 // pred_check
          %p3434 = pneg %p212
        $region66: #{multi_rnn_forward.2} parent=43 // pred_check_branch
          %3436 = sbr.rel (%p3434) target = $region68
        $region67: #{multi_rnn_forward.2} parent=43 // pred_region
          _
        $region68: #{multi_rnn_forward.2} parent=43 // pred_fallthru
          _
        // Predicated region
        $region69: #{multi_rnn_forward.2} parent=43 // pred_check
          %p3437 = pneg %p191
        $region70: #{multi_rnn_forward.2} parent=43 // pred_check_branch
          %3439 = sbr.rel (%p3437) target = $region72
        $region71: #{multi_rnn_forward.2} parent=43 // pred_region
          _
        $region72: #{multi_rnn_forward.2} parent=43 // pred_fallthru
          _
        // Predicated region
        $region73: #{multi_rnn_forward.2} parent=43 // pred_check
          %p3440 = pneg %p212
        $region74: #{multi_rnn_forward.2} parent=43 // pred_check_branch
          %3442 = sbr.rel (%p3440) target = $region76
        $region75: #{multi_rnn_forward.2} parent=43 // pred_region
          _
        $region76: #{multi_rnn_forward.2} parent=43 // pred_fallthru
          _
      $region44: #{multi_rnn_forward.2} parent=5 // pred_fallthru
        _
      %p3443 = scmp.le.s32.totalorder 2, %s16
      // Predicated region
      $region77: #{multi_rnn_forward.2} parent=5 // pred_check
        %p3444 = pneg %p3443
      $region78: #{multi_rnn_forward.2} parent=5 // pred_check_branch
        %3446 = sbr.rel (%p3444) target = $region80
      $region79: #{multi_rnn_forward.2} parent=5 // pred_region
        %s3447 = ssub.s32 %s16, 2
        // Predicated region
        $region81: #{multi_rnn_forward.2} parent=79 // pred_check
          %p3448 = pneg %p176
        $region82: #{multi_rnn_forward.2} parent=79 // pred_check_branch
          %3450 = sbr.rel (%p3448) target = $region84
        $region83: #{multi_rnn_forward.2} parent=79 // pred_region
          %s3451 = smul.u32 16, %s22
          %p3452 = scmp.lt.s32.totalorder %s3451, 31
          %s3453 = scalar_select %p3452, %s3451, 31
          %s3454 = smul.addr %s3453, 4
          %s3455 = scalar_lea.vmem %s6, %s3454
        $region84: #{multi_rnn_forward.2} parent=79 // pred_fallthru
          _
      $region80: #{multi_rnn_forward.2} parent=5 // pred_fallthru
        _
    $region6: #{multi_rnn_forward.2} parent=1 // loop_footer
      %s20 = sadd.s32 1, %s16
    $region7: #{multi_rnn_forward.2} parent=1 // loop_footer_branch
      %15 = sbr.rel target = $region3
    $region8: #{multi_rnn_forward.2} parent=1 // loop_exit
      _
    %3456 = vsyncpa [#allocation6], 1
    %s3457 = scalar_lea.sflag [#allocation6], 1
    %3458 = vsyncpa %s3457, 1

</llo_original>
